<compile_context>
chip_gen: v7x
topology: tpu7x:2x2x1
jax: 0.10.0
libtpu: 0.0.40
codegen_flags: <defaults>
</compile_context>

<pallas_src>
import functools

import numpy as np

import jax
import jax.numpy as jnp
from jax import lax
from jax.experimental import pallas as pl
from jax.experimental.pallas import tpu as pltpu


# kernel tap (kh or kw) used by output parity r and window-offset index in {0, 1}:
#   even outputs (r=0): input rows {i-1, i} use kernel taps {3, 1}
#   odd  outputs (r=1): input rows {i, i+1} use kernel taps {2, 0}
_KIDX = ((3, 1), (2, 0))


def _tap_index_tables():
    """Static (9, 4) tables: kernel index (kh, kw) and validity per (tap, phase)."""
    kh = np.zeros((9, 4), np.int32)
    kw = np.zeros((9, 4), np.int32)
    valid = np.zeros((9, 4), np.float32)
    for a in range(3):
        for b in range(3):
            t = a * 3 + b
            for rh in range(2):
                for rw in range(2):
                    ph = rh * 2 + rw
                    if (a - rh) in (0, 1) and (b - rw) in (0, 1):
                        kh[t, ph] = _KIDX[rh][a - rh]
                        kw[t, ph] = _KIDX[rw][b - rw]
                        valid[t, ph] = 1.0
    return kh, kw, valid


_KH_TAB, _KW_TAB, _VALID_TAB = _tap_index_tables()


# ----------------------------- Pallas kernels -----------------------------

def _first_block_kernel(h_ref, w_ref, seg_ref, segt_ref, g_ref, b_ref, o_ref):
    """ConvTranspose2d(k=4,s=2,p=0) on a 1x1 input + InstanceNorm2d(affine) + ReLU.

    Whole batch in one grid step, everything lane-dense:
      h_ref:   (N, Cin)        bf16  latent + label-embedding rows
      w_ref:   (Cin, C1*16)    bf16  weight, column = c*16 + kh*4 + kw
      seg_ref: (C1*16, C1)     f32   0/1 segment-sum matrix (group of 16 lanes -> channel)
      segt_ref:(C1, C1*16)     f32   its transpose (channel -> group of 16 lanes)
      g_ref/b_ref: (1, C1*16)  f32   per-channel affine, pre-expanded 16x along lanes
      o_ref:   (N, C1*16)      bf16  NCHW-flattened (C1, 4, 4) output per sample
    """
    y = jnp.dot(h_ref[...], w_ref[...], preferred_element_type=jnp.float32)
    seg = seg_ref[...]
    segt = segt_ref[...]
    mean = jnp.dot(y, seg, preferred_element_type=jnp.float32) * (1.0 / 16.0)
    mean_b = jnp.dot(mean, segt, preferred_element_type=jnp.float32)
    d = y - mean_b
    var = jnp.dot(d * d, seg, preferred_element_type=jnp.float32) * (1.0 / 16.0)
    var_b = jnp.dot(var, segt, preferred_element_type=jnp.float32)
    yn = d * lax.rsqrt(var_b + 1e-5) * g_ref[...] + b_ref[...]
    o_ref[...] = jnp.maximum(yn, 0.0).astype(o_ref.dtype)


def _conv_phase_major(x_ref, w_ref, hw, wdim):
    """ConvTranspose2d(k=4, s=2, p=1) via sub-pixel (phase) decomposition.

    x_ref: (1, Cin, hw + 2*(wdim+1)) bf16  flattened NCHW input, zero-padded by wdim+1
           on each side of the flat spatial axis (done in glue).
    w_ref: (9, 4*Cout, Cin) bf16           per-tap phase-stacked weight matrices.
    Returns (4*Cout, hw) f32 phase-major result, row = (rh*2 + rw)*Cout + co.
    """
    cin = x_ref.shape[1]
    m = w_ref.shape[1]
    off = wdim + 1
    # column-validity masks (only needed for horizontal shifts; vertical shifts read
    # the zero padding, and the row-crossing garbage of horizontal shifts is masked)
    j = lax.broadcasted_iota(jnp.int32, (cin, hw), 1) % wdim
    ok = {-1: j > 0, 0: None, 1: j < (wdim - 1)}

    acc = jnp.zeros((m, hw), jnp.float32)
    for a in range(3):
        for b in range(3):
            da, db = a - 1, b - 1
            start = off + da * wdim + db                     # static, >= 0
            slab = x_ref[0, :, start:start + hw]             # (Cin, hw) bf16
            if ok[db] is not None:
                slab = jnp.where(ok[db], slab, jnp.zeros_like(slab))
            acc = acc + jnp.dot(w_ref[a * 3 + b], slab,
                                preferred_element_type=jnp.float32)
    return acc


def _tile4(v):
    """(C, 1) -> (4*C, 1) by stacking the four phase copies along sublanes."""
    return jnp.concatenate([v, v, v, v], axis=0)


def _upconv_norm_relu_kernel(x_ref, w_ref, g_ref, b_ref, o_ref, *, hw, wdim):
    """Up-conv + InstanceNorm2d(affine) + ReLU for one sample; phase-major bf16 output."""
    cout = w_ref.shape[1] // 4
    acc = _conv_phase_major(x_ref, w_ref, hw, wdim)          # (4*Cout, hw) f32
    inv = 1.0 / float(4 * hw)                                 # stats over the full 2Hx2W
    rs = jnp.sum(acc, axis=-1, keepdims=True)                 # (4*Cout, 1)
    csum = rs[:cout] + rs[cout:2 * cout] + rs[2 * cout:3 * cout] + rs[3 * cout:]
    mean4 = _tile4(csum * inv)                                # (4*Cout, 1)
    d = acc - mean4
    ss = jnp.sum(d * d, axis=-1, keepdims=True)               # biased var (PyTorch)
    cvar = (ss[:cout] + ss[cout:2 * cout] + ss[2 * cout:3 * cout] + ss[3 * cout:]) * inv
    scale = g_ref[...] * lax.rsqrt(_tile4(cvar) + 1e-5)       # g_ref pre-tiled (4*Cout, 1)
    o_ref[0] = jnp.maximum(d * scale + b_ref[...], 0.0).astype(o_ref.dtype)


def _upconv_bias_tanh_kernel(x_ref, w_ref, bias_ref, o_ref, *, hw, wdim):
    """Final up-conv (bias=True) + Tanh for one sample; phase-major f32 output."""
    acc = _conv_phase_major(x_ref, w_ref, hw, wdim)
    o_ref[0] = jnp.tanh(acc + bias_ref[...]).astype(o_ref.dtype)


# ------------------------------ call wrappers ------------------------------

def _phase_tap_weights(w):
    """(Cin, Cout, 4, 4) ConvTranspose2d weight -> (9, 4*Cout, Cin) bf16 tap matrices.

    taps[a*3+b, ph*Cout+co, ci] = w[ci, co, KH, KW] for the (tap, phase) pairs that are
    actually used by k=4, s=2, p=1, and exact zeros elsewhere."""
    cin, cout = w.shape[0], w.shape[1]
    sel = w[:, :, _KH_TAB, _KW_TAB]                           # (Cin, Cout, 9, 4)
    sel = sel * jnp.asarray(_VALID_TAB, dtype=w.dtype)
    sel = jnp.transpose(sel, (2, 3, 1, 0))                    # (9, 4, Cout, Cin)
    return sel.reshape(9, 4 * cout, cin).astype(jnp.bfloat16)


def _upconv_layer(kernel_body, x_flat, taps_w, extras, *, hdim, wdim, cout,
                  out_dtype, transcendentals=0):
    """x_flat: (N, Cin, H*W) bf16 flattened NCHW -> (N, 4*Cout, H*W) phase-major output."""
    n, cin, hw = x_flat.shape
    pad = wdim + 1
    x_pad = jnp.pad(x_flat, ((0, 0), (0, 0), (pad, pad)))     # tiny flat-axis zero pad
    hwpad = hw + 2 * pad
    kern = functools.partial(kernel_body, hw=hw, wdim=wdim)
    cost = pl.CostEstimate(
        flops=int(2 * n * 9 * (4 * cout) * cin * hw),
        transcendentals=int(transcendentals),
        bytes_accessed=int(x_pad.size * 2 + taps_w.size * 2
                           + n * 4 * cout * hw * jnp.dtype(out_dtype).itemsize))
    extra_specs = [pl.BlockSpec((4 * cout, 1), lambda i: (0, 0)) for _ in extras]
    return pl.pallas_call(
        kern,
        out_shape=jax.ShapeDtypeStruct((n, 4 * cout, hw), out_dtype),
        grid=(n,),
        in_specs=[pl.BlockSpec((1, cin, hwpad), lambda i: (i, 0, 0)),
                  pl.BlockSpec((9, 4 * cout, cin), lambda i: (0, 0, 0))] + extra_specs,
        out_specs=pl.BlockSpec((1, 4 * cout, hw), lambda i: (i, 0, 0)),
        compiler_params=pltpu.CompilerParams(dimension_semantics=("parallel",)),
        cost_estimate=cost,
    )(x_pad, taps_w, *extras)


def _first_block(h, w1, gamma, beta):
    """(N, Cin) latent rows -> (N, C1, 16) bf16 = InstanceNorm(ReLU'd) 4x4 feature maps."""
    n, cin = h.shape
    c1 = w1.shape[1]
    nlanes = c1 * 16
    w1m = w1.reshape(cin, nlanes).astype(jnp.bfloat16)
    ch = jnp.arange(nlanes, dtype=jnp.int32) // 16
    seg = (ch[:, None] == jnp.arange(c1, dtype=jnp.int32)[None, :]).astype(jnp.float32)
    segt = jnp.transpose(seg)
    g_x = jnp.repeat(gamma.astype(jnp.float32), 16).reshape(1, nlanes)
    b_x = jnp.repeat(beta.astype(jnp.float32), 16).reshape(1, nlanes)
    out = pl.pallas_call(
        _first_block_kernel,
        out_shape=jax.ShapeDtypeStruct((n, nlanes), jnp.bfloat16),
        grid=(1,),
        in_specs=[pl.BlockSpec((n, cin), lambda i: (0, 0)),
                  pl.BlockSpec((cin, nlanes), lambda i: (0, 0)),
                  pl.BlockSpec((nlanes, c1), lambda i: (0, 0)),
                  pl.BlockSpec((c1, nlanes), lambda i: (0, 0)),
                  pl.BlockSpec((1, nlanes), lambda i: (0, 0)),
                  pl.BlockSpec((1, nlanes), lambda i: (0, 0))],
        out_specs=pl.BlockSpec((n, nlanes), lambda i: (0, 0)),
        compiler_params=pltpu.CompilerParams(dimension_semantics=("arbitrary",)),
    )(h.astype(jnp.bfloat16), w1m, seg, segt, g_x, b_x)
    return out.reshape(n, c1, 16)          # free: same bytes, NCHW-flattened per sample


# ------------------------------ JAX glue ----------------------------------

def _phase_to_nchw_flat(o, cout, hdim, wdim):
    """(N, 4*Cout, H*W) phase-major -> (N, Cout, (2H)*(2W)) flattened NCHW (one transpose)."""
    n = o.shape[0]
    o = o.reshape(n, 2, 2, cout, hdim, wdim)
    o = jnp.transpose(o, (0, 3, 4, 1, 5, 2))   # (N, Cout, H, rh, W, rw)
    return o.reshape(n, cout, 4 * hdim * wdim)


def generator_forward(params, x, labels):
    n = x.shape[0]
    emb = jnp.take(params["embed"], labels, axis=0)                    # (N, embed)
    h = jnp.concatenate([x.reshape(n, -1), emb], axis=1)               # (N, z + embed)

    # layer 1: (N, z+e, 1, 1) -> (N, fg*16, 4, 4)
    a = _first_block(h, params["w1"], params["g1"], params["b1"])      # (N, C1, 16) bf16

    # layers 2-4: ConvTranspose(k=4,s=2,p=1, no bias) + InstanceNorm(affine) + ReLU
    spatial = 4
    for idx in (2, 3, 4):
        w = params[f"w{idx}"]
        cout = w.shape[1]
        taps = _phase_tap_weights(w)
        g4 = _tile4(params[f"g{idx}"].astype(jnp.float32).reshape(cout, 1))
        b4 = _tile4(params[f"b{idx}"].astype(jnp.float32).reshape(cout, 1))
        o = _upconv_layer(_upconv_norm_relu_kernel, a, taps, (g4, b4),
                          hdim=spatial, wdim=spatial, cout=cout,
                          out_dtype=jnp.bfloat16)
        a = _phase_to_nchw_flat(o, cout, spatial, spatial)             # (N, Cout, (2s)^2) bf16
        spatial *= 2

    # layer 5: ConvTranspose(k=4,s=2,p=1, bias=True) + Tanh
    w5 = params["w5"]
    cimg = w5.shape[1]
    taps5 = _phase_tap_weights(w5)
    bias4 = _tile4(params["bias5"].astype(jnp.float32).reshape(cimg, 1))
    o = _upconv_layer(_upconv_bias_tanh_kernel, a, taps5, (bias4,),
                      hdim=spatial, wdim=spatial, cout=cimg, out_dtype=jnp.float32,
                      transcendentals=n * 4 * cimg * spatial * spatial)
    img = _phase_to_nchw_flat(o, cimg, spatial, spatial)
    return img.reshape(n, cimg, 2 * spatial, 2 * spatial)              # (N, C_img, 64, 64)


# ------------------------------- params / main ------------------------------

def init_params(key, z_dim, img_channels, features_g, num_classes, embed_size):
    ks = jax.random.split(key, 16)
    fg = features_g
    c_in = z_dim + embed_size

    def w(k, cin, cout):
        return (0.05 * jax.random.normal(k, (cin, cout, 4, 4))).astype(jnp.float32)

    params = {
        "embed": (0.1 * jax.random.normal(ks[0], (num_classes, embed_size))).astype(jnp.float32),
        "w1": w(ks[1], c_in, fg * 16),
        "w2": w(ks[2], fg * 16, fg * 8),
        "w3": w(ks[3], fg * 8, fg * 4),
        "w4": w(ks[4], fg * 4, fg * 2),
        "w5": w(ks[5], fg * 2, img_channels),
        "bias5": (0.01 * jax.random.normal(ks[6], (img_channels,))).astype(jnp.float32),
        # InstanceNorm2d(affine=True) params
        "g1": (1.0 + 0.01 * jax.random.normal(ks[7], (fg * 16,))).astype(jnp.float32),
        "b1": (0.01 * jax.random.normal(ks[8], (fg * 16,))).astype(jnp.float32),
        "g2": (1.0 + 0.01 * jax.random.normal(ks[9], (fg * 8,))).astype(jnp.float32),
        "b2": (0.01 * jax.random.normal(ks[10], (fg * 8,))).astype(jnp.float32),
        "g3": (1.0 + 0.01 * jax.random.normal(ks[11], (fg * 4,))).astype(jnp.float32),
        "b3": (0.01 * jax.random.normal(ks[12], (fg * 4,))).astype(jnp.float32),
        "g4": (1.0 + 0.01 * jax.random.normal(ks[13], (fg * 2,))).astype(jnp.float32),
        "b4": (0.01 * jax.random.normal(ks[14], (fg * 2,))).astype(jnp.float32),
    }
    return params


if __name__ == "__main__":
    # small config: z_dim=8, img_channels=3, features_g=4, num_classes=10, img_size=64, embed_size=8
    z_dim, img_channels, features_g, num_classes, embed_size = 8, 3, 4, 10, 8
    batch = 2

    key = jax.random.PRNGKey(0)
    kp, kx, kl = jax.random.split(key, 3)
    params = init_params(kp, z_dim, img_channels, features_g, num_classes, embed_size)

    x = jax.random.normal(kx, (batch, z_dim, 1, 1), dtype=jnp.float32)   # NCHW noise
    labels = jax.random.randint(kl, (batch,), 0, num_classes, dtype=jnp.int32)

    fwd = jax.jit(generator_forward)
    out = jax.block_until_ready(fwd(params, x, labels))

    assert out.shape == (batch, img_channels, 64, 64), out.shape
    assert bool(jnp.all(jnp.isfinite(out)))
    assert bool(jnp.all(jnp.abs(out) <= 1.0 + 1e-5))  # tanh range
    print("KERNEL_OK")
</pallas_src>

<mosaic_0001>
module attributes {stable_mosaic.version = 11 : i64} {
  func.func @_first_block_kernel(%arg0: i32, %arg1: memref<2x16xbf16, #tpu.memory_space<vmem>>, %arg2: memref<16x1024xbf16, #tpu.memory_space<vmem>>, %arg3: memref<1024x64xf32, #tpu.memory_space<vmem>>, %arg4: memref<64x1024xf32, #tpu.memory_space<vmem>>, %arg5: memref<1x1024xf32, #tpu.memory_space<vmem>>, %arg6: memref<1x1024xf32, #tpu.memory_space<vmem>>, %arg7: memref<2x1024xbf16, #tpu.memory_space<vmem>>) attributes {dimension_semantics = [#tpu.dimension_semantics<arbitrary>], iteration_bounds = array<i64: 1>, scalar_prefetch = 0 : i64, scratch_operands = 0 : i64, tpu.core_type = #tpu.core_type<tc>, window_params = [{pipeline_mode = #tpu.pipeline_mode<synchronous>, transform_indices = @transform_0, window_bounds = array<i64: 2, 16>}, {pipeline_mode = #tpu.pipeline_mode<synchronous>, transform_indices = @transform_1, window_bounds = array<i64: 16, 1024>}, {pipeline_mode = #tpu.pipeline_mode<synchronous>, transform_indices = @transform_2, window_bounds = array<i64: 1024, 64>}, {pipeline_mode = #tpu.pipeline_mode<synchronous>, transform_indices = @transform_3, window_bounds = array<i64: 64, 1024>}, {pipeline_mode = #tpu.pipeline_mode<synchronous>, transform_indices = @transform_4, window_bounds = array<i64: 1, 1024>}, {pipeline_mode = #tpu.pipeline_mode<synchronous>, transform_indices = @transform_5, window_bounds = array<i64: 1, 1024>}, {pipeline_mode = #tpu.pipeline_mode<synchronous>, transform_indices = @transform_6, window_bounds = array<i64: 2, 1024>}]} {
    %c0 = arith.constant 0 : index
    %c0_0 = arith.constant 0 : index
    %0 = vector.load %arg1[%c0, %c0_0] : memref<2x16xbf16, #tpu.memory_space<vmem>>, vector<2x16xbf16>
    %c0_1 = arith.constant 0 : index
    %c0_2 = arith.constant 0 : index
    %1 = vector.load %arg2[%c0_1, %c0_2] : memref<16x1024xbf16, #tpu.memory_space<vmem>>, vector<16x1024xbf16>
    %cst = arith.constant dense<0.000000e+00> : vector<2x1024xf32>
    %2 = tpu.matmul %0, %1, %cst {dimension_numbers = #tpu.dot_dimension_numbers<[1], [0], [0], [1], [0, 0, 1, 1], [], []>} : vector<2x16xbf16>, vector<16x1024xbf16>, vector<2x1024xf32> -> vector<2x1024xf32>
    %c0_3 = arith.constant 0 : index
    %c0_4 = arith.constant 0 : index
    %3 = vector.load %arg3[%c0_3, %c0_4] : memref<1024x64xf32, #tpu.memory_space<vmem>>, vector<1024x64xf32>
    %c0_5 = arith.constant 0 : index
    %c0_6 = arith.constant 0 : index
    %4 = vector.load %arg4[%c0_5, %c0_6] : memref<64x1024xf32, #tpu.memory_space<vmem>>, vector<64x1024xf32>
    %cst_7 = arith.constant dense<0.000000e+00> : vector<2x64xf32>
    %5 = tpu.matmul %2, %3, %cst_7 {dimension_numbers = #tpu.dot_dimension_numbers<[1], [0], [0], [1], [0, 0, 1, 1], [], []>} : vector<2x1024xf32>, vector<1024x64xf32>, vector<2x64xf32> -> vector<2x64xf32>
    %cst_8 = arith.constant 6.250000e-02 : f32
    %6 = vector.broadcast %cst_8 : f32 to vector<2x64xf32>
    %7 = arith.mulf %5, %6 : vector<2x64xf32>
    %cst_9 = arith.constant dense<0.000000e+00> : vector<2x1024xf32>
    %8 = tpu.matmul %7, %4, %cst_9 {dimension_numbers = #tpu.dot_dimension_numbers<[1], [0], [0], [1], [0, 0, 1, 1], [], []>} : vector<2x64xf32>, vector<64x1024xf32>, vector<2x1024xf32> -> vector<2x1024xf32>
    %9 = arith.subf %2, %8 : vector<2x1024xf32>
    %10 = arith.mulf %9, %9 : vector<2x1024xf32>
    %cst_10 = arith.constant dense<0.000000e+00> : vector<2x64xf32>
    %11 = tpu.matmul %10, %3, %cst_10 {dimension_numbers = #tpu.dot_dimension_numbers<[1], [0], [0], [1], [0, 0, 1, 1], [], []>} : vector<2x1024xf32>, vector<1024x64xf32>, vector<2x64xf32> -> vector<2x64xf32>
    %cst_11 = arith.constant 6.250000e-02 : f32
    %12 = vector.broadcast %cst_11 : f32 to vector<2x64xf32>
    %13 = arith.mulf %11, %12 : vector<2x64xf32>
    %cst_12 = arith.constant dense<0.000000e+00> : vector<2x1024xf32>
    %14 = tpu.matmul %13, %4, %cst_12 {dimension_numbers = #tpu.dot_dimension_numbers<[1], [0], [0], [1], [0, 0, 1, 1], [], []>} : vector<2x64xf32>, vector<64x1024xf32>, vector<2x1024xf32> -> vector<2x1024xf32>
    %cst_13 = arith.constant 9.99999974E-6 : f32
    %15 = vector.broadcast %cst_13 : f32 to vector<2x1024xf32>
    %16 = arith.addf %14, %15 : vector<2x1024xf32>
    %17 = math.rsqrt %16 : vector<2x1024xf32>
    %18 = arith.mulf %9, %17 : vector<2x1024xf32>
    %c0_14 = arith.constant 0 : index
    %c0_15 = arith.constant 0 : index
    %19 = vector.load %arg5[%c0_14, %c0_15] : memref<1x1024xf32, #tpu.memory_space<vmem>>, vector<1x1024xf32>
    %20 = vector.broadcast %19 : vector<1x1024xf32> to vector<2x1024xf32>
    %21 = arith.mulf %18, %20 : vector<2x1024xf32>
    %c0_16 = arith.constant 0 : index
    %c0_17 = arith.constant 0 : index
    %22 = vector.load %arg6[%c0_16, %c0_17] : memref<1x1024xf32, #tpu.memory_space<vmem>>, vector<1x1024xf32>
    %23 = vector.broadcast %22 : vector<1x1024xf32> to vector<2x1024xf32>
    %24 = arith.addf %21, %23 : vector<2x1024xf32>
    %cst_18 = arith.constant 0.000000e+00 : f32
    %25 = vector.broadcast %cst_18 : f32 to vector<2x1024xf32>
    %26 = arith.maximumf %24, %25 : vector<2x1024xf32>
    %27 = arith.truncf %26 : vector<2x1024xf32> to vector<2x1024xbf16>
    %c0_19 = arith.constant 0 : index
    %c0_20 = arith.constant 0 : index
    %28 = vector.load %arg7[%c0_19, %c0_20] : memref<2x1024xbf16, #tpu.memory_space<vmem>>, vector<2x1024xbf16>
    tpu.vector_store %arg7[%c0_19, %c0_20], %27 {strides = array<i32>} : memref<2x1024xbf16, #tpu.memory_space<vmem>>, vector<2x1024xbf16>,
    return
  }
  func.func @transform_0(%arg0: i32) -> (i32, i32) {
    %c0_i32 = arith.constant 0 : i32
    %c0_i32_0 = arith.constant 0 : i32
    %c0_i32_1 = arith.constant 0 : i32
    return %c0_i32, %c0_i32_0 : i32, i32
  }
  func.func @transform_1(%arg0: i32) -> (i32, i32) {
    %c0_i32 = arith.constant 0 : i32
    %c0_i32_0 = arith.constant 0 : i32
    %c0_i32_1 = arith.constant 0 : i32
    return %c0_i32, %c0_i32_0 : i32, i32
  }
  func.func @transform_2(%arg0: i32) -> (i32, i32) {
    %c0_i32 = arith.constant 0 : i32
    %c0_i32_0 = arith.constant 0 : i32
    %c0_i32_1 = arith.constant 0 : i32
    return %c0_i32, %c0_i32_0 : i32, i32
  }
  func.func @transform_3(%arg0: i32) -> (i32, i32) {
    %c0_i32 = arith.constant 0 : i32
    %c0_i32_0 = arith.constant 0 : i32
    %c0_i32_1 = arith.constant 0 : i32
    return %c0_i32, %c0_i32_0 : i32, i32
  }
  func.func @transform_4(%arg0: i32) -> (i32, i32) {
    %c0_i32 = arith.constant 0 : i32
    %c0_i32_0 = arith.constant 0 : i32
    %c0_i32_1 = arith.constant 0 : i32
    return %c0_i32, %c0_i32_0 : i32, i32
  }
  func.func @transform_5(%arg0: i32) -> (i32, i32) {
    %c0_i32 = arith.constant 0 : i32
    %c0_i32_0 = arith.constant 0 : i32
    %c0_i32_1 = arith.constant 0 : i32
    return %c0_i32, %c0_i32_0 : i32, i32
  }
  func.func @transform_6(%arg0: i32) -> (i32, i32) {
    %c0_i32 = arith.constant 0 : i32
    %c0_i32_0 = arith.constant 0 : i32
    %c0_i32_1 = arith.constant 0 : i32
    return %c0_i32, %c0_i32_0 : i32, i32
  }
}

module attributes {stable_mosaic.version = 11 : i64} {
  func.func @_upconv_norm_relu_kernel(%arg0: i32, %arg1: memref<1x64x26xbf16, #tpu.memory_space<vmem>>, %arg2: memref<9x128x64xbf16, #tpu.memory_space<vmem>>, %arg3: memref<128x1xf32, #tpu.memory_space<vmem>>, %arg4: memref<128x1xf32, #tpu.memory_space<vmem>>, %arg5: memref<1x128x16xbf16, #tpu.memory_space<vmem>>) attributes {dimension_semantics = [#tpu.dimension_semantics<parallel>], iteration_bounds = array<i64: 2>, scalar_prefetch = 0 : i64, scratch_operands = 0 : i64, tpu.core_type = #tpu.core_type<tc>, window_params = [{transform_indices = @transform_0, window_bounds = array<i64: 1, 64, 26>}, {pipeline_mode = #tpu.pipeline_mode<synchronous>, transform_indices = @transform_1, window_bounds = array<i64: 9, 128, 64>}, {pipeline_mode = #tpu.pipeline_mode<synchronous>, transform_indices = @transform_2, window_bounds = array<i64: 128, 1>}, {pipeline_mode = #tpu.pipeline_mode<synchronous>, transform_indices = @transform_3, window_bounds = array<i64: 128, 1>}, {transform_indices = @transform_4, window_bounds = array<i64: 1, 128, 16>}]} {
    %0 = tpu.iota {dimensions = array<i32: 1>} : vector<64x16xi32>
    %c4_i32 = arith.constant 4 : i32
    %c0_i32 = arith.constant 0 : i32
    %1 = arith.cmpi eq, %c4_i32, %c0_i32 : i32
    %c1_i32 = arith.constant 1 : i32
    %2 = arith.select %1, %c1_i32, %c4_i32 : i32
    %3 = vector.broadcast %2 : i32 to vector<64x16xi32>
    %4 = arith.remsi %0, %3 : vector<64x16xi32>
    %c0_i32_0 = arith.constant 0 : i32
    %5 = vector.broadcast %c0_i32_0 : i32 to vector<64x16xi32>
    %6 = arith.cmpi ne, %4, %5 : vector<64x16xi32>
    %c0_i32_1 = arith.constant 0 : i32
    %7 = vector.broadcast %c0_i32_1 : i32 to vector<64x16xi32>
    %8 = arith.cmpi slt, %4, %7 : vector<64x16xi32>
    %c0_i32_2 = arith.constant 0 : i32
    %9 = arith.cmpi slt, %2, %c0_i32_2 : i32
    %10 = vector.broadcast %9 : i1 to vector<64x16xi1>
    %11 = vector.broadcast %10 : vector<64x16xi1> to vector<64x16xi1>
    %12 = arith.xori %8, %11 : vector<64x16xi1>
    %13 = arith.andi %12, %6 : vector<64x16xi1>
    %14 = vector.broadcast %2 : i32 to vector<64x16xi32>
    %15 = arith.addi %4, %14 : vector<64x16xi32>
    %16 = arith.select %13, %15, %4 : vector<64x16xi1>, vector<64x16xi32>
    %c0_i32_3 = arith.constant 0 : i32
    %17 = vector.broadcast %c0_i32_3 : i32 to vector<64x16xi32>
    %18 = arith.cmpi sgt, %16, %17 : vector<64x16xi32>
    %c3_i32 = arith.constant 3 : i32
    %19 = vector.broadcast %c3_i32 : i32 to vector<64x16xi32>
    %20 = arith.cmpi slt, %16, %19 : vector<64x16xi32>
    %cst = arith.constant 0.000000e+00 : f32
    %21 = vector.broadcast %cst : f32 to vector<128x16xf32>
    %c0 = arith.constant 0 : index
    %c0_4 = arith.constant 0 : index
    %c0_5 = arith.constant 0 : index
    %22 = vector.load %arg1[%c0, %c0_4, %c0_5] : memref<1x64x26xbf16, #tpu.memory_space<vmem>>, vector<1x64x16xbf16>
    %23 = vector.shape_cast %22 : vector<1x64x16xbf16> to vector<64x16xbf16>
    %cst_6 = arith.constant 0.000000e+00 : bf16
    %24 = vector.broadcast %cst_6 : bf16 to vector<64x16xbf16>
    %25 = arith.select %18, %23, %24 : vector<64x16xi1>, vector<64x16xbf16>
    %c0_7 = arith.constant 0 : index
    %c0_8 = arith.constant 0 : index
    %c0_9 = arith.constant 0 : index
    %26 = vector.load %arg2[%c0_7, %c0_8, %c0_9] : memref<9x128x64xbf16, #tpu.memory_space<vmem>>, vector<1x128x64xbf16>
    %27 = vector.shape_cast %26 : vector<1x128x64xbf16> to vector<128x64xbf16>
    %cst_10 = arith.constant dense<0.000000e+00> : vector<128x16xf32>
    %28 = tpu.matmul %27, %25, %cst_10 {dimension_numbers = #tpu.dot_dimension_numbers<[1], [0], [0], [1], [0, 0, 1, 1], [], []>} : vector<128x64xbf16>, vector<64x16xbf16>, vector<128x16xf32> -> vector<128x16xf32>
    %29 = arith.addf %21, %28 : vector<128x16xf32>
    %c0_11 = arith.constant 0 : index
    %c0_12 = arith.constant 0 : index
    %c1 = arith.constant 1 : index
    %30 = vector.load %arg1[%c0_11, %c0_12, %c1] : memref<1x64x26xbf16, #tpu.memory_space<vmem>>, vector<1x64x16xbf16>
    %31 = vector.shape_cast %30 : vector<1x64x16xbf16> to vector<64x16xbf16>
    %c1_13 = arith.constant 1 : index
    %c0_14 = arith.constant 0 : index
    %c0_15 = arith.constant 0 : index
    %32 = vector.load %arg2[%c1_13, %c0_14, %c0_15] : memref<9x128x64xbf16, #tpu.memory_space<vmem>>, vector<1x128x64xbf16>
    %33 = vector.shape_cast %32 : vector<1x128x64xbf16> to vector<128x64xbf16>
    %cst_16 = arith.constant dense<0.000000e+00> : vector<128x16xf32>
    %34 = tpu.matmul %33, %31, %cst_16 {dimension_numbers = #tpu.dot_dimension_numbers<[1], [0], [0], [1], [0, 0, 1, 1], [], []>} : vector<128x64xbf16>, vector<64x16xbf16>, vector<128x16xf32> -> vector<128x16xf32>
    %35 = arith.addf %29, %34 : vector<128x16xf32>
    %c0_17 = arith.constant 0 : index
    %c0_18 = arith.constant 0 : index
    %c2 = arith.constant 2 : index
    %36 = vector.load %arg1[%c0_17, %c0_18, %c2] : memref<1x64x26xbf16, #tpu.memory_space<vmem>>, vector<1x64x16xbf16>
    %37 = vector.shape_cast %36 : vector<1x64x16xbf16> to vector<64x16xbf16>
    %cst_19 = arith.constant 0.000000e+00 : bf16
    %38 = vector.broadcast %cst_19 : bf16 to vector<64x16xbf16>
    %39 = arith.select %20, %37, %38 : vector<64x16xi1>, vector<64x16xbf16>
    %c2_20 = arith.constant 2 : index
    %c0_21 = arith.constant 0 : index
    %c0_22 = arith.constant 0 : index
    %40 = vector.load %arg2[%c2_20, %c0_21, %c0_22] : memref<9x128x64xbf16, #tpu.memory_space<vmem>>, vector<1x128x64xbf16>
    %41 = vector.shape_cast %40 : vector<1x128x64xbf16> to vector<128x64xbf16>
    %cst_23 = arith.constant dense<0.000000e+00> : vector<128x16xf32>
    %42 = tpu.matmul %41, %39, %cst_23 {dimension_numbers = #tpu.dot_dimension_numbers<[1], [0], [0], [1], [0, 0, 1, 1], [], []>} : vector<128x64xbf16>, vector<64x16xbf16>, vector<128x16xf32> -> vector<128x16xf32>
    %43 = arith.addf %35, %42 : vector<128x16xf32>
    %c0_24 = arith.constant 0 : index
    %c0_25 = arith.constant 0 : index
    %c4 = arith.constant 4 : index
    %44 = vector.load %arg1[%c0_24, %c0_25, %c4] : memref<1x64x26xbf16, #tpu.memory_space<vmem>>, vector<1x64x16xbf16>
    %45 = vector.shape_cast %44 : vector<1x64x16xbf16> to vector<64x16xbf16>
    %cst_26 = arith.constant 0.000000e+00 : bf16
    %46 = vector.broadcast %cst_26 : bf16 to vector<64x16xbf16>
    %47 = arith.select %18, %45, %46 : vector<64x16xi1>, vector<64x16xbf16>
    %c3 = arith.constant 3 : index
    %c0_27 = arith.constant 0 : index
    %c0_28 = arith.constant 0 : index
    %48 = vector.load %arg2[%c3, %c0_27, %c0_28] : memref<9x128x64xbf16, #tpu.memory_space<vmem>>, vector<1x128x64xbf16>
    %49 = vector.shape_cast %48 : vector<1x128x64xbf16> to vector<128x64xbf16>
    %cst_29 = arith.constant dense<0.000000e+00> : vector<128x16xf32>
    %50 = tpu.matmul %49, %47, %cst_29 {dimension_numbers = #tpu.dot_dimension_numbers<[1], [0], [0], [1], [0, 0, 1, 1], [], []>} : vector<128x64xbf16>, vector<64x16xbf16>, vector<128x16xf32> -> vector<128x16xf32>
    %51 = arith.addf %43, %50 : vector<128x16xf32>
    %c0_30 = arith.constant 0 : index
    %c0_31 = arith.constant 0 : index
    %c5 = arith.constant 5 : index
    %52 = vector.load %arg1[%c0_30, %c0_31, %c5] : memref<1x64x26xbf16, #tpu.memory_space<vmem>>, vector<1x64x16xbf16>
    %53 = vector.shape_cast %52 : vector<1x64x16xbf16> to vector<64x16xbf16>
    %c4_32 = arith.constant 4 : index
    %c0_33 = arith.constant 0 : index
    %c0_34 = arith.constant 0 : index
    %54 = vector.load %arg2[%c4_32, %c0_33, %c0_34] : memref<9x128x64xbf16, #tpu.memory_space<vmem>>, vector<1x128x64xbf16>
    %55 = vector.shape_cast %54 : vector<1x128x64xbf16> to vector<128x64xbf16>
    %cst_35 = arith.constant dense<0.000000e+00> : vector<128x16xf32>
    %56 = tpu.matmul %55, %53, %cst_35 {dimension_numbers = #tpu.dot_dimension_numbers<[1], [0], [0], [1], [0, 0, 1, 1], [], []>} : vector<128x64xbf16>, vector<64x16xbf16>, vector<128x16xf32> -> vector<128x16xf32>
    %57 = arith.addf %51, %56 : vector<128x16xf32>
    %c0_36 = arith.constant 0 : index
    %c0_37 = arith.constant 0 : index
    %c6 = arith.constant 6 : index
    %58 = vector.load %arg1[%c0_36, %c0_37, %c6] : memref<1x64x26xbf16, #tpu.memory_space<vmem>>, vector<1x64x16xbf16>
    %59 = vector.shape_cast %58 : vector<1x64x16xbf16> to vector<64x16xbf16>
    %cst_38 = arith.constant 0.000000e+00 : bf16
    %60 = vector.broadcast %cst_38 : bf16 to vector<64x16xbf16>
    %61 = arith.select %20, %59, %60 : vector<64x16xi1>, vector<64x16xbf16>
    %c5_39 = arith.constant 5 : index
    %c0_40 = arith.constant 0 : index
    %c0_41 = arith.constant 0 : index
    %62 = vector.load %arg2[%c5_39, %c0_40, %c0_41] : memref<9x128x64xbf16, #tpu.memory_space<vmem>>, vector<1x128x64xbf16>
    %63 = vector.shape_cast %62 : vector<1x128x64xbf16> to vector<128x64xbf16>
    %cst_42 = arith.constant dense<0.000000e+00> : vector<128x16xf32>
    %64 = tpu.matmul %63, %61, %cst_42 {dimension_numbers = #tpu.dot_dimension_numbers<[1], [0], [0], [1], [0, 0, 1, 1], [], []>} : vector<128x64xbf16>, vector<64x16xbf16>, vector<128x16xf32> -> vector<128x16xf32>
    %65 = arith.addf %57, %64 : vector<128x16xf32>
    %c0_43 = arith.constant 0 : index
    %c0_44 = arith.constant 0 : index
    %c8 = arith.constant 8 : index
    %66 = vector.load %arg1[%c0_43, %c0_44, %c8] : memref<1x64x26xbf16, #tpu.memory_space<vmem>>, vector<1x64x16xbf16>
    %67 = vector.shape_cast %66 : vector<1x64x16xbf16> to vector<64x16xbf16>
    %cst_45 = arith.constant 0.000000e+00 : bf16
    %68 = vector.broadcast %cst_45 : bf16 to vector<64x16xbf16>
    %69 = arith.select %18, %67, %68 : vector<64x16xi1>, vector<64x16xbf16>
    %c6_46 = arith.constant 6 : index
    %c0_47 = arith.constant 0 : index
    %c0_48 = arith.constant 0 : index
    %70 = vector.load %arg2[%c6_46, %c0_47, %c0_48] : memref<9x128x64xbf16, #tpu.memory_space<vmem>>, vector<1x128x64xbf16>
    %71 = vector.shape_cast %70 : vector<1x128x64xbf16> to vector<128x64xbf16>
    %cst_49 = arith.constant dense<0.000000e+00> : vector<128x16xf32>
    %72 = tpu.matmul %71, %69, %cst_49 {dimension_numbers = #tpu.dot_dimension_numbers<[1], [0], [0], [1], [0, 0, 1, 1], [], []>} : vector<128x64xbf16>, vector<64x16xbf16>, vector<128x16xf32> -> vector<128x16xf32>
    %73 = arith.addf %65, %72 : vector<128x16xf32>
    %c0_50 = arith.constant 0 : index
    %c0_51 = arith.constant 0 : index
    %c9 = arith.constant 9 : index
    %74 = vector.load %arg1[%c0_50, %c0_51, %c9] : memref<1x64x26xbf16, #tpu.memory_space<vmem>>, vector<1x64x16xbf16>
    %75 = vector.shape_cast %74 : vector<1x64x16xbf16> to vector<64x16xbf16>
    %c7 = arith.constant 7 : index
    %c0_52 = arith.constant 0 : index
    %c0_53 = arith.constant 0 : index
    %76 = vector.load %arg2[%c7, %c0_52, %c0_53] : memref<9x128x64xbf16, #tpu.memory_space<vmem>>, vector<1x128x64xbf16>
    %77 = vector.shape_cast %76 : vector<1x128x64xbf16> to vector<128x64xbf16>
    %cst_54 = arith.constant dense<0.000000e+00> : vector<128x16xf32>
    %78 = tpu.matmul %77, %75, %cst_54 {dimension_numbers = #tpu.dot_dimension_numbers<[1], [0], [0], [1], [0, 0, 1, 1], [], []>} : vector<128x64xbf16>, vector<64x16xbf16>, vector<128x16xf32> -> vector<128x16xf32>
    %79 = arith.addf %73, %78 : vector<128x16xf32>
    %c0_55 = arith.constant 0 : index
    %c0_56 = arith.constant 0 : index
    %c10 = arith.constant 10 : index
    %80 = vector.load %arg1[%c0_55, %c0_56, %c10] : memref<1x64x26xbf16, #tpu.memory_space<vmem>>, vector<1x64x16xbf16>
    %81 = vector.shape_cast %80 : vector<1x64x16xbf16> to vector<64x16xbf16>
    %cst_57 = arith.constant 0.000000e+00 : bf16
    %82 = vector.broadcast %cst_57 : bf16 to vector<64x16xbf16>
    %83 = arith.select %20, %81, %82 : vector<64x16xi1>, vector<64x16xbf16>
    %c8_58 = arith.constant 8 : index
    %c0_59 = arith.constant 0 : index
    %c0_60 = arith.constant 0 : index
    %84 = vector.load %arg2[%c8_58, %c0_59, %c0_60] : memref<9x128x64xbf16, #tpu.memory_space<vmem>>, vector<1x128x64xbf16>
    %85 = vector.shape_cast %84 : vector<1x128x64xbf16> to vector<128x64xbf16>
    %cst_61 = arith.constant dense<0.000000e+00> : vector<128x16xf32>
    %86 = tpu.matmul %85, %83, %cst_61 {dimension_numbers = #tpu.dot_dimension_numbers<[1], [0], [0], [1], [0, 0, 1, 1], [], []>} : vector<128x64xbf16>, vector<64x16xbf16>, vector<128x16xf32> -> vector<128x16xf32>
    %87 = arith.addf %79, %86 : vector<128x16xf32>
    %cst_62 = arith.constant dense<0.000000e+00> : vector<128xf32>
    %88 = vector.multi_reduction <add>, %87, %cst_62 [1] : vector<128x16xf32> to vector<128xf32>
    %89 = vector.shape_cast %88 : vector<128xf32> to vector<128x1xf32>
    %90 = vector.extract_strided_slice %89 {offsets = [0, 0], sizes = [32, 1], strides = [1, 1]} : vector<128x1xf32> to vector<32x1xf32>
    %91 = vector.extract_strided_slice %89 {offsets = [32, 0], sizes = [32, 1], strides = [1, 1]} : vector<128x1xf32> to vector<32x1xf32>
    %92 = arith.addf %90, %91 : vector<32x1xf32>
    %93 = vector.extract_strided_slice %89 {offsets = [64, 0], sizes = [32, 1], strides = [1, 1]} : vector<128x1xf32> to vector<32x1xf32>
    %94 = arith.addf %92, %93 : vector<32x1xf32>
    %95 = vector.extract_strided_slice %89 {offsets = [96, 0], sizes = [32, 1], strides = [1, 1]} : vector<128x1xf32> to vector<32x1xf32>
    %96 = arith.addf %94, %95 : vector<32x1xf32>
    %cst_63 = arith.constant 1.562500e-02 : f32
    %97 = vector.broadcast %cst_63 : f32 to vector<32x1xf32>
    %98 = arith.mulf %96, %97 : vector<32x1xf32>
    %99 = tpu.concatenate %98, %98, %98, %98 in 0 : vector<32x1xf32>, vector<32x1xf32>, vector<32x1xf32>, vector<32x1xf32> -> vector<128x1xf32>
    %100 = vector.broadcast %99 : vector<128x1xf32> to vector<128x16xf32>
    %101 = arith.subf %87, %100 : vector<128x16xf32>
    %102 = arith.mulf %101, %101 : vector<128x16xf32>
    %cst_64 = arith.constant dense<0.000000e+00> : vector<128xf32>
    %103 = vector.multi_reduction <add>, %102, %cst_64 [1] : vector<128x16xf32> to vector<128xf32>
    %104 = vector.shape_cast %103 : vector<128xf32> to vector<128x1xf32>
    %105 = vector.extract_strided_slice %104 {offsets = [0, 0], sizes = [32, 1], strides = [1, 1]} : vector<128x1xf32> to vector<32x1xf32>
    %106 = vector.extract_strided_slice %104 {offsets = [32, 0], sizes = [32, 1], strides = [1, 1]} : vector<128x1xf32> to vector<32x1xf32>
    %107 = arith.addf %105, %106 : vector<32x1xf32>
    %108 = vector.extract_strided_slice %104 {offsets = [64, 0], sizes = [32, 1], strides = [1, 1]} : vector<128x1xf32> to vector<32x1xf32>
    %109 = arith.addf %107, %108 : vector<32x1xf32>
    %110 = vector.extract_strided_slice %104 {offsets = [96, 0], sizes = [32, 1], strides = [1, 1]} : vector<128x1xf32> to vector<32x1xf32>
    %111 = arith.addf %109, %110 : vector<32x1xf32>
    %cst_65 = arith.constant 1.562500e-02 : f32
    %112 = vector.broadcast %cst_65 : f32 to vector<32x1xf32>
    %113 = arith.mulf %111, %112 : vector<32x1xf32>
    %c0_66 = arith.constant 0 : index
    %c0_67 = arith.constant 0 : index
    %114 = vector.load %arg3[%c0_66, %c0_67] : memref<128x1xf32, #tpu.memory_space<vmem>>, vector<128x1xf32>
    %115 = tpu.concatenate %113, %113, %113, %113 in 0 : vector<32x1xf32>, vector<32x1xf32>, vector<32x1xf32>, vector<32x1xf32> -> vector<128x1xf32>
    %cst_68 = arith.constant 9.99999974E-6 : f32
    %116 = vector.broadcast %cst_68 : f32 to vector<128x1xf32>
    %117 = arith.addf %115, %116 : vector<128x1xf32>
    %118 = math.rsqrt %117 : vector<128x1xf32>
    %119 = arith.mulf %114, %118 : vector<128x1xf32>
    %120 = vector.broadcast %119 : vector<128x1xf32> to vector<128x16xf32>
    %121 = arith.mulf %101, %120 : vector<128x16xf32>
    %c0_69 = arith.constant 0 : index
    %c0_70 = arith.constant 0 : index
    %122 = vector.load %arg4[%c0_69, %c0_70] : memref<128x1xf32, #tpu.memory_space<vmem>>, vector<128x1xf32>
    %123 = vector.broadcast %122 : vector<128x1xf32> to vector<128x16xf32>
    %124 = arith.addf %121, %123 : vector<128x16xf32>
    %cst_71 = arith.constant 0.000000e+00 : f32
    %125 = vector.broadcast %cst_71 : f32 to vector<128x16xf32>
    %126 = arith.maximumf %124, %125 : vector<128x16xf32>
    %127 = arith.truncf %126 : vector<128x16xf32> to vector<128x16xbf16>
    %c0_72 = arith.constant 0 : index
    %c0_73 = arith.constant 0 : index
    %c0_74 = arith.constant 0 : index
    %128 = vector.load %arg5[%c0_72, %c0_73, %c0_74] : memref<1x128x16xbf16, #tpu.memory_space<vmem>>, vector<1x128x16xbf16>
    %129 = vector.shape_cast %128 : vector<1x128x16xbf16> to vector<128x16xbf16>
    %130 = vector.shape_cast %127 : vector<128x16xbf16> to vector<1x128x16xbf16>
    tpu.vector_store %arg5[%c0_72, %c0_73, %c0_74], %130 {strides = array<i32>} : memref<1x128x16xbf16, #tpu.memory_space<vmem>>, vector<1x128x16xbf16>,
    return
  }
  func.func @transform_0(%arg0: i32) -> (i32, i32, i32) {
    %c0_i32 = arith.constant 0 : i32
    %c0_i32_0 = arith.constant 0 : i32
    %c0_i32_1 = arith.constant 0 : i32
    return %arg0, %c0_i32, %c0_i32_0 : i32, i32, i32
  }
  func.func @transform_1(%arg0: i32) -> (i32, i32, i32) {
    %c0_i32 = arith.constant 0 : i32
    %c0_i32_0 = arith.constant 0 : i32
    %c0_i32_1 = arith.constant 0 : i32
    %c0_i32_2 = arith.constant 0 : i32
    return %c0_i32, %c0_i32_0, %c0_i32_1 : i32, i32, i32
  }
  func.func @transform_2(%arg0: i32) -> (i32, i32) {
    %c0_i32 = arith.constant 0 : i32
    %c0_i32_0 = arith.constant 0 : i32
    %c0_i32_1 = arith.constant 0 : i32
    return %c0_i32, %c0_i32_0 : i32, i32
  }
  func.func @transform_3(%arg0: i32) -> (i32, i32) {
    %c0_i32 = arith.constant 0 : i32
    %c0_i32_0 = arith.constant 0 : i32
    %c0_i32_1 = arith.constant 0 : i32
    return %c0_i32, %c0_i32_0 : i32, i32
  }
  func.func @transform_4(%arg0: i32) -> (i32, i32, i32) {
    %c0_i32 = arith.constant 0 : i32
    %c0_i32_0 = arith.constant 0 : i32
    %c0_i32_1 = arith.constant 0 : i32
    return %arg0, %c0_i32, %c0_i32_0 : i32, i32, i32
  }
}

module attributes {stable_mosaic.version = 11 : i64} {
  func.func @_upconv_norm_relu_kernel(%arg0: i32, %arg1: memref<1x32x82xbf16, #tpu.memory_space<vmem>>, %arg2: memref<9x64x32xbf16, #tpu.memory_space<vmem>>, %arg3: memref<64x1xf32, #tpu.memory_space<vmem>>, %arg4: memref<64x1xf32, #tpu.memory_space<vmem>>, %arg5: memref<1x64x64xbf16, #tpu.memory_space<vmem>>) attributes {dimension_semantics = [#tpu.dimension_semantics<parallel>], iteration_bounds = array<i64: 2>, scalar_prefetch = 0 : i64, scratch_operands = 0 : i64, tpu.core_type = #tpu.core_type<tc>, window_params = [{transform_indices = @transform_0, window_bounds = array<i64: 1, 32, 82>}, {pipeline_mode = #tpu.pipeline_mode<synchronous>, transform_indices = @transform_1, window_bounds = array<i64: 9, 64, 32>}, {pipeline_mode = #tpu.pipeline_mode<synchronous>, transform_indices = @transform_2, window_bounds = array<i64: 64, 1>}, {pipeline_mode = #tpu.pipeline_mode<synchronous>, transform_indices = @transform_3, window_bounds = array<i64: 64, 1>}, {transform_indices = @transform_4, window_bounds = array<i64: 1, 64, 64>}]} {
    %0 = tpu.iota {dimensions = array<i32: 1>} : vector<32x64xi32>
    %c8_i32 = arith.constant 8 : i32
    %c0_i32 = arith.constant 0 : i32
    %1 = arith.cmpi eq, %c8_i32, %c0_i32 : i32
    %c1_i32 = arith.constant 1 : i32
    %2 = arith.select %1, %c1_i32, %c8_i32 : i32
    %3 = vector.broadcast %2 : i32 to vector<32x64xi32>
    %4 = arith.remsi %0, %3 : vector<32x64xi32>
    %c0_i32_0 = arith.constant 0 : i32
    %5 = vector.broadcast %c0_i32_0 : i32 to vector<32x64xi32>
    %6 = arith.cmpi ne, %4, %5 : vector<32x64xi32>
    %c0_i32_1 = arith.constant 0 : i32
    %7 = vector.broadcast %c0_i32_1 : i32 to vector<32x64xi32>
    %8 = arith.cmpi slt, %4, %7 : vector<32x64xi32>
    %c0_i32_2 = arith.constant 0 : i32
    %9 = arith.cmpi slt, %2, %c0_i32_2 : i32
    %10 = vector.broadcast %9 : i1 to vector<32x64xi1>
    %11 = vector.broadcast %10 : vector<32x64xi1> to vector<32x64xi1>
    %12 = arith.xori %8, %11 : vector<32x64xi1>
    %13 = arith.andi %12, %6 : vector<32x64xi1>
    %14 = vector.broadcast %2 : i32 to vector<32x64xi32>
    %15 = arith.addi %4, %14 : vector<32x64xi32>
    %16 = arith.select %13, %15, %4 : vector<32x64xi1>, vector<32x64xi32>
    %c0_i32_3 = arith.constant 0 : i32
    %17 = vector.broadcast %c0_i32_3 : i32 to vector<32x64xi32>
    %18 = arith.cmpi sgt, %16, %17 : vector<32x64xi32>
    %c7_i32 = arith.constant 7 : i32
    %19 = vector.broadcast %c7_i32 : i32 to vector<32x64xi32>
    %20 = arith.cmpi slt, %16, %19 : vector<32x64xi32>
    %cst = arith.constant 0.000000e+00 : f32
    %21 = vector.broadcast %cst : f32 to vector<64x64xf32>
    %c0 = arith.constant 0 : index
    %c0_4 = arith.constant 0 : index
    %c0_5 = arith.constant 0 : index
    %22 = vector.load %arg1[%c0, %c0_4, %c0_5] : memref<1x32x82xbf16, #tpu.memory_space<vmem>>, vector<1x32x64xbf16>
    %23 = vector.shape_cast %22 : vector<1x32x64xbf16> to vector<32x64xbf16>
    %cst_6 = arith.constant 0.000000e+00 : bf16
    %24 = vector.broadcast %cst_6 : bf16 to vector<32x64xbf16>
    %25 = arith.select %18, %23, %24 : vector<32x64xi1>, vector<32x64xbf16>
    %c0_7 = arith.constant 0 : index
    %c0_8 = arith.constant 0 : index
    %c0_9 = arith.constant 0 : index
    %26 = vector.load %arg2[%c0_7, %c0_8, %c0_9] : memref<9x64x32xbf16, #tpu.memory_space<vmem>>, vector<1x64x32xbf16>
    %27 = vector.shape_cast %26 : vector<1x64x32xbf16> to vector<64x32xbf16>
    %cst_10 = arith.constant dense<0.000000e+00> : vector<64x64xf32>
    %28 = tpu.matmul %27, %25, %cst_10 {dimension_numbers = #tpu.dot_dimension_numbers<[1], [0], [0], [1], [0, 0, 1, 1], [], []>} : vector<64x32xbf16>, vector<32x64xbf16>, vector<64x64xf32> -> vector<64x64xf32>
    %29 = arith.addf %21, %28 : vector<64x64xf32>
    %c0_11 = arith.constant 0 : index
    %c0_12 = arith.constant 0 : index
    %c1 = arith.constant 1 : index
    %30 = vector.load %arg1[%c0_11, %c0_12, %c1] : memref<1x32x82xbf16, #tpu.memory_space<vmem>>, vector<1x32x64xbf16>
    %31 = vector.shape_cast %30 : vector<1x32x64xbf16> to vector<32x64xbf16>
    %c1_13 = arith.constant 1 : index
    %c0_14 = arith.constant 0 : index
    %c0_15 = arith.constant 0 : index
    %32 = vector.load %arg2[%c1_13, %c0_14, %c0_15] : memref<9x64x32xbf16, #tpu.memory_space<vmem>>, vector<1x64x32xbf16>
    %33 = vector.shape_cast %32 : vector<1x64x32xbf16> to vector<64x32xbf16>
    %cst_16 = arith.constant dense<0.000000e+00> : vector<64x64xf32>
    %34 = tpu.matmul %33, %31, %cst_16 {dimension_numbers = #tpu.dot_dimension_numbers<[1], [0], [0], [1], [0, 0, 1, 1], [], []>} : vector<64x32xbf16>, vector<32x64xbf16>, vector<64x64xf32> -> vector<64x64xf32>
    %35 = arith.addf %29, %34 : vector<64x64xf32>
    %c0_17 = arith.constant 0 : index
    %c0_18 = arith.constant 0 : index
    %c2 = arith.constant 2 : index
    %36 = vector.load %arg1[%c0_17, %c0_18, %c2] : memref<1x32x82xbf16, #tpu.memory_space<vmem>>, vector<1x32x64xbf16>
    %37 = vector.shape_cast %36 : vector<1x32x64xbf16> to vector<32x64xbf16>
    %cst_19 = arith.constant 0.000000e+00 : bf16
    %38 = vector.broadcast %cst_19 : bf16 to vector<32x64xbf16>
    %39 = arith.select %20, %37, %38 : vector<32x64xi1>, vector<32x64xbf16>
    %c2_20 = arith.constant 2 : index
    %c0_21 = arith.constant 0 : index
    %c0_22 = arith.constant 0 : index
    %40 = vector.load %arg2[%c2_20, %c0_21, %c0_22] : memref<9x64x32xbf16, #tpu.memory_space<vmem>>, vector<1x64x32xbf16>
    %41 = vector.shape_cast %40 : vector<1x64x32xbf16> to vector<64x32xbf16>
    %cst_23 = arith.constant dense<0.000000e+00> : vector<64x64xf32>
    %42 = tpu.matmul %41, %39, %cst_23 {dimension_numbers = #tpu.dot_dimension_numbers<[1], [0], [0], [1], [0, 0, 1, 1], [], []>} : vector<64x32xbf16>, vector<32x64xbf16>, vector<64x64xf32> -> vector<64x64xf32>
    %43 = arith.addf %35, %42 : vector<64x64xf32>
    %c0_24 = arith.constant 0 : index
    %c0_25 = arith.constant 0 : index
    %c8 = arith.constant 8 : index
    %44 = vector.load %arg1[%c0_24, %c0_25, %c8] : memref<1x32x82xbf16, #tpu.memory_space<vmem>>, vector<1x32x64xbf16>
    %45 = vector.shape_cast %44 : vector<1x32x64xbf16> to vector<32x64xbf16>
    %cst_26 = arith.constant 0.000000e+00 : bf16
    %46 = vector.broadcast %cst_26 : bf16 to vector<32x64xbf16>
    %47 = arith.select %18, %45, %46 : vector<32x64xi1>, vector<32x64xbf16>
    %c3 = arith.constant 3 : index
    %c0_27 = arith.constant 0 : index
    %c0_28 = arith.constant 0 : index
    %48 = vector.load %arg2[%c3, %c0_27, %c0_28] : memref<9x64x32xbf16, #tpu.memory_space<vmem>>, vector<1x64x32xbf16>
    %49 = vector.shape_cast %48 : vector<1x64x32xbf16> to vector<64x32xbf16>
    %cst_29 = arith.constant dense<0.000000e+00> : vector<64x64xf32>
    %50 = tpu.matmul %49, %47, %cst_29 {dimension_numbers = #tpu.dot_dimension_numbers<[1], [0], [0], [1], [0, 0, 1, 1], [], []>} : vector<64x32xbf16>, vector<32x64xbf16>, vector<64x64xf32> -> vector<64x64xf32>
    %51 = arith.addf %43, %50 : vector<64x64xf32>
    %c0_30 = arith.constant 0 : index
    %c0_31 = arith.constant 0 : index
    %c9 = arith.constant 9 : index
    %52 = vector.load %arg1[%c0_30, %c0_31, %c9] : memref<1x32x82xbf16, #tpu.memory_space<vmem>>, vector<1x32x64xbf16>
    %53 = vector.shape_cast %52 : vector<1x32x64xbf16> to vector<32x64xbf16>
    %c4 = arith.constant 4 : index
    %c0_32 = arith.constant 0 : index
    %c0_33 = arith.constant 0 : index
    %54 = vector.load %arg2[%c4, %c0_32, %c0_33] : memref<9x64x32xbf16, #tpu.memory_space<vmem>>, vector<1x64x32xbf16>
    %55 = vector.shape_cast %54 : vector<1x64x32xbf16> to vector<64x32xbf16>
    %cst_34 = arith.constant dense<0.000000e+00> : vector<64x64xf32>
    %56 = tpu.matmul %55, %53, %cst_34 {dimension_numbers = #tpu.dot_dimension_numbers<[1], [0], [0], [1], [0, 0, 1, 1], [], []>} : vector<64x32xbf16>, vector<32x64xbf16>, vector<64x64xf32> -> vector<64x64xf32>
    %57 = arith.addf %51, %56 : vector<64x64xf32>
    %c0_35 = arith.constant 0 : index
    %c0_36 = arith.constant 0 : index
    %c10 = arith.constant 10 : index
    %58 = vector.load %arg1[%c0_35, %c0_36, %c10] : memref<1x32x82xbf16, #tpu.memory_space<vmem>>, vector<1x32x64xbf16>
    %59 = vector.shape_cast %58 : vector<1x32x64xbf16> to vector<32x64xbf16>
    %cst_37 = arith.constant 0.000000e+00 : bf16
    %60 = vector.broadcast %cst_37 : bf16 to vector<32x64xbf16>
    %61 = arith.select %20, %59, %60 : vector<32x64xi1>, vector<32x64xbf16>
    %c5 = arith.constant 5 : index
    %c0_38 = arith.constant 0 : index
    %c0_39 = arith.constant 0 : index
    %62 = vector.load %arg2[%c5, %c0_38, %c0_39] : memref<9x64x32xbf16, #tpu.memory_space<vmem>>, vector<1x64x32xbf16>
    %63 = vector.shape_cast %62 : vector<1x64x32xbf16> to vector<64x32xbf16>
    %cst_40 = arith.constant dense<0.000000e+00> : vector<64x64xf32>
    %64 = tpu.matmul %63, %61, %cst_40 {dimension_numbers = #tpu.dot_dimension_numbers<[1], [0], [0], [1], [0, 0, 1, 1], [], []>} : vector<64x32xbf16>, vector<32x64xbf16>, vector<64x64xf32> -> vector<64x64xf32>
    %65 = arith.addf %57, %64 : vector<64x64xf32>
    %c0_41 = arith.constant 0 : index
    %c0_42 = arith.constant 0 : index
    %c16 = arith.constant 16 : index
    %66 = vector.load %arg1[%c0_41, %c0_42, %c16] : memref<1x32x82xbf16, #tpu.memory_space<vmem>>, vector<1x32x64xbf16>
    %67 = vector.shape_cast %66 : vector<1x32x64xbf16> to vector<32x64xbf16>
    %cst_43 = arith.constant 0.000000e+00 : bf16
    %68 = vector.broadcast %cst_43 : bf16 to vector<32x64xbf16>
    %69 = arith.select %18, %67, %68 : vector<32x64xi1>, vector<32x64xbf16>
    %c6 = arith.constant 6 : index
    %c0_44 = arith.constant 0 : index
    %c0_45 = arith.constant 0 : index
    %70 = vector.load %arg2[%c6, %c0_44, %c0_45] : memref<9x64x32xbf16, #tpu.memory_space<vmem>>, vector<1x64x32xbf16>
    %71 = vector.shape_cast %70 : vector<1x64x32xbf16> to vector<64x32xbf16>
    %cst_46 = arith.constant dense<0.000000e+00> : vector<64x64xf32>
    %72 = tpu.matmul %71, %69, %cst_46 {dimension_numbers = #tpu.dot_dimension_numbers<[1], [0], [0], [1], [0, 0, 1, 1], [], []>} : vector<64x32xbf16>, vector<32x64xbf16>, vector<64x64xf32> -> vector<64x64xf32>
    %73 = arith.addf %65, %72 : vector<64x64xf32>
    %c0_47 = arith.constant 0 : index
    %c0_48 = arith.constant 0 : index
    %c17 = arith.constant 17 : index
    %74 = vector.load %arg1[%c0_47, %c0_48, %c17] : memref<1x32x82xbf16, #tpu.memory_space<vmem>>, vector<1x32x64xbf16>
    %75 = vector.shape_cast %74 : vector<1x32x64xbf16> to vector<32x64xbf16>
    %c7 = arith.constant 7 : index
    %c0_49 = arith.constant 0 : index
    %c0_50 = arith.constant 0 : index
    %76 = vector.load %arg2[%c7, %c0_49, %c0_50] : memref<9x64x32xbf16, #tpu.memory_space<vmem>>, vector<1x64x32xbf16>
    %77 = vector.shape_cast %76 : vector<1x64x32xbf16> to vector<64x32xbf16>
    %cst_51 = arith.constant dense<0.000000e+00> : vector<64x64xf32>
    %78 = tpu.matmul %77, %75, %cst_51 {dimension_numbers = #tpu.dot_dimension_numbers<[1], [0], [0], [1], [0, 0, 1, 1], [], []>} : vector<64x32xbf16>, vector<32x64xbf16>, vector<64x64xf32> -> vector<64x64xf32>
    %79 = arith.addf %73, %78 : vector<64x64xf32>
    %c0_52 = arith.constant 0 : index
    %c0_53 = arith.constant 0 : index
    %c18 = arith.constant 18 : index
    %80 = vector.load %arg1[%c0_52, %c0_53, %c18] : memref<1x32x82xbf16, #tpu.memory_space<vmem>>, vector<1x32x64xbf16>
    %81 = vector.shape_cast %80 : vector<1x32x64xbf16> to vector<32x64xbf16>
    %cst_54 = arith.constant 0.000000e+00 : bf16
    %82 = vector.broadcast %cst_54 : bf16 to vector<32x64xbf16>
    %83 = arith.select %20, %81, %82 : vector<32x64xi1>, vector<32x64xbf16>
    %c8_55 = arith.constant 8 : index
    %c0_56 = arith.constant 0 : index
    %c0_57 = arith.constant 0 : index
    %84 = vector.load %arg2[%c8_55, %c0_56, %c0_57] : memref<9x64x32xbf16, #tpu.memory_space<vmem>>, vector<1x64x32xbf16>
    %85 = vector.shape_cast %84 : vector<1x64x32xbf16> to vector<64x32xbf16>
    %cst_58 = arith.constant dense<0.000000e+00> : vector<64x64xf32>
    %86 = tpu.matmul %85, %83, %cst_58 {dimension_numbers = #tpu.dot_dimension_numbers<[1], [0], [0], [1], [0, 0, 1, 1], [], []>} : vector<64x32xbf16>, vector<32x64xbf16>, vector<64x64xf32> -> vector<64x64xf32>
    %87 = arith.addf %79, %86 : vector<64x64xf32>
    %cst_59 = arith.constant dense<0.000000e+00> : vector<64xf32>
    %88 = vector.multi_reduction <add>, %87, %cst_59 [1] : vector<64x64xf32> to vector<64xf32>
    %89 = vector.shape_cast %88 : vector<64xf32> to vector<64x1xf32>
    %90 = vector.extract_strided_slice %89 {offsets = [0, 0], sizes = [16, 1], strides = [1, 1]} : vector<64x1xf32> to vector<16x1xf32>
    %91 = vector.extract_strided_slice %89 {offsets = [16, 0], sizes = [16, 1], strides = [1, 1]} : vector<64x1xf32> to vector<16x1xf32>
    %92 = arith.addf %90, %91 : vector<16x1xf32>
    %93 = vector.extract_strided_slice %89 {offsets = [32, 0], sizes = [16, 1], strides = [1, 1]} : vector<64x1xf32> to vector<16x1xf32>
    %94 = arith.addf %92, %93 : vector<16x1xf32>
    %95 = vector.extract_strided_slice %89 {offsets = [48, 0], sizes = [16, 1], strides = [1, 1]} : vector<64x1xf32> to vector<16x1xf32>
    %96 = arith.addf %94, %95 : vector<16x1xf32>
    %cst_60 = arith.constant 3.906250e-03 : f32
    %97 = vector.broadcast %cst_60 : f32 to vector<16x1xf32>
    %98 = arith.mulf %96, %97 : vector<16x1xf32>
    %99 = tpu.concatenate %98, %98, %98, %98 in 0 : vector<16x1xf32>, vector<16x1xf32>, vector<16x1xf32>, vector<16x1xf32> -> vector<64x1xf32>
    %100 = vector.broadcast %99 : vector<64x1xf32> to vector<64x64xf32>
    %101 = arith.subf %87, %100 : vector<64x64xf32>
    %102 = arith.mulf %101, %101 : vector<64x64xf32>
    %cst_61 = arith.constant dense<0.000000e+00> : vector<64xf32>
    %103 = vector.multi_reduction <add>, %102, %cst_61 [1] : vector<64x64xf32> to vector<64xf32>
    %104 = vector.shape_cast %103 : vector<64xf32> to vector<64x1xf32>
    %105 = vector.extract_strided_slice %104 {offsets = [0, 0], sizes = [16, 1], strides = [1, 1]} : vector<64x1xf32> to vector<16x1xf32>
    %106 = vector.extract_strided_slice %104 {offsets = [16, 0], sizes = [16, 1], strides = [1, 1]} : vector<64x1xf32> to vector<16x1xf32>
    %107 = arith.addf %105, %106 : vector<16x1xf32>
    %108 = vector.extract_strided_slice %104 {offsets = [32, 0], sizes = [16, 1], strides = [1, 1]} : vector<64x1xf32> to vector<16x1xf32>
    %109 = arith.addf %107, %108 : vector<16x1xf32>
    %110 = vector.extract_strided_slice %104 {offsets = [48, 0], sizes = [16, 1], strides = [1, 1]} : vector<64x1xf32> to vector<16x1xf32>
    %111 = arith.addf %109, %110 : vector<16x1xf32>
    %cst_62 = arith.constant 3.906250e-03 : f32
    %112 = vector.broadcast %cst_62 : f32 to vector<16x1xf32>
    %113 = arith.mulf %111, %112 : vector<16x1xf32>
    %c0_63 = arith.constant 0 : index
    %c0_64 = arith.constant 0 : index
    %114 = vector.load %arg3[%c0_63, %c0_64] : memref<64x1xf32, #tpu.memory_space<vmem>>, vector<64x1xf32>
    %115 = tpu.concatenate %113, %113, %113, %113 in 0 : vector<16x1xf32>, vector<16x1xf32>, vector<16x1xf32>, vector<16x1xf32> -> vector<64x1xf32>
    %cst_65 = arith.constant 9.99999974E-6 : f32
    %116 = vector.broadcast %cst_65 : f32 to vector<64x1xf32>
    %117 = arith.addf %115, %116 : vector<64x1xf32>
    %118 = math.rsqrt %117 : vector<64x1xf32>
    %119 = arith.mulf %114, %118 : vector<64x1xf32>
    %120 = vector.broadcast %119 : vector<64x1xf32> to vector<64x64xf32>
    %121 = arith.mulf %101, %120 : vector<64x64xf32>
    %c0_66 = arith.constant 0 : index
    %c0_67 = arith.constant 0 : index
    %122 = vector.load %arg4[%c0_66, %c0_67] : memref<64x1xf32, #tpu.memory_space<vmem>>, vector<64x1xf32>
    %123 = vector.broadcast %122 : vector<64x1xf32> to vector<64x64xf32>
    %124 = arith.addf %121, %123 : vector<64x64xf32>
    %cst_68 = arith.constant 0.000000e+00 : f32
    %125 = vector.broadcast %cst_68 : f32 to vector<64x64xf32>
    %126 = arith.maximumf %124, %125 : vector<64x64xf32>
    %127 = arith.truncf %126 : vector<64x64xf32> to vector<64x64xbf16>
    %c0_69 = arith.constant 0 : index
    %c0_70 = arith.constant 0 : index
    %c0_71 = arith.constant 0 : index
    %128 = vector.load %arg5[%c0_69, %c0_70, %c0_71] : memref<1x64x64xbf16, #tpu.memory_space<vmem>>, vector<1x64x64xbf16>
    %129 = vector.shape_cast %128 : vector<1x64x64xbf16> to vector<64x64xbf16>
    %130 = vector.shape_cast %127 : vector<64x64xbf16> to vector<1x64x64xbf16>
    tpu.vector_store %arg5[%c0_69, %c0_70, %c0_71], %130 {strides = array<i32>} : memref<1x64x64xbf16, #tpu.memory_space<vmem>>, vector<1x64x64xbf16>,
    return
  }
  func.func @transform_0(%arg0: i32) -> (i32, i32, i32) {
    %c0_i32 = arith.constant 0 : i32
    %c0_i32_0 = arith.constant 0 : i32
    %c0_i32_1 = arith.constant 0 : i32
    return %arg0, %c0_i32, %c0_i32_0 : i32, i32, i32
  }
  func.func @transform_1(%arg0: i32) -> (i32, i32, i32) {
    %c0_i32 = arith.constant 0 : i32
    %c0_i32_0 = arith.constant 0 : i32
    %c0_i32_1 = arith.constant 0 : i32
    %c0_i32_2 = arith.constant 0 : i32
    return %c0_i32, %c0_i32_0, %c0_i32_1 : i32, i32, i32
  }
  func.func @transform_2(%arg0: i32) -> (i32, i32) {
    %c0_i32 = arith.constant 0 : i32
    %c0_i32_0 = arith.constant 0 : i32
    %c0_i32_1 = arith.constant 0 : i32
    return %c0_i32, %c0_i32_0 : i32, i32
  }
  func.func @transform_3(%arg0: i32) -> (i32, i32) {
    %c0_i32 = arith.constant 0 : i32
    %c0_i32_0 = arith.constant 0 : i32
    %c0_i32_1 = arith.constant 0 : i32
    return %c0_i32, %c0_i32_0 : i32, i32
  }
  func.func @transform_4(%arg0: i32) -> (i32, i32, i32) {
    %c0_i32 = arith.constant 0 : i32
    %c0_i32_0 = arith.constant 0 : i32
    %c0_i32_1 = arith.constant 0 : i32
    return %arg0, %c0_i32, %c0_i32_0 : i32, i32, i32
  }
}

module attributes {stable_mosaic.version = 11 : i64} {
  func.func @_upconv_norm_relu_kernel(%arg0: i32, %arg1: memref<1x16x290xbf16, #tpu.memory_space<vmem>>, %arg2: memref<9x32x16xbf16, #tpu.memory_space<vmem>>, %arg3: memref<32x1xf32, #tpu.memory_space<vmem>>, %arg4: memref<32x1xf32, #tpu.memory_space<vmem>>, %arg5: memref<1x32x256xbf16, #tpu.memory_space<vmem>>) attributes {dimension_semantics = [#tpu.dimension_semantics<parallel>], iteration_bounds = array<i64: 2>, scalar_prefetch = 0 : i64, scratch_operands = 0 : i64, tpu.core_type = #tpu.core_type<tc>, window_params = [{transform_indices = @transform_0, window_bounds = array<i64: 1, 16, 290>}, {pipeline_mode = #tpu.pipeline_mode<synchronous>, transform_indices = @transform_1, window_bounds = array<i64: 9, 32, 16>}, {pipeline_mode = #tpu.pipeline_mode<synchronous>, transform_indices = @transform_2, window_bounds = array<i64: 32, 1>}, {pipeline_mode = #tpu.pipeline_mode<synchronous>, transform_indices = @transform_3, window_bounds = array<i64: 32, 1>}, {transform_indices = @transform_4, window_bounds = array<i64: 1, 32, 256>}]} {
    %0 = tpu.iota {dimensions = array<i32: 1>} : vector<16x256xi32>
    %c16_i32 = arith.constant 16 : i32
    %c0_i32 = arith.constant 0 : i32
    %1 = arith.cmpi eq, %c16_i32, %c0_i32 : i32
    %c1_i32 = arith.constant 1 : i32
    %2 = arith.select %1, %c1_i32, %c16_i32 : i32
    %3 = vector.broadcast %2 : i32 to vector<16x256xi32>
    %4 = arith.remsi %0, %3 : vector<16x256xi32>
    %c0_i32_0 = arith.constant 0 : i32
    %5 = vector.broadcast %c0_i32_0 : i32 to vector<16x256xi32>
    %6 = arith.cmpi ne, %4, %5 : vector<16x256xi32>
    %c0_i32_1 = arith.constant 0 : i32
    %7 = vector.broadcast %c0_i32_1 : i32 to vector<16x256xi32>
    %8 = arith.cmpi slt, %4, %7 : vector<16x256xi32>
    %c0_i32_2 = arith.constant 0 : i32
    %9 = arith.cmpi slt, %2, %c0_i32_2 : i32
    %10 = vector.broadcast %9 : i1 to vector<16x256xi1>
    %11 = vector.broadcast %10 : vector<16x256xi1> to vector<16x256xi1>
    %12 = arith.xori %8, %11 : vector<16x256xi1>
    %13 = arith.andi %12, %6 : vector<16x256xi1>
    %14 = vector.broadcast %2 : i32 to vector<16x256xi32>
    %15 = arith.addi %4, %14 : vector<16x256xi32>
    %16 = arith.select %13, %15, %4 : vector<16x256xi1>, vector<16x256xi32>
    %c0_i32_3 = arith.constant 0 : i32
    %17 = vector.broadcast %c0_i32_3 : i32 to vector<16x256xi32>
    %18 = arith.cmpi sgt, %16, %17 : vector<16x256xi32>
    %c15_i32 = arith.constant 15 : i32
    %19 = vector.broadcast %c15_i32 : i32 to vector<16x256xi32>
    %20 = arith.cmpi slt, %16, %19 : vector<16x256xi32>
    %cst = arith.constant 0.000000e+00 : f32
    %21 = vector.broadcast %cst : f32 to vector<32x256xf32>
    %c0 = arith.constant 0 : index
    %c0_4 = arith.constant 0 : index
    %c0_5 = arith.constant 0 : index
    %22 = vector.load %arg1[%c0, %c0_4, %c0_5] : memref<1x16x290xbf16, #tpu.memory_space<vmem>>, vector<1x16x256xbf16>
    %23 = vector.shape_cast %22 : vector<1x16x256xbf16> to vector<16x256xbf16>
    %cst_6 = arith.constant 0.000000e+00 : bf16
    %24 = vector.broadcast %cst_6 : bf16 to vector<16x256xbf16>
    %25 = arith.select %18, %23, %24 : vector<16x256xi1>, vector<16x256xbf16>
    %c0_7 = arith.constant 0 : index
    %c0_8 = arith.constant 0 : index
    %c0_9 = arith.constant 0 : index
    %26 = vector.load %arg2[%c0_7, %c0_8, %c0_9] : memref<9x32x16xbf16, #tpu.memory_space<vmem>>, vector<1x32x16xbf16>
    %27 = vector.shape_cast %26 : vector<1x32x16xbf16> to vector<32x16xbf16>
    %cst_10 = arith.constant dense<0.000000e+00> : vector<32x256xf32>
    %28 = tpu.matmul %27, %25, %cst_10 {dimension_numbers = #tpu.dot_dimension_numbers<[1], [0], [0], [1], [0, 0, 1, 1], [], []>} : vector<32x16xbf16>, vector<16x256xbf16>, vector<32x256xf32> -> vector<32x256xf32>
    %29 = arith.addf %21, %28 : vector<32x256xf32>
    %c0_11 = arith.constant 0 : index
    %c0_12 = arith.constant 0 : index
    %c1 = arith.constant 1 : index
    %30 = vector.load %arg1[%c0_11, %c0_12, %c1] : memref<1x16x290xbf16, #tpu.memory_space<vmem>>, vector<1x16x256xbf16>
    %31 = vector.shape_cast %30 : vector<1x16x256xbf16> to vector<16x256xbf16>
    %c1_13 = arith.constant 1 : index
    %c0_14 = arith.constant 0 : index
    %c0_15 = arith.constant 0 : index
    %32 = vector.load %arg2[%c1_13, %c0_14, %c0_15] : memref<9x32x16xbf16, #tpu.memory_space<vmem>>, vector<1x32x16xbf16>
    %33 = vector.shape_cast %32 : vector<1x32x16xbf16> to vector<32x16xbf16>
    %cst_16 = arith.constant dense<0.000000e+00> : vector<32x256xf32>
    %34 = tpu.matmul %33, %31, %cst_16 {dimension_numbers = #tpu.dot_dimension_numbers<[1], [0], [0], [1], [0, 0, 1, 1], [], []>} : vector<32x16xbf16>, vector<16x256xbf16>, vector<32x256xf32> -> vector<32x256xf32>
    %35 = arith.addf %29, %34 : vector<32x256xf32>
    %c0_17 = arith.constant 0 : index
    %c0_18 = arith.constant 0 : index
    %c2 = arith.constant 2 : index
    %36 = vector.load %arg1[%c0_17, %c0_18, %c2] : memref<1x16x290xbf16, #tpu.memory_space<vmem>>, vector<1x16x256xbf16>
    %37 = vector.shape_cast %36 : vector<1x16x256xbf16> to vector<16x256xbf16>
    %cst_19 = arith.constant 0.000000e+00 : bf16
    %38 = vector.broadcast %cst_19 : bf16 to vector<16x256xbf16>
    %39 = arith.select %20, %37, %38 : vector<16x256xi1>, vector<16x256xbf16>
    %c2_20 = arith.constant 2 : index
    %c0_21 = arith.constant 0 : index
    %c0_22 = arith.constant 0 : index
    %40 = vector.load %arg2[%c2_20, %c0_21, %c0_22] : memref<9x32x16xbf16, #tpu.memory_space<vmem>>, vector<1x32x16xbf16>
    %41 = vector.shape_cast %40 : vector<1x32x16xbf16> to vector<32x16xbf16>
    %cst_23 = arith.constant dense<0.000000e+00> : vector<32x256xf32>
    %42 = tpu.matmul %41, %39, %cst_23 {dimension_numbers = #tpu.dot_dimension_numbers<[1], [0], [0], [1], [0, 0, 1, 1], [], []>} : vector<32x16xbf16>, vector<16x256xbf16>, vector<32x256xf32> -> vector<32x256xf32>
    %43 = arith.addf %35, %42 : vector<32x256xf32>
    %c0_24 = arith.constant 0 : index
    %c0_25 = arith.constant 0 : index
    %c16 = arith.constant 16 : index
    %44 = vector.load %arg1[%c0_24, %c0_25, %c16] : memref<1x16x290xbf16, #tpu.memory_space<vmem>>, vector<1x16x256xbf16>
    %45 = vector.shape_cast %44 : vector<1x16x256xbf16> to vector<16x256xbf16>
    %cst_26 = arith.constant 0.000000e+00 : bf16
    %46 = vector.broadcast %cst_26 : bf16 to vector<16x256xbf16>
    %47 = arith.select %18, %45, %46 : vector<16x256xi1>, vector<16x256xbf16>
    %c3 = arith.constant 3 : index
    %c0_27 = arith.constant 0 : index
    %c0_28 = arith.constant 0 : index
    %48 = vector.load %arg2[%c3, %c0_27, %c0_28] : memref<9x32x16xbf16, #tpu.memory_space<vmem>>, vector<1x32x16xbf16>
    %49 = vector.shape_cast %48 : vector<1x32x16xbf16> to vector<32x16xbf16>
    %cst_29 = arith.constant dense<0.000000e+00> : vector<32x256xf32>
    %50 = tpu.matmul %49, %47, %cst_29 {dimension_numbers = #tpu.dot_dimension_numbers<[1], [0], [0], [1], [0, 0, 1, 1], [], []>} : vector<32x16xbf16>, vector<16x256xbf16>, vector<32x256xf32> -> vector<32x256xf32>
    %51 = arith.addf %43, %50 : vector<32x256xf32>
    %c0_30 = arith.constant 0 : index
    %c0_31 = arith.constant 0 : index
    %c17 = arith.constant 17 : index
    %52 = vector.load %arg1[%c0_30, %c0_31, %c17] : memref<1x16x290xbf16, #tpu.memory_space<vmem>>, vector<1x16x256xbf16>
    %53 = vector.shape_cast %52 : vector<1x16x256xbf16> to vector<16x256xbf16>
    %c4 = arith.constant 4 : index
    %c0_32 = arith.constant 0 : index
    %c0_33 = arith.constant 0 : index
    %54 = vector.load %arg2[%c4, %c0_32, %c0_33] : memref<9x32x16xbf16, #tpu.memory_space<vmem>>, vector<1x32x16xbf16>
    %55 = vector.shape_cast %54 : vector<1x32x16xbf16> to vector<32x16xbf16>
    %cst_34 = arith.constant dense<0.000000e+00> : vector<32x256xf32>
    %56 = tpu.matmul %55, %53, %cst_34 {dimension_numbers = #tpu.dot_dimension_numbers<[1], [0], [0], [1], [0, 0, 1, 1], [], []>} : vector<32x16xbf16>, vector<16x256xbf16>, vector<32x256xf32> -> vector<32x256xf32>
    %57 = arith.addf %51, %56 : vector<32x256xf32>
    %c0_35 = arith.constant 0 : index
    %c0_36 = arith.constant 0 : index
    %c18 = arith.constant 18 : index
    %58 = vector.load %arg1[%c0_35, %c0_36, %c18] : memref<1x16x290xbf16, #tpu.memory_space<vmem>>, vector<1x16x256xbf16>
    %59 = vector.shape_cast %58 : vector<1x16x256xbf16> to vector<16x256xbf16>
    %cst_37 = arith.constant 0.000000e+00 : bf16
    %60 = vector.broadcast %cst_37 : bf16 to vector<16x256xbf16>
    %61 = arith.select %20, %59, %60 : vector<16x256xi1>, vector<16x256xbf16>
    %c5 = arith.constant 5 : index
    %c0_38 = arith.constant 0 : index
    %c0_39 = arith.constant 0 : index
    %62 = vector.load %arg2[%c5, %c0_38, %c0_39] : memref<9x32x16xbf16, #tpu.memory_space<vmem>>, vector<1x32x16xbf16>
    %63 = vector.shape_cast %62 : vector<1x32x16xbf16> to vector<32x16xbf16>
    %cst_40 = arith.constant dense<0.000000e+00> : vector<32x256xf32>
    %64 = tpu.matmul %63, %61, %cst_40 {dimension_numbers = #tpu.dot_dimension_numbers<[1], [0], [0], [1], [0, 0, 1, 1], [], []>} : vector<32x16xbf16>, vector<16x256xbf16>, vector<32x256xf32> -> vector<32x256xf32>
    %65 = arith.addf %57, %64 : vector<32x256xf32>
    %c0_41 = arith.constant 0 : index
    %c0_42 = arith.constant 0 : index
    %c32 = arith.constant 32 : index
    %66 = vector.load %arg1[%c0_41, %c0_42, %c32] : memref<1x16x290xbf16, #tpu.memory_space<vmem>>, vector<1x16x256xbf16>
    %67 = vector.shape_cast %66 : vector<1x16x256xbf16> to vector<16x256xbf16>
    %cst_43 = arith.constant 0.000000e+00 : bf16
    %68 = vector.broadcast %cst_43 : bf16 to vector<16x256xbf16>
    %69 = arith.select %18, %67, %68 : vector<16x256xi1>, vector<16x256xbf16>
    %c6 = arith.constant 6 : index
    %c0_44 = arith.constant 0 : index
    %c0_45 = arith.constant 0 : index
    %70 = vector.load %arg2[%c6, %c0_44, %c0_45] : memref<9x32x16xbf16, #tpu.memory_space<vmem>>, vector<1x32x16xbf16>
    %71 = vector.shape_cast %70 : vector<1x32x16xbf16> to vector<32x16xbf16>
    %cst_46 = arith.constant dense<0.000000e+00> : vector<32x256xf32>
    %72 = tpu.matmul %71, %69, %cst_46 {dimension_numbers = #tpu.dot_dimension_numbers<[1], [0], [0], [1], [0, 0, 1, 1], [], []>} : vector<32x16xbf16>, vector<16x256xbf16>, vector<32x256xf32> -> vector<32x256xf32>
    %73 = arith.addf %65, %72 : vector<32x256xf32>
    %c0_47 = arith.constant 0 : index
    %c0_48 = arith.constant 0 : index
    %c33 = arith.constant 33 : index
    %74 = vector.load %arg1[%c0_47, %c0_48, %c33] : memref<1x16x290xbf16, #tpu.memory_space<vmem>>, vector<1x16x256xbf16>
    %75 = vector.shape_cast %74 : vector<1x16x256xbf16> to vector<16x256xbf16>
    %c7 = arith.constant 7 : index
    %c0_49 = arith.constant 0 : index
    %c0_50 = arith.constant 0 : index
    %76 = vector.load %arg2[%c7, %c0_49, %c0_50] : memref<9x32x16xbf16, #tpu.memory_space<vmem>>, vector<1x32x16xbf16>
    %77 = vector.shape_cast %76 : vector<1x32x16xbf16> to vector<32x16xbf16>
    %cst_51 = arith.constant dense<0.000000e+00> : vector<32x256xf32>
    %78 = tpu.matmul %77, %75, %cst_51 {dimension_numbers = #tpu.dot_dimension_numbers<[1], [0], [0], [1], [0, 0, 1, 1], [], []>} : vector<32x16xbf16>, vector<16x256xbf16>, vector<32x256xf32> -> vector<32x256xf32>
    %79 = arith.addf %73, %78 : vector<32x256xf32>
    %c0_52 = arith.constant 0 : index
    %c0_53 = arith.constant 0 : index
    %c34 = arith.constant 34 : index
    %80 = vector.load %arg1[%c0_52, %c0_53, %c34] : memref<1x16x290xbf16, #tpu.memory_space<vmem>>, vector<1x16x256xbf16>
    %81 = vector.shape_cast %80 : vector<1x16x256xbf16> to vector<16x256xbf16>
    %cst_54 = arith.constant 0.000000e+00 : bf16
    %82 = vector.broadcast %cst_54 : bf16 to vector<16x256xbf16>
    %83 = arith.select %20, %81, %82 : vector<16x256xi1>, vector<16x256xbf16>
    %c8 = arith.constant 8 : index
    %c0_55 = arith.constant 0 : index
    %c0_56 = arith.constant 0 : index
    %84 = vector.load %arg2[%c8, %c0_55, %c0_56] : memref<9x32x16xbf16, #tpu.memory_space<vmem>>, vector<1x32x16xbf16>
    %85 = vector.shape_cast %84 : vector<1x32x16xbf16> to vector<32x16xbf16>
    %cst_57 = arith.constant dense<0.000000e+00> : vector<32x256xf32>
    %86 = tpu.matmul %85, %83, %cst_57 {dimension_numbers = #tpu.dot_dimension_numbers<[1], [0], [0], [1], [0, 0, 1, 1], [], []>} : vector<32x16xbf16>, vector<16x256xbf16>, vector<32x256xf32> -> vector<32x256xf32>
    %87 = arith.addf %79, %86 : vector<32x256xf32>
    %cst_58 = arith.constant dense<0.000000e+00> : vector<32xf32>
    %88 = vector.multi_reduction <add>, %87, %cst_58 [1] : vector<32x256xf32> to vector<32xf32>
    %89 = vector.shape_cast %88 : vector<32xf32> to vector<32x1xf32>
    %90 = vector.extract_strided_slice %89 {offsets = [0, 0], sizes = [8, 1], strides = [1, 1]} : vector<32x1xf32> to vector<8x1xf32>
    %91 = vector.extract_strided_slice %89 {offsets = [8, 0], sizes = [8, 1], strides = [1, 1]} : vector<32x1xf32> to vector<8x1xf32>
    %92 = arith.addf %90, %91 : vector<8x1xf32>
    %93 = vector.extract_strided_slice %89 {offsets = [16, 0], sizes = [8, 1], strides = [1, 1]} : vector<32x1xf32> to vector<8x1xf32>
    %94 = arith.addf %92, %93 : vector<8x1xf32>
    %95 = vector.extract_strided_slice %89 {offsets = [24, 0], sizes = [8, 1], strides = [1, 1]} : vector<32x1xf32> to vector<8x1xf32>
    %96 = arith.addf %94, %95 : vector<8x1xf32>
    %cst_59 = arith.constant 9.765625E-4 : f32
    %97 = vector.broadcast %cst_59 : f32 to vector<8x1xf32>
    %98 = arith.mulf %96, %97 : vector<8x1xf32>
    %99 = tpu.concatenate %98, %98, %98, %98 in 0 : vector<8x1xf32>, vector<8x1xf32>, vector<8x1xf32>, vector<8x1xf32> -> vector<32x1xf32>
    %100 = vector.broadcast %99 : vector<32x1xf32> to vector<32x256xf32>
    %101 = arith.subf %87, %100 : vector<32x256xf32>
    %102 = arith.mulf %101, %101 : vector<32x256xf32>
    %cst_60 = arith.constant dense<0.000000e+00> : vector<32xf32>
    %103 = vector.multi_reduction <add>, %102, %cst_60 [1] : vector<32x256xf32> to vector<32xf32>
    %104 = vector.shape_cast %103 : vector<32xf32> to vector<32x1xf32>
    %105 = vector.extract_strided_slice %104 {offsets = [0, 0], sizes = [8, 1], strides = [1, 1]} : vector<32x1xf32> to vector<8x1xf32>
    %106 = vector.extract_strided_slice %104 {offsets = [8, 0], sizes = [8, 1], strides = [1, 1]} : vector<32x1xf32> to vector<8x1xf32>
    %107 = arith.addf %105, %106 : vector<8x1xf32>
    %108 = vector.extract_strided_slice %104 {offsets = [16, 0], sizes = [8, 1], strides = [1, 1]} : vector<32x1xf32> to vector<8x1xf32>
    %109 = arith.addf %107, %108 : vector<8x1xf32>
    %110 = vector.extract_strided_slice %104 {offsets = [24, 0], sizes = [8, 1], strides = [1, 1]} : vector<32x1xf32> to vector<8x1xf32>
    %111 = arith.addf %109, %110 : vector<8x1xf32>
    %cst_61 = arith.constant 9.765625E-4 : f32
    %112 = vector.broadcast %cst_61 : f32 to vector<8x1xf32>
    %113 = arith.mulf %111, %112 : vector<8x1xf32>
    %c0_62 = arith.constant 0 : index
    %c0_63 = arith.constant 0 : index
    %114 = vector.load %arg3[%c0_62, %c0_63] : memref<32x1xf32, #tpu.memory_space<vmem>>, vector<32x1xf32>
    %115 = tpu.concatenate %113, %113, %113, %113 in 0 : vector<8x1xf32>, vector<8x1xf32>, vector<8x1xf32>, vector<8x1xf32> -> vector<32x1xf32>
    %cst_64 = arith.constant 9.99999974E-6 : f32
    %116 = vector.broadcast %cst_64 : f32 to vector<32x1xf32>
    %117 = arith.addf %115, %116 : vector<32x1xf32>
    %118 = math.rsqrt %117 : vector<32x1xf32>
    %119 = arith.mulf %114, %118 : vector<32x1xf32>
    %120 = vector.broadcast %119 : vector<32x1xf32> to vector<32x256xf32>
    %121 = arith.mulf %101, %120 : vector<32x256xf32>
    %c0_65 = arith.constant 0 : index
    %c0_66 = arith.constant 0 : index
    %122 = vector.load %arg4[%c0_65, %c0_66] : memref<32x1xf32, #tpu.memory_space<vmem>>, vector<32x1xf32>
    %123 = vector.broadcast %122 : vector<32x1xf32> to vector<32x256xf32>
    %124 = arith.addf %121, %123 : vector<32x256xf32>
    %cst_67 = arith.constant 0.000000e+00 : f32
    %125 = vector.broadcast %cst_67 : f32 to vector<32x256xf32>
    %126 = arith.maximumf %124, %125 : vector<32x256xf32>
    %127 = arith.truncf %126 : vector<32x256xf32> to vector<32x256xbf16>
    %c0_68 = arith.constant 0 : index
    %c0_69 = arith.constant 0 : index
    %c0_70 = arith.constant 0 : index
    %128 = vector.load %arg5[%c0_68, %c0_69, %c0_70] : memref<1x32x256xbf16, #tpu.memory_space<vmem>>, vector<1x32x256xbf16>
    %129 = vector.shape_cast %128 : vector<1x32x256xbf16> to vector<32x256xbf16>
    %130 = vector.shape_cast %127 : vector<32x256xbf16> to vector<1x32x256xbf16>
    tpu.vector_store %arg5[%c0_68, %c0_69, %c0_70], %130 {strides = array<i32>} : memref<1x32x256xbf16, #tpu.memory_space<vmem>>, vector<1x32x256xbf16>,
    return
  }
  func.func @transform_0(%arg0: i32) -> (i32, i32, i32) {
    %c0_i32 = arith.constant 0 : i32
    %c0_i32_0 = arith.constant 0 : i32
    %c0_i32_1 = arith.constant 0 : i32
    return %arg0, %c0_i32, %c0_i32_0 : i32, i32, i32
  }
  func.func @transform_1(%arg0: i32) -> (i32, i32, i32) {
    %c0_i32 = arith.constant 0 : i32
    %c0_i32_0 = arith.constant 0 : i32
    %c0_i32_1 = arith.constant 0 : i32
    %c0_i32_2 = arith.constant 0 : i32
    return %c0_i32, %c0_i32_0, %c0_i32_1 : i32, i32, i32
  }
  func.func @transform_2(%arg0: i32) -> (i32, i32) {
    %c0_i32 = arith.constant 0 : i32
    %c0_i32_0 = arith.constant 0 : i32
    %c0_i32_1 = arith.constant 0 : i32
    return %c0_i32, %c0_i32_0 : i32, i32
  }
  func.func @transform_3(%arg0: i32) -> (i32, i32) {
    %c0_i32 = arith.constant 0 : i32
    %c0_i32_0 = arith.constant 0 : i32
    %c0_i32_1 = arith.constant 0 : i32
    return %c0_i32, %c0_i32_0 : i32, i32
  }
  func.func @transform_4(%arg0: i32) -> (i32, i32, i32) {
    %c0_i32 = arith.constant 0 : i32
    %c0_i32_0 = arith.constant 0 : i32
    %c0_i32_1 = arith.constant 0 : i32
    return %arg0, %c0_i32, %c0_i32_0 : i32, i32, i32
  }
}

module attributes {stable_mosaic.version = 11 : i64} {
  func.func @_upconv_bias_tanh_kernel(%arg0: i32, %arg1: memref<1x8x1090xbf16, #tpu.memory_space<vmem>>, %arg2: memref<9x12x8xbf16, #tpu.memory_space<vmem>>, %arg3: memref<12x1xf32, #tpu.memory_space<vmem>>, %arg4: memref<1x12x1024xf32, #tpu.memory_space<vmem>>) attributes {dimension_semantics = [#tpu.dimension_semantics<parallel>], iteration_bounds = array<i64: 2>, scalar_prefetch = 0 : i64, scratch_operands = 0 : i64, tpu.core_type = #tpu.core_type<tc>, window_params = [{transform_indices = @transform_0, window_bounds = array<i64: 1, 8, 1090>}, {pipeline_mode = #tpu.pipeline_mode<synchronous>, transform_indices = @transform_1, window_bounds = array<i64: 9, 12, 8>}, {pipeline_mode = #tpu.pipeline_mode<synchronous>, transform_indices = @transform_2, window_bounds = array<i64: 12, 1>}, {transform_indices = @transform_3, window_bounds = array<i64: 1, 12, 1024>}]} {
    %0 = tpu.iota {dimensions = array<i32: 1>} : vector<8x1024xi32>
    %c32_i32 = arith.constant 32 : i32
    %c0_i32 = arith.constant 0 : i32
    %1 = arith.cmpi eq, %c32_i32, %c0_i32 : i32
    %c1_i32 = arith.constant 1 : i32
    %2 = arith.select %1, %c1_i32, %c32_i32 : i32
    %3 = vector.broadcast %2 : i32 to vector<8x1024xi32>
    %4 = arith.remsi %0, %3 : vector<8x1024xi32>
    %c0_i32_0 = arith.constant 0 : i32
    %5 = vector.broadcast %c0_i32_0 : i32 to vector<8x1024xi32>
    %6 = arith.cmpi ne, %4, %5 : vector<8x1024xi32>
    %c0_i32_1 = arith.constant 0 : i32
    %7 = vector.broadcast %c0_i32_1 : i32 to vector<8x1024xi32>
    %8 = arith.cmpi slt, %4, %7 : vector<8x1024xi32>
    %c0_i32_2 = arith.constant 0 : i32
    %9 = arith.cmpi slt, %2, %c0_i32_2 : i32
    %10 = vector.broadcast %9 : i1 to vector<8x1024xi1>
    %11 = vector.broadcast %10 : vector<8x1024xi1> to vector<8x1024xi1>
    %12 = arith.xori %8, %11 : vector<8x1024xi1>
    %13 = arith.andi %12, %6 : vector<8x1024xi1>
    %14 = vector.broadcast %2 : i32 to vector<8x1024xi32>
    %15 = arith.addi %4, %14 : vector<8x1024xi32>
    %16 = arith.select %13, %15, %4 : vector<8x1024xi1>, vector<8x1024xi32>
    %c0_i32_3 = arith.constant 0 : i32
    %17 = vector.broadcast %c0_i32_3 : i32 to vector<8x1024xi32>
    %18 = arith.cmpi sgt, %16, %17 : vector<8x1024xi32>
    %c31_i32 = arith.constant 31 : i32
    %19 = vector.broadcast %c31_i32 : i32 to vector<8x1024xi32>
    %20 = arith.cmpi slt, %16, %19 : vector<8x1024xi32>
    %cst = arith.constant 0.000000e+00 : f32
    %21 = vector.broadcast %cst : f32 to vector<12x1024xf32>
    %c0 = arith.constant 0 : index
    %c0_4 = arith.constant 0 : index
    %c0_5 = arith.constant 0 : index
    %22 = vector.load %arg1[%c0, %c0_4, %c0_5] : memref<1x8x1090xbf16, #tpu.memory_space<vmem>>, vector<1x8x1024xbf16>
    %23 = vector.shape_cast %22 : vector<1x8x1024xbf16> to vector<8x1024xbf16>
    %cst_6 = arith.constant 0.000000e+00 : bf16
    %24 = vector.broadcast %cst_6 : bf16 to vector<8x1024xbf16>
    %25 = arith.select %18, %23, %24 : vector<8x1024xi1>, vector<8x1024xbf16>
    %c0_7 = arith.constant 0 : index
    %c0_8 = arith.constant 0 : index
    %c0_9 = arith.constant 0 : index
    %26 = vector.load %arg2[%c0_7, %c0_8, %c0_9] : memref<9x12x8xbf16, #tpu.memory_space<vmem>>, vector<1x12x8xbf16>
    %27 = vector.shape_cast %26 : vector<1x12x8xbf16> to vector<12x8xbf16>
    %cst_10 = arith.constant dense<0.000000e+00> : vector<12x1024xf32>
    %28 = tpu.matmul %27, %25, %cst_10 {dimension_numbers = #tpu.dot_dimension_numbers<[1], [0], [0], [1], [0, 0, 1, 1], [], []>} : vector<12x8xbf16>, vector<8x1024xbf16>, vector<12x1024xf32> -> vector<12x1024xf32>
    %29 = arith.addf %21, %28 : vector<12x1024xf32>
    %c0_11 = arith.constant 0 : index
    %c0_12 = arith.constant 0 : index
    %c1 = arith.constant 1 : index
    %30 = vector.load %arg1[%c0_11, %c0_12, %c1] : memref<1x8x1090xbf16, #tpu.memory_space<vmem>>, vector<1x8x1024xbf16>
    %31 = vector.shape_cast %30 : vector<1x8x1024xbf16> to vector<8x1024xbf16>
    %c1_13 = arith.constant 1 : index
    %c0_14 = arith.constant 0 : index
    %c0_15 = arith.constant 0 : index
    %32 = vector.load %arg2[%c1_13, %c0_14, %c0_15] : memref<9x12x8xbf16, #tpu.memory_space<vmem>>, vector<1x12x8xbf16>
    %33 = vector.shape_cast %32 : vector<1x12x8xbf16> to vector<12x8xbf16>
    %cst_16 = arith.constant dense<0.000000e+00> : vector<12x1024xf32>
    %34 = tpu.matmul %33, %31, %cst_16 {dimension_numbers = #tpu.dot_dimension_numbers<[1], [0], [0], [1], [0, 0, 1, 1], [], []>} : vector<12x8xbf16>, vector<8x1024xbf16>, vector<12x1024xf32> -> vector<12x1024xf32>
    %35 = arith.addf %29, %34 : vector<12x1024xf32>
    %c0_17 = arith.constant 0 : index
    %c0_18 = arith.constant 0 : index
    %c2 = arith.constant 2 : index
    %36 = vector.load %arg1[%c0_17, %c0_18, %c2] : memref<1x8x1090xbf16, #tpu.memory_space<vmem>>, vector<1x8x1024xbf16>
    %37 = vector.shape_cast %36 : vector<1x8x1024xbf16> to vector<8x1024xbf16>
    %cst_19 = arith.constant 0.000000e+00 : bf16
    %38 = vector.broadcast %cst_19 : bf16 to vector<8x1024xbf16>
    %39 = arith.select %20, %37, %38 : vector<8x1024xi1>, vector<8x1024xbf16>
    %c2_20 = arith.constant 2 : index
    %c0_21 = arith.constant 0 : index
    %c0_22 = arith.constant 0 : index
    %40 = vector.load %arg2[%c2_20, %c0_21, %c0_22] : memref<9x12x8xbf16, #tpu.memory_space<vmem>>, vector<1x12x8xbf16>
    %41 = vector.shape_cast %40 : vector<1x12x8xbf16> to vector<12x8xbf16>
    %cst_23 = arith.constant dense<0.000000e+00> : vector<12x1024xf32>
    %42 = tpu.matmul %41, %39, %cst_23 {dimension_numbers = #tpu.dot_dimension_numbers<[1], [0], [0], [1], [0, 0, 1, 1], [], []>} : vector<12x8xbf16>, vector<8x1024xbf16>, vector<12x1024xf32> -> vector<12x1024xf32>
    %43 = arith.addf %35, %42 : vector<12x1024xf32>
    %c0_24 = arith.constant 0 : index
    %c0_25 = arith.constant 0 : index
    %c32 = arith.constant 32 : index
    %44 = vector.load %arg1[%c0_24, %c0_25, %c32] : memref<1x8x1090xbf16, #tpu.memory_space<vmem>>, vector<1x8x1024xbf16>
    %45 = vector.shape_cast %44 : vector<1x8x1024xbf16> to vector<8x1024xbf16>
    %cst_26 = arith.constant 0.000000e+00 : bf16
    %46 = vector.broadcast %cst_26 : bf16 to vector<8x1024xbf16>
    %47 = arith.select %18, %45, %46 : vector<8x1024xi1>, vector<8x1024xbf16>
    %c3 = arith.constant 3 : index
    %c0_27 = arith.constant 0 : index
    %c0_28 = arith.constant 0 : index
    %48 = vector.load %arg2[%c3, %c0_27, %c0_28] : memref<9x12x8xbf16, #tpu.memory_space<vmem>>, vector<1x12x8xbf16>
    %49 = vector.shape_cast %48 : vector<1x12x8xbf16> to vector<12x8xbf16>
    %cst_29 = arith.constant dense<0.000000e+00> : vector<12x1024xf32>
    %50 = tpu.matmul %49, %47, %cst_29 {dimension_numbers = #tpu.dot_dimension_numbers<[1], [0], [0], [1], [0, 0, 1, 1], [], []>} : vector<12x8xbf16>, vector<8x1024xbf16>, vector<12x1024xf32> -> vector<12x1024xf32>
    %51 = arith.addf %43, %50 : vector<12x1024xf32>
    %c0_30 = arith.constant 0 : index
    %c0_31 = arith.constant 0 : index
    %c33 = arith.constant 33 : index
    %52 = vector.load %arg1[%c0_30, %c0_31, %c33] : memref<1x8x1090xbf16, #tpu.memory_space<vmem>>, vector<1x8x1024xbf16>
    %53 = vector.shape_cast %52 : vector<1x8x1024xbf16> to vector<8x1024xbf16>
    %c4 = arith.constant 4 : index
    %c0_32 = arith.constant 0 : index
    %c0_33 = arith.constant 0 : index
    %54 = vector.load %arg2[%c4, %c0_32, %c0_33] : memref<9x12x8xbf16, #tpu.memory_space<vmem>>, vector<1x12x8xbf16>
    %55 = vector.shape_cast %54 : vector<1x12x8xbf16> to vector<12x8xbf16>
    %cst_34 = arith.constant dense<0.000000e+00> : vector<12x1024xf32>
    %56 = tpu.matmul %55, %53, %cst_34 {dimension_numbers = #tpu.dot_dimension_numbers<[1], [0], [0], [1], [0, 0, 1, 1], [], []>} : vector<12x8xbf16>, vector<8x1024xbf16>, vector<12x1024xf32> -> vector<12x1024xf32>
    %57 = arith.addf %51, %56 : vector<12x1024xf32>
    %c0_35 = arith.constant 0 : index
    %c0_36 = arith.constant 0 : index
    %c34 = arith.constant 34 : index
    %58 = vector.load %arg1[%c0_35, %c0_36, %c34] : memref<1x8x1090xbf16, #tpu.memory_space<vmem>>, vector<1x8x1024xbf16>
    %59 = vector.shape_cast %58 : vector<1x8x1024xbf16> to vector<8x1024xbf16>
    %cst_37 = arith.constant 0.000000e+00 : bf16
    %60 = vector.broadcast %cst_37 : bf16 to vector<8x1024xbf16>
    %61 = arith.select %20, %59, %60 : vector<8x1024xi1>, vector<8x1024xbf16>
    %c5 = arith.constant 5 : index
    %c0_38 = arith.constant 0 : index
    %c0_39 = arith.constant 0 : index
    %62 = vector.load %arg2[%c5, %c0_38, %c0_39] : memref<9x12x8xbf16, #tpu.memory_space<vmem>>, vector<1x12x8xbf16>
    %63 = vector.shape_cast %62 : vector<1x12x8xbf16> to vector<12x8xbf16>
    %cst_40 = arith.constant dense<0.000000e+00> : vector<12x1024xf32>
    %64 = tpu.matmul %63, %61, %cst_40 {dimension_numbers = #tpu.dot_dimension_numbers<[1], [0], [0], [1], [0, 0, 1, 1], [], []>} : vector<12x8xbf16>, vector<8x1024xbf16>, vector<12x1024xf32> -> vector<12x1024xf32>
    %65 = arith.addf %57, %64 : vector<12x1024xf32>
    %c0_41 = arith.constant 0 : index
    %c0_42 = arith.constant 0 : index
    %c64 = arith.constant 64 : index
    %66 = vector.load %arg1[%c0_41, %c0_42, %c64] : memref<1x8x1090xbf16, #tpu.memory_space<vmem>>, vector<1x8x1024xbf16>
    %67 = vector.shape_cast %66 : vector<1x8x1024xbf16> to vector<8x1024xbf16>
    %cst_43 = arith.constant 0.000000e+00 : bf16
    %68 = vector.broadcast %cst_43 : bf16 to vector<8x1024xbf16>
    %69 = arith.select %18, %67, %68 : vector<8x1024xi1>, vector<8x1024xbf16>
    %c6 = arith.constant 6 : index
    %c0_44 = arith.constant 0 : index
    %c0_45 = arith.constant 0 : index
    %70 = vector.load %arg2[%c6, %c0_44, %c0_45] : memref<9x12x8xbf16, #tpu.memory_space<vmem>>, vector<1x12x8xbf16>
    %71 = vector.shape_cast %70 : vector<1x12x8xbf16> to vector<12x8xbf16>
    %cst_46 = arith.constant dense<0.000000e+00> : vector<12x1024xf32>
    %72 = tpu.matmul %71, %69, %cst_46 {dimension_numbers = #tpu.dot_dimension_numbers<[1], [0], [0], [1], [0, 0, 1, 1], [], []>} : vector<12x8xbf16>, vector<8x1024xbf16>, vector<12x1024xf32> -> vector<12x1024xf32>
    %73 = arith.addf %65, %72 : vector<12x1024xf32>
    %c0_47 = arith.constant 0 : index
    %c0_48 = arith.constant 0 : index
    %c65 = arith.constant 65 : index
    %74 = vector.load %arg1[%c0_47, %c0_48, %c65] : memref<1x8x1090xbf16, #tpu.memory_space<vmem>>, vector<1x8x1024xbf16>
    %75 = vector.shape_cast %74 : vector<1x8x1024xbf16> to vector<8x1024xbf16>
    %c7 = arith.constant 7 : index
    %c0_49 = arith.constant 0 : index
    %c0_50 = arith.constant 0 : index
    %76 = vector.load %arg2[%c7, %c0_49, %c0_50] : memref<9x12x8xbf16, #tpu.memory_space<vmem>>, vector<1x12x8xbf16>
    %77 = vector.shape_cast %76 : vector<1x12x8xbf16> to vector<12x8xbf16>
    %cst_51 = arith.constant dense<0.000000e+00> : vector<12x1024xf32>
    %78 = tpu.matmul %77, %75, %cst_51 {dimension_numbers = #tpu.dot_dimension_numbers<[1], [0], [0], [1], [0, 0, 1, 1], [], []>} : vector<12x8xbf16>, vector<8x1024xbf16>, vector<12x1024xf32> -> vector<12x1024xf32>
    %79 = arith.addf %73, %78 : vector<12x1024xf32>
    %c0_52 = arith.constant 0 : index
    %c0_53 = arith.constant 0 : index
    %c66 = arith.constant 66 : index
    %80 = vector.load %arg1[%c0_52, %c0_53, %c66] : memref<1x8x1090xbf16, #tpu.memory_space<vmem>>, vector<1x8x1024xbf16>
    %81 = vector.shape_cast %80 : vector<1x8x1024xbf16> to vector<8x1024xbf16>
    %cst_54 = arith.constant 0.000000e+00 : bf16
    %82 = vector.broadcast %cst_54 : bf16 to vector<8x1024xbf16>
    %83 = arith.select %20, %81, %82 : vector<8x1024xi1>, vector<8x1024xbf16>
    %c8 = arith.constant 8 : index
    %c0_55 = arith.constant 0 : index
    %c0_56 = arith.constant 0 : index
    %84 = vector.load %arg2[%c8, %c0_55, %c0_56] : memref<9x12x8xbf16, #tpu.memory_space<vmem>>, vector<1x12x8xbf16>
    %85 = vector.shape_cast %84 : vector<1x12x8xbf16> to vector<12x8xbf16>
    %cst_57 = arith.constant dense<0.000000e+00> : vector<12x1024xf32>
    %86 = tpu.matmul %85, %83, %cst_57 {dimension_numbers = #tpu.dot_dimension_numbers<[1], [0], [0], [1], [0, 0, 1, 1], [], []>} : vector<12x8xbf16>, vector<8x1024xbf16>, vector<12x1024xf32> -> vector<12x1024xf32>
    %87 = arith.addf %79, %86 : vector<12x1024xf32>
    %c0_58 = arith.constant 0 : index
    %c0_59 = arith.constant 0 : index
    %88 = vector.load %arg3[%c0_58, %c0_59] : memref<12x1xf32, #tpu.memory_space<vmem>>, vector<12x1xf32>
    %89 = vector.broadcast %88 : vector<12x1xf32> to vector<12x1024xf32>
    %90 = arith.addf %87, %89 : vector<12x1024xf32>
    %91 = math.tanh %90 : vector<12x1024xf32>
    %c0_60 = arith.constant 0 : index
    %c0_61 = arith.constant 0 : index
    %c0_62 = arith.constant 0 : index
    %92 = vector.load %arg4[%c0_60, %c0_61, %c0_62] : memref<1x12x1024xf32, #tpu.memory_space<vmem>>, vector<1x12x1024xf32>
    %93 = vector.shape_cast %92 : vector<1x12x1024xf32> to vector<12x1024xf32>
    %94 = vector.shape_cast %91 : vector<12x1024xf32> to vector<1x12x1024xf32>
    tpu.vector_store %arg4[%c0_60, %c0_61, %c0_62], %94 {strides = array<i32>} : memref<1x12x1024xf32, #tpu.memory_space<vmem>>, vector<1x12x1024xf32>,
    return
  }
  func.func @transform_0(%arg0: i32) -> (i32, i32, i32) {
    %c0_i32 = arith.constant 0 : i32
    %c0_i32_0 = arith.constant 0 : i32
    %c0_i32_1 = arith.constant 0 : i32
    return %arg0, %c0_i32, %c0_i32_0 : i32, i32, i32
  }
  func.func @transform_1(%arg0: i32) -> (i32, i32, i32) {
    %c0_i32 = arith.constant 0 : i32
    %c0_i32_0 = arith.constant 0 : i32
    %c0_i32_1 = arith.constant 0 : i32
    %c0_i32_2 = arith.constant 0 : i32
    return %c0_i32, %c0_i32_0, %c0_i32_1 : i32, i32, i32
  }
  func.func @transform_2(%arg0: i32) -> (i32, i32) {
    %c0_i32 = arith.constant 0 : i32
    %c0_i32_0 = arith.constant 0 : i32
    %c0_i32_1 = arith.constant 0 : i32
    return %c0_i32, %c0_i32_0 : i32, i32
  }
  func.func @transform_3(%arg0: i32) -> (i32, i32, i32) {
    %c0_i32 = arith.constant 0 : i32
    %c0_i32_0 = arith.constant 0 : i32
    %c0_i32_1 = arith.constant 0 : i32
    return %arg0, %c0_i32, %c0_i32_0 : i32, i32, i32
  }
}

</mosaic_0001>

<llo_original>
// kernel: generator_forward.5
$region0: #{generator_forward.5}
  #allocation0 [shape = 'u32[]', space=smem, size = 0x4, offset = 0x4, fixed_abs, tag = 'smem constant byte address 0x4 - core index']
  #allocation1 [shape = 'u32[144,128]{1,0:T(1,128)}', space=vmem, size = 0x12000, scoped, tag = 'internal scratch']
  %s0 = inlined_call_operand.vmem [shape: bf16[2,16], index: 0, kind: input, shape index: {}]
  %s1 = inlined_call_operand.vmem [shape: bf16[16,1024], index: 1, kind: input, shape index: {}]
  %s2 = inlined_call_operand.vmem [shape: f32[1024,64], index: 2, kind: input, shape index: {}]
  %s3 = inlined_call_operand.vmem [shape: f32[64,1024], index: 3, kind: input, shape index: {}]
  %s4 = inlined_call_operand.vmem [shape: f32[1,1024], index: 4, kind: input, shape index: {}]
  %s5 = inlined_call_operand.vmem [shape: f32[1,1024], index: 5, kind: input, shape index: {}]
  %s6 = inlined_call_operand.vmem [shape: bf16[2,1024], index: 6, kind: output, shape index: {}]
  %s7 = sld [smem:[#allocation0]]
  $region34: #{generator_forward.5} parent=0
    _
  %s9 = ssub.s32 1, %s7
  %s10 = scalar_select 0, %s9, %s7
  // Predicated region
  $region2: #{generator_forward.5} parent=0 // pred_check
    _
  $region3: #{generator_forward.5} parent=0 // pred_check_branch
    %12 = sbr.rel (0) target = $region5
  $region4: #{generator_forward.5} parent=0 // pred_region
    _
  $region5: #{generator_forward.5} parent=0 // pred_fallthru
    _
  // Predicated region
  $region6: #{generator_forward.5} parent=0 // pred_check
    _
  $region7: #{generator_forward.5} parent=0 // pred_check_branch
    %14 = sbr.rel (0) target = $region9
  $region8: #{generator_forward.5} parent=0 // pred_region
    _
  $region9: #{generator_forward.5} parent=0 // pred_fallthru
    _
  // Predicated region
  $region10: #{generator_forward.5} parent=0 // pred_check
    _
  $region11: #{generator_forward.5} parent=0 // pred_check_branch
    %16 = sbr.rel (0) target = $region13
  $region12: #{generator_forward.5} parent=0 // pred_region
    _
  $region13: #{generator_forward.5} parent=0 // pred_fallthru
    _
  // Predicated region
  $region14: #{generator_forward.5} parent=0 // pred_check
    _
  $region15: #{generator_forward.5} parent=0 // pred_check_branch
    %18 = sbr.rel (0) target = $region17
  $region16: #{generator_forward.5} parent=0 // pred_region
    _
  $region17: #{generator_forward.5} parent=0 // pred_fallthru
    _
  // Predicated region
  $region18: #{generator_forward.5} parent=0 // pred_check
    _
  $region19: #{generator_forward.5} parent=0 // pred_check_branch
    %20 = sbr.rel (0) target = $region21
  $region20: #{generator_forward.5} parent=0 // pred_region
    _
  $region21: #{generator_forward.5} parent=0 // pred_fallthru
    _
  // Predicated region
  $region22: #{generator_forward.5} parent=0 // pred_check
    _
  $region23: #{generator_forward.5} parent=0 // pred_check_branch
    %22 = sbr.rel (0) target = $region25
  $region24: #{generator_forward.5} parent=0 // pred_region
    _
  $region25: #{generator_forward.5} parent=0 // pred_fallthru
    _
  %v24 = vld [vmem:[%s0] sm:$0x1]
  %v25 = vld [vmem:[%s1] sm:$0xff]
  %v26 = vld [vmem:[%s1 + $0x8] sm:$0xff]
  %v27 = vld [vmem:[%s1 + $0x10] sm:$0xff]
  %v28 = vld [vmem:[%s1 + $0x18] sm:$0xff]
  %v29 = vld [vmem:[%s1 + $0x20] sm:$0xff]
  %v30 = vld [vmem:[%s1 + $0x28] sm:$0xff]
  %v31 = vld [vmem:[%s1 + $0x30] sm:$0xff]
  %v32 = vld [vmem:[%s1 + $0x38] sm:$0xff]
  %v41 = vunpack.c.l.b16 %v25
  %v42 = vunpack.c.h.b16 %v25
  %v43 = vunpack.c.l.b16 %v26
  %v44 = vunpack.c.h.b16 %v26
  %v45 = vunpack.c.l.b16 %v27
  %v46 = vunpack.c.h.b16 %v27
  %v47 = vunpack.c.l.b16 %v28
  %v48 = vunpack.c.h.b16 %v28
  %v49 = vunpack.c.l.b16 %v29
  %v50 = vunpack.c.h.b16 %v29
  %v51 = vunpack.c.l.b16 %v30
  %v52 = vunpack.c.h.b16 %v30
  %v53 = vunpack.c.l.b16 %v31
  %v54 = vunpack.c.h.b16 %v31
  %v55 = vunpack.c.l.b16 %v32
  %v56 = vunpack.c.h.b16 %v32
  %v57 = vpack.c.b16 %v49, %v41
  %v58 = vpack.c.b16 %v50, %v42
  %v59 = vpack.c.b16 %v51, %v43
  %v60 = vpack.c.b16 %v52, %v44
  %v61 = vpack.c.b16 %v53, %v45
  %v62 = vpack.c.b16 %v54, %v46
  %v63 = vpack.c.b16 %v55, %v47
  %v64 = vpack.c.b16 %v56, %v48
  %vm73 = vcmask 130048
  %v75 = vsel %vm73, %v24, 0
  %77 = vmatprep.subr.bf16.mxu0 %v58
  %78 = vmatpush1.bf16.msra.mxu0 %v57
  %79 = vmatprep.subr.bf16.mxu0 0
  %80 = vmatpush1.bf16.msra.mxu0 0
  %81 = vmatprep.subr.bf16.mxu0 0
  %82 = vmatpush1.bf16.msra.mxu0 0
  %83 = vmatprep.subr.bf16.mxu0 0
  %84 = vmatpush1.bf16.msra.mxu0 0
  %85 = vmatprep.subr.bf16.mxu0 0
  %86 = vmatpush1.bf16.msra.mxu0 0
  %87 = vmatprep.subr.bf16.mxu0 0
  %88 = vmatpush1.bf16.msra.mxu0 0
  %89 = vmatprep.subr.bf16.mxu0 0
  %90 = vmatpush1.bf16.msra.mxu0 0
  %91 = vmatprep.subr.bf16.mxu0 0
  %92 = vmatpush1.bf16.msra.mxu0 0
  %93 = vmatprep.subr.bf16.mxu0 0
  %94 = vmatpush1.bf16.msra.mxu0 0
  %95 = vmatprep.subr.bf16.mxu0 0
  %96 = vmatpush1.bf16.msra.mxu0 0
  %97 = vmatprep.subr.bf16.mxu0 0
  %98 = vmatpush1.bf16.msra.mxu0 0
  %99 = vmatprep.subr.bf16.mxu0 0
  %100 = vmatpush1.bf16.msra.mxu0 0
  %101 = vmatprep.subr.bf16.mxu0 0
  %102 = vmatpush1.bf16.msra.mxu0 0
  %103 = vmatprep.subr.bf16.mxu0 0
  %104 = vmatpush1.bf16.msra.mxu0 0
  %105 = vmatprep.subr.bf16.mxu0 0
  %106 = vmatpush1.bf16.msra.mxu0 0
  %107 = vmatprep.subr.bf16.mxu0 0
  %108 = vmatpush1.bf16.msra.mxu0 0
  %109 = vmatprep.mubr.bf16.mxu0 0
  %110 = vmatmul.mubr.bf16.gmra.mrb[0].mxu0 %v75
  %v111 = vpop.f32.mrb[0].mxu0
  %v112 = vadd.f32 0.0, %v111
  %v113 = vpop.f32.mrb[0].mxu0
  %v114 = vadd.f32 0.0, %v113
  %v115 = vpop.f32.mrb[0].mxu0
  %v116 = vpop.f32.mrb[0].mxu0
  %117 = vdwg.mxu0
  %118 = vmatprep.subr.bf16.mxu0 %v60
  %119 = vmatpush1.bf16.msra.mxu0 %v59
  %120 = vmatprep.subr.bf16.mxu0 0
  %121 = vmatpush1.bf16.msra.mxu0 0
  %122 = vmatprep.subr.bf16.mxu0 0
  %123 = vmatpush1.bf16.msra.mxu0 0
  %124 = vmatprep.subr.bf16.mxu0 0
  %125 = vmatpush1.bf16.msra.mxu0 0
  %126 = vmatprep.subr.bf16.mxu0 0
  %127 = vmatpush1.bf16.msra.mxu0 0
  %128 = vmatprep.subr.bf16.mxu0 0
  %129 = vmatpush1.bf16.msra.mxu0 0
  %130 = vmatprep.subr.bf16.mxu0 0
  %131 = vmatpush1.bf16.msra.mxu0 0
  %132 = vmatprep.subr.bf16.mxu0 0
  %133 = vmatpush1.bf16.msra.mxu0 0
  %134 = vmatprep.subr.bf16.mxu0 0
  %135 = vmatpush1.bf16.msra.mxu0 0
  %136 = vmatprep.subr.bf16.mxu0 0
  %137 = vmatpush1.bf16.msra.mxu0 0
  %138 = vmatprep.subr.bf16.mxu0 0
  %139 = vmatpush1.bf16.msra.mxu0 0
  %140 = vmatprep.subr.bf16.mxu0 0
  %141 = vmatpush1.bf16.msra.mxu0 0
  %142 = vmatprep.subr.bf16.mxu0 0
  %143 = vmatpush1.bf16.msra.mxu0 0
  %144 = vmatprep.subr.bf16.mxu0 0
  %145 = vmatpush1.bf16.msra.mxu0 0
  %146 = vmatprep.subr.bf16.mxu0 0
  %147 = vmatpush1.bf16.msra.mxu0 0
  %148 = vmatprep.subr.bf16.mxu0 0
  %149 = vmatpush1.bf16.msra.mxu0 0
  %150 = vmatprep.mubr.bf16.mxu0 0
  %151 = vmatmul.mubr.bf16.gmra.mrb[0].mxu0 %v75
  %v152 = vpop.f32.mrb[0].mxu0
  %v153 = vadd.f32 0.0, %v152
  %v154 = vpop.f32.mrb[0].mxu0
  %v155 = vadd.f32 0.0, %v154
  %v156 = vpop.f32.mrb[0].mxu0
  %v157 = vpop.f32.mrb[0].mxu0
  %158 = vdwg.mxu0
  %159 = vmatprep.subr.bf16.mxu0 %v62
  %160 = vmatpush1.bf16.msra.mxu0 %v61
  %161 = vmatprep.subr.bf16.mxu0 0
  %162 = vmatpush1.bf16.msra.mxu0 0
  %163 = vmatprep.subr.bf16.mxu0 0
  %164 = vmatpush1.bf16.msra.mxu0 0
  %165 = vmatprep.subr.bf16.mxu0 0
  %166 = vmatpush1.bf16.msra.mxu0 0
  %167 = vmatprep.subr.bf16.mxu0 0
  %168 = vmatpush1.bf16.msra.mxu0 0
  %169 = vmatprep.subr.bf16.mxu0 0
  %170 = vmatpush1.bf16.msra.mxu0 0
  %171 = vmatprep.subr.bf16.mxu0 0
  %172 = vmatpush1.bf16.msra.mxu0 0
  %173 = vmatprep.subr.bf16.mxu0 0
  %174 = vmatpush1.bf16.msra.mxu0 0
  %175 = vmatprep.subr.bf16.mxu0 0
  %176 = vmatpush1.bf16.msra.mxu0 0
  %177 = vmatprep.subr.bf16.mxu0 0
  %178 = vmatpush1.bf16.msra.mxu0 0
  %179 = vmatprep.subr.bf16.mxu0 0
  %180 = vmatpush1.bf16.msra.mxu0 0
  %181 = vmatprep.subr.bf16.mxu0 0
  %182 = vmatpush1.bf16.msra.mxu0 0
  %183 = vmatprep.subr.bf16.mxu0 0
  %184 = vmatpush1.bf16.msra.mxu0 0
  %185 = vmatprep.subr.bf16.mxu0 0
  %186 = vmatpush1.bf16.msra.mxu0 0
  %187 = vmatprep.subr.bf16.mxu0 0
  %188 = vmatpush1.bf16.msra.mxu0 0
  %189 = vmatprep.subr.bf16.mxu0 0
  %190 = vmatpush1.bf16.msra.mxu0 0
  %191 = vmatprep.mubr.bf16.mxu0 0
  %192 = vmatmul.mubr.bf16.gmra.mrb[0].mxu0 %v75
  %v193 = vpop.f32.mrb[0].mxu0
  %v194 = vadd.f32 0.0, %v193
  %v195 = vpop.f32.mrb[0].mxu0
  %v196 = vadd.f32 0.0, %v195
  %v197 = vpop.f32.mrb[0].mxu0
  %v198 = vpop.f32.mrb[0].mxu0
  %199 = vdwg.mxu0
  %200 = vmatprep.subr.bf16.mxu0 %v64
  %201 = vmatpush1.bf16.msra.mxu0 %v63
  %202 = vmatprep.subr.bf16.mxu0 0
  %203 = vmatpush1.bf16.msra.mxu0 0
  %204 = vmatprep.subr.bf16.mxu0 0
  %205 = vmatpush1.bf16.msra.mxu0 0
  %206 = vmatprep.subr.bf16.mxu0 0
  %207 = vmatpush1.bf16.msra.mxu0 0
  %208 = vmatprep.subr.bf16.mxu0 0
  %209 = vmatpush1.bf16.msra.mxu0 0
  %210 = vmatprep.subr.bf16.mxu0 0
  %211 = vmatpush1.bf16.msra.mxu0 0
  %212 = vmatprep.subr.bf16.mxu0 0
  %213 = vmatpush1.bf16.msra.mxu0 0
  %214 = vmatprep.subr.bf16.mxu0 0
  %215 = vmatpush1.bf16.msra.mxu0 0
  %216 = vmatprep.subr.bf16.mxu0 0
  %217 = vmatpush1.bf16.msra.mxu0 0
  %218 = vmatprep.subr.bf16.mxu0 0
  %219 = vmatpush1.bf16.msra.mxu0 0
  %220 = vmatprep.subr.bf16.mxu0 0
  %221 = vmatpush1.bf16.msra.mxu0 0
  %222 = vmatprep.subr.bf16.mxu0 0
  %223 = vmatpush1.bf16.msra.mxu0 0
  %224 = vmatprep.subr.bf16.mxu0 0
  %225 = vmatpush1.bf16.msra.mxu0 0
  %226 = vmatprep.subr.bf16.mxu0 0
  %227 = vmatpush1.bf16.msra.mxu0 0
  %228 = vmatprep.subr.bf16.mxu0 0
  %229 = vmatpush1.bf16.msra.mxu0 0
  %230 = vmatprep.subr.bf16.mxu0 0
  %231 = vmatpush1.bf16.msra.mxu0 0
  %232 = vmatprep.mubr.bf16.mxu0 0
  %233 = vmatmul.mubr.bf16.gmra.mrb[0].mxu0 %v75
  %v234 = vpop.f32.mrb[0].mxu0
  %v235 = vadd.f32 0.0, %v234
  %v236 = vpop.f32.mrb[0].mxu0
  %v237 = vadd.f32 0.0, %v236
  %v238 = vpop.f32.mrb[0].mxu0
  %v239 = vpop.f32.mrb[0].mxu0
  %240 = vdwg.mxu0
  %v241 = vld [vmem:[%s2] sm:$0xff]
  %v242 = vld [vmem:[%s2 + $0x8] sm:$0xff]
  %v243 = vld [vmem:[%s2 + $0x10] sm:$0xff]
  %v244 = vld [vmem:[%s2 + $0x18] sm:$0xff]
  %v245 = vld [vmem:[%s2 + $0x20] sm:$0xff]
  %v246 = vld [vmem:[%s2 + $0x28] sm:$0xff]
  %v247 = vld [vmem:[%s2 + $0x30] sm:$0xff]
  %v248 = vld [vmem:[%s2 + $0x38] sm:$0xff]
  %v249 = vld [vmem:[%s2 + $0x40] sm:$0xff]
  %v250 = vld [vmem:[%s2 + $0x48] sm:$0xff]
  %v251 = vld [vmem:[%s2 + $0x50] sm:$0xff]
  %v252 = vld [vmem:[%s2 + $0x58] sm:$0xff]
  %v253 = vld [vmem:[%s2 + $0x60] sm:$0xff]
  %v254 = vld [vmem:[%s2 + $0x68] sm:$0xff]
  %v255 = vld [vmem:[%s2 + $0x70] sm:$0xff]
  %v256 = vld [vmem:[%s2 + $0x78] sm:$0xff]
  %v257 = vld [vmem:[%s2 + $0x80] sm:$0xff]
  %v258 = vld [vmem:[%s2 + $0x88] sm:$0xff]
  %v259 = vld [vmem:[%s2 + $0x90] sm:$0xff]
  %v260 = vld [vmem:[%s2 + $0x98] sm:$0xff]
  %v261 = vld [vmem:[%s2 + $0xa0] sm:$0xff]
  %v262 = vld [vmem:[%s2 + $0xa8] sm:$0xff]
  %v263 = vld [vmem:[%s2 + $0xb0] sm:$0xff]
  %v264 = vld [vmem:[%s2 + $0xb8] sm:$0xff]
  %v265 = vld [vmem:[%s2 + $0xc0] sm:$0xff]
  %v266 = vld [vmem:[%s2 + $0xc8] sm:$0xff]
  %v267 = vld [vmem:[%s2 + $0xd0] sm:$0xff]
  %v268 = vld [vmem:[%s2 + $0xd8] sm:$0xff]
  %v269 = vld [vmem:[%s2 + $0xe0] sm:$0xff]
  %v270 = vld [vmem:[%s2 + $0xe8] sm:$0xff]
  %v271 = vld [vmem:[%s2 + $0xf0] sm:$0xff]
  %v272 = vld [vmem:[%s2 + $0xf8] sm:$0xff]
  %v273 = vld [vmem:[%s2 + $0x100] sm:$0xff]
  %v274 = vld [vmem:[%s2 + $0x108] sm:$0xff]
  %v275 = vld [vmem:[%s2 + $0x110] sm:$0xff]
  %v276 = vld [vmem:[%s2 + $0x118] sm:$0xff]
  %v277 = vld [vmem:[%s2 + $0x120] sm:$0xff]
  %v278 = vld [vmem:[%s2 + $0x128] sm:$0xff]
  %v279 = vld [vmem:[%s2 + $0x130] sm:$0xff]
  %v280 = vld [vmem:[%s2 + $0x138] sm:$0xff]
  %v281 = vld [vmem:[%s2 + $0x140] sm:$0xff]
  %v282 = vld [vmem:[%s2 + $0x148] sm:$0xff]
  %v283 = vld [vmem:[%s2 + $0x150] sm:$0xff]
  %v284 = vld [vmem:[%s2 + $0x158] sm:$0xff]
  %v285 = vld [vmem:[%s2 + $0x160] sm:$0xff]
  %v286 = vld [vmem:[%s2 + $0x168] sm:$0xff]
  %v287 = vld [vmem:[%s2 + $0x170] sm:$0xff]
  %v288 = vld [vmem:[%s2 + $0x178] sm:$0xff]
  %v289 = vld [vmem:[%s2 + $0x180] sm:$0xff]
  %v290 = vld [vmem:[%s2 + $0x188] sm:$0xff]
  %v291 = vld [vmem:[%s2 + $0x190] sm:$0xff]
  %v292 = vld [vmem:[%s2 + $0x198] sm:$0xff]
  %v293 = vld [vmem:[%s2 + $0x1a0] sm:$0xff]
  %v294 = vld [vmem:[%s2 + $0x1a8] sm:$0xff]
  %v295 = vld [vmem:[%s2 + $0x1b0] sm:$0xff]
  %v296 = vld [vmem:[%s2 + $0x1b8] sm:$0xff]
  %v297 = vld [vmem:[%s2 + $0x1c0] sm:$0xff]
  %v298 = vld [vmem:[%s2 + $0x1c8] sm:$0xff]
  %v299 = vld [vmem:[%s2 + $0x1d0] sm:$0xff]
  %v300 = vld [vmem:[%s2 + $0x1d8] sm:$0xff]
  %v301 = vld [vmem:[%s2 + $0x1e0] sm:$0xff]
  %v302 = vld [vmem:[%s2 + $0x1e8] sm:$0xff]
  %v303 = vld [vmem:[%s2 + $0x1f0] sm:$0xff]
  %v304 = vld [vmem:[%s2 + $0x1f8] sm:$0xff]
  %v305 = vld [vmem:[%s2 + $0x200] sm:$0xff]
  %v306 = vld [vmem:[%s2 + $0x208] sm:$0xff]
  %v307 = vld [vmem:[%s2 + $0x210] sm:$0xff]
  %v308 = vld [vmem:[%s2 + $0x218] sm:$0xff]
  %v309 = vld [vmem:[%s2 + $0x220] sm:$0xff]
  %v310 = vld [vmem:[%s2 + $0x228] sm:$0xff]
  %v311 = vld [vmem:[%s2 + $0x230] sm:$0xff]
  %v312 = vld [vmem:[%s2 + $0x238] sm:$0xff]
  %v313 = vld [vmem:[%s2 + $0x240] sm:$0xff]
  %v314 = vld [vmem:[%s2 + $0x248] sm:$0xff]
  %v315 = vld [vmem:[%s2 + $0x250] sm:$0xff]
  %v316 = vld [vmem:[%s2 + $0x258] sm:$0xff]
  %v317 = vld [vmem:[%s2 + $0x260] sm:$0xff]
  %v318 = vld [vmem:[%s2 + $0x268] sm:$0xff]
  %v319 = vld [vmem:[%s2 + $0x270] sm:$0xff]
  %v320 = vld [vmem:[%s2 + $0x278] sm:$0xff]
  %v321 = vld [vmem:[%s2 + $0x280] sm:$0xff]
  %v322 = vld [vmem:[%s2 + $0x288] sm:$0xff]
  %v323 = vld [vmem:[%s2 + $0x290] sm:$0xff]
  %v324 = vld [vmem:[%s2 + $0x298] sm:$0xff]
  %v325 = vld [vmem:[%s2 + $0x2a0] sm:$0xff]
  %v326 = vld [vmem:[%s2 + $0x2a8] sm:$0xff]
  %v327 = vld [vmem:[%s2 + $0x2b0] sm:$0xff]
  %v328 = vld [vmem:[%s2 + $0x2b8] sm:$0xff]
  %v329 = vld [vmem:[%s2 + $0x2c0] sm:$0xff]
  %v330 = vld [vmem:[%s2 + $0x2c8] sm:$0xff]
  %v331 = vld [vmem:[%s2 + $0x2d0] sm:$0xff]
  %v332 = vld [vmem:[%s2 + $0x2d8] sm:$0xff]
  %v333 = vld [vmem:[%s2 + $0x2e0] sm:$0xff]
  %v334 = vld [vmem:[%s2 + $0x2e8] sm:$0xff]
  %v335 = vld [vmem:[%s2 + $0x2f0] sm:$0xff]
  %v336 = vld [vmem:[%s2 + $0x2f8] sm:$0xff]
  %v337 = vld [vmem:[%s2 + $0x300] sm:$0xff]
  %v338 = vld [vmem:[%s2 + $0x308] sm:$0xff]
  %v339 = vld [vmem:[%s2 + $0x310] sm:$0xff]
  %v340 = vld [vmem:[%s2 + $0x318] sm:$0xff]
  %v341 = vld [vmem:[%s2 + $0x320] sm:$0xff]
  %v342 = vld [vmem:[%s2 + $0x328] sm:$0xff]
  %v343 = vld [vmem:[%s2 + $0x330] sm:$0xff]
  %v344 = vld [vmem:[%s2 + $0x338] sm:$0xff]
  %v345 = vld [vmem:[%s2 + $0x340] sm:$0xff]
  %v346 = vld [vmem:[%s2 + $0x348] sm:$0xff]
  %v347 = vld [vmem:[%s2 + $0x350] sm:$0xff]
  %v348 = vld [vmem:[%s2 + $0x358] sm:$0xff]
  %v349 = vld [vmem:[%s2 + $0x360] sm:$0xff]
  %v350 = vld [vmem:[%s2 + $0x368] sm:$0xff]
  %v351 = vld [vmem:[%s2 + $0x370] sm:$0xff]
  %v352 = vld [vmem:[%s2 + $0x378] sm:$0xff]
  %v353 = vld [vmem:[%s2 + $0x380] sm:$0xff]
  %v354 = vld [vmem:[%s2 + $0x388] sm:$0xff]
  %v355 = vld [vmem:[%s2 + $0x390] sm:$0xff]
  %v356 = vld [vmem:[%s2 + $0x398] sm:$0xff]
  %v357 = vld [vmem:[%s2 + $0x3a0] sm:$0xff]
  %v358 = vld [vmem:[%s2 + $0x3a8] sm:$0xff]
  %v359 = vld [vmem:[%s2 + $0x3b0] sm:$0xff]
  %v360 = vld [vmem:[%s2 + $0x3b8] sm:$0xff]
  %v361 = vld [vmem:[%s2 + $0x3c0] sm:$0xff]
  %v362 = vld [vmem:[%s2 + $0x3c8] sm:$0xff]
  %v363 = vld [vmem:[%s2 + $0x3d0] sm:$0xff]
  %v364 = vld [vmem:[%s2 + $0x3d8] sm:$0xff]
  %v365 = vld [vmem:[%s2 + $0x3e0] sm:$0xff]
  %v366 = vld [vmem:[%s2 + $0x3e8] sm:$0xff]
  %v367 = vld [vmem:[%s2 + $0x3f0] sm:$0xff]
  %v368 = vld [vmem:[%s2 + $0x3f8] sm:$0xff]
  %v369 = vld [vmem:[%s3] sm:$0xff]
  %v370 = vld [vmem:[%s3 + $0x8] sm:$0xff]
  %v371 = vld [vmem:[%s3 + $0x10] sm:$0xff]
  %v372 = vld [vmem:[%s3 + $0x18] sm:$0xff]
  %v373 = vld [vmem:[%s3 + $0x20] sm:$0xff]
  %v374 = vld [vmem:[%s3 + $0x28] sm:$0xff]
  %v375 = vld [vmem:[%s3 + $0x30] sm:$0xff]
  %v376 = vld [vmem:[%s3 + $0x38] sm:$0xff]
  %v377 = vld [vmem:[%s3 + $0x40] sm:$0xff]
  %v378 = vld [vmem:[%s3 + $0x48] sm:$0xff]
  %v379 = vld [vmem:[%s3 + $0x50] sm:$0xff]
  %v380 = vld [vmem:[%s3 + $0x58] sm:$0xff]
  %v381 = vld [vmem:[%s3 + $0x60] sm:$0xff]
  %v382 = vld [vmem:[%s3 + $0x68] sm:$0xff]
  %v383 = vld [vmem:[%s3 + $0x70] sm:$0xff]
  %v384 = vld [vmem:[%s3 + $0x78] sm:$0xff]
  %v385 = vld [vmem:[%s3 + $0x80] sm:$0xff]
  %v386 = vld [vmem:[%s3 + $0x88] sm:$0xff]
  %v387 = vld [vmem:[%s3 + $0x90] sm:$0xff]
  %v388 = vld [vmem:[%s3 + $0x98] sm:$0xff]
  %v389 = vld [vmem:[%s3 + $0xa0] sm:$0xff]
  %v390 = vld [vmem:[%s3 + $0xa8] sm:$0xff]
  %v391 = vld [vmem:[%s3 + $0xb0] sm:$0xff]
  %v392 = vld [vmem:[%s3 + $0xb8] sm:$0xff]
  %v393 = vld [vmem:[%s3 + $0xc0] sm:$0xff]
  %v394 = vld [vmem:[%s3 + $0xc8] sm:$0xff]
  %v395 = vld [vmem:[%s3 + $0xd0] sm:$0xff]
  %v396 = vld [vmem:[%s3 + $0xd8] sm:$0xff]
  %v397 = vld [vmem:[%s3 + $0xe0] sm:$0xff]
  %v398 = vld [vmem:[%s3 + $0xe8] sm:$0xff]
  %v399 = vld [vmem:[%s3 + $0xf0] sm:$0xff]
  %v400 = vld [vmem:[%s3 + $0xf8] sm:$0xff]
  %v401 = vld [vmem:[%s3 + $0x100] sm:$0xff]
  %v402 = vld [vmem:[%s3 + $0x108] sm:$0xff]
  %v403 = vld [vmem:[%s3 + $0x110] sm:$0xff]
  %v404 = vld [vmem:[%s3 + $0x118] sm:$0xff]
  %v405 = vld [vmem:[%s3 + $0x120] sm:$0xff]
  %v406 = vld [vmem:[%s3 + $0x128] sm:$0xff]
  %v407 = vld [vmem:[%s3 + $0x130] sm:$0xff]
  %v408 = vld [vmem:[%s3 + $0x138] sm:$0xff]
  %v409 = vld [vmem:[%s3 + $0x140] sm:$0xff]
  %v410 = vld [vmem:[%s3 + $0x148] sm:$0xff]
  %v411 = vld [vmem:[%s3 + $0x150] sm:$0xff]
  %v412 = vld [vmem:[%s3 + $0x158] sm:$0xff]
  %v413 = vld [vmem:[%s3 + $0x160] sm:$0xff]
  %v414 = vld [vmem:[%s3 + $0x168] sm:$0xff]
  %v415 = vld [vmem:[%s3 + $0x170] sm:$0xff]
  %v416 = vld [vmem:[%s3 + $0x178] sm:$0xff]
  %v417 = vld [vmem:[%s3 + $0x180] sm:$0xff]
  %v418 = vld [vmem:[%s3 + $0x188] sm:$0xff]
  %v419 = vld [vmem:[%s3 + $0x190] sm:$0xff]
  %v420 = vld [vmem:[%s3 + $0x198] sm:$0xff]
  %v421 = vld [vmem:[%s3 + $0x1a0] sm:$0xff]
  %v422 = vld [vmem:[%s3 + $0x1a8] sm:$0xff]
  %v423 = vld [vmem:[%s3 + $0x1b0] sm:$0xff]
  %v424 = vld [vmem:[%s3 + $0x1b8] sm:$0xff]
  %v425 = vld [vmem:[%s3 + $0x1c0] sm:$0xff]
  %v426 = vld [vmem:[%s3 + $0x1c8] sm:$0xff]
  %v427 = vld [vmem:[%s3 + $0x1d0] sm:$0xff]
  %v428 = vld [vmem:[%s3 + $0x1d8] sm:$0xff]
  %v429 = vld [vmem:[%s3 + $0x1e0] sm:$0xff]
  %v430 = vld [vmem:[%s3 + $0x1e8] sm:$0xff]
  %v431 = vld [vmem:[%s3 + $0x1f0] sm:$0xff]
  %v432 = vld [vmem:[%s3 + $0x1f8] sm:$0xff]
  %433 = vmatprep.subr.mxu0 0.0
  %434 = vmatpush1.msra.mxu0 %v241
  %435 = vmatprep.subr.mxu0 0.0
  %436 = vmatpush1.msra.mxu0 %v242
  %437 = vmatprep.subr.mxu0 0.0
  %438 = vmatpush1.msra.mxu0 %v243
  %439 = vmatprep.subr.mxu0 0.0
  %440 = vmatpush1.msra.mxu0 %v244
  %441 = vmatprep.subr.mxu0 0.0
  %442 = vmatpush1.msra.mxu0 %v245
  %443 = vmatprep.subr.mxu0 0.0
  %444 = vmatpush1.msra.mxu0 %v246
  %445 = vmatprep.subr.mxu0 0.0
  %446 = vmatpush1.msra.mxu0 %v247
  %447 = vmatprep.subr.mxu0 0.0
  %448 = vmatpush1.msra.mxu0 %v248
  %449 = vmatprep.subr.mxu0 0.0
  %450 = vmatpush1.msra.mxu0 %v249
  %451 = vmatprep.subr.mxu0 0.0
  %452 = vmatpush1.msra.mxu0 %v250
  %453 = vmatprep.subr.mxu0 0.0
  %454 = vmatpush1.msra.mxu0 %v251
  %455 = vmatprep.subr.mxu0 0.0
  %456 = vmatpush1.msra.mxu0 %v252
  %457 = vmatprep.subr.mxu0 0.0
  %458 = vmatpush1.msra.mxu0 %v253
  %459 = vmatprep.subr.mxu0 0.0
  %460 = vmatpush1.msra.mxu0 %v254
  %461 = vmatprep.subr.mxu0 0.0
  %462 = vmatpush1.msra.mxu0 %v255
  %463 = vmatprep.subr.mxu0 0.0
  %464 = vmatpush1.msra.mxu0 %v256
  %465 = vmatprep.subr.mxu0 0.0
  %466 = vmatpush1.msra.mxu0 %v257
  %467 = vmatprep.subr.mxu0 0.0
  %468 = vmatpush1.msra.mxu0 %v258
  %469 = vmatprep.subr.mxu0 0.0
  %470 = vmatpush1.msra.mxu0 %v259
  %471 = vmatprep.subr.mxu0 0.0
  %472 = vmatpush1.msra.mxu0 %v260
  %473 = vmatprep.subr.mxu0 0.0
  %474 = vmatpush1.msra.mxu0 %v261
  %475 = vmatprep.subr.mxu0 0.0
  %476 = vmatpush1.msra.mxu0 %v262
  %477 = vmatprep.subr.mxu0 0.0
  %478 = vmatpush1.msra.mxu0 %v263
  %479 = vmatprep.subr.mxu0 0.0
  %480 = vmatpush1.msra.mxu0 %v264
  %481 = vmatprep.subr.mxu0 0.0
  %482 = vmatpush1.msra.mxu0 %v265
  %483 = vmatprep.subr.mxu0 0.0
  %484 = vmatpush1.msra.mxu0 %v266
  %485 = vmatprep.subr.mxu0 0.0
  %486 = vmatpush1.msra.mxu0 %v267
  %487 = vmatprep.subr.mxu0 0.0
  %488 = vmatpush1.msra.mxu0 %v268
  %489 = vmatprep.subr.mxu0 0.0
  %490 = vmatpush1.msra.mxu0 %v269
  %491 = vmatprep.subr.mxu0 0.0
  %492 = vmatpush1.msra.mxu0 %v270
  %493 = vmatprep.subr.mxu0 0.0
  %494 = vmatpush1.msra.mxu0 %v271
  %495 = vmatprep.subr.mxu0 0.0
  %496 = vmatpush1.msra.mxu0 %v272
  %497 = vmatprep.mubr.f32.mxu0 %v114
  %498 = vmatmul.mubr.f32.gmra.mrb[0].mxu0 %v112
  %v499 = vpop.f32.mrb[0].mxu0
  %v500 = vadd.f32 0.0, %v499
  %v501 = vpop.f32.mrb[0].mxu0
  %502 = vdwg.mxu0
  %503 = vmatprep.subr.mxu0 0.0
  %504 = vmatpush1.msra.mxu0 %v273
  %505 = vmatprep.subr.mxu0 0.0
  %506 = vmatpush1.msra.mxu0 %v274
  %507 = vmatprep.subr.mxu0 0.0
  %508 = vmatpush1.msra.mxu0 %v275
  %509 = vmatprep.subr.mxu0 0.0
  %510 = vmatpush1.msra.mxu0 %v276
  %511 = vmatprep.subr.mxu0 0.0
  %512 = vmatpush1.msra.mxu0 %v277
  %513 = vmatprep.subr.mxu0 0.0
  %514 = vmatpush1.msra.mxu0 %v278
  %515 = vmatprep.subr.mxu0 0.0
  %516 = vmatpush1.msra.mxu0 %v279
  %517 = vmatprep.subr.mxu0 0.0
  %518 = vmatpush1.msra.mxu0 %v280
  %519 = vmatprep.subr.mxu0 0.0
  %520 = vmatpush1.msra.mxu0 %v281
  %521 = vmatprep.subr.mxu0 0.0
  %522 = vmatpush1.msra.mxu0 %v282
  %523 = vmatprep.subr.mxu0 0.0
  %524 = vmatpush1.msra.mxu0 %v283
  %525 = vmatprep.subr.mxu0 0.0
  %526 = vmatpush1.msra.mxu0 %v284
  %527 = vmatprep.subr.mxu0 0.0
  %528 = vmatpush1.msra.mxu0 %v285
  %529 = vmatprep.subr.mxu0 0.0
  %530 = vmatpush1.msra.mxu0 %v286
  %531 = vmatprep.subr.mxu0 0.0
  %532 = vmatpush1.msra.mxu0 %v287
  %533 = vmatprep.subr.mxu0 0.0
  %534 = vmatpush1.msra.mxu0 %v288
  %535 = vmatprep.subr.mxu0 0.0
  %536 = vmatpush1.msra.mxu0 %v289
  %537 = vmatprep.subr.mxu0 0.0
  %538 = vmatpush1.msra.mxu0 %v290
  %539 = vmatprep.subr.mxu0 0.0
  %540 = vmatpush1.msra.mxu0 %v291
  %541 = vmatprep.subr.mxu0 0.0
  %542 = vmatpush1.msra.mxu0 %v292
  %543 = vmatprep.subr.mxu0 0.0
  %544 = vmatpush1.msra.mxu0 %v293
  %545 = vmatprep.subr.mxu0 0.0
  %546 = vmatpush1.msra.mxu0 %v294
  %547 = vmatprep.subr.mxu0 0.0
  %548 = vmatpush1.msra.mxu0 %v295
  %549 = vmatprep.subr.mxu0 0.0
  %550 = vmatpush1.msra.mxu0 %v296
  %551 = vmatprep.subr.mxu0 0.0
  %552 = vmatpush1.msra.mxu0 %v297
  %553 = vmatprep.subr.mxu0 0.0
  %554 = vmatpush1.msra.mxu0 %v298
  %555 = vmatprep.subr.mxu0 0.0
  %556 = vmatpush1.msra.mxu0 %v299
  %557 = vmatprep.subr.mxu0 0.0
  %558 = vmatpush1.msra.mxu0 %v300
  %559 = vmatprep.subr.mxu0 0.0
  %560 = vmatpush1.msra.mxu0 %v301
  %561 = vmatprep.subr.mxu0 0.0
  %562 = vmatpush1.msra.mxu0 %v302
  %563 = vmatprep.subr.mxu0 0.0
  %564 = vmatpush1.msra.mxu0 %v303
  %565 = vmatprep.subr.mxu0 0.0
  %566 = vmatpush1.msra.mxu0 %v304
  %567 = vmatprep.mubr.f32.mxu0 %v155
  %568 = vmatmul.mubr.f32.gmra.mrb[0].mxu0 %v153
  %v569 = vpop.f32.mrb[0].mxu0
  %v570 = vadd.f32 %v500, %v569
  %v571 = vpop.f32.mrb[0].mxu0
  %572 = vdwg.mxu0
  %573 = vmatprep.subr.mxu0 0.0
  %574 = vmatpush1.msra.mxu0 %v305
  %575 = vmatprep.subr.mxu0 0.0
  %576 = vmatpush1.msra.mxu0 %v306
  %577 = vmatprep.subr.mxu0 0.0
  %578 = vmatpush1.msra.mxu0 %v307
  %579 = vmatprep.subr.mxu0 0.0
  %580 = vmatpush1.msra.mxu0 %v308
  %581 = vmatprep.subr.mxu0 0.0
  %582 = vmatpush1.msra.mxu0 %v309
  %583 = vmatprep.subr.mxu0 0.0
  %584 = vmatpush1.msra.mxu0 %v310
  %585 = vmatprep.subr.mxu0 0.0
  %586 = vmatpush1.msra.mxu0 %v311
  %587 = vmatprep.subr.mxu0 0.0
  %588 = vmatpush1.msra.mxu0 %v312
  %589 = vmatprep.subr.mxu0 0.0
  %590 = vmatpush1.msra.mxu0 %v313
  %591 = vmatprep.subr.mxu0 0.0
  %592 = vmatpush1.msra.mxu0 %v314
  %593 = vmatprep.subr.mxu0 0.0
  %594 = vmatpush1.msra.mxu0 %v315
  %595 = vmatprep.subr.mxu0 0.0
  %596 = vmatpush1.msra.mxu0 %v316
  %597 = vmatprep.subr.mxu0 0.0
  %598 = vmatpush1.msra.mxu0 %v317
  %599 = vmatprep.subr.mxu0 0.0
  %600 = vmatpush1.msra.mxu0 %v318
  %601 = vmatprep.subr.mxu0 0.0
  %602 = vmatpush1.msra.mxu0 %v319
  %603 = vmatprep.subr.mxu0 0.0
  %604 = vmatpush1.msra.mxu0 %v320
  %605 = vmatprep.subr.mxu0 0.0
  %606 = vmatpush1.msra.mxu0 %v321
  %607 = vmatprep.subr.mxu0 0.0
  %608 = vmatpush1.msra.mxu0 %v322
  %609 = vmatprep.subr.mxu0 0.0
  %610 = vmatpush1.msra.mxu0 %v323
  %611 = vmatprep.subr.mxu0 0.0
  %612 = vmatpush1.msra.mxu0 %v324
  %613 = vmatprep.subr.mxu0 0.0
  %614 = vmatpush1.msra.mxu0 %v325
  %615 = vmatprep.subr.mxu0 0.0
  %616 = vmatpush1.msra.mxu0 %v326
  %617 = vmatprep.subr.mxu0 0.0
  %618 = vmatpush1.msra.mxu0 %v327
  %619 = vmatprep.subr.mxu0 0.0
  %620 = vmatpush1.msra.mxu0 %v328
  %621 = vmatprep.subr.mxu0 0.0
  %622 = vmatpush1.msra.mxu0 %v329
  %623 = vmatprep.subr.mxu0 0.0
  %624 = vmatpush1.msra.mxu0 %v330
  %625 = vmatprep.subr.mxu0 0.0
  %626 = vmatpush1.msra.mxu0 %v331
  %627 = vmatprep.subr.mxu0 0.0
  %628 = vmatpush1.msra.mxu0 %v332
  %629 = vmatprep.subr.mxu0 0.0
  %630 = vmatpush1.msra.mxu0 %v333
  %631 = vmatprep.subr.mxu0 0.0
  %632 = vmatpush1.msra.mxu0 %v334
  %633 = vmatprep.subr.mxu0 0.0
  %634 = vmatpush1.msra.mxu0 %v335
  %635 = vmatprep.subr.mxu0 0.0
  %636 = vmatpush1.msra.mxu0 %v336
  %637 = vmatprep.mubr.f32.mxu0 %v196
  %638 = vmatmul.mubr.f32.gmra.mrb[0].mxu0 %v194
  %v639 = vpop.f32.mrb[0].mxu0
  %v640 = vadd.f32 %v570, %v639
  %v641 = vpop.f32.mrb[0].mxu0
  %642 = vdwg.mxu0
  %643 = vmatprep.subr.mxu0 0.0
  %644 = vmatpush1.msra.mxu0 %v337
  %645 = vmatprep.subr.mxu0 0.0
  %646 = vmatpush1.msra.mxu0 %v338
  %647 = vmatprep.subr.mxu0 0.0
  %648 = vmatpush1.msra.mxu0 %v339
  %649 = vmatprep.subr.mxu0 0.0
  %650 = vmatpush1.msra.mxu0 %v340
  %651 = vmatprep.subr.mxu0 0.0
  %652 = vmatpush1.msra.mxu0 %v341
  %653 = vmatprep.subr.mxu0 0.0
  %654 = vmatpush1.msra.mxu0 %v342
  %655 = vmatprep.subr.mxu0 0.0
  %656 = vmatpush1.msra.mxu0 %v343
  %657 = vmatprep.subr.mxu0 0.0
  %658 = vmatpush1.msra.mxu0 %v344
  %659 = vmatprep.subr.mxu0 0.0
  %660 = vmatpush1.msra.mxu0 %v345
  %661 = vmatprep.subr.mxu0 0.0
  %662 = vmatpush1.msra.mxu0 %v346
  %663 = vmatprep.subr.mxu0 0.0
  %664 = vmatpush1.msra.mxu0 %v347
  %665 = vmatprep.subr.mxu0 0.0
  %666 = vmatpush1.msra.mxu0 %v348
  %667 = vmatprep.subr.mxu0 0.0
  %668 = vmatpush1.msra.mxu0 %v349
  %669 = vmatprep.subr.mxu0 0.0
  %670 = vmatpush1.msra.mxu0 %v350
  %671 = vmatprep.subr.mxu0 0.0
  %672 = vmatpush1.msra.mxu0 %v351
  %673 = vmatprep.subr.mxu0 0.0
  %674 = vmatpush1.msra.mxu0 %v352
  %675 = vmatprep.subr.mxu0 0.0
  %676 = vmatpush1.msra.mxu0 %v353
  %677 = vmatprep.subr.mxu0 0.0
  %678 = vmatpush1.msra.mxu0 %v354
  %679 = vmatprep.subr.mxu0 0.0
  %680 = vmatpush1.msra.mxu0 %v355
  %681 = vmatprep.subr.mxu0 0.0
  %682 = vmatpush1.msra.mxu0 %v356
  %683 = vmatprep.subr.mxu0 0.0
  %684 = vmatpush1.msra.mxu0 %v357
  %685 = vmatprep.subr.mxu0 0.0
  %686 = vmatpush1.msra.mxu0 %v358
  %687 = vmatprep.subr.mxu0 0.0
  %688 = vmatpush1.msra.mxu0 %v359
  %689 = vmatprep.subr.mxu0 0.0
  %690 = vmatpush1.msra.mxu0 %v360
  %691 = vmatprep.subr.mxu0 0.0
  %692 = vmatpush1.msra.mxu0 %v361
  %693 = vmatprep.subr.mxu0 0.0
  %694 = vmatpush1.msra.mxu0 %v362
  %695 = vmatprep.subr.mxu0 0.0
  %696 = vmatpush1.msra.mxu0 %v363
  %697 = vmatprep.subr.mxu0 0.0
  %698 = vmatpush1.msra.mxu0 %v364
  %699 = vmatprep.subr.mxu0 0.0
  %700 = vmatpush1.msra.mxu0 %v365
  %701 = vmatprep.subr.mxu0 0.0
  %702 = vmatpush1.msra.mxu0 %v366
  %703 = vmatprep.subr.mxu0 0.0
  %704 = vmatpush1.msra.mxu0 %v367
  %705 = vmatprep.subr.mxu0 0.0
  %706 = vmatpush1.msra.mxu0 %v368
  %707 = vmatprep.mubr.f32.mxu0 %v237
  %708 = vmatmul.mubr.f32.gmra.mrb[0].mxu0 %v235
  %v709 = vpop.f32.mrb[0].mxu0
  %v710 = vadd.f32 %v640, %v709
  %v711 = vpop.f32.mrb[0].mxu0
  %712 = vdwg.mxu0
  %v713 = vmul.f32 %v710, 0.0625
  %vm714 = vcmask 523264
  %v716 = vsel %vm714, %v713, 0
  %718 = vmatprep.subr.mxu0 %v370
  %719 = vmatpush1.msra.mxu0 %v369
  %720 = vmatprep.subr.mxu0 %v378
  %721 = vmatpush1.msra.mxu0 %v377
  %722 = vmatprep.subr.mxu0 %v386
  %723 = vmatpush1.msra.mxu0 %v385
  %724 = vmatprep.subr.mxu0 %v394
  %725 = vmatpush1.msra.mxu0 %v393
  %726 = vmatprep.subr.mxu0 %v402
  %727 = vmatpush1.msra.mxu0 %v401
  %728 = vmatprep.subr.mxu0 %v410
  %729 = vmatpush1.msra.mxu0 %v409
  %730 = vmatprep.subr.mxu0 %v418
  %731 = vmatpush1.msra.mxu0 %v417
  %732 = vmatprep.subr.mxu0 %v426
  %733 = vmatpush1.msra.mxu0 %v425
  %734 = vmatprep.subr.mxu0 0.0
  %735 = vmatpush1.msra.mxu0 0.0
  %736 = vmatprep.subr.mxu0 0.0
  %737 = vmatpush1.msra.mxu0 0.0
  %738 = vmatprep.subr.mxu0 0.0
  %739 = vmatpush1.msra.mxu0 0.0
  %740 = vmatprep.subr.mxu0 0.0
  %741 = vmatpush1.msra.mxu0 0.0
  %742 = vmatprep.subr.mxu0 0.0
  %743 = vmatpush1.msra.mxu0 0.0
  %744 = vmatprep.subr.mxu0 0.0
  %745 = vmatpush1.msra.mxu0 0.0
  %746 = vmatprep.subr.mxu0 0.0
  %747 = vmatpush1.msra.mxu0 0.0
  %748 = vmatprep.subr.mxu0 0.0
  %749 = vmatpush1.msra.mxu0 0.0
  %750 = vmatprep.subr.mxu0 0.0
  %751 = vmatpush1.msra.mxu0 0.0
  %752 = vmatprep.subr.mxu0 0.0
  %753 = vmatpush1.msra.mxu0 0.0
  %754 = vmatprep.subr.mxu0 0.0
  %755 = vmatpush1.msra.mxu0 0.0
  %756 = vmatprep.subr.mxu0 0.0
  %757 = vmatpush1.msra.mxu0 0.0
  %758 = vmatprep.subr.mxu0 0.0
  %759 = vmatpush1.msra.mxu0 0.0
  %760 = vmatprep.subr.mxu0 0.0
  %761 = vmatpush1.msra.mxu0 0.0
  %762 = vmatprep.subr.mxu0 0.0
  %763 = vmatpush1.msra.mxu0 0.0
  %764 = vmatprep.subr.mxu0 0.0
  %765 = vmatpush1.msra.mxu0 0.0
  %766 = vmatprep.subr.mxu0 0.0
  %767 = vmatpush1.msra.mxu0 0.0
  %768 = vmatprep.subr.mxu0 0.0
  %769 = vmatpush1.msra.mxu0 0.0
  %770 = vmatprep.subr.mxu0 0.0
  %771 = vmatpush1.msra.mxu0 0.0
  %772 = vmatprep.subr.mxu0 0.0
  %773 = vmatpush1.msra.mxu0 0.0
  %774 = vmatprep.subr.mxu0 0.0
  %775 = vmatpush1.msra.mxu0 0.0
  %776 = vmatprep.subr.mxu0 0.0
  %777 = vmatpush1.msra.mxu0 0.0
  %778 = vmatprep.subr.mxu0 0.0
  %779 = vmatpush1.msra.mxu0 0.0
  %780 = vmatprep.subr.mxu0 0.0
  %781 = vmatpush1.msra.mxu0 0.0
  %782 = vmatprep.mubr.f32.mxu0 0.0
  %783 = vmatmul.mubr.f32.gmra.mrb[0].mxu0 %v716
  %v784 = vpop.f32.mrb[0].mxu0
  %v785 = vadd.f32 0.0, %v784
  %v786 = vpop.f32.mrb[0].mxu0
  %v787 = vadd.f32 0.0, %v786
  %788 = vdwg.mxu0
  %789 = vmatprep.subr.mxu0 %v372
  %790 = vmatpush1.msra.mxu0 %v371
  %791 = vmatprep.subr.mxu0 %v380
  %792 = vmatpush1.msra.mxu0 %v379
  %793 = vmatprep.subr.mxu0 %v388
  %794 = vmatpush1.msra.mxu0 %v387
  %795 = vmatprep.subr.mxu0 %v396
  %796 = vmatpush1.msra.mxu0 %v395
  %797 = vmatprep.subr.mxu0 %v404
  %798 = vmatpush1.msra.mxu0 %v403
  %799 = vmatprep.subr.mxu0 %v412
  %800 = vmatpush1.msra.mxu0 %v411
  %801 = vmatprep.subr.mxu0 %v420
  %802 = vmatpush1.msra.mxu0 %v419
  %803 = vmatprep.subr.mxu0 %v428
  %804 = vmatpush1.msra.mxu0 %v427
  %805 = vmatprep.subr.mxu0 0.0
  %806 = vmatpush1.msra.mxu0 0.0
  %807 = vmatprep.subr.mxu0 0.0
  %808 = vmatpush1.msra.mxu0 0.0
  %809 = vmatprep.subr.mxu0 0.0
  %810 = vmatpush1.msra.mxu0 0.0
  %811 = vmatprep.subr.mxu0 0.0
  %812 = vmatpush1.msra.mxu0 0.0
  %813 = vmatprep.subr.mxu0 0.0
  %814 = vmatpush1.msra.mxu0 0.0
  %815 = vmatprep.subr.mxu0 0.0
  %816 = vmatpush1.msra.mxu0 0.0
  %817 = vmatprep.subr.mxu0 0.0
  %818 = vmatpush1.msra.mxu0 0.0
  %819 = vmatprep.subr.mxu0 0.0
  %820 = vmatpush1.msra.mxu0 0.0
  %821 = vmatprep.subr.mxu0 0.0
  %822 = vmatpush1.msra.mxu0 0.0
  %823 = vmatprep.subr.mxu0 0.0
  %824 = vmatpush1.msra.mxu0 0.0
  %825 = vmatprep.subr.mxu0 0.0
  %826 = vmatpush1.msra.mxu0 0.0
  %827 = vmatprep.subr.mxu0 0.0
  %828 = vmatpush1.msra.mxu0 0.0
  %829 = vmatprep.subr.mxu0 0.0
  %830 = vmatpush1.msra.mxu0 0.0
  %831 = vmatprep.subr.mxu0 0.0
  %832 = vmatpush1.msra.mxu0 0.0
  %833 = vmatprep.subr.mxu0 0.0
  %834 = vmatpush1.msra.mxu0 0.0
  %835 = vmatprep.subr.mxu0 0.0
  %836 = vmatpush1.msra.mxu0 0.0
  %837 = vmatprep.subr.mxu0 0.0
  %838 = vmatpush1.msra.mxu0 0.0
  %839 = vmatprep.subr.mxu0 0.0
  %840 = vmatpush1.msra.mxu0 0.0
  %841 = vmatprep.subr.mxu0 0.0
  %842 = vmatpush1.msra.mxu0 0.0
  %843 = vmatprep.subr.mxu0 0.0
  %844 = vmatpush1.msra.mxu0 0.0
  %845 = vmatprep.subr.mxu0 0.0
  %846 = vmatpush1.msra.mxu0 0.0
  %847 = vmatprep.subr.mxu0 0.0
  %848 = vmatpush1.msra.mxu0 0.0
  %849 = vmatprep.subr.mxu0 0.0
  %850 = vmatpush1.msra.mxu0 0.0
  %851 = vmatprep.subr.mxu0 0.0
  %852 = vmatpush1.msra.mxu0 0.0
  %853 = vmatprep.mubr.f32.mxu0 0.0
  %854 = vmatmul.mubr.f32.gmra.mrb[0].mxu0 %v716
  %v855 = vpop.f32.mrb[0].mxu0
  %v856 = vadd.f32 0.0, %v855
  %v857 = vpop.f32.mrb[0].mxu0
  %v858 = vadd.f32 0.0, %v857
  %859 = vdwg.mxu0
  %860 = vmatprep.subr.mxu0 %v374
  %861 = vmatpush1.msra.mxu0 %v373
  %862 = vmatprep.subr.mxu0 %v382
  %863 = vmatpush1.msra.mxu0 %v381
  %864 = vmatprep.subr.mxu0 %v390
  %865 = vmatpush1.msra.mxu0 %v389
  %866 = vmatprep.subr.mxu0 %v398
  %867 = vmatpush1.msra.mxu0 %v397
  %868 = vmatprep.subr.mxu0 %v406
  %869 = vmatpush1.msra.mxu0 %v405
  %870 = vmatprep.subr.mxu0 %v414
  %871 = vmatpush1.msra.mxu0 %v413
  %872 = vmatprep.subr.mxu0 %v422
  %873 = vmatpush1.msra.mxu0 %v421
  %874 = vmatprep.subr.mxu0 %v430
  %875 = vmatpush1.msra.mxu0 %v429
  %876 = vmatprep.subr.mxu0 0.0
  %877 = vmatpush1.msra.mxu0 0.0
  %878 = vmatprep.subr.mxu0 0.0
  %879 = vmatpush1.msra.mxu0 0.0
  %880 = vmatprep.subr.mxu0 0.0
  %881 = vmatpush1.msra.mxu0 0.0
  %882 = vmatprep.subr.mxu0 0.0
  %883 = vmatpush1.msra.mxu0 0.0
  %884 = vmatprep.subr.mxu0 0.0
  %885 = vmatpush1.msra.mxu0 0.0
  %886 = vmatprep.subr.mxu0 0.0
  %887 = vmatpush1.msra.mxu0 0.0
  %888 = vmatprep.subr.mxu0 0.0
  %889 = vmatpush1.msra.mxu0 0.0
  %890 = vmatprep.subr.mxu0 0.0
  %891 = vmatpush1.msra.mxu0 0.0
  %892 = vmatprep.subr.mxu0 0.0
  %893 = vmatpush1.msra.mxu0 0.0
  %894 = vmatprep.subr.mxu0 0.0
  %895 = vmatpush1.msra.mxu0 0.0
  %896 = vmatprep.subr.mxu0 0.0
  %897 = vmatpush1.msra.mxu0 0.0
  %898 = vmatprep.subr.mxu0 0.0
  %899 = vmatpush1.msra.mxu0 0.0
  %900 = vmatprep.subr.mxu0 0.0
  %901 = vmatpush1.msra.mxu0 0.0
  %902 = vmatprep.subr.mxu0 0.0
  %903 = vmatpush1.msra.mxu0 0.0
  %904 = vmatprep.subr.mxu0 0.0
  %905 = vmatpush1.msra.mxu0 0.0
  %906 = vmatprep.subr.mxu0 0.0
  %907 = vmatpush1.msra.mxu0 0.0
  %908 = vmatprep.subr.mxu0 0.0
  %909 = vmatpush1.msra.mxu0 0.0
  %910 = vmatprep.subr.mxu0 0.0
  %911 = vmatpush1.msra.mxu0 0.0
  %912 = vmatprep.subr.mxu0 0.0
  %913 = vmatpush1.msra.mxu0 0.0
  %914 = vmatprep.subr.mxu0 0.0
  %915 = vmatpush1.msra.mxu0 0.0
  %916 = vmatprep.subr.mxu0 0.0
  %917 = vmatpush1.msra.mxu0 0.0
  %918 = vmatprep.subr.mxu0 0.0
  %919 = vmatpush1.msra.mxu0 0.0
  %920 = vmatprep.subr.mxu0 0.0
  %921 = vmatpush1.msra.mxu0 0.0
  %922 = vmatprep.subr.mxu0 0.0
  %923 = vmatpush1.msra.mxu0 0.0
  %924 = vmatprep.mubr.f32.mxu0 0.0
  %925 = vmatmul.mubr.f32.gmra.mrb[0].mxu0 %v716
  %v926 = vpop.f32.mrb[0].mxu0
  %v927 = vadd.f32 0.0, %v926
  %v928 = vpop.f32.mrb[0].mxu0
  %v929 = vadd.f32 0.0, %v928
  %930 = vdwg.mxu0
  %931 = vmatprep.subr.mxu0 %v376
  %932 = vmatpush1.msra.mxu0 %v375
  %933 = vmatprep.subr.mxu0 %v384
  %934 = vmatpush1.msra.mxu0 %v383
  %935 = vmatprep.subr.mxu0 %v392
  %936 = vmatpush1.msra.mxu0 %v391
  %937 = vmatprep.subr.mxu0 %v400
  %938 = vmatpush1.msra.mxu0 %v399
  %939 = vmatprep.subr.mxu0 %v408
  %940 = vmatpush1.msra.mxu0 %v407
  %941 = vmatprep.subr.mxu0 %v416
  %942 = vmatpush1.msra.mxu0 %v415
  %943 = vmatprep.subr.mxu0 %v424
  %944 = vmatpush1.msra.mxu0 %v423
  %945 = vmatprep.subr.mxu0 %v432
  %946 = vmatpush1.msra.mxu0 %v431
  %947 = vmatprep.subr.mxu0 0.0
  %948 = vmatpush1.msra.mxu0 0.0
  %949 = vmatprep.subr.mxu0 0.0
  %950 = vmatpush1.msra.mxu0 0.0
  %951 = vmatprep.subr.mxu0 0.0
  %952 = vmatpush1.msra.mxu0 0.0
  %953 = vmatprep.subr.mxu0 0.0
  %954 = vmatpush1.msra.mxu0 0.0
  %955 = vmatprep.subr.mxu0 0.0
  %956 = vmatpush1.msra.mxu0 0.0
  %957 = vmatprep.subr.mxu0 0.0
  %958 = vmatpush1.msra.mxu0 0.0
  %959 = vmatprep.subr.mxu0 0.0
  %960 = vmatpush1.msra.mxu0 0.0
  %961 = vmatprep.subr.mxu0 0.0
  %962 = vmatpush1.msra.mxu0 0.0
  %963 = vmatprep.subr.mxu0 0.0
  %964 = vmatpush1.msra.mxu0 0.0
  %965 = vmatprep.subr.mxu0 0.0
  %966 = vmatpush1.msra.mxu0 0.0
  %967 = vmatprep.subr.mxu0 0.0
  %968 = vmatpush1.msra.mxu0 0.0
  %969 = vmatprep.subr.mxu0 0.0
  %970 = vmatpush1.msra.mxu0 0.0
  %971 = vmatprep.subr.mxu0 0.0
  %972 = vmatpush1.msra.mxu0 0.0
  %973 = vmatprep.subr.mxu0 0.0
  %974 = vmatpush1.msra.mxu0 0.0
  %975 = vmatprep.subr.mxu0 0.0
  %976 = vmatpush1.msra.mxu0 0.0
  %977 = vmatprep.subr.mxu0 0.0
  %978 = vmatpush1.msra.mxu0 0.0
  %979 = vmatprep.subr.mxu0 0.0
  %980 = vmatpush1.msra.mxu0 0.0
  %981 = vmatprep.subr.mxu0 0.0
  %982 = vmatpush1.msra.mxu0 0.0
  %983 = vmatprep.subr.mxu0 0.0
  %984 = vmatpush1.msra.mxu0 0.0
  %985 = vmatprep.subr.mxu0 0.0
  %986 = vmatpush1.msra.mxu0 0.0
  %987 = vmatprep.subr.mxu0 0.0
  %988 = vmatpush1.msra.mxu0 0.0
  %989 = vmatprep.subr.mxu0 0.0
  %990 = vmatpush1.msra.mxu0 0.0
  %991 = vmatprep.subr.mxu0 0.0
  %992 = vmatpush1.msra.mxu0 0.0
  %993 = vmatprep.subr.mxu0 0.0
  %994 = vmatpush1.msra.mxu0 0.0
  %995 = vmatprep.mubr.f32.mxu0 0.0
  %996 = vmatmul.mubr.f32.gmra.mrb[0].mxu0 %v716
  %v997 = vpop.f32.mrb[0].mxu0
  %v998 = vadd.f32 0.0, %v997
  %v999 = vpop.f32.mrb[0].mxu0
  %v1000 = vadd.f32 0.0, %v999
  %1001 = vdwg.mxu0
  %v1002 = vsub.f32 %v112, %v785
  %v1003 = vsub.f32 %v114, %v787
  %v1004 = vsub.f32 %v153, %v856
  %v1005 = vsub.f32 %v155, %v858
  %v1006 = vsub.f32 %v194, %v927
  %v1007 = vsub.f32 %v196, %v929
  %v1008 = vsub.f32 %v235, %v998
  %v1009 = vsub.f32 %v237, %v1000
  %v1010 = vmul.f32 %v1002, %v1002
  %v1011 = vmul.f32 %v1003, %v1003
  %v1012 = vmul.f32 %v1004, %v1004
  %v1013 = vmul.f32 %v1005, %v1005
  %v1014 = vmul.f32 %v1006, %v1006
  %v1015 = vmul.f32 %v1007, %v1007
  %v1016 = vmul.f32 %v1008, %v1008
  %v1017 = vmul.f32 %v1009, %v1009
  %1018 = vmatprep.subr.mxu0 0.0
  %1019 = vmatpush1.msra.mxu0 %v241
  %1020 = vmatprep.subr.mxu0 0.0
  %1021 = vmatpush1.msra.mxu0 %v242
  %1022 = vmatprep.subr.mxu0 0.0
  %1023 = vmatpush1.msra.mxu0 %v243
  %1024 = vmatprep.subr.mxu0 0.0
  %1025 = vmatpush1.msra.mxu0 %v244
  %1026 = vmatprep.subr.mxu0 0.0
  %1027 = vmatpush1.msra.mxu0 %v245
  %1028 = vmatprep.subr.mxu0 0.0
  %1029 = vmatpush1.msra.mxu0 %v246
  %1030 = vmatprep.subr.mxu0 0.0
  %1031 = vmatpush1.msra.mxu0 %v247
  %1032 = vmatprep.subr.mxu0 0.0
  %1033 = vmatpush1.msra.mxu0 %v248
  %1034 = vmatprep.subr.mxu0 0.0
  %1035 = vmatpush1.msra.mxu0 %v249
  %1036 = vmatprep.subr.mxu0 0.0
  %1037 = vmatpush1.msra.mxu0 %v250
  %1038 = vmatprep.subr.mxu0 0.0
  %1039 = vmatpush1.msra.mxu0 %v251
  %1040 = vmatprep.subr.mxu0 0.0
  %1041 = vmatpush1.msra.mxu0 %v252
  %1042 = vmatprep.subr.mxu0 0.0
  %1043 = vmatpush1.msra.mxu0 %v253
  %1044 = vmatprep.subr.mxu0 0.0
  %1045 = vmatpush1.msra.mxu0 %v254
  %1046 = vmatprep.subr.mxu0 0.0
  %1047 = vmatpush1.msra.mxu0 %v255
  %1048 = vmatprep.subr.mxu0 0.0
  %1049 = vmatpush1.msra.mxu0 %v256
  %1050 = vmatprep.subr.mxu0 0.0
  %1051 = vmatpush1.msra.mxu0 %v257
  %1052 = vmatprep.subr.mxu0 0.0
  %1053 = vmatpush1.msra.mxu0 %v258
  %1054 = vmatprep.subr.mxu0 0.0
  %1055 = vmatpush1.msra.mxu0 %v259
  %1056 = vmatprep.subr.mxu0 0.0
  %1057 = vmatpush1.msra.mxu0 %v260
  %1058 = vmatprep.subr.mxu0 0.0
  %1059 = vmatpush1.msra.mxu0 %v261
  %1060 = vmatprep.subr.mxu0 0.0
  %1061 = vmatpush1.msra.mxu0 %v262
  %1062 = vmatprep.subr.mxu0 0.0
  %1063 = vmatpush1.msra.mxu0 %v263
  %1064 = vmatprep.subr.mxu0 0.0
  %1065 = vmatpush1.msra.mxu0 %v264
  %1066 = vmatprep.subr.mxu0 0.0
  %1067 = vmatpush1.msra.mxu0 %v265
  %1068 = vmatprep.subr.mxu0 0.0
  %1069 = vmatpush1.msra.mxu0 %v266
  %1070 = vmatprep.subr.mxu0 0.0
  %1071 = vmatpush1.msra.mxu0 %v267
  %1072 = vmatprep.subr.mxu0 0.0
  %1073 = vmatpush1.msra.mxu0 %v268
  %1074 = vmatprep.subr.mxu0 0.0
  %1075 = vmatpush1.msra.mxu0 %v269
  %1076 = vmatprep.subr.mxu0 0.0
  %1077 = vmatpush1.msra.mxu0 %v270
  %1078 = vmatprep.subr.mxu0 0.0
  %1079 = vmatpush1.msra.mxu0 %v271
  %1080 = vmatprep.subr.mxu0 0.0
  %1081 = vmatpush1.msra.mxu0 %v272
  %1082 = vmatprep.mubr.f32.mxu0 %v1011
  %1083 = vmatmul.mubr.f32.gmra.mrb[0].mxu0 %v1010
  %v1084 = vpop.f32.mrb[0].mxu0
  %v1085 = vadd.f32 0.0, %v1084
  %v1086 = vpop.f32.mrb[0].mxu0
  %1087 = vdwg.mxu0
  %1088 = vmatprep.subr.mxu0 0.0
  %1089 = vmatpush1.msra.mxu0 %v273
  %1090 = vmatprep.subr.mxu0 0.0
  %1091 = vmatpush1.msra.mxu0 %v274
  %1092 = vmatprep.subr.mxu0 0.0
  %1093 = vmatpush1.msra.mxu0 %v275
  %1094 = vmatprep.subr.mxu0 0.0
  %1095 = vmatpush1.msra.mxu0 %v276
  %1096 = vmatprep.subr.mxu0 0.0
  %1097 = vmatpush1.msra.mxu0 %v277
  %1098 = vmatprep.subr.mxu0 0.0
  %1099 = vmatpush1.msra.mxu0 %v278
  %1100 = vmatprep.subr.mxu0 0.0
  %1101 = vmatpush1.msra.mxu0 %v279
  %1102 = vmatprep.subr.mxu0 0.0
  %1103 = vmatpush1.msra.mxu0 %v280
  %1104 = vmatprep.subr.mxu0 0.0
  %1105 = vmatpush1.msra.mxu0 %v281
  %1106 = vmatprep.subr.mxu0 0.0
  %1107 = vmatpush1.msra.mxu0 %v282
  %1108 = vmatprep.subr.mxu0 0.0
  %1109 = vmatpush1.msra.mxu0 %v283
  %1110 = vmatprep.subr.mxu0 0.0
  %1111 = vmatpush1.msra.mxu0 %v284
  %1112 = vmatprep.subr.mxu0 0.0
  %1113 = vmatpush1.msra.mxu0 %v285
  %1114 = vmatprep.subr.mxu0 0.0
  %1115 = vmatpush1.msra.mxu0 %v286
  %1116 = vmatprep.subr.mxu0 0.0
  %1117 = vmatpush1.msra.mxu0 %v287
  %1118 = vmatprep.subr.mxu0 0.0
  %1119 = vmatpush1.msra.mxu0 %v288
  %1120 = vmatprep.subr.mxu0 0.0
  %1121 = vmatpush1.msra.mxu0 %v289
  %1122 = vmatprep.subr.mxu0 0.0
  %1123 = vmatpush1.msra.mxu0 %v290
  %1124 = vmatprep.subr.mxu0 0.0
  %1125 = vmatpush1.msra.mxu0 %v291
  %1126 = vmatprep.subr.mxu0 0.0
  %1127 = vmatpush1.msra.mxu0 %v292
  %1128 = vmatprep.subr.mxu0 0.0
  %1129 = vmatpush1.msra.mxu0 %v293
  %1130 = vmatprep.subr.mxu0 0.0
  %1131 = vmatpush1.msra.mxu0 %v294
  %1132 = vmatprep.subr.mxu0 0.0
  %1133 = vmatpush1.msra.mxu0 %v295
  %1134 = vmatprep.subr.mxu0 0.0
  %1135 = vmatpush1.msra.mxu0 %v296
  %1136 = vmatprep.subr.mxu0 0.0
  %1137 = vmatpush1.msra.mxu0 %v297
  %1138 = vmatprep.subr.mxu0 0.0
  %1139 = vmatpush1.msra.mxu0 %v298
  %1140 = vmatprep.subr.mxu0 0.0
  %1141 = vmatpush1.msra.mxu0 %v299
  %1142 = vmatprep.subr.mxu0 0.0
  %1143 = vmatpush1.msra.mxu0 %v300
  %1144 = vmatprep.subr.mxu0 0.0
  %1145 = vmatpush1.msra.mxu0 %v301
  %1146 = vmatprep.subr.mxu0 0.0
  %1147 = vmatpush1.msra.mxu0 %v302
  %1148 = vmatprep.subr.mxu0 0.0
  %1149 = vmatpush1.msra.mxu0 %v303
  %1150 = vmatprep.subr.mxu0 0.0
  %1151 = vmatpush1.msra.mxu0 %v304
  %1152 = vmatprep.mubr.f32.mxu0 %v1013
  %1153 = vmatmul.mubr.f32.gmra.mrb[0].mxu0 %v1012
  %v1154 = vpop.f32.mrb[0].mxu0
  %v1155 = vadd.f32 %v1085, %v1154
  %v1156 = vpop.f32.mrb[0].mxu0
  %1157 = vdwg.mxu0
  %1158 = vmatprep.subr.mxu0 0.0
  %1159 = vmatpush1.msra.mxu0 %v305
  %1160 = vmatprep.subr.mxu0 0.0
  %1161 = vmatpush1.msra.mxu0 %v306
  %1162 = vmatprep.subr.mxu0 0.0
  %1163 = vmatpush1.msra.mxu0 %v307
  %1164 = vmatprep.subr.mxu0 0.0
  %1165 = vmatpush1.msra.mxu0 %v308
  %1166 = vmatprep.subr.mxu0 0.0
  %1167 = vmatpush1.msra.mxu0 %v309
  %1168 = vmatprep.subr.mxu0 0.0
  %1169 = vmatpush1.msra.mxu0 %v310
  %1170 = vmatprep.subr.mxu0 0.0
  %1171 = vmatpush1.msra.mxu0 %v311
  %1172 = vmatprep.subr.mxu0 0.0
  %1173 = vmatpush1.msra.mxu0 %v312
  %1174 = vmatprep.subr.mxu0 0.0
  %1175 = vmatpush1.msra.mxu0 %v313
  %1176 = vmatprep.subr.mxu0 0.0
  %1177 = vmatpush1.msra.mxu0 %v314
  %1178 = vmatprep.subr.mxu0 0.0
  %1179 = vmatpush1.msra.mxu0 %v315
  %1180 = vmatprep.subr.mxu0 0.0
  %1181 = vmatpush1.msra.mxu0 %v316
  %1182 = vmatprep.subr.mxu0 0.0
  %1183 = vmatpush1.msra.mxu0 %v317
  %1184 = vmatprep.subr.mxu0 0.0
  %1185 = vmatpush1.msra.mxu0 %v318
  %1186 = vmatprep.subr.mxu0 0.0
  %1187 = vmatpush1.msra.mxu0 %v319
  %1188 = vmatprep.subr.mxu0 0.0
  %1189 = vmatpush1.msra.mxu0 %v320
  %1190 = vmatprep.subr.mxu0 0.0
  %1191 = vmatpush1.msra.mxu0 %v321
  %1192 = vmatprep.subr.mxu0 0.0
  %1193 = vmatpush1.msra.mxu0 %v322
  %1194 = vmatprep.subr.mxu0 0.0
  %1195 = vmatpush1.msra.mxu0 %v323
  %1196 = vmatprep.subr.mxu0 0.0
  %1197 = vmatpush1.msra.mxu0 %v324
  %1198 = vmatprep.subr.mxu0 0.0
  %1199 = vmatpush1.msra.mxu0 %v325
  %1200 = vmatprep.subr.mxu0 0.0
  %1201 = vmatpush1.msra.mxu0 %v326
  %1202 = vmatprep.subr.mxu0 0.0
  %1203 = vmatpush1.msra.mxu0 %v327
  %1204 = vmatprep.subr.mxu0 0.0
  %1205 = vmatpush1.msra.mxu0 %v328
  %1206 = vmatprep.subr.mxu0 0.0
  %1207 = vmatpush1.msra.mxu0 %v329
  %1208 = vmatprep.subr.mxu0 0.0
  %1209 = vmatpush1.msra.mxu0 %v330
  %1210 = vmatprep.subr.mxu0 0.0
  %1211 = vmatpush1.msra.mxu0 %v331
  %1212 = vmatprep.subr.mxu0 0.0
  %1213 = vmatpush1.msra.mxu0 %v332
  %1214 = vmatprep.subr.mxu0 0.0
  %1215 = vmatpush1.msra.mxu0 %v333
  %1216 = vmatprep.subr.mxu0 0.0
  %1217 = vmatpush1.msra.mxu0 %v334
  %1218 = vmatprep.subr.mxu0 0.0
  %1219 = vmatpush1.msra.mxu0 %v335
  %1220 = vmatprep.subr.mxu0 0.0
  %1221 = vmatpush1.msra.mxu0 %v336
  %1222 = vmatprep.mubr.f32.mxu0 %v1015
  %1223 = vmatmul.mubr.f32.gmra.mrb[0].mxu0 %v1014
  %v1224 = vpop.f32.mrb[0].mxu0
  %v1225 = vadd.f32 %v1155, %v1224
  %v1226 = vpop.f32.mrb[0].mxu0
  %1227 = vdwg.mxu0
  %1228 = vmatprep.subr.mxu0 0.0
  %1229 = vmatpush1.msra.mxu0 %v337
  %1230 = vmatprep.subr.mxu0 0.0
  %1231 = vmatpush1.msra.mxu0 %v338
  %1232 = vmatprep.subr.mxu0 0.0
  %1233 = vmatpush1.msra.mxu0 %v339
  %1234 = vmatprep.subr.mxu0 0.0
  %1235 = vmatpush1.msra.mxu0 %v340
  %1236 = vmatprep.subr.mxu0 0.0
  %1237 = vmatpush1.msra.mxu0 %v341
  %1238 = vmatprep.subr.mxu0 0.0
  %1239 = vmatpush1.msra.mxu0 %v342
  %1240 = vmatprep.subr.mxu0 0.0
  %1241 = vmatpush1.msra.mxu0 %v343
  %1242 = vmatprep.subr.mxu0 0.0
  %1243 = vmatpush1.msra.mxu0 %v344
  %1244 = vmatprep.subr.mxu0 0.0
  %1245 = vmatpush1.msra.mxu0 %v345
  %1246 = vmatprep.subr.mxu0 0.0
  %1247 = vmatpush1.msra.mxu0 %v346
  %1248 = vmatprep.subr.mxu0 0.0
  %1249 = vmatpush1.msra.mxu0 %v347
  %1250 = vmatprep.subr.mxu0 0.0
  %1251 = vmatpush1.msra.mxu0 %v348
  %1252 = vmatprep.subr.mxu0 0.0
  %1253 = vmatpush1.msra.mxu0 %v349
  %1254 = vmatprep.subr.mxu0 0.0
  %1255 = vmatpush1.msra.mxu0 %v350
  %1256 = vmatprep.subr.mxu0 0.0
  %1257 = vmatpush1.msra.mxu0 %v351
  %1258 = vmatprep.subr.mxu0 0.0
  %1259 = vmatpush1.msra.mxu0 %v352
  %1260 = vmatprep.subr.mxu0 0.0
  %1261 = vmatpush1.msra.mxu0 %v353
  %1262 = vmatprep.subr.mxu0 0.0
  %1263 = vmatpush1.msra.mxu0 %v354
  %1264 = vmatprep.subr.mxu0 0.0
  %1265 = vmatpush1.msra.mxu0 %v355
  %1266 = vmatprep.subr.mxu0 0.0
  %1267 = vmatpush1.msra.mxu0 %v356
  %1268 = vmatprep.subr.mxu0 0.0
  %1269 = vmatpush1.msra.mxu0 %v357
  %1270 = vmatprep.subr.mxu0 0.0
  %1271 = vmatpush1.msra.mxu0 %v358
  %1272 = vmatprep.subr.mxu0 0.0
  %1273 = vmatpush1.msra.mxu0 %v359
  %1274 = vmatprep.subr.mxu0 0.0
  %1275 = vmatpush1.msra.mxu0 %v360
  %1276 = vmatprep.subr.mxu0 0.0
  %1277 = vmatpush1.msra.mxu0 %v361
  %1278 = vmatprep.subr.mxu0 0.0
  %1279 = vmatpush1.msra.mxu0 %v362
  %1280 = vmatprep.subr.mxu0 0.0
  %1281 = vmatpush1.msra.mxu0 %v363
  %1282 = vmatprep.subr.mxu0 0.0
  %1283 = vmatpush1.msra.mxu0 %v364
  %1284 = vmatprep.subr.mxu0 0.0
  %1285 = vmatpush1.msra.mxu0 %v365
  %1286 = vmatprep.subr.mxu0 0.0
  %1287 = vmatpush1.msra.mxu0 %v366
  %1288 = vmatprep.subr.mxu0 0.0
  %1289 = vmatpush1.msra.mxu0 %v367
  %1290 = vmatprep.subr.mxu0 0.0
  %1291 = vmatpush1.msra.mxu0 %v368
  %1292 = vmatprep.mubr.f32.mxu0 %v1017
  %1293 = vmatmul.mubr.f32.gmra.mrb[0].mxu0 %v1016
  %v1294 = vpop.f32.mrb[0].mxu0
  %v1295 = vadd.f32 %v1225, %v1294
  %v1296 = vpop.f32.mrb[0].mxu0
  %1297 = vdwg.mxu0
  %v1298 = vmul.f32 %v1295, 0.0625
  %v1300 = vsel %vm714, %v1298, 0
  %1302 = vmatprep.subr.mxu0 %v370
  %1303 = vmatpush1.msra.mxu0 %v369
  %1304 = vmatprep.subr.mxu0 %v378
  %1305 = vmatpush1.msra.mxu0 %v377
  %1306 = vmatprep.subr.mxu0 %v386
  %1307 = vmatpush1.msra.mxu0 %v385
  %1308 = vmatprep.subr.mxu0 %v394
  %1309 = vmatpush1.msra.mxu0 %v393
  %1310 = vmatprep.subr.mxu0 %v402
  %1311 = vmatpush1.msra.mxu0 %v401
  %1312 = vmatprep.subr.mxu0 %v410
  %1313 = vmatpush1.msra.mxu0 %v409
  %1314 = vmatprep.subr.mxu0 %v418
  %1315 = vmatpush1.msra.mxu0 %v417
  %1316 = vmatprep.subr.mxu0 %v426
  %1317 = vmatpush1.msra.mxu0 %v425
  %1318 = vmatprep.subr.mxu0 0.0
  %1319 = vmatpush1.msra.mxu0 0.0
  %1320 = vmatprep.subr.mxu0 0.0
  %1321 = vmatpush1.msra.mxu0 0.0
  %1322 = vmatprep.subr.mxu0 0.0
  %1323 = vmatpush1.msra.mxu0 0.0
  %1324 = vmatprep.subr.mxu0 0.0
  %1325 = vmatpush1.msra.mxu0 0.0
  %1326 = vmatprep.subr.mxu0 0.0
  %1327 = vmatpush1.msra.mxu0 0.0
  %1328 = vmatprep.subr.mxu0 0.0
  %1329 = vmatpush1.msra.mxu0 0.0
  %1330 = vmatprep.subr.mxu0 0.0
  %1331 = vmatpush1.msra.mxu0 0.0
  %1332 = vmatprep.subr.mxu0 0.0
  %1333 = vmatpush1.msra.mxu0 0.0
  %1334 = vmatprep.subr.mxu0 0.0
  %1335 = vmatpush1.msra.mxu0 0.0
  %1336 = vmatprep.subr.mxu0 0.0
  %1337 = vmatpush1.msra.mxu0 0.0
  %1338 = vmatprep.subr.mxu0 0.0
  %1339 = vmatpush1.msra.mxu0 0.0
  %1340 = vmatprep.subr.mxu0 0.0
  %1341 = vmatpush1.msra.mxu0 0.0
  %1342 = vmatprep.subr.mxu0 0.0
  %1343 = vmatpush1.msra.mxu0 0.0
  %1344 = vmatprep.subr.mxu0 0.0
  %1345 = vmatpush1.msra.mxu0 0.0
  %1346 = vmatprep.subr.mxu0 0.0
  %1347 = vmatpush1.msra.mxu0 0.0
  %1348 = vmatprep.subr.mxu0 0.0
  %1349 = vmatpush1.msra.mxu0 0.0
  %1350 = vmatprep.subr.mxu0 0.0
  %1351 = vmatpush1.msra.mxu0 0.0
  %1352 = vmatprep.subr.mxu0 0.0
  %1353 = vmatpush1.msra.mxu0 0.0
  %1354 = vmatprep.subr.mxu0 0.0
  %1355 = vmatpush1.msra.mxu0 0.0
  %1356 = vmatprep.subr.mxu0 0.0
  %1357 = vmatpush1.msra.mxu0 0.0
  %1358 = vmatprep.subr.mxu0 0.0
  %1359 = vmatpush1.msra.mxu0 0.0
  %1360 = vmatprep.subr.mxu0 0.0
  %1361 = vmatpush1.msra.mxu0 0.0
  %1362 = vmatprep.subr.mxu0 0.0
  %1363 = vmatpush1.msra.mxu0 0.0
  %1364 = vmatprep.subr.mxu0 0.0
  %1365 = vmatpush1.msra.mxu0 0.0
  %1366 = vmatprep.mubr.f32.mxu0 0.0
  %1367 = vmatmul.mubr.f32.gmra.mrb[0].mxu0 %v1300
  %v1368 = vpop.f32.mrb[0].mxu0
  %v1369 = vadd.f32 1e-05, %v1368
  %v1370 = vpop.f32.mrb[0].mxu0
  %v1371 = vadd.f32 1e-05, %v1370
  %1372 = vdwg.mxu0
  %1373 = vmatprep.subr.mxu0 %v372
  %1374 = vmatpush1.msra.mxu0 %v371
  %1375 = vmatprep.subr.mxu0 %v380
  %1376 = vmatpush1.msra.mxu0 %v379
  %1377 = vmatprep.subr.mxu0 %v388
  %1378 = vmatpush1.msra.mxu0 %v387
  %1379 = vmatprep.subr.mxu0 %v396
  %1380 = vmatpush1.msra.mxu0 %v395
  %1381 = vmatprep.subr.mxu0 %v404
  %1382 = vmatpush1.msra.mxu0 %v403
  %1383 = vmatprep.subr.mxu0 %v412
  %1384 = vmatpush1.msra.mxu0 %v411
  %1385 = vmatprep.subr.mxu0 %v420
  %1386 = vmatpush1.msra.mxu0 %v419
  %1387 = vmatprep.subr.mxu0 %v428
  %1388 = vmatpush1.msra.mxu0 %v427
  %1389 = vmatprep.subr.mxu0 0.0
  %1390 = vmatpush1.msra.mxu0 0.0
  %1391 = vmatprep.subr.mxu0 0.0
  %1392 = vmatpush1.msra.mxu0 0.0
  %1393 = vmatprep.subr.mxu0 0.0
  %1394 = vmatpush1.msra.mxu0 0.0
  %1395 = vmatprep.subr.mxu0 0.0
  %1396 = vmatpush1.msra.mxu0 0.0
  %1397 = vmatprep.subr.mxu0 0.0
  %1398 = vmatpush1.msra.mxu0 0.0
  %1399 = vmatprep.subr.mxu0 0.0
  %1400 = vmatpush1.msra.mxu0 0.0
  %1401 = vmatprep.subr.mxu0 0.0
  %1402 = vmatpush1.msra.mxu0 0.0
  %1403 = vmatprep.subr.mxu0 0.0
  %1404 = vmatpush1.msra.mxu0 0.0
  %1405 = vmatprep.subr.mxu0 0.0
  %1406 = vmatpush1.msra.mxu0 0.0
  %1407 = vmatprep.subr.mxu0 0.0
  %1408 = vmatpush1.msra.mxu0 0.0
  %1409 = vmatprep.subr.mxu0 0.0
  %1410 = vmatpush1.msra.mxu0 0.0
  %1411 = vmatprep.subr.mxu0 0.0
  %1412 = vmatpush1.msra.mxu0 0.0
  %1413 = vmatprep.subr.mxu0 0.0
  %1414 = vmatpush1.msra.mxu0 0.0
  %1415 = vmatprep.subr.mxu0 0.0
  %1416 = vmatpush1.msra.mxu0 0.0
  %1417 = vmatprep.subr.mxu0 0.0
  %1418 = vmatpush1.msra.mxu0 0.0
  %1419 = vmatprep.subr.mxu0 0.0
  %1420 = vmatpush1.msra.mxu0 0.0
  %1421 = vmatprep.subr.mxu0 0.0
  %1422 = vmatpush1.msra.mxu0 0.0
  %1423 = vmatprep.subr.mxu0 0.0
  %1424 = vmatpush1.msra.mxu0 0.0
  %1425 = vmatprep.subr.mxu0 0.0
  %1426 = vmatpush1.msra.mxu0 0.0
  %1427 = vmatprep.subr.mxu0 0.0
  %1428 = vmatpush1.msra.mxu0 0.0
  %1429 = vmatprep.subr.mxu0 0.0
  %1430 = vmatpush1.msra.mxu0 0.0
  %1431 = vmatprep.subr.mxu0 0.0
  %1432 = vmatpush1.msra.mxu0 0.0
  %1433 = vmatprep.subr.mxu0 0.0
  %1434 = vmatpush1.msra.mxu0 0.0
  %1435 = vmatprep.subr.mxu0 0.0
  %1436 = vmatpush1.msra.mxu0 0.0
  %1437 = vmatprep.mubr.f32.mxu0 0.0
  %1438 = vmatmul.mubr.f32.gmra.mrb[0].mxu0 %v1300
  %v1439 = vpop.f32.mrb[0].mxu0
  %v1440 = vadd.f32 1e-05, %v1439
  %v1441 = vpop.f32.mrb[0].mxu0
  %v1442 = vadd.f32 1e-05, %v1441
  %1443 = vdwg.mxu0
  %1444 = vmatprep.subr.mxu0 %v374
  %1445 = vmatpush1.msra.mxu0 %v373
  %1446 = vmatprep.subr.mxu0 %v382
  %1447 = vmatpush1.msra.mxu0 %v381
  %1448 = vmatprep.subr.mxu0 %v390
  %1449 = vmatpush1.msra.mxu0 %v389
  %1450 = vmatprep.subr.mxu0 %v398
  %1451 = vmatpush1.msra.mxu0 %v397
  %1452 = vmatprep.subr.mxu0 %v406
  %1453 = vmatpush1.msra.mxu0 %v405
  %1454 = vmatprep.subr.mxu0 %v414
  %1455 = vmatpush1.msra.mxu0 %v413
  %1456 = vmatprep.subr.mxu0 %v422
  %1457 = vmatpush1.msra.mxu0 %v421
  %1458 = vmatprep.subr.mxu0 %v430
  %1459 = vmatpush1.msra.mxu0 %v429
  %1460 = vmatprep.subr.mxu0 0.0
  %1461 = vmatpush1.msra.mxu0 0.0
  %1462 = vmatprep.subr.mxu0 0.0
  %1463 = vmatpush1.msra.mxu0 0.0
  %1464 = vmatprep.subr.mxu0 0.0
  %1465 = vmatpush1.msra.mxu0 0.0
  %1466 = vmatprep.subr.mxu0 0.0
  %1467 = vmatpush1.msra.mxu0 0.0
  %1468 = vmatprep.subr.mxu0 0.0
  %1469 = vmatpush1.msra.mxu0 0.0
  %1470 = vmatprep.subr.mxu0 0.0
  %1471 = vmatpush1.msra.mxu0 0.0
  %1472 = vmatprep.subr.mxu0 0.0
  %1473 = vmatpush1.msra.mxu0 0.0
  %1474 = vmatprep.subr.mxu0 0.0
  %1475 = vmatpush1.msra.mxu0 0.0
  %1476 = vmatprep.subr.mxu0 0.0
  %1477 = vmatpush1.msra.mxu0 0.0
  %1478 = vmatprep.subr.mxu0 0.0
  %1479 = vmatpush1.msra.mxu0 0.0
  %1480 = vmatprep.subr.mxu0 0.0
  %1481 = vmatpush1.msra.mxu0 0.0
  %1482 = vmatprep.subr.mxu0 0.0
  %1483 = vmatpush1.msra.mxu0 0.0
  %1484 = vmatprep.subr.mxu0 0.0
  %1485 = vmatpush1.msra.mxu0 0.0
  %1486 = vmatprep.subr.mxu0 0.0
  %1487 = vmatpush1.msra.mxu0 0.0
  %1488 = vmatprep.subr.mxu0 0.0
  %1489 = vmatpush1.msra.mxu0 0.0
  %1490 = vmatprep.subr.mxu0 0.0
  %1491 = vmatpush1.msra.mxu0 0.0
  %1492 = vmatprep.subr.mxu0 0.0
  %1493 = vmatpush1.msra.mxu0 0.0
  %1494 = vmatprep.subr.mxu0 0.0
  %1495 = vmatpush1.msra.mxu0 0.0
  %1496 = vmatprep.subr.mxu0 0.0
  %1497 = vmatpush1.msra.mxu0 0.0
  %1498 = vmatprep.subr.mxu0 0.0
  %1499 = vmatpush1.msra.mxu0 0.0
  %1500 = vmatprep.subr.mxu0 0.0
  %1501 = vmatpush1.msra.mxu0 0.0
  %1502 = vmatprep.subr.mxu0 0.0
  %1503 = vmatpush1.msra.mxu0 0.0
  %1504 = vmatprep.subr.mxu0 0.0
  %1505 = vmatpush1.msra.mxu0 0.0
  %1506 = vmatprep.subr.mxu0 0.0
  %1507 = vmatpush1.msra.mxu0 0.0
  %1508 = vmatprep.mubr.f32.mxu0 0.0
  %1509 = vmatmul.mubr.f32.gmra.mrb[0].mxu0 %v1300
  %v1510 = vpop.f32.mrb[0].mxu0
  %v1511 = vadd.f32 1e-05, %v1510
  %v1512 = vpop.f32.mrb[0].mxu0
  %v1513 = vadd.f32 1e-05, %v1512
  %1514 = vdwg.mxu0
  %1515 = vmatprep.subr.mxu0 %v376
  %1516 = vmatpush1.msra.mxu0 %v375
  %1517 = vmatprep.subr.mxu0 %v384
  %1518 = vmatpush1.msra.mxu0 %v383
  %1519 = vmatprep.subr.mxu0 %v392
  %1520 = vmatpush1.msra.mxu0 %v391
  %1521 = vmatprep.subr.mxu0 %v400
  %1522 = vmatpush1.msra.mxu0 %v399
  %1523 = vmatprep.subr.mxu0 %v408
  %1524 = vmatpush1.msra.mxu0 %v407
  %1525 = vmatprep.subr.mxu0 %v416
  %1526 = vmatpush1.msra.mxu0 %v415
  %1527 = vmatprep.subr.mxu0 %v424
  %1528 = vmatpush1.msra.mxu0 %v423
  %1529 = vmatprep.subr.mxu0 %v432
  %1530 = vmatpush1.msra.mxu0 %v431
  %1531 = vmatprep.subr.mxu0 0.0
  %1532 = vmatpush1.msra.mxu0 0.0
  %1533 = vmatprep.subr.mxu0 0.0
  %1534 = vmatpush1.msra.mxu0 0.0
  %1535 = vmatprep.subr.mxu0 0.0
  %1536 = vmatpush1.msra.mxu0 0.0
  %1537 = vmatprep.subr.mxu0 0.0
  %1538 = vmatpush1.msra.mxu0 0.0
  %1539 = vmatprep.subr.mxu0 0.0
  %1540 = vmatpush1.msra.mxu0 0.0
  %1541 = vmatprep.subr.mxu0 0.0
  %1542 = vmatpush1.msra.mxu0 0.0
  %1543 = vmatprep.subr.mxu0 0.0
  %1544 = vmatpush1.msra.mxu0 0.0
  %1545 = vmatprep.subr.mxu0 0.0
  %1546 = vmatpush1.msra.mxu0 0.0
  %1547 = vmatprep.subr.mxu0 0.0
  %1548 = vmatpush1.msra.mxu0 0.0
  %1549 = vmatprep.subr.mxu0 0.0
  %1550 = vmatpush1.msra.mxu0 0.0
  %1551 = vmatprep.subr.mxu0 0.0
  %1552 = vmatpush1.msra.mxu0 0.0
  %1553 = vmatprep.subr.mxu0 0.0
  %1554 = vmatpush1.msra.mxu0 0.0
  %1555 = vmatprep.subr.mxu0 0.0
  %1556 = vmatpush1.msra.mxu0 0.0
  %1557 = vmatprep.subr.mxu0 0.0
  %1558 = vmatpush1.msra.mxu0 0.0
  %1559 = vmatprep.subr.mxu0 0.0
  %1560 = vmatpush1.msra.mxu0 0.0
  %1561 = vmatprep.subr.mxu0 0.0
  %1562 = vmatpush1.msra.mxu0 0.0
  %1563 = vmatprep.subr.mxu0 0.0
  %1564 = vmatpush1.msra.mxu0 0.0
  %1565 = vmatprep.subr.mxu0 0.0
  %1566 = vmatpush1.msra.mxu0 0.0
  %1567 = vmatprep.subr.mxu0 0.0
  %1568 = vmatpush1.msra.mxu0 0.0
  %1569 = vmatprep.subr.mxu0 0.0
  %1570 = vmatpush1.msra.mxu0 0.0
  %1571 = vmatprep.subr.mxu0 0.0
  %1572 = vmatpush1.msra.mxu0 0.0
  %1573 = vmatprep.subr.mxu0 0.0
  %1574 = vmatpush1.msra.mxu0 0.0
  %1575 = vmatprep.subr.mxu0 0.0
  %1576 = vmatpush1.msra.mxu0 0.0
  %1577 = vmatprep.subr.mxu0 0.0
  %1578 = vmatpush1.msra.mxu0 0.0
  %1579 = vmatprep.mubr.f32.mxu0 0.0
  %1580 = vmatmul.mubr.f32.gmra.mrb[0].mxu0 %v1300
  %v1581 = vpop.f32.mrb[0].mxu0
  %v1582 = vadd.f32 1e-05, %v1581
  %v1583 = vpop.f32.mrb[0].mxu0
  %v1584 = vadd.f32 1e-05, %v1583
  %1585 = vdwg.mxu0
  %v1586 = vrsqrt.pop %v1369
  %v1587 = vrsqrt.pop %v1371
  %v1588 = vrsqrt.pop %v1440
  %v1589 = vrsqrt.pop %v1442
  %v1590 = vrsqrt.pop %v1511
  %v1591 = vrsqrt.pop %v1513
  %v1592 = vrsqrt.pop %v1582
  %v1593 = vrsqrt.pop %v1584
  %v1594 = vmul.f32 %v1002, %v1586
  %v1595 = vmul.f32 %v1003, %v1587
  %v1596 = vmul.f32 %v1004, %v1588
  %v1597 = vmul.f32 %v1005, %v1589
  %v1598 = vmul.f32 %v1006, %v1590
  %v1599 = vmul.f32 %v1007, %v1591
  %v1600 = vmul.f32 %v1008, %v1592
  %v1601 = vmul.f32 %v1009, %v1593
  %v1602 = vld [vmem:[%s4] sm:$0xff]
  %v1604 = vlaneseq
  %v1605 = vshrl.u32 %v1604, 7
  %v1606 = vsub.s32 0, %v1605
  %v1607 = vrot.slane %v1602, %v1606
  %v1608 = vlaneseq
  %v1609 = vshrl.u32 %v1608, 7
  %v1610 = vsub.s32 1, %v1609
  %v1611 = vrot.slane %v1602, %v1610
  %v1612 = vlaneseq
  %v1613 = vshrl.u32 %v1612, 7
  %v1614 = vsub.s32 2, %v1613
  %v1615 = vrot.slane %v1602, %v1614
  %v1616 = vlaneseq
  %v1617 = vshrl.u32 %v1616, 7
  %v1618 = vsub.s32 3, %v1617
  %v1619 = vrot.slane %v1602, %v1618
  %v1620 = vlaneseq
  %v1621 = vshrl.u32 %v1620, 7
  %v1622 = vsub.s32 4, %v1621
  %v1623 = vrot.slane %v1602, %v1622
  %v1624 = vlaneseq
  %v1625 = vshrl.u32 %v1624, 7
  %v1626 = vsub.s32 5, %v1625
  %v1627 = vrot.slane %v1602, %v1626
  %v1628 = vlaneseq
  %v1629 = vshrl.u32 %v1628, 7
  %v1630 = vsub.s32 6, %v1629
  %v1631 = vrot.slane %v1602, %v1630
  %v1632 = vlaneseq
  %v1633 = vshrl.u32 %v1632, 7
  %v1634 = vsub.s32 7, %v1633
  %v1635 = vrot.slane %v1602, %v1634
  %v1644 = vmul.f32 %v1594, %v1607
  %v1645 = vmul.f32 %v1595, %v1611
  %v1646 = vmul.f32 %v1596, %v1615
  %v1647 = vmul.f32 %v1597, %v1619
  %v1648 = vmul.f32 %v1598, %v1623
  %v1649 = vmul.f32 %v1599, %v1627
  %v1650 = vmul.f32 %v1600, %v1631
  %v1651 = vmul.f32 %v1601, %v1635
  %v1652 = vld [vmem:[%s5] sm:$0xff]
  %v1654 = vlaneseq
  %v1655 = vshrl.u32 %v1654, 7
  %v1656 = vsub.s32 0, %v1655
  %v1657 = vrot.slane %v1652, %v1656
  %v1658 = vlaneseq
  %v1659 = vshrl.u32 %v1658, 7
  %v1660 = vsub.s32 1, %v1659
  %v1661 = vrot.slane %v1652, %v1660
  %v1662 = vlaneseq
  %v1663 = vshrl.u32 %v1662, 7
  %v1664 = vsub.s32 2, %v1663
  %v1665 = vrot.slane %v1652, %v1664
  %v1666 = vlaneseq
  %v1667 = vshrl.u32 %v1666, 7
  %v1668 = vsub.s32 3, %v1667
  %v1669 = vrot.slane %v1652, %v1668
  %v1670 = vlaneseq
  %v1671 = vshrl.u32 %v1670, 7
  %v1672 = vsub.s32 4, %v1671
  %v1673 = vrot.slane %v1652, %v1672
  %v1674 = vlaneseq
  %v1675 = vshrl.u32 %v1674, 7
  %v1676 = vsub.s32 5, %v1675
  %v1677 = vrot.slane %v1652, %v1676
  %v1678 = vlaneseq
  %v1679 = vshrl.u32 %v1678, 7
  %v1680 = vsub.s32 6, %v1679
  %v1681 = vrot.slane %v1652, %v1680
  %v1682 = vlaneseq
  %v1683 = vshrl.u32 %v1682, 7
  %v1684 = vsub.s32 7, %v1683
  %v1685 = vrot.slane %v1652, %v1684
  %v1694 = vadd.f32 %v1644, %v1657
  %v1695 = vadd.f32 %v1645, %v1661
  %v1696 = vadd.f32 %v1646, %v1665
  %v1697 = vadd.f32 %v1647, %v1669
  %v1698 = vadd.f32 %v1648, %v1673
  %v1699 = vadd.f32 %v1649, %v1677
  %v1700 = vadd.f32 %v1650, %v1681
  %v1701 = vadd.f32 %v1651, %v1685
  %v1702 = vmax.f32 %v1694, 0.0
  %v1703 = vmax.f32 %v1695, 0.0
  %v1704 = vmax.f32 %v1696, 0.0
  %v1705 = vmax.f32 %v1697, 0.0
  %v1706 = vmax.f32 %v1698, 0.0
  %v1707 = vmax.f32 %v1699, 0.0
  %v1708 = vmax.f32 %v1700, 0.0
  %v1709 = vmax.f32 %v1701, 0.0
  %v1710 = vpack.c.bf16 %v1702, %v1702
  %v1711 = vpack.c.bf16 %v1703, %v1703
  %v1712 = vpack.c.bf16 %v1704, %v1704
  %v1713 = vpack.c.bf16 %v1705, %v1705
  %v1714 = vpack.c.bf16 %v1706, %v1706
  %v1715 = vpack.c.bf16 %v1707, %v1707
  %v1716 = vpack.c.bf16 %v1708, %v1708
  %v1717 = vpack.c.bf16 %v1709, %v1709
  %v1726 = vcombine.low %v1710, %v1711
  %v1727 = vcombine.low %v1712, %v1713
  %v1728 = vcombine.low %v1714, %v1715
  %v1729 = vcombine.low %v1716, %v1717
  %v1731 = vunpack.c.l.s4 1966171168
  %v1732 = vunpack.c.0.s8 %v1731
  %v1733 = vlaneseq
  %v1734 = vshrl.u32 %v1733, 7
  %v1735 = vsub.s32 %v1732, %v1734
  %v1736 = vrot.slane %v1726, %v1735
  %v1738 = vunpack.c.l.s4 1966171168
  %v1739 = vunpack.c.0.s8 %v1738
  %v1740 = vlaneseq
  %v1741 = vshrl.u32 %v1740, 7
  %v1742 = vsub.s32 %v1739, %v1741
  %v1743 = vrot.slane %v1727, %v1742
  %v1745 = vunpack.c.l.s4 1966171168
  %v1746 = vunpack.c.0.s8 %v1745
  %v1747 = vlaneseq
  %v1748 = vshrl.u32 %v1747, 7
  %v1749 = vsub.s32 %v1746, %v1748
  %v1750 = vrot.slane %v1728, %v1749
  %v1752 = vunpack.c.l.s4 1966171168
  %v1753 = vunpack.c.0.s8 %v1752
  %v1754 = vlaneseq
  %v1755 = vshrl.u32 %v1754, 7
  %v1756 = vsub.s32 %v1753, %v1755
  %v1757 = vrot.slane %v1729, %v1756
  %v1758 = vcombine.low %v1736, %v1743
  %v1759 = vcombine.low %v1750, %v1757
  %v1761 = vunpack.c.l.s4 1966171168
  %v1762 = vunpack.c.0.s8 %v1761
  %v1763 = vlaneseq
  %v1764 = vshrl.u32 %v1763, 7
  %v1765 = vsub.s32 %v1762, %v1764
  %v1766 = vrot.slane %v1758, %v1765
  %v1768 = vunpack.c.l.s4 1966171168
  %v1769 = vunpack.c.0.s8 %v1768
  %v1770 = vlaneseq
  %v1771 = vshrl.u32 %v1770, 7
  %v1772 = vsub.s32 %v1769, %v1771
  %v1773 = vrot.slane %v1759, %v1772
  %v1774 = vcombine.low %v1766, %v1773
  %1776 = vst [vmem:[%s6] sm:$0xff] %v1774
  // Predicated region
  $region26: #{generator_forward.5} parent=0 // pred_check
    _
  $region27: #{generator_forward.5} parent=0 // pred_check_branch
    %1778 = sbr.rel (0) target = $region29
  $region28: #{generator_forward.5} parent=0 // pred_region
    _
  $region29: #{generator_forward.5} parent=0 // pred_fallthru
    _
  // Predicated region
  $region30: #{generator_forward.5} parent=0 // pred_check
    _
  $region31: #{generator_forward.5} parent=0 // pred_check_branch
    %1780 = sbr.rel (0) target = $region33
  $region32: #{generator_forward.5} parent=0 // pred_region
    _
  $region33: #{generator_forward.5} parent=0 // pred_fallthru
    _

// kernel: generator_forward.7
$region0: #{generator_forward.7}
  #allocation0 [shape = 'u32[]', space=smem, size = 0x4, offset = 0x4, fixed_abs, tag = 'smem constant byte address 0x4 - core index']
  #allocation1 [shape = 'u32[144,128]{1,0:T(1,128)}', space=vmem, size = 0x12000, scoped, tag = 'internal scratch']
  %s0 = inlined_call_operand.vmem [shape: bf16[2,32,82], index: 0, kind: input, shape index: {}]
  %s1 = inlined_call_operand.vmem [shape: bf16[9,64,32], index: 1, kind: input, shape index: {}]
  %s2 = inlined_call_operand.vmem [shape: f32[64,1], index: 2, kind: input, shape index: {}]
  %s3 = inlined_call_operand.vmem [shape: f32[64,1], index: 3, kind: input, shape index: {}]
  %s4 = inlined_call_operand.vmem [shape: bf16[2,64,64], index: 4, kind: output, shape index: {}]
  %s5 = sld [smem:[#allocation0]]
  $region49: #{generator_forward.7} parent=0
    _
  %s7 = ssub.s32 1, %s5
  %s8 = scalar_select 0, %s7, %s5
  loop: start=0, step=1, limit=4
  $region2: #{generator_forward.7} parent=0 // loop_pre_header
    _
  $region3: #{generator_forward.7} parent=0 // loop_header
    %s10 = sphi 0, %s14
    %p11 = scmp.ge.s32.totalorder %s10, 4
    %s20 = sphi 0, %s22
    %s23 = sphi 0, %s20
    %s24 = sphi 0, %s23
    %s40 = sphi 0, %s24
    %s44 = sphi 0, %s44
    %s46 = sphi 0, %s44
    %s47 = sphi 0, %s46
    %s61 = sphi 0, %s47
    %s65 = sphi 0, %s65
    %s67 = sphi 0, %s65
    %s68 = sphi 0, %s67
    %s82 = sphi 0, %s68
    %s86 = sphi 0, %s86
    %s88 = sphi 0, %s86
    %s89 = sphi 0, %s88
    %s103 = sphi 0, %s89
    %s109 = sphi 0, %s111
    %s112 = sphi 0, %s109
    %s113 = sphi 0, %s112
    %s129 = sphi 0, %s113
  $region4: #{generator_forward.7} parent=0 // loop_header_branch
    %13 = sbr.rel (%p11) target = $region8
  $region5: #{generator_forward.7} parent=0 // loop_body
    %s15 = ssub.s32 %s10, 1
    %s16 = ssub.s32 %s10, 2
    %s17 = sadd.s32 %s10, 1
    %s18 = ssub.s32 %s10, %s17
    %p19 = scmp.eq.s32.totalorder %s18, 0
    %s21 = sadd.s32 %s20, 1
    %s22 = scalar_select %p19, %s20, %s21
    %p25 = pneg %p19
    %p26 = scmp.eq.s32.totalorder %s10, 1
    %p27 = por %p25, %p26
    %p28 = scmp.ne.s32.totalorder %s20, %s23
    %p29 = scmp.eq.s32.totalorder %s10, 0
    %p30 = por %p28, %p29
    %p31 = scmp.ne.s32.totalorder %s20, %s23
    %p32 = scmp.eq.s32.totalorder %s15, 1
    %p33 = por %p31, %p32
    %p34 = scmp.ne.s32.totalorder %s23, %s24
    %p35 = scmp.eq.s32.totalorder %s15, 0
    %p36 = por %p34, %p35
    %p37 = scmp.ne.s32.totalorder %s23, %s24
    %p38 = scmp.eq.s32.totalorder %s16, 1
    %p39 = por %p37, %p38
    %p41 = scmp.ne.s32.totalorder %s24, %s40
    %p42 = scmp.eq.s32.totalorder %s16, 0
    %p43 = por %p41, %p42
    %s45 = sadd.s32 %s44, 1
    %p48 = scmp.eq.s32.totalorder %s10, 1
    %p49 = scmp.ne.s32.totalorder %s44, %s46
    %p50 = scmp.eq.s32.totalorder %s10, 0
    %p51 = por %p49, %p50
    %p52 = scmp.ne.s32.totalorder %s44, %s46
    %p53 = scmp.eq.s32.totalorder %s15, 1
    %p54 = por %p52, %p53
    %p55 = scmp.ne.s32.totalorder %s46, %s47
    %p56 = scmp.eq.s32.totalorder %s15, 0
    %p57 = por %p55, %p56
    %p58 = scmp.ne.s32.totalorder %s46, %s47
    %p59 = scmp.eq.s32.totalorder %s16, 1
    %p60 = por %p58, %p59
    %p62 = scmp.ne.s32.totalorder %s47, %s61
    %p63 = scmp.eq.s32.totalorder %s16, 0
    %p64 = por %p62, %p63
    %s66 = sadd.s32 %s65, 1
    %p69 = scmp.eq.s32.totalorder %s10, 1
    %p70 = scmp.ne.s32.totalorder %s65, %s67
    %p71 = scmp.eq.s32.totalorder %s10, 0
    %p72 = por %p70, %p71
    %p73 = scmp.ne.s32.totalorder %s65, %s67
    %p74 = scmp.eq.s32.totalorder %s15, 1
    %p75 = por %p73, %p74
    %p76 = scmp.ne.s32.totalorder %s67, %s68
    %p77 = scmp.eq.s32.totalorder %s15, 0
    %p78 = por %p76, %p77
    %p79 = scmp.ne.s32.totalorder %s67, %s68
    %p80 = scmp.eq.s32.totalorder %s16, 1
    %p81 = por %p79, %p80
    %p83 = scmp.ne.s32.totalorder %s68, %s82
    %p84 = scmp.eq.s32.totalorder %s16, 0
    %p85 = por %p83, %p84
    %s87 = sadd.s32 %s86, 1
    %p90 = scmp.eq.s32.totalorder %s10, 1
    %p91 = scmp.ne.s32.totalorder %s86, %s88
    %p92 = scmp.eq.s32.totalorder %s10, 0
    %p93 = por %p91, %p92
    %p94 = scmp.ne.s32.totalorder %s86, %s88
    %p95 = scmp.eq.s32.totalorder %s15, 1
    %p96 = por %p94, %p95
    %p97 = scmp.ne.s32.totalorder %s88, %s89
    %p98 = scmp.eq.s32.totalorder %s15, 0
    %p99 = por %p97, %p98
    %p100 = scmp.ne.s32.totalorder %s88, %s89
    %p101 = scmp.eq.s32.totalorder %s16, 1
    %p102 = por %p100, %p101
    %p104 = scmp.ne.s32.totalorder %s89, %s103
    %p105 = scmp.eq.s32.totalorder %s16, 0
    %p106 = por %p104, %p105
    %s107 = ssub.s32 %s10, %s17
    %p108 = scmp.eq.s32.totalorder %s107, 0
    %s110 = sadd.s32 %s109, 1
    %s111 = scalar_select %p108, %s109, %s110
    %p114 = pneg %p108
    %p115 = scmp.eq.s32.totalorder %s10, 1
    %p116 = por %p114, %p115
    %p117 = scmp.ne.s32.totalorder %s109, %s112
    %p118 = scmp.eq.s32.totalorder %s10, 0
    %p119 = por %p117, %p118
    %p120 = scmp.ne.s32.totalorder %s109, %s112
    %p121 = scmp.eq.s32.totalorder %s15, 1
    %p122 = por %p120, %p121
    %p123 = scmp.ne.s32.totalorder %s112, %s113
    %p124 = scmp.eq.s32.totalorder %s15, 0
    %p125 = por %p123, %p124
    %p126 = scmp.ne.s32.totalorder %s112, %s113
    %p127 = scmp.eq.s32.totalorder %s16, 1
    %p128 = por %p126, %p127
    %p130 = scmp.ne.s32.totalorder %s113, %s129
    %p131 = scmp.eq.s32.totalorder %s16, 0
    %p132 = por %p130, %p131
    %p133 = scmp.le.s32.totalorder 1, %s10
    %p134 = scmp.lt.s32.totalorder %s10, 3
    %p135 = pnand %p133, %p134
    %p136 = pneg %p135
    // Predicated region
    $region9: #{generator_forward.7} parent=5 // pred_check
      _
    $region10: #{generator_forward.7} parent=5 // pred_check_branch
      %138 = sbr.rel (%p135) target = $region12
    $region11: #{generator_forward.7} parent=5 // pred_region
      %s139 = ssub.s32 %s10, 1
      // Predicated region
      $region13: #{generator_forward.7} parent=11 // pred_check
        %p140 = pneg %p57
      $region14: #{generator_forward.7} parent=11 // pred_check_branch
        %142 = sbr.rel (%p140) target = $region16
      $region15: #{generator_forward.7} parent=11 // pred_region
        _
      $region16: #{generator_forward.7} parent=11 // pred_fallthru
        _
      // Predicated region
      $region17: #{generator_forward.7} parent=11 // pred_check
        %p143 = pneg %p78
      $region18: #{generator_forward.7} parent=11 // pred_check_branch
        %145 = sbr.rel (%p143) target = $region20
      $region19: #{generator_forward.7} parent=11 // pred_region
        _
      $region20: #{generator_forward.7} parent=11 // pred_fallthru
        _
      // Predicated region
      $region21: #{generator_forward.7} parent=11 // pred_check
        %p146 = pneg %p99
      $region22: #{generator_forward.7} parent=11 // pred_check_branch
        %148 = sbr.rel (%p146) target = $region24
      $region23: #{generator_forward.7} parent=11 // pred_region
        _
      $region24: #{generator_forward.7} parent=11 // pred_fallthru
        _
    $region12: #{generator_forward.7} parent=5 // pred_fallthru
      _
    %p149 = scmp.lt.s32.totalorder %s10, 2
    // Predicated region
    $region25: #{generator_forward.7} parent=5 // pred_check
      %p150 = pneg %p149
    $region26: #{generator_forward.7} parent=5 // pred_check_branch
      %152 = sbr.rel (%p150) target = $region28
    $region27: #{generator_forward.7} parent=5 // pred_region
      // Predicated region
      $region29: #{generator_forward.7} parent=27 // pred_check
        %p153 = pneg %p30
      $region30: #{generator_forward.7} parent=27 // pred_check_branch
        %155 = sbr.rel (%p153) target = $region32
      $region31: #{generator_forward.7} parent=27 // pred_region
        %p156 = scmp.lt.s32.totalorder %s10, 1
        %s157 = scalar_select %p156, %s10, 1
        %s158 = smul.addr %s157, 4
        %s159 = smul.addr %s158, 4
        %s160 = scalar_lea.vmem %s0, %s159
      $region32: #{generator_forward.7} parent=27 // pred_fallthru
        _
    $region28: #{generator_forward.7} parent=5 // pred_fallthru
      _
    %p161 = scmp.le.s32.totalorder 1, %s10
    %p162 = scmp.lt.s32.totalorder %s10, 3
    %p163 = pnand %p161, %p162
    %p164 = pneg %p163
    // Predicated region
    $region33: #{generator_forward.7} parent=5 // pred_check
      _
    $region34: #{generator_forward.7} parent=5 // pred_check_branch
      %166 = sbr.rel (%p163) target = $region36
    $region35: #{generator_forward.7} parent=5 // pred_region
      %s167 = ssub.s32 %s10, 1
      %p168 = scmp.lt.s32.totalorder %s15, 1
      %s169 = scalar_select %p168, %s15, 1
      %s170 = smul.addr %s169, 4
      %s171 = smul.addr %s170, 4
      %s172 = scalar_lea.vmem %s0, %s171
      %p173 = pneg %p36
      %p174 = pneg %p33
      %p175 = pneg %p57
      %p176 = pneg %p54
      %p177 = pneg %p78
      %p178 = pneg %p75
      %p179 = pneg %p99
      %p180 = pneg %p96
      %p181 = pneg %p125
      %p182 = pneg %p122
      %p183 = scmp.lt.s32.totalorder %s15, 1
      %s184 = scalar_select %p183, %s15, 1
      %s185 = smul.addr %s184, 8
      %s186 = smul.addr %s185, 4
      %s187 = scalar_lea.vmem %s4, %s186
      %p188 = scmp.lt.s32.totalorder %s15, 1
      %s189 = scalar_select %p188, %s15, 1
      %s190 = smul.addr %s189, 4
      %s191 = smul.addr %s190, 4
      %s192 = scalar_lea.vmem %s0, %s191
      %p193 = scmp.lt.s32.totalorder %s15, 1
      %s194 = scalar_select %p193, %s15, 1
      %s195 = smul.addr %s194, 8
      %s196 = smul.addr %s195, 4
      %s197 = scalar_lea.vmem %s4, %s196
      %v201 = vlaneseq
      %v202 = vand.u32 %v201, 127
      %vm203 = vcmp.lt.s32.totalorder %v202, 0
      %v204 = vsub.s32 0, %v202
      %v205 = vsel %vm203, %v204, %v202
      %v206 = vshrl.u32 %v205, 3
      %v207 = vand.u32 %v205, 7
      %v208 = vsub.s32 0, %v207
      %v209 = vsel %vm203, %v208, %v207
      %vm210 = vcmp.ne.s32.totalorder %v209, 0
      %vm211 = vcmp.lt.s32.totalorder %v209, 0
      %vm212 = vmand %vm211, %vm210
      %v213 = vadd.s32 %v209, 8
      %v214 = vsel %vm212, %v213, %v209
      %vm215 = vcmp.gt.s32.totalorder %v214, 0
      %vm216 = vcmp.lt.s32.totalorder %v214, 7
      %v217 = vld [vmem:[%s192] sm:$0xf]
      %v218 = vld [vmem:[%s192 + $0x4] sm:$0xf]
      %v219 = vld [vmem:[%s192 + $0x8] sm:$0xf]
      %v220 = vld [vmem:[%s192 + $0xc] sm:$0xf]
      %vm221 = vmpackc.low %vm215, %vm215
      %v222 = vsel %vm221, %v217, 0
      %v223 = vsel %vm221, %v218, 0
      %v224 = vsel %vm221, %v219, 0
      %v225 = vsel %vm221, %v220, 0
      %v226 = vld [vmem:[%s1] sm:$0xf]
      %v227 = vld [vmem:[%s1 + $0x4] sm:$0xf]
      %v228 = vld [vmem:[%s1 + $0x8] sm:$0xf]
      %v229 = vld [vmem:[%s1 + $0xc] sm:$0xf]
      %v230 = vld [vmem:[%s1 + $0x10] sm:$0xf]
      %v231 = vld [vmem:[%s1 + $0x14] sm:$0xf]
      %v232 = vld [vmem:[%s1 + $0x18] sm:$0xf]
      %v233 = vld [vmem:[%s1 + $0x1c] sm:$0xf]
      %s234 = scalar_lea.vmem %s1, 32
      %v235 = vld [vmem:[%s234] sm:$0xf]
      %v236 = vld [vmem:[%s234 + $0x4] sm:$0xf]
      %v237 = vld [vmem:[%s234 + $0x8] sm:$0xf]
      %v238 = vld [vmem:[%s234 + $0xc] sm:$0xf]
      %v239 = vld [vmem:[%s234 + $0x10] sm:$0xf]
      %v240 = vld [vmem:[%s234 + $0x14] sm:$0xf]
      %v241 = vld [vmem:[%s234 + $0x18] sm:$0xf]
      %v242 = vld [vmem:[%s234 + $0x1c] sm:$0xf]
      %v251 = vunpack.c.l.b16 %v235
      %v252 = vunpack.c.l.b16 %v236
      %v253 = vunpack.c.l.b16 %v237
      %v254 = vunpack.c.l.b16 %v238
      %v255 = vunpack.c.l.b16 %v239
      %v256 = vunpack.c.l.b16 %v240
      %v257 = vunpack.c.l.b16 %v241
      %v258 = vunpack.c.l.b16 %v242
      %v259 = vpack.c.b16 %v252, %v251
      %v260 = vpack.c.b16 %v254, %v253
      %v261 = vpack.c.b16 %v256, %v255
      %v262 = vpack.c.b16 %v258, %v257
      %v267 = vunpack.c.l.b16 %v217
      %v268 = vunpack.c.l.b16 %v218
      %v269 = vunpack.c.l.b16 %v219
      %v270 = vunpack.c.l.b16 %v220
      %v271 = vpack.c.b16 %v268, %v267
      %v272 = vpack.c.b16 %v270, %v269
      %273 = vrot.lane.b32.xlu0 %v271, 127
      %v274 = vpop.permute.xlu0 %273
      %275 = vrot.lane.b32.xlu0 %v272, 127
      %v276 = vpop.permute.xlu0 %275
      %vm279 = vcmask 261120
      %v281 = vsel %vm279, %v259, 0
      %v284 = vsel %vm279, %v260, 0
      %v287 = vsel %vm279, %v261, 0
      %v290 = vsel %vm279, %v262, 0
      %292 = vmatprep.subr.bf16.mxu0 0
      %293 = vmatpush1.bf16.msra.mxu0 %v274
      %294 = vmatprep.subr.bf16.mxu0 0
      %295 = vmatpush1.bf16.msra.mxu0 %v276
      %296 = vmatprep.subr.bf16.mxu0 0
      %297 = vmatpush1.bf16.msra.mxu0 0
      %298 = vmatprep.subr.bf16.mxu0 0
      %299 = vmatpush1.bf16.msra.mxu0 0
      %300 = vmatprep.subr.bf16.mxu0 0
      %301 = vmatpush1.bf16.msra.mxu0 0
      %302 = vmatprep.subr.bf16.mxu0 0
      %303 = vmatpush1.bf16.msra.mxu0 0
      %304 = vmatprep.subr.bf16.mxu0 0
      %305 = vmatpush1.bf16.msra.mxu0 0
      %306 = vmatprep.subr.bf16.mxu0 0
      %307 = vmatpush1.bf16.msra.mxu0 0
      %308 = vmatprep.subr.bf16.mxu0 0
      %309 = vmatpush1.bf16.msra.mxu0 0
      %310 = vmatprep.subr.bf16.mxu0 0
      %311 = vmatpush1.bf16.msra.mxu0 0
      %312 = vmatprep.subr.bf16.mxu0 0
      %313 = vmatpush1.bf16.msra.mxu0 0
      %314 = vmatprep.subr.bf16.mxu0 0
      %315 = vmatpush1.bf16.msra.mxu0 0
      %316 = vmatprep.subr.bf16.mxu0 0
      %317 = vmatpush1.bf16.msra.mxu0 0
      %318 = vmatprep.subr.bf16.mxu0 0
      %319 = vmatpush1.bf16.msra.mxu0 0
      %320 = vmatprep.subr.bf16.mxu0 0
      %321 = vmatpush1.bf16.msra.mxu0 0
      %322 = vmatprep.subr.bf16.mxu0 0
      %323 = vmatpush1.bf16.msra.mxu0 0
      %324 = vmatprep.mubr.bf16.mxu0 0
      %325 = vmatmul.mubr.bf16.gmra.mrb[0].mxu0 %v281
      %v326 = vpop.f32.mrb[0].mxu0
      %v327 = vadd.f32 0.0, %v326
      %v328 = vpop.f32.mrb[0].mxu0
      %v329 = vpop.f32.mrb[0].mxu0
      %v330 = vadd.f32 0.0, %v329
      %v331 = vpop.f32.mrb[0].mxu0
      %332 = vmatprep.mubr.bf16.mxu0 0
      %333 = vmatmul.mubr.bf16.gmra.mrb[0].mxu0 %v284
      %v334 = vpop.f32.mrb[0].mxu0
      %v335 = vadd.f32 0.0, %v334
      %v336 = vpop.f32.mrb[0].mxu0
      %v337 = vpop.f32.mrb[0].mxu0
      %v338 = vadd.f32 0.0, %v337
      %v339 = vpop.f32.mrb[0].mxu0
      %340 = vmatprep.mubr.bf16.mxu0 0
      %341 = vmatmul.mubr.bf16.gmra.mrb[0].mxu0 %v287
      %v342 = vpop.f32.mrb[0].mxu0
      %v343 = vadd.f32 0.0, %v342
      %v344 = vpop.f32.mrb[0].mxu0
      %v345 = vpop.f32.mrb[0].mxu0
      %v346 = vadd.f32 0.0, %v345
      %v347 = vpop.f32.mrb[0].mxu0
      %348 = vmatprep.mubr.bf16.mxu0 0
      %349 = vmatmul.mubr.bf16.gmra.mrb[0].mxu0 %v290
      %v350 = vpop.f32.mrb[0].mxu0
      %v351 = vadd.f32 0.0, %v350
      %v352 = vpop.f32.mrb[0].mxu0
      %v353 = vpop.f32.mrb[0].mxu0
      %v354 = vadd.f32 0.0, %v353
      %v355 = vpop.f32.mrb[0].mxu0
      %356 = vdwg.mxu0
      %v365 = vunpack.c.l.b16 %v226
      %v366 = vunpack.c.l.b16 %v227
      %v367 = vunpack.c.l.b16 %v228
      %v368 = vunpack.c.l.b16 %v229
      %v369 = vunpack.c.l.b16 %v230
      %v370 = vunpack.c.l.b16 %v231
      %v371 = vunpack.c.l.b16 %v232
      %v372 = vunpack.c.l.b16 %v233
      %v373 = vpack.c.b16 %v366, %v365
      %v374 = vpack.c.b16 %v368, %v367
      %v375 = vpack.c.b16 %v370, %v369
      %v376 = vpack.c.b16 %v372, %v371
      %v381 = vunpack.c.l.b16 %v222
      %v382 = vunpack.c.l.b16 %v223
      %v383 = vunpack.c.l.b16 %v224
      %v384 = vunpack.c.l.b16 %v225
      %v385 = vpack.c.b16 %v382, %v381
      %v386 = vpack.c.b16 %v384, %v383
      %v390 = vsel %vm279, %v373, 0
      %v393 = vsel %vm279, %v374, 0
      %v396 = vsel %vm279, %v375, 0
      %v399 = vsel %vm279, %v376, 0
      %401 = vmatprep.subr.bf16.mxu0 0
      %402 = vmatpush1.bf16.msra.mxu0 %v385
      %403 = vmatprep.subr.bf16.mxu0 0
      %404 = vmatpush1.bf16.msra.mxu0 %v386
      %405 = vmatprep.subr.bf16.mxu0 0
      %406 = vmatpush1.bf16.msra.mxu0 0
      %407 = vmatprep.subr.bf16.mxu0 0
      %408 = vmatpush1.bf16.msra.mxu0 0
      %409 = vmatprep.subr.bf16.mxu0 0
      %410 = vmatpush1.bf16.msra.mxu0 0
      %411 = vmatprep.subr.bf16.mxu0 0
      %412 = vmatpush1.bf16.msra.mxu0 0
      %413 = vmatprep.subr.bf16.mxu0 0
      %414 = vmatpush1.bf16.msra.mxu0 0
      %415 = vmatprep.subr.bf16.mxu0 0
      %416 = vmatpush1.bf16.msra.mxu0 0
      %417 = vmatprep.subr.bf16.mxu0 0
      %418 = vmatpush1.bf16.msra.mxu0 0
      %419 = vmatprep.subr.bf16.mxu0 0
      %420 = vmatpush1.bf16.msra.mxu0 0
      %421 = vmatprep.subr.bf16.mxu0 0
      %422 = vmatpush1.bf16.msra.mxu0 0
      %423 = vmatprep.subr.bf16.mxu0 0
      %424 = vmatpush1.bf16.msra.mxu0 0
      %425 = vmatprep.subr.bf16.mxu0 0
      %426 = vmatpush1.bf16.msra.mxu0 0
      %427 = vmatprep.subr.bf16.mxu0 0
      %428 = vmatpush1.bf16.msra.mxu0 0
      %429 = vmatprep.subr.bf16.mxu0 0
      %430 = vmatpush1.bf16.msra.mxu0 0
      %431 = vmatprep.subr.bf16.mxu0 0
      %432 = vmatpush1.bf16.msra.mxu0 0
      %433 = vmatprep.mubr.bf16.mxu0 0
      %434 = vmatmul.mubr.bf16.gmra.mrb[0].mxu0 %v390
      %v435 = vpop.f32.mrb[0].mxu0
      %v436 = vadd.f32 %v327, %v435
      %v437 = vpop.f32.mrb[0].mxu0
      %v438 = vpop.f32.mrb[0].mxu0
      %v439 = vadd.f32 %v330, %v438
      %v440 = vpop.f32.mrb[0].mxu0
      %441 = vmatprep.mubr.bf16.mxu0 0
      %442 = vmatmul.mubr.bf16.gmra.mrb[0].mxu0 %v393
      %v443 = vpop.f32.mrb[0].mxu0
      %v444 = vadd.f32 %v335, %v443
      %v445 = vpop.f32.mrb[0].mxu0
      %v446 = vpop.f32.mrb[0].mxu0
      %v447 = vadd.f32 %v338, %v446
      %v448 = vpop.f32.mrb[0].mxu0
      %449 = vmatprep.mubr.bf16.mxu0 0
      %450 = vmatmul.mubr.bf16.gmra.mrb[0].mxu0 %v396
      %v451 = vpop.f32.mrb[0].mxu0
      %v452 = vadd.f32 %v343, %v451
      %v453 = vpop.f32.mrb[0].mxu0
      %v454 = vpop.f32.mrb[0].mxu0
      %v455 = vadd.f32 %v346, %v454
      %v456 = vpop.f32.mrb[0].mxu0
      %457 = vmatprep.mubr.bf16.mxu0 0
      %458 = vmatmul.mubr.bf16.gmra.mrb[0].mxu0 %v399
      %v459 = vpop.f32.mrb[0].mxu0
      %v460 = vadd.f32 %v351, %v459
      %v461 = vpop.f32.mrb[0].mxu0
      %v462 = vpop.f32.mrb[0].mxu0
      %v463 = vadd.f32 %v354, %v462
      %v464 = vpop.f32.mrb[0].mxu0
      %465 = vdwg.mxu0
      %vm466 = vmpackc.low %vm216, %vm216
      %v467 = vsel %vm466, 65537, 0
      %468 = vrot.lane.b32.xlu0 %v467, 2
      %v469 = vpop.permute.xlu0 %468
      %vm470 = vcmp.ne.s16.totalorder %v469, 0
      %v471 = vsel %vm470, %v217, 0
      %v472 = vsel %vm470, %v218, 0
      %v473 = vsel %vm470, %v219, 0
      %v474 = vsel %vm470, %v220, 0
      %s475 = scalar_lea.vmem %s1, 64
      %v476 = vld [vmem:[%s475] sm:$0xf]
      %v477 = vld [vmem:[%s475 + $0x4] sm:$0xf]
      %v478 = vld [vmem:[%s475 + $0x8] sm:$0xf]
      %v479 = vld [vmem:[%s475 + $0xc] sm:$0xf]
      %v480 = vld [vmem:[%s475 + $0x10] sm:$0xf]
      %v481 = vld [vmem:[%s475 + $0x14] sm:$0xf]
      %v482 = vld [vmem:[%s475 + $0x18] sm:$0xf]
      %v483 = vld [vmem:[%s475 + $0x1c] sm:$0xf]
      %v492 = vunpack.c.l.b16 %v476
      %v493 = vunpack.c.l.b16 %v477
      %v494 = vunpack.c.l.b16 %v478
      %v495 = vunpack.c.l.b16 %v479
      %v496 = vunpack.c.l.b16 %v480
      %v497 = vunpack.c.l.b16 %v481
      %v498 = vunpack.c.l.b16 %v482
      %v499 = vunpack.c.l.b16 %v483
      %v500 = vpack.c.b16 %v493, %v492
      %v501 = vpack.c.b16 %v495, %v494
      %v502 = vpack.c.b16 %v497, %v496
      %v503 = vpack.c.b16 %v499, %v498
      %v508 = vunpack.c.l.b16 %v471
      %v509 = vunpack.c.l.b16 %v472
      %v510 = vunpack.c.l.b16 %v473
      %v511 = vunpack.c.l.b16 %v474
      %v512 = vpack.c.b16 %v509, %v508
      %v513 = vpack.c.b16 %v511, %v510
      %514 = vrot.lane.b32.xlu0 %v512, 126
      %v515 = vpop.permute.xlu0 %514
      %516 = vrot.lane.b32.xlu0 %v513, 126
      %v517 = vpop.permute.xlu0 %516
      %v521 = vsel %vm279, %v500, 0
      %v524 = vsel %vm279, %v501, 0
      %v527 = vsel %vm279, %v502, 0
      %v530 = vsel %vm279, %v503, 0
      %532 = vmatprep.subr.bf16.mxu0 0
      %533 = vmatpush1.bf16.msra.mxu0 %v515
      %534 = vmatprep.subr.bf16.mxu0 0
      %535 = vmatpush1.bf16.msra.mxu0 %v517
      %536 = vmatprep.subr.bf16.mxu0 0
      %537 = vmatpush1.bf16.msra.mxu0 0
      %538 = vmatprep.subr.bf16.mxu0 0
      %539 = vmatpush1.bf16.msra.mxu0 0
      %540 = vmatprep.subr.bf16.mxu0 0
      %541 = vmatpush1.bf16.msra.mxu0 0
      %542 = vmatprep.subr.bf16.mxu0 0
      %543 = vmatpush1.bf16.msra.mxu0 0
      %544 = vmatprep.subr.bf16.mxu0 0
      %545 = vmatpush1.bf16.msra.mxu0 0
      %546 = vmatprep.subr.bf16.mxu0 0
      %547 = vmatpush1.bf16.msra.mxu0 0
      %548 = vmatprep.subr.bf16.mxu0 0
      %549 = vmatpush1.bf16.msra.mxu0 0
      %550 = vmatprep.subr.bf16.mxu0 0
      %551 = vmatpush1.bf16.msra.mxu0 0
      %552 = vmatprep.subr.bf16.mxu0 0
      %553 = vmatpush1.bf16.msra.mxu0 0
      %554 = vmatprep.subr.bf16.mxu0 0
      %555 = vmatpush1.bf16.msra.mxu0 0
      %556 = vmatprep.subr.bf16.mxu0 0
      %557 = vmatpush1.bf16.msra.mxu0 0
      %558 = vmatprep.subr.bf16.mxu0 0
      %559 = vmatpush1.bf16.msra.mxu0 0
      %560 = vmatprep.subr.bf16.mxu0 0
      %561 = vmatpush1.bf16.msra.mxu0 0
      %562 = vmatprep.subr.bf16.mxu0 0
      %563 = vmatpush1.bf16.msra.mxu0 0
      %564 = vmatprep.mubr.bf16.mxu0 0
      %565 = vmatmul.mubr.bf16.gmra.mrb[0].mxu0 %v521
      %v566 = vpop.f32.mrb[0].mxu0
      %v567 = vadd.f32 0.0, %v566
      %v568 = vpop.f32.mrb[0].mxu0
      %v569 = vpop.f32.mrb[0].mxu0
      %v570 = vadd.f32 0.0, %v569
      %v571 = vpop.f32.mrb[0].mxu0
      %572 = vmatprep.mubr.bf16.mxu0 0
      %573 = vmatmul.mubr.bf16.gmra.mrb[0].mxu0 %v524
      %v574 = vpop.f32.mrb[0].mxu0
      %v575 = vadd.f32 0.0, %v574
      %v576 = vpop.f32.mrb[0].mxu0
      %v577 = vpop.f32.mrb[0].mxu0
      %v578 = vadd.f32 0.0, %v577
      %v579 = vpop.f32.mrb[0].mxu0
      %580 = vmatprep.mubr.bf16.mxu0 0
      %581 = vmatmul.mubr.bf16.gmra.mrb[0].mxu0 %v527
      %v582 = vpop.f32.mrb[0].mxu0
      %v583 = vadd.f32 0.0, %v582
      %v584 = vpop.f32.mrb[0].mxu0
      %v585 = vpop.f32.mrb[0].mxu0
      %v586 = vadd.f32 0.0, %v585
      %v587 = vpop.f32.mrb[0].mxu0
      %588 = vmatprep.mubr.bf16.mxu0 0
      %589 = vmatmul.mubr.bf16.gmra.mrb[0].mxu0 %v530
      %v590 = vpop.f32.mrb[0].mxu0
      %v591 = vadd.f32 0.0, %v590
      %v592 = vpop.f32.mrb[0].mxu0
      %v593 = vpop.f32.mrb[0].mxu0
      %v594 = vadd.f32 0.0, %v593
      %v595 = vpop.f32.mrb[0].mxu0
      %596 = vdwg.mxu0
      %v597 = vadd.f32 %v436, %v567
      %v598 = vadd.f32 %v439, %v570
      %v599 = vadd.f32 %v444, %v575
      %v600 = vadd.f32 %v447, %v578
      %v601 = vadd.f32 %v452, %v583
      %v602 = vadd.f32 %v455, %v586
      %v603 = vadd.f32 %v460, %v591
      %v604 = vadd.f32 %v463, %v594
      %v605 = vsel %vm221, 65537, 0
      %606 = vrot.lane.b32.xlu0 %v605, 8
      %v607 = vpop.permute.xlu0 %606
      %vm608 = vcmp.ne.s16.totalorder %v607, 0
      %v609 = vsel %vm608, %v217, 0
      %v610 = vsel %vm608, %v218, 0
      %v611 = vsel %vm608, %v219, 0
      %v612 = vsel %vm608, %v220, 0
      %s613 = scalar_lea.vmem %s1, 96
      %v614 = vld [vmem:[%s613] sm:$0xf]
      %v615 = vld [vmem:[%s613 + $0x4] sm:$0xf]
      %v616 = vld [vmem:[%s613 + $0x8] sm:$0xf]
      %v617 = vld [vmem:[%s613 + $0xc] sm:$0xf]
      %v618 = vld [vmem:[%s613 + $0x10] sm:$0xf]
      %v619 = vld [vmem:[%s613 + $0x14] sm:$0xf]
      %v620 = vld [vmem:[%s613 + $0x18] sm:$0xf]
      %v621 = vld [vmem:[%s613 + $0x1c] sm:$0xf]
      %v630 = vunpack.c.l.b16 %v614
      %v631 = vunpack.c.l.b16 %v615
      %v632 = vunpack.c.l.b16 %v616
      %v633 = vunpack.c.l.b16 %v617
      %v634 = vunpack.c.l.b16 %v618
      %v635 = vunpack.c.l.b16 %v619
      %v636 = vunpack.c.l.b16 %v620
      %v637 = vunpack.c.l.b16 %v621
      %v638 = vpack.c.b16 %v631, %v630
      %v639 = vpack.c.b16 %v633, %v632
      %v640 = vpack.c.b16 %v635, %v634
      %v641 = vpack.c.b16 %v637, %v636
      %v646 = vunpack.c.l.b16 %v609
      %v647 = vunpack.c.l.b16 %v610
      %v648 = vunpack.c.l.b16 %v611
      %v649 = vunpack.c.l.b16 %v612
      %v650 = vpack.c.b16 %v647, %v646
      %v651 = vpack.c.b16 %v649, %v648
      %652 = vrot.lane.b32.xlu0 %v650, 120
      %v653 = vpop.permute.xlu0 %652
      %654 = vrot.lane.b32.xlu0 %v651, 120
      %v655 = vpop.permute.xlu0 %654
      %v659 = vsel %vm279, %v638, 0
      %v662 = vsel %vm279, %v639, 0
      %v665 = vsel %vm279, %v640, 0
      %v668 = vsel %vm279, %v641, 0
      %670 = vmatprep.subr.bf16.mxu0 0
      %671 = vmatpush1.bf16.msra.mxu0 %v653
      %672 = vmatprep.subr.bf16.mxu0 0
      %673 = vmatpush1.bf16.msra.mxu0 %v655
      %674 = vmatprep.subr.bf16.mxu0 0
      %675 = vmatpush1.bf16.msra.mxu0 0
      %676 = vmatprep.subr.bf16.mxu0 0
      %677 = vmatpush1.bf16.msra.mxu0 0
      %678 = vmatprep.subr.bf16.mxu0 0
      %679 = vmatpush1.bf16.msra.mxu0 0
      %680 = vmatprep.subr.bf16.mxu0 0
      %681 = vmatpush1.bf16.msra.mxu0 0
      %682 = vmatprep.subr.bf16.mxu0 0
      %683 = vmatpush1.bf16.msra.mxu0 0
      %684 = vmatprep.subr.bf16.mxu0 0
      %685 = vmatpush1.bf16.msra.mxu0 0
      %686 = vmatprep.subr.bf16.mxu0 0
      %687 = vmatpush1.bf16.msra.mxu0 0
      %688 = vmatprep.subr.bf16.mxu0 0
      %689 = vmatpush1.bf16.msra.mxu0 0
      %690 = vmatprep.subr.bf16.mxu0 0
      %691 = vmatpush1.bf16.msra.mxu0 0
      %692 = vmatprep.subr.bf16.mxu0 0
      %693 = vmatpush1.bf16.msra.mxu0 0
      %694 = vmatprep.subr.bf16.mxu0 0
      %695 = vmatpush1.bf16.msra.mxu0 0
      %696 = vmatprep.subr.bf16.mxu0 0
      %697 = vmatpush1.bf16.msra.mxu0 0
      %698 = vmatprep.subr.bf16.mxu0 0
      %699 = vmatpush1.bf16.msra.mxu0 0
      %700 = vmatprep.subr.bf16.mxu0 0
      %701 = vmatpush1.bf16.msra.mxu0 0
      %702 = vmatprep.mubr.bf16.mxu0 0
      %703 = vmatmul.mubr.bf16.gmra.mrb[0].mxu0 %v659
      %v704 = vpop.f32.mrb[0].mxu0
      %v705 = vadd.f32 0.0, %v704
      %v706 = vpop.f32.mrb[0].mxu0
      %v707 = vpop.f32.mrb[0].mxu0
      %v708 = vadd.f32 0.0, %v707
      %v709 = vpop.f32.mrb[0].mxu0
      %710 = vmatprep.mubr.bf16.mxu0 0
      %711 = vmatmul.mubr.bf16.gmra.mrb[0].mxu0 %v662
      %v712 = vpop.f32.mrb[0].mxu0
      %v713 = vadd.f32 0.0, %v712
      %v714 = vpop.f32.mrb[0].mxu0
      %v715 = vpop.f32.mrb[0].mxu0
      %v716 = vadd.f32 0.0, %v715
      %v717 = vpop.f32.mrb[0].mxu0
      %718 = vmatprep.mubr.bf16.mxu0 0
      %719 = vmatmul.mubr.bf16.gmra.mrb[0].mxu0 %v665
      %v720 = vpop.f32.mrb[0].mxu0
      %v721 = vadd.f32 0.0, %v720
      %v722 = vpop.f32.mrb[0].mxu0
      %v723 = vpop.f32.mrb[0].mxu0
      %v724 = vadd.f32 0.0, %v723
      %v725 = vpop.f32.mrb[0].mxu0
      %726 = vmatprep.mubr.bf16.mxu0 0
      %727 = vmatmul.mubr.bf16.gmra.mrb[0].mxu0 %v668
      %v728 = vpop.f32.mrb[0].mxu0
      %v729 = vadd.f32 0.0, %v728
      %v730 = vpop.f32.mrb[0].mxu0
      %v731 = vpop.f32.mrb[0].mxu0
      %v732 = vadd.f32 0.0, %v731
      %v733 = vpop.f32.mrb[0].mxu0
      %734 = vdwg.mxu0
      %v735 = vadd.f32 %v597, %v705
      %v736 = vadd.f32 %v598, %v708
      %v737 = vadd.f32 %v599, %v713
      %v738 = vadd.f32 %v600, %v716
      %v739 = vadd.f32 %v601, %v721
      %v740 = vadd.f32 %v602, %v724
      %v741 = vadd.f32 %v603, %v729
      %v742 = vadd.f32 %v604, %v732
      %s743 = scalar_lea.vmem %s1, 128
      %v744 = vld [vmem:[%s743] sm:$0xf]
      %v745 = vld [vmem:[%s743 + $0x4] sm:$0xf]
      %v746 = vld [vmem:[%s743 + $0x8] sm:$0xf]
      %v747 = vld [vmem:[%s743 + $0xc] sm:$0xf]
      %v748 = vld [vmem:[%s743 + $0x10] sm:$0xf]
      %v749 = vld [vmem:[%s743 + $0x14] sm:$0xf]
      %v750 = vld [vmem:[%s743 + $0x18] sm:$0xf]
      %v751 = vld [vmem:[%s743 + $0x1c] sm:$0xf]
      %v760 = vunpack.c.l.b16 %v744
      %v761 = vunpack.c.l.b16 %v745
      %v762 = vunpack.c.l.b16 %v746
      %v763 = vunpack.c.l.b16 %v747
      %v764 = vunpack.c.l.b16 %v748
      %v765 = vunpack.c.l.b16 %v749
      %v766 = vunpack.c.l.b16 %v750
      %v767 = vunpack.c.l.b16 %v751
      %v768 = vpack.c.b16 %v761, %v760
      %v769 = vpack.c.b16 %v763, %v762
      %v770 = vpack.c.b16 %v765, %v764
      %v771 = vpack.c.b16 %v767, %v766
      %772 = vrot.lane.b32.xlu0 %v271, 119
      %v773 = vpop.permute.xlu0 %772
      %774 = vrot.lane.b32.xlu0 %v272, 119
      %v775 = vpop.permute.xlu0 %774
      %v779 = vsel %vm279, %v768, 0
      %v782 = vsel %vm279, %v769, 0
      %v785 = vsel %vm279, %v770, 0
      %v788 = vsel %vm279, %v771, 0
      %790 = vmatprep.subr.bf16.mxu0 0
      %791 = vmatpush1.bf16.msra.mxu0 %v773
      %792 = vmatprep.subr.bf16.mxu0 0
      %793 = vmatpush1.bf16.msra.mxu0 %v775
      %794 = vmatprep.subr.bf16.mxu0 0
      %795 = vmatpush1.bf16.msra.mxu0 0
      %796 = vmatprep.subr.bf16.mxu0 0
      %797 = vmatpush1.bf16.msra.mxu0 0
      %798 = vmatprep.subr.bf16.mxu0 0
      %799 = vmatpush1.bf16.msra.mxu0 0
      %800 = vmatprep.subr.bf16.mxu0 0
      %801 = vmatpush1.bf16.msra.mxu0 0
      %802 = vmatprep.subr.bf16.mxu0 0
      %803 = vmatpush1.bf16.msra.mxu0 0
      %804 = vmatprep.subr.bf16.mxu0 0
      %805 = vmatpush1.bf16.msra.mxu0 0
      %806 = vmatprep.subr.bf16.mxu0 0
      %807 = vmatpush1.bf16.msra.mxu0 0
      %808 = vmatprep.subr.bf16.mxu0 0
      %809 = vmatpush1.bf16.msra.mxu0 0
      %810 = vmatprep.subr.bf16.mxu0 0
      %811 = vmatpush1.bf16.msra.mxu0 0
      %812 = vmatprep.subr.bf16.mxu0 0
      %813 = vmatpush1.bf16.msra.mxu0 0
      %814 = vmatprep.subr.bf16.mxu0 0
      %815 = vmatpush1.bf16.msra.mxu0 0
      %816 = vmatprep.subr.bf16.mxu0 0
      %817 = vmatpush1.bf16.msra.mxu0 0
      %818 = vmatprep.subr.bf16.mxu0 0
      %819 = vmatpush1.bf16.msra.mxu0 0
      %820 = vmatprep.subr.bf16.mxu0 0
      %821 = vmatpush1.bf16.msra.mxu0 0
      %822 = vmatprep.mubr.bf16.mxu0 0
      %823 = vmatmul.mubr.bf16.gmra.mrb[0].mxu0 %v779
      %v824 = vpop.f32.mrb[0].mxu0
      %v825 = vadd.f32 0.0, %v824
      %v826 = vpop.f32.mrb[0].mxu0
      %v827 = vpop.f32.mrb[0].mxu0
      %v828 = vadd.f32 0.0, %v827
      %v829 = vpop.f32.mrb[0].mxu0
      %830 = vmatprep.mubr.bf16.mxu0 0
      %831 = vmatmul.mubr.bf16.gmra.mrb[0].mxu0 %v782
      %v832 = vpop.f32.mrb[0].mxu0
      %v833 = vadd.f32 0.0, %v832
      %v834 = vpop.f32.mrb[0].mxu0
      %v835 = vpop.f32.mrb[0].mxu0
      %v836 = vadd.f32 0.0, %v835
      %v837 = vpop.f32.mrb[0].mxu0
      %838 = vmatprep.mubr.bf16.mxu0 0
      %839 = vmatmul.mubr.bf16.gmra.mrb[0].mxu0 %v785
      %v840 = vpop.f32.mrb[0].mxu0
      %v841 = vadd.f32 0.0, %v840
      %v842 = vpop.f32.mrb[0].mxu0
      %v843 = vpop.f32.mrb[0].mxu0
      %v844 = vadd.f32 0.0, %v843
      %v845 = vpop.f32.mrb[0].mxu0
      %846 = vmatprep.mubr.bf16.mxu0 0
      %847 = vmatmul.mubr.bf16.gmra.mrb[0].mxu0 %v788
      %v848 = vpop.f32.mrb[0].mxu0
      %v849 = vadd.f32 0.0, %v848
      %v850 = vpop.f32.mrb[0].mxu0
      %v851 = vpop.f32.mrb[0].mxu0
      %v852 = vadd.f32 0.0, %v851
      %v853 = vpop.f32.mrb[0].mxu0
      %854 = vdwg.mxu0
      %v855 = vadd.f32 %v735, %v825
      %v856 = vadd.f32 %v736, %v828
      %v857 = vadd.f32 %v737, %v833
      %v858 = vadd.f32 %v738, %v836
      %v859 = vadd.f32 %v739, %v841
      %v860 = vadd.f32 %v740, %v844
      %v861 = vadd.f32 %v741, %v849
      %v862 = vadd.f32 %v742, %v852
      %863 = vrot.lane.b32.xlu0 %v467, 10
      %v864 = vpop.permute.xlu0 %863
      %vm865 = vcmp.ne.s16.totalorder %v864, 0
      %v866 = vsel %vm865, %v217, 0
      %v867 = vsel %vm865, %v218, 0
      %v868 = vsel %vm865, %v219, 0
      %v869 = vsel %vm865, %v220, 0
      %s870 = scalar_lea.vmem %s1, 160
      %v871 = vld [vmem:[%s870] sm:$0xf]
      %v872 = vld [vmem:[%s870 + $0x4] sm:$0xf]
      %v873 = vld [vmem:[%s870 + $0x8] sm:$0xf]
      %v874 = vld [vmem:[%s870 + $0xc] sm:$0xf]
      %v875 = vld [vmem:[%s870 + $0x10] sm:$0xf]
      %v876 = vld [vmem:[%s870 + $0x14] sm:$0xf]
      %v877 = vld [vmem:[%s870 + $0x18] sm:$0xf]
      %v878 = vld [vmem:[%s870 + $0x1c] sm:$0xf]
      %v887 = vunpack.c.l.b16 %v871
      %v888 = vunpack.c.l.b16 %v872
      %v889 = vunpack.c.l.b16 %v873
      %v890 = vunpack.c.l.b16 %v874
      %v891 = vunpack.c.l.b16 %v875
      %v892 = vunpack.c.l.b16 %v876
      %v893 = vunpack.c.l.b16 %v877
      %v894 = vunpack.c.l.b16 %v878
      %v895 = vpack.c.b16 %v888, %v887
      %v896 = vpack.c.b16 %v890, %v889
      %v897 = vpack.c.b16 %v892, %v891
      %v898 = vpack.c.b16 %v894, %v893
      %v903 = vunpack.c.l.b16 %v866
      %v904 = vunpack.c.l.b16 %v867
      %v905 = vunpack.c.l.b16 %v868
      %v906 = vunpack.c.l.b16 %v869
      %v907 = vpack.c.b16 %v904, %v903
      %v908 = vpack.c.b16 %v906, %v905
      %909 = vrot.lane.b32.xlu0 %v907, 118
      %v910 = vpop.permute.xlu0 %909
      %911 = vrot.lane.b32.xlu0 %v908, 118
      %v912 = vpop.permute.xlu0 %911
      %v916 = vsel %vm279, %v895, 0
      %v919 = vsel %vm279, %v896, 0
      %v922 = vsel %vm279, %v897, 0
      %v925 = vsel %vm279, %v898, 0
      %927 = vmatprep.subr.bf16.mxu0 0
      %928 = vmatpush1.bf16.msra.mxu0 %v910
      %929 = vmatprep.subr.bf16.mxu0 0
      %930 = vmatpush1.bf16.msra.mxu0 %v912
      %931 = vmatprep.subr.bf16.mxu0 0
      %932 = vmatpush1.bf16.msra.mxu0 0
      %933 = vmatprep.subr.bf16.mxu0 0
      %934 = vmatpush1.bf16.msra.mxu0 0
      %935 = vmatprep.subr.bf16.mxu0 0
      %936 = vmatpush1.bf16.msra.mxu0 0
      %937 = vmatprep.subr.bf16.mxu0 0
      %938 = vmatpush1.bf16.msra.mxu0 0
      %939 = vmatprep.subr.bf16.mxu0 0
      %940 = vmatpush1.bf16.msra.mxu0 0
      %941 = vmatprep.subr.bf16.mxu0 0
      %942 = vmatpush1.bf16.msra.mxu0 0
      %943 = vmatprep.subr.bf16.mxu0 0
      %944 = vmatpush1.bf16.msra.mxu0 0
      %945 = vmatprep.subr.bf16.mxu0 0
      %946 = vmatpush1.bf16.msra.mxu0 0
      %947 = vmatprep.subr.bf16.mxu0 0
      %948 = vmatpush1.bf16.msra.mxu0 0
      %949 = vmatprep.subr.bf16.mxu0 0
      %950 = vmatpush1.bf16.msra.mxu0 0
      %951 = vmatprep.subr.bf16.mxu0 0
      %952 = vmatpush1.bf16.msra.mxu0 0
      %953 = vmatprep.subr.bf16.mxu0 0
      %954 = vmatpush1.bf16.msra.mxu0 0
      %955 = vmatprep.subr.bf16.mxu0 0
      %956 = vmatpush1.bf16.msra.mxu0 0
      %957 = vmatprep.subr.bf16.mxu0 0
      %958 = vmatpush1.bf16.msra.mxu0 0
      %959 = vmatprep.mubr.bf16.mxu0 0
      %960 = vmatmul.mubr.bf16.gmra.mrb[0].mxu0 %v916
      %v961 = vpop.f32.mrb[0].mxu0
      %v962 = vadd.f32 0.0, %v961
      %v963 = vpop.f32.mrb[0].mxu0
      %v964 = vpop.f32.mrb[0].mxu0
      %v965 = vadd.f32 0.0, %v964
      %v966 = vpop.f32.mrb[0].mxu0
      %967 = vmatprep.mubr.bf16.mxu0 0
      %968 = vmatmul.mubr.bf16.gmra.mrb[0].mxu0 %v919
      %v969 = vpop.f32.mrb[0].mxu0
      %v970 = vadd.f32 0.0, %v969
      %v971 = vpop.f32.mrb[0].mxu0
      %v972 = vpop.f32.mrb[0].mxu0
      %v973 = vadd.f32 0.0, %v972
      %v974 = vpop.f32.mrb[0].mxu0
      %975 = vmatprep.mubr.bf16.mxu0 0
      %976 = vmatmul.mubr.bf16.gmra.mrb[0].mxu0 %v922
      %v977 = vpop.f32.mrb[0].mxu0
      %v978 = vadd.f32 0.0, %v977
      %v979 = vpop.f32.mrb[0].mxu0
      %v980 = vpop.f32.mrb[0].mxu0
      %v981 = vadd.f32 0.0, %v980
      %v982 = vpop.f32.mrb[0].mxu0
      %983 = vmatprep.mubr.bf16.mxu0 0
      %984 = vmatmul.mubr.bf16.gmra.mrb[0].mxu0 %v925
      %v985 = vpop.f32.mrb[0].mxu0
      %v986 = vadd.f32 0.0, %v985
      %v987 = vpop.f32.mrb[0].mxu0
      %v988 = vpop.f32.mrb[0].mxu0
      %v989 = vadd.f32 0.0, %v988
      %v990 = vpop.f32.mrb[0].mxu0
      %991 = vdwg.mxu0
      %v992 = vadd.f32 %v855, %v962
      %v993 = vadd.f32 %v856, %v965
      %v994 = vadd.f32 %v857, %v970
      %v995 = vadd.f32 %v858, %v973
      %v996 = vadd.f32 %v859, %v978
      %v997 = vadd.f32 %v860, %v981
      %v998 = vadd.f32 %v861, %v986
      %v999 = vadd.f32 %v862, %v989
      %1000 = vrot.lane.b32.xlu0 %v605, 16
      %v1001 = vpop.permute.xlu0 %1000
      %vm1002 = vcmp.ne.s16.totalorder %v1001, 0
      %v1003 = vsel %vm1002, %v217, 0
      %v1004 = vsel %vm1002, %v218, 0
      %v1005 = vsel %vm1002, %v219, 0
      %v1006 = vsel %vm1002, %v220, 0
      %s1007 = scalar_lea.vmem %s1, 192
      %v1008 = vld [vmem:[%s1007] sm:$0xf]
      %v1009 = vld [vmem:[%s1007 + $0x4] sm:$0xf]
      %v1010 = vld [vmem:[%s1007 + $0x8] sm:$0xf]
      %v1011 = vld [vmem:[%s1007 + $0xc] sm:$0xf]
      %v1012 = vld [vmem:[%s1007 + $0x10] sm:$0xf]
      %v1013 = vld [vmem:[%s1007 + $0x14] sm:$0xf]
      %v1014 = vld [vmem:[%s1007 + $0x18] sm:$0xf]
      %v1015 = vld [vmem:[%s1007 + $0x1c] sm:$0xf]
      %v1024 = vunpack.c.l.b16 %v1008
      %v1025 = vunpack.c.l.b16 %v1009
      %v1026 = vunpack.c.l.b16 %v1010
      %v1027 = vunpack.c.l.b16 %v1011
      %v1028 = vunpack.c.l.b16 %v1012
      %v1029 = vunpack.c.l.b16 %v1013
      %v1030 = vunpack.c.l.b16 %v1014
      %v1031 = vunpack.c.l.b16 %v1015
      %v1032 = vpack.c.b16 %v1025, %v1024
      %v1033 = vpack.c.b16 %v1027, %v1026
      %v1034 = vpack.c.b16 %v1029, %v1028
      %v1035 = vpack.c.b16 %v1031, %v1030
      %v1040 = vunpack.c.l.b16 %v1003
      %v1041 = vunpack.c.l.b16 %v1004
      %v1042 = vunpack.c.l.b16 %v1005
      %v1043 = vunpack.c.l.b16 %v1006
      %v1044 = vpack.c.b16 %v1041, %v1040
      %v1045 = vpack.c.b16 %v1043, %v1042
      %1046 = vrot.lane.b32.xlu0 %v1044, 112
      %v1047 = vpop.permute.xlu0 %1046
      %1048 = vrot.lane.b32.xlu0 %v1045, 112
      %v1049 = vpop.permute.xlu0 %1048
      %v1053 = vsel %vm279, %v1032, 0
      %v1056 = vsel %vm279, %v1033, 0
      %v1059 = vsel %vm279, %v1034, 0
      %v1062 = vsel %vm279, %v1035, 0
      %1064 = vmatprep.subr.bf16.mxu0 0
      %1065 = vmatpush1.bf16.msra.mxu0 %v1047
      %1066 = vmatprep.subr.bf16.mxu0 0
      %1067 = vmatpush1.bf16.msra.mxu0 %v1049
      %1068 = vmatprep.subr.bf16.mxu0 0
      %1069 = vmatpush1.bf16.msra.mxu0 0
      %1070 = vmatprep.subr.bf16.mxu0 0
      %1071 = vmatpush1.bf16.msra.mxu0 0
      %1072 = vmatprep.subr.bf16.mxu0 0
      %1073 = vmatpush1.bf16.msra.mxu0 0
      %1074 = vmatprep.subr.bf16.mxu0 0
      %1075 = vmatpush1.bf16.msra.mxu0 0
      %1076 = vmatprep.subr.bf16.mxu0 0
      %1077 = vmatpush1.bf16.msra.mxu0 0
      %1078 = vmatprep.subr.bf16.mxu0 0
      %1079 = vmatpush1.bf16.msra.mxu0 0
      %1080 = vmatprep.subr.bf16.mxu0 0
      %1081 = vmatpush1.bf16.msra.mxu0 0
      %1082 = vmatprep.subr.bf16.mxu0 0
      %1083 = vmatpush1.bf16.msra.mxu0 0
      %1084 = vmatprep.subr.bf16.mxu0 0
      %1085 = vmatpush1.bf16.msra.mxu0 0
      %1086 = vmatprep.subr.bf16.mxu0 0
      %1087 = vmatpush1.bf16.msra.mxu0 0
      %1088 = vmatprep.subr.bf16.mxu0 0
      %1089 = vmatpush1.bf16.msra.mxu0 0
      %1090 = vmatprep.subr.bf16.mxu0 0
      %1091 = vmatpush1.bf16.msra.mxu0 0
      %1092 = vmatprep.subr.bf16.mxu0 0
      %1093 = vmatpush1.bf16.msra.mxu0 0
      %1094 = vmatprep.subr.bf16.mxu0 0
      %1095 = vmatpush1.bf16.msra.mxu0 0
      %1096 = vmatprep.mubr.bf16.mxu0 0
      %1097 = vmatmul.mubr.bf16.gmra.mrb[0].mxu0 %v1053
      %v1098 = vpop.f32.mrb[0].mxu0
      %v1099 = vadd.f32 0.0, %v1098
      %v1100 = vpop.f32.mrb[0].mxu0
      %v1101 = vpop.f32.mrb[0].mxu0
      %v1102 = vadd.f32 0.0, %v1101
      %v1103 = vpop.f32.mrb[0].mxu0
      %1104 = vmatprep.mubr.bf16.mxu0 0
      %1105 = vmatmul.mubr.bf16.gmra.mrb[0].mxu0 %v1056
      %v1106 = vpop.f32.mrb[0].mxu0
      %v1107 = vadd.f32 0.0, %v1106
      %v1108 = vpop.f32.mrb[0].mxu0
      %v1109 = vpop.f32.mrb[0].mxu0
      %v1110 = vadd.f32 0.0, %v1109
      %v1111 = vpop.f32.mrb[0].mxu0
      %1112 = vmatprep.mubr.bf16.mxu0 0
      %1113 = vmatmul.mubr.bf16.gmra.mrb[0].mxu0 %v1059
      %v1114 = vpop.f32.mrb[0].mxu0
      %v1115 = vadd.f32 0.0, %v1114
      %v1116 = vpop.f32.mrb[0].mxu0
      %v1117 = vpop.f32.mrb[0].mxu0
      %v1118 = vadd.f32 0.0, %v1117
      %v1119 = vpop.f32.mrb[0].mxu0
      %1120 = vmatprep.mubr.bf16.mxu0 0
      %1121 = vmatmul.mubr.bf16.gmra.mrb[0].mxu0 %v1062
      %v1122 = vpop.f32.mrb[0].mxu0
      %v1123 = vadd.f32 0.0, %v1122
      %v1124 = vpop.f32.mrb[0].mxu0
      %v1125 = vpop.f32.mrb[0].mxu0
      %v1126 = vadd.f32 0.0, %v1125
      %v1127 = vpop.f32.mrb[0].mxu0
      %1128 = vdwg.mxu0
      %v1129 = vadd.f32 %v992, %v1099
      %v1130 = vadd.f32 %v993, %v1102
      %v1131 = vadd.f32 %v994, %v1107
      %v1132 = vadd.f32 %v995, %v1110
      %v1133 = vadd.f32 %v996, %v1115
      %v1134 = vadd.f32 %v997, %v1118
      %v1135 = vadd.f32 %v998, %v1123
      %v1136 = vadd.f32 %v999, %v1126
      %s1137 = scalar_lea.vmem %s1, 224
      %v1138 = vld [vmem:[%s1137] sm:$0xf]
      %v1139 = vld [vmem:[%s1137 + $0x4] sm:$0xf]
      %v1140 = vld [vmem:[%s1137 + $0x8] sm:$0xf]
      %v1141 = vld [vmem:[%s1137 + $0xc] sm:$0xf]
      %v1142 = vld [vmem:[%s1137 + $0x10] sm:$0xf]
      %v1143 = vld [vmem:[%s1137 + $0x14] sm:$0xf]
      %v1144 = vld [vmem:[%s1137 + $0x18] sm:$0xf]
      %v1145 = vld [vmem:[%s1137 + $0x1c] sm:$0xf]
      %v1154 = vunpack.c.l.b16 %v1138
      %v1155 = vunpack.c.l.b16 %v1139
      %v1156 = vunpack.c.l.b16 %v1140
      %v1157 = vunpack.c.l.b16 %v1141
      %v1158 = vunpack.c.l.b16 %v1142
      %v1159 = vunpack.c.l.b16 %v1143
      %v1160 = vunpack.c.l.b16 %v1144
      %v1161 = vunpack.c.l.b16 %v1145
      %v1162 = vpack.c.b16 %v1155, %v1154
      %v1163 = vpack.c.b16 %v1157, %v1156
      %v1164 = vpack.c.b16 %v1159, %v1158
      %v1165 = vpack.c.b16 %v1161, %v1160
      %1166 = vrot.lane.b32.xlu0 %v271, 111
      %v1167 = vpop.permute.xlu0 %1166
      %1168 = vrot.lane.b32.xlu0 %v272, 111
      %v1169 = vpop.permute.xlu0 %1168
      %v1173 = vsel %vm279, %v1162, 0
      %v1176 = vsel %vm279, %v1163, 0
      %v1179 = vsel %vm279, %v1164, 0
      %v1182 = vsel %vm279, %v1165, 0
      %1184 = vmatprep.subr.bf16.mxu0 0
      %1185 = vmatpush1.bf16.msra.mxu0 %v1167
      %1186 = vmatprep.subr.bf16.mxu0 0
      %1187 = vmatpush1.bf16.msra.mxu0 %v1169
      %1188 = vmatprep.subr.bf16.mxu0 0
      %1189 = vmatpush1.bf16.msra.mxu0 0
      %1190 = vmatprep.subr.bf16.mxu0 0
      %1191 = vmatpush1.bf16.msra.mxu0 0
      %1192 = vmatprep.subr.bf16.mxu0 0
      %1193 = vmatpush1.bf16.msra.mxu0 0
      %1194 = vmatprep.subr.bf16.mxu0 0
      %1195 = vmatpush1.bf16.msra.mxu0 0
      %1196 = vmatprep.subr.bf16.mxu0 0
      %1197 = vmatpush1.bf16.msra.mxu0 0
      %1198 = vmatprep.subr.bf16.mxu0 0
      %1199 = vmatpush1.bf16.msra.mxu0 0
      %1200 = vmatprep.subr.bf16.mxu0 0
      %1201 = vmatpush1.bf16.msra.mxu0 0
      %1202 = vmatprep.subr.bf16.mxu0 0
      %1203 = vmatpush1.bf16.msra.mxu0 0
      %1204 = vmatprep.subr.bf16.mxu0 0
      %1205 = vmatpush1.bf16.msra.mxu0 0
      %1206 = vmatprep.subr.bf16.mxu0 0
      %1207 = vmatpush1.bf16.msra.mxu0 0
      %1208 = vmatprep.subr.bf16.mxu0 0
      %1209 = vmatpush1.bf16.msra.mxu0 0
      %1210 = vmatprep.subr.bf16.mxu0 0
      %1211 = vmatpush1.bf16.msra.mxu0 0
      %1212 = vmatprep.subr.bf16.mxu0 0
      %1213 = vmatpush1.bf16.msra.mxu0 0
      %1214 = vmatprep.subr.bf16.mxu0 0
      %1215 = vmatpush1.bf16.msra.mxu0 0
      %1216 = vmatprep.mubr.bf16.mxu0 0
      %1217 = vmatmul.mubr.bf16.gmra.mrb[0].mxu0 %v1173
      %v1218 = vpop.f32.mrb[0].mxu0
      %v1219 = vadd.f32 0.0, %v1218
      %v1220 = vpop.f32.mrb[0].mxu0
      %v1221 = vpop.f32.mrb[0].mxu0
      %v1222 = vadd.f32 0.0, %v1221
      %v1223 = vpop.f32.mrb[0].mxu0
      %1224 = vmatprep.mubr.bf16.mxu0 0
      %1225 = vmatmul.mubr.bf16.gmra.mrb[0].mxu0 %v1176
      %v1226 = vpop.f32.mrb[0].mxu0
      %v1227 = vadd.f32 0.0, %v1226
      %v1228 = vpop.f32.mrb[0].mxu0
      %v1229 = vpop.f32.mrb[0].mxu0
      %v1230 = vadd.f32 0.0, %v1229
      %v1231 = vpop.f32.mrb[0].mxu0
      %1232 = vmatprep.mubr.bf16.mxu0 0
      %1233 = vmatmul.mubr.bf16.gmra.mrb[0].mxu0 %v1179
      %v1234 = vpop.f32.mrb[0].mxu0
      %v1235 = vadd.f32 0.0, %v1234
      %v1236 = vpop.f32.mrb[0].mxu0
      %v1237 = vpop.f32.mrb[0].mxu0
      %v1238 = vadd.f32 0.0, %v1237
      %v1239 = vpop.f32.mrb[0].mxu0
      %1240 = vmatprep.mubr.bf16.mxu0 0
      %1241 = vmatmul.mubr.bf16.gmra.mrb[0].mxu0 %v1182
      %v1242 = vpop.f32.mrb[0].mxu0
      %v1243 = vadd.f32 0.0, %v1242
      %v1244 = vpop.f32.mrb[0].mxu0
      %v1245 = vpop.f32.mrb[0].mxu0
      %v1246 = vadd.f32 0.0, %v1245
      %v1247 = vpop.f32.mrb[0].mxu0
      %1248 = vdwg.mxu0
      %v1249 = vadd.f32 %v1129, %v1219
      %v1250 = vadd.f32 %v1130, %v1222
      %v1251 = vadd.f32 %v1131, %v1227
      %v1252 = vadd.f32 %v1132, %v1230
      %v1253 = vadd.f32 %v1133, %v1235
      %v1254 = vadd.f32 %v1134, %v1238
      %v1255 = vadd.f32 %v1135, %v1243
      %v1256 = vadd.f32 %v1136, %v1246
      %1257 = vrot.lane.b32.xlu0 %v467, 18
      %v1258 = vpop.permute.xlu0 %1257
      %vm1259 = vcmp.ne.s16.totalorder %v1258, 0
      %v1260 = vsel %vm1259, %v217, 0
      %v1261 = vsel %vm1259, %v218, 0
      %v1262 = vsel %vm1259, %v219, 0
      %v1263 = vsel %vm1259, %v220, 0
      %s1264 = scalar_lea.vmem %s1, 256
      %v1265 = vld [vmem:[%s1264] sm:$0xf]
      %v1266 = vld [vmem:[%s1264 + $0x4] sm:$0xf]
      %v1267 = vld [vmem:[%s1264 + $0x8] sm:$0xf]
      %v1268 = vld [vmem:[%s1264 + $0xc] sm:$0xf]
      %v1269 = vld [vmem:[%s1264 + $0x10] sm:$0xf]
      %v1270 = vld [vmem:[%s1264 + $0x14] sm:$0xf]
      %v1271 = vld [vmem:[%s1264 + $0x18] sm:$0xf]
      %v1272 = vld [vmem:[%s1264 + $0x1c] sm:$0xf]
      %v1281 = vunpack.c.l.b16 %v1265
      %v1282 = vunpack.c.l.b16 %v1266
      %v1283 = vunpack.c.l.b16 %v1267
      %v1284 = vunpack.c.l.b16 %v1268
      %v1285 = vunpack.c.l.b16 %v1269
      %v1286 = vunpack.c.l.b16 %v1270
      %v1287 = vunpack.c.l.b16 %v1271
      %v1288 = vunpack.c.l.b16 %v1272
      %v1289 = vpack.c.b16 %v1282, %v1281
      %v1290 = vpack.c.b16 %v1284, %v1283
      %v1291 = vpack.c.b16 %v1286, %v1285
      %v1292 = vpack.c.b16 %v1288, %v1287
      %v1297 = vunpack.c.l.b16 %v1260
      %v1298 = vunpack.c.l.b16 %v1261
      %v1299 = vunpack.c.l.b16 %v1262
      %v1300 = vunpack.c.l.b16 %v1263
      %v1301 = vpack.c.b16 %v1298, %v1297
      %v1302 = vpack.c.b16 %v1300, %v1299
      %1303 = vrot.lane.b32.xlu0 %v1301, 110
      %v1304 = vpop.permute.xlu0 %1303
      %1305 = vrot.lane.b32.xlu0 %v1302, 110
      %v1306 = vpop.permute.xlu0 %1305
      %v1310 = vsel %vm279, %v1289, 0
      %v1313 = vsel %vm279, %v1290, 0
      %v1316 = vsel %vm279, %v1291, 0
      %v1319 = vsel %vm279, %v1292, 0
      %1321 = vmatprep.subr.bf16.mxu0 0
      %1322 = vmatpush1.bf16.msra.mxu0 %v1304
      %1323 = vmatprep.subr.bf16.mxu0 0
      %1324 = vmatpush1.bf16.msra.mxu0 %v1306
      %1325 = vmatprep.subr.bf16.mxu0 0
      %1326 = vmatpush1.bf16.msra.mxu0 0
      %1327 = vmatprep.subr.bf16.mxu0 0
      %1328 = vmatpush1.bf16.msra.mxu0 0
      %1329 = vmatprep.subr.bf16.mxu0 0
      %1330 = vmatpush1.bf16.msra.mxu0 0
      %1331 = vmatprep.subr.bf16.mxu0 0
      %1332 = vmatpush1.bf16.msra.mxu0 0
      %1333 = vmatprep.subr.bf16.mxu0 0
      %1334 = vmatpush1.bf16.msra.mxu0 0
      %1335 = vmatprep.subr.bf16.mxu0 0
      %1336 = vmatpush1.bf16.msra.mxu0 0
      %1337 = vmatprep.subr.bf16.mxu0 0
      %1338 = vmatpush1.bf16.msra.mxu0 0
      %1339 = vmatprep.subr.bf16.mxu0 0
      %1340 = vmatpush1.bf16.msra.mxu0 0
      %1341 = vmatprep.subr.bf16.mxu0 0
      %1342 = vmatpush1.bf16.msra.mxu0 0
      %1343 = vmatprep.subr.bf16.mxu0 0
      %1344 = vmatpush1.bf16.msra.mxu0 0
      %1345 = vmatprep.subr.bf16.mxu0 0
      %1346 = vmatpush1.bf16.msra.mxu0 0
      %1347 = vmatprep.subr.bf16.mxu0 0
      %1348 = vmatpush1.bf16.msra.mxu0 0
      %1349 = vmatprep.subr.bf16.mxu0 0
      %1350 = vmatpush1.bf16.msra.mxu0 0
      %1351 = vmatprep.subr.bf16.mxu0 0
      %1352 = vmatpush1.bf16.msra.mxu0 0
      %1353 = vmatprep.mubr.bf16.mxu0 0
      %1354 = vmatmul.mubr.bf16.gmra.mrb[0].mxu0 %v1310
      %v1355 = vpop.f32.mrb[0].mxu0
      %v1356 = vadd.f32 0.0, %v1355
      %v1357 = vpop.f32.mrb[0].mxu0
      %v1358 = vpop.f32.mrb[0].mxu0
      %v1359 = vadd.f32 0.0, %v1358
      %v1360 = vpop.f32.mrb[0].mxu0
      %1361 = vmatprep.mubr.bf16.mxu0 0
      %1362 = vmatmul.mubr.bf16.gmra.mrb[0].mxu0 %v1313
      %v1363 = vpop.f32.mrb[0].mxu0
      %v1364 = vadd.f32 0.0, %v1363
      %v1365 = vpop.f32.mrb[0].mxu0
      %v1366 = vpop.f32.mrb[0].mxu0
      %v1367 = vadd.f32 0.0, %v1366
      %v1368 = vpop.f32.mrb[0].mxu0
      %1369 = vmatprep.mubr.bf16.mxu0 0
      %1370 = vmatmul.mubr.bf16.gmra.mrb[0].mxu0 %v1316
      %v1371 = vpop.f32.mrb[0].mxu0
      %v1372 = vadd.f32 0.0, %v1371
      %v1373 = vpop.f32.mrb[0].mxu0
      %v1374 = vpop.f32.mrb[0].mxu0
      %v1375 = vadd.f32 0.0, %v1374
      %v1376 = vpop.f32.mrb[0].mxu0
      %1377 = vmatprep.mubr.bf16.mxu0 0
      %1378 = vmatmul.mubr.bf16.gmra.mrb[0].mxu0 %v1319
      %v1379 = vpop.f32.mrb[0].mxu0
      %v1380 = vadd.f32 0.0, %v1379
      %v1381 = vpop.f32.mrb[0].mxu0
      %v1382 = vpop.f32.mrb[0].mxu0
      %v1383 = vadd.f32 0.0, %v1382
      %v1384 = vpop.f32.mrb[0].mxu0
      %1385 = vdwg.mxu0
      %v1386 = vadd.f32 %v1249, %v1356
      %v1387 = vadd.f32 %v1250, %v1359
      %v1388 = vadd.f32 %v1251, %v1364
      %v1389 = vadd.f32 %v1252, %v1367
      %v1390 = vadd.f32 %v1253, %v1372
      %v1391 = vadd.f32 %v1254, %v1375
      %v1392 = vadd.f32 %v1255, %v1380
      %v1393 = vadd.f32 %v1256, %v1383
      %vm1394 = vcmask 523264
      %v1395 = vsel %vm1394, %v1386, 0.0
      %1396 = vadd.xlane.f32.xlu0 %v1395
      %v1397 = vpop.xlane.xlu0 %1396
      %v1398 = vsel %vm1394, %v1387, 0.0
      %1399 = vadd.xlane.f32.xlu0 %v1398
      %v1400 = vpop.xlane.xlu0 %1399
      %v1401 = vsel %vm1394, %v1388, 0.0
      %1402 = vadd.xlane.f32.xlu0 %v1401
      %v1403 = vpop.xlane.xlu0 %1402
      %v1404 = vsel %vm1394, %v1389, 0.0
      %1405 = vadd.xlane.f32.xlu0 %v1404
      %v1406 = vpop.xlane.xlu0 %1405
      %v1407 = vsel %vm1394, %v1390, 0.0
      %1408 = vadd.xlane.f32.xlu0 %v1407
      %v1409 = vpop.xlane.xlu0 %1408
      %v1410 = vsel %vm1394, %v1391, 0.0
      %1411 = vadd.xlane.f32.xlu0 %v1410
      %v1412 = vpop.xlane.xlu0 %1411
      %v1413 = vsel %vm1394, %v1392, 0.0
      %1414 = vadd.xlane.f32.xlu0 %v1413
      %v1415 = vpop.xlane.xlu0 %1414
      %v1416 = vsel %vm1394, %v1393, 0.0
      %1417 = vadd.xlane.f32.xlu0 %v1416
      %v1418 = vpop.xlane.xlu0 %1417
      %v1419 = vadd.f32 %v1397, %v1403
      %v1420 = vadd.f32 %v1400, %v1406
      %v1421 = vadd.f32 %v1419, %v1409
      %v1422 = vadd.f32 %v1420, %v1412
      %v1423 = vadd.f32 %v1421, %v1415
      %v1424 = vadd.f32 %v1422, %v1418
      %v1425 = vmul.f32 %v1423, 0.00390625
      %v1426 = vmul.f32 %v1424, 0.00390625
      %1428 = vset.pattern.permute.xlu0 0
      %1429 = vperm.xlu0 %1428, %v1425
      %v1430 = vpop.permute.xlu0 %1429
      %1433 = vset.pattern.permute.xlu0 0
      %1434 = vperm.xlu0 %1433, %v1426
      %v1435 = vpop.permute.xlu0 %1434
      %v1437 = vsub.f32 %v1386, %v1430
      %v1438 = vsub.f32 %v1387, %v1435
      %v1439 = vsub.f32 %v1388, %v1430
      %v1440 = vsub.f32 %v1389, %v1435
      %v1441 = vsub.f32 %v1390, %v1430
      %v1442 = vsub.f32 %v1391, %v1435
      %v1443 = vsub.f32 %v1392, %v1430
      %v1444 = vsub.f32 %v1393, %v1435
      %v1445 = vmul.f32 %v1437, %v1437
      %v1446 = vmul.f32 %v1438, %v1438
      %v1447 = vmul.f32 %v1439, %v1439
      %v1448 = vmul.f32 %v1440, %v1440
      %v1449 = vmul.f32 %v1441, %v1441
      %v1450 = vmul.f32 %v1442, %v1442
      %v1451 = vmul.f32 %v1443, %v1443
      %v1452 = vmul.f32 %v1444, %v1444
      %v1453 = vsel %vm1394, %v1445, 0.0
      %1454 = vadd.xlane.f32.xlu0 %v1453
      %v1455 = vpop.xlane.xlu0 %1454
      %v1456 = vsel %vm1394, %v1446, 0.0
      %1457 = vadd.xlane.f32.xlu0 %v1456
      %v1458 = vpop.xlane.xlu0 %1457
      %v1459 = vsel %vm1394, %v1447, 0.0
      %1460 = vadd.xlane.f32.xlu0 %v1459
      %v1461 = vpop.xlane.xlu0 %1460
      %v1462 = vsel %vm1394, %v1448, 0.0
      %1463 = vadd.xlane.f32.xlu0 %v1462
      %v1464 = vpop.xlane.xlu0 %1463
      %v1465 = vsel %vm1394, %v1449, 0.0
      %1466 = vadd.xlane.f32.xlu0 %v1465
      %v1467 = vpop.xlane.xlu0 %1466
      %v1468 = vsel %vm1394, %v1450, 0.0
      %1469 = vadd.xlane.f32.xlu0 %v1468
      %v1470 = vpop.xlane.xlu0 %1469
      %v1471 = vsel %vm1394, %v1451, 0.0
      %1472 = vadd.xlane.f32.xlu0 %v1471
      %v1473 = vpop.xlane.xlu0 %1472
      %v1474 = vsel %vm1394, %v1452, 0.0
      %1475 = vadd.xlane.f32.xlu0 %v1474
      %v1476 = vpop.xlane.xlu0 %1475
      %v1477 = vadd.f32 %v1455, %v1461
      %v1478 = vadd.f32 %v1458, %v1464
      %v1479 = vadd.f32 %v1477, %v1467
      %v1480 = vadd.f32 %v1478, %v1470
      %v1481 = vadd.f32 %v1479, %v1473
      %v1482 = vadd.f32 %v1480, %v1476
      %v1483 = vmul.f32 %v1481, 0.00390625
      %v1484 = vmul.f32 %v1482, 0.00390625
      %v1485 = vld [vmem:[%s2] sm:$0xff]
      %v1486 = vld [vmem:[%s2 + $0x8] sm:$0xff]
      %v1487 = vld [vmem:[%s2 + $0x10] sm:$0xff]
      %v1488 = vld [vmem:[%s2 + $0x18] sm:$0xff]
      %v1489 = vld [vmem:[%s2 + $0x20] sm:$0xff]
      %v1490 = vld [vmem:[%s2 + $0x28] sm:$0xff]
      %v1491 = vld [vmem:[%s2 + $0x30] sm:$0xff]
      %v1492 = vld [vmem:[%s2 + $0x38] sm:$0xff]
      %v1493 = vadd.f32 %v1483, 1e-05
      %v1494 = vadd.f32 %v1484, 1e-05
      %v1495 = vrsqrt.pop %v1493
      %v1496 = vrsqrt.pop %v1494
      %v1497 = vmul.f32 %v1485, %v1495
      %v1498 = vmul.f32 %v1486, %v1496
      %v1499 = vmul.f32 %v1487, %v1495
      %v1500 = vmul.f32 %v1488, %v1496
      %v1501 = vmul.f32 %v1489, %v1495
      %v1502 = vmul.f32 %v1490, %v1496
      %v1503 = vmul.f32 %v1491, %v1495
      %v1504 = vmul.f32 %v1492, %v1496
      %1506 = vset.pattern.permute.xlu0 0
      %1507 = vperm.xlu0 %1506, %v1497
      %v1508 = vpop.permute.xlu0 %1507
      %1511 = vset.pattern.permute.xlu0 0
      %1512 = vperm.xlu0 %1511, %v1498
      %v1513 = vpop.permute.xlu0 %1512
      %1516 = vset.pattern.permute.xlu0 0
      %1517 = vperm.xlu0 %1516, %v1499
      %v1518 = vpop.permute.xlu0 %1517
      %1521 = vset.pattern.permute.xlu0 0
      %1522 = vperm.xlu0 %1521, %v1500
      %v1523 = vpop.permute.xlu0 %1522
      %1526 = vset.pattern.permute.xlu0 0
      %1527 = vperm.xlu0 %1526, %v1501
      %v1528 = vpop.permute.xlu0 %1527
      %1531 = vset.pattern.permute.xlu0 0
      %1532 = vperm.xlu0 %1531, %v1502
      %v1533 = vpop.permute.xlu0 %1532
      %1536 = vset.pattern.permute.xlu0 0
      %1537 = vperm.xlu0 %1536, %v1503
      %v1538 = vpop.permute.xlu0 %1537
      %1541 = vset.pattern.permute.xlu0 0
      %1542 = vperm.xlu0 %1541, %v1504
      %v1543 = vpop.permute.xlu0 %1542
      %v1545 = vmul.f32 %v1437, %v1508
      %v1546 = vmul.f32 %v1438, %v1513
      %v1547 = vmul.f32 %v1439, %v1518
      %v1548 = vmul.f32 %v1440, %v1523
      %v1549 = vmul.f32 %v1441, %v1528
      %v1550 = vmul.f32 %v1442, %v1533
      %v1551 = vmul.f32 %v1443, %v1538
      %v1552 = vmul.f32 %v1444, %v1543
      %v1553 = vld [vmem:[%s3] sm:$0xff]
      %v1554 = vld [vmem:[%s3 + $0x8] sm:$0xff]
      %v1555 = vld [vmem:[%s3 + $0x10] sm:$0xff]
      %v1556 = vld [vmem:[%s3 + $0x18] sm:$0xff]
      %v1557 = vld [vmem:[%s3 + $0x20] sm:$0xff]
      %v1558 = vld [vmem:[%s3 + $0x28] sm:$0xff]
      %v1559 = vld [vmem:[%s3 + $0x30] sm:$0xff]
      %v1560 = vld [vmem:[%s3 + $0x38] sm:$0xff]
      %1562 = vset.pattern.permute.xlu0 0
      %1563 = vperm.xlu0 %1562, %v1553
      %v1564 = vpop.permute.xlu0 %1563
      %1567 = vset.pattern.permute.xlu0 0
      %1568 = vperm.xlu0 %1567, %v1554
      %v1569 = vpop.permute.xlu0 %1568
      %1572 = vset.pattern.permute.xlu0 0
      %1573 = vperm.xlu0 %1572, %v1555
      %v1574 = vpop.permute.xlu0 %1573
      %1577 = vset.pattern.permute.xlu0 0
      %1578 = vperm.xlu0 %1577, %v1556
      %v1579 = vpop.permute.xlu0 %1578
      %1582 = vset.pattern.permute.xlu0 0
      %1583 = vperm.xlu0 %1582, %v1557
      %v1584 = vpop.permute.xlu0 %1583
      %1587 = vset.pattern.permute.xlu0 0
      %1588 = vperm.xlu0 %1587, %v1558
      %v1589 = vpop.permute.xlu0 %1588
      %1592 = vset.pattern.permute.xlu0 0
      %1593 = vperm.xlu0 %1592, %v1559
      %v1594 = vpop.permute.xlu0 %1593
      %1597 = vset.pattern.permute.xlu0 0
      %1598 = vperm.xlu0 %1597, %v1560
      %v1599 = vpop.permute.xlu0 %1598
      %v1601 = vadd.f32 %v1545, %v1564
      %v1602 = vadd.f32 %v1546, %v1569
      %v1603 = vadd.f32 %v1547, %v1574
      %v1604 = vadd.f32 %v1548, %v1579
      %v1605 = vadd.f32 %v1549, %v1584
      %v1606 = vadd.f32 %v1550, %v1589
      %v1607 = vadd.f32 %v1551, %v1594
      %v1608 = vadd.f32 %v1552, %v1599
      %v1609 = vmax.f32 %v1601, 0.0
      %v1610 = vmax.f32 %v1602, 0.0
      %v1611 = vmax.f32 %v1603, 0.0
      %v1612 = vmax.f32 %v1604, 0.0
      %v1613 = vmax.f32 %v1605, 0.0
      %v1614 = vmax.f32 %v1606, 0.0
      %v1615 = vmax.f32 %v1607, 0.0
      %v1616 = vmax.f32 %v1608, 0.0
      %v1617 = vpack.c.bf16 %v1610, %v1609
      %v1618 = vpack.c.bf16 %v1612, %v1611
      %v1619 = vpack.c.bf16 %v1614, %v1613
      %v1620 = vpack.c.bf16 %v1616, %v1615
      %v1625 = vunpack.c.l.b16 %v1617
      %v1626 = vunpack.c.h.b16 %v1617
      %v1627 = vunpack.c.l.b16 %v1618
      %v1628 = vunpack.c.h.b16 %v1618
      %v1629 = vunpack.c.l.b16 %v1619
      %v1630 = vunpack.c.h.b16 %v1619
      %v1631 = vunpack.c.l.b16 %v1620
      %v1632 = vunpack.c.h.b16 %v1620
      %v1633 = vpack.c.b16 %v1625, %v1625
      %v1634 = vpack.c.b16 %v1626, %v1626
      %v1635 = vpack.c.b16 %v1627, %v1627
      %v1636 = vpack.c.b16 %v1628, %v1628
      %v1637 = vpack.c.b16 %v1629, %v1629
      %v1638 = vpack.c.b16 %v1630, %v1630
      %v1639 = vpack.c.b16 %v1631, %v1631
      %v1640 = vpack.c.b16 %v1632, %v1632
      %vm1649 = vcmask 519168
      %1650 = vst.msk [vmem:[%s197] sm:$0xf] %vm1649, %v1633
      %1651 = vst.msk [vmem:[%s197 + $0x4] sm:$0xf] %vm1649, %v1634
      %1652 = vst.msk [vmem:[%s197 + $0x8] sm:$0xf] %vm1649, %v1635
      %1653 = vst.msk [vmem:[%s197 + $0xc] sm:$0xf] %vm1649, %v1636
      %1654 = vst.msk [vmem:[%s197 + $0x10] sm:$0xf] %vm1649, %v1637
      %1655 = vst.msk [vmem:[%s197 + $0x14] sm:$0xf] %vm1649, %v1638
      %1656 = vst.msk [vmem:[%s197 + $0x18] sm:$0xf] %vm1649, %v1639
      %1657 = vst.msk [vmem:[%s197 + $0x1c] sm:$0xf] %vm1649, %v1640
      %p1658 = scmp.lt.s32.totalorder %s15, 1
      %s1659 = scalar_select %p1658, %s15, 1
      %s1660 = smul.addr %s1659, 8
      %s1661 = smul.addr %s1660, 4
      %s1662 = scalar_lea.vmem %s4, %s1661
      // Predicated region
      $region37: #{generator_forward.7} parent=35 // pred_check
        %p1663 = pneg %p122
      $region38: #{generator_forward.7} parent=35 // pred_check_branch
        %1665 = sbr.rel (%p1663) target = $region40
      $region39: #{generator_forward.7} parent=35 // pred_region
        _
      $region40: #{generator_forward.7} parent=35 // pred_fallthru
        _
    $region36: #{generator_forward.7} parent=5 // pred_fallthru
      _
    %p1666 = scmp.le.s32.totalorder 2, %s10
    // Predicated region
    $region41: #{generator_forward.7} parent=5 // pred_check
      %p1667 = pneg %p1666
    $region42: #{generator_forward.7} parent=5 // pred_check_branch
      %1669 = sbr.rel (%p1667) target = $region44
    $region43: #{generator_forward.7} parent=5 // pred_region
      %s1670 = ssub.s32 %s10, 2
      // Predicated region
      $region45: #{generator_forward.7} parent=43 // pred_check
        %p1671 = pneg %p128
      $region46: #{generator_forward.7} parent=43 // pred_check_branch
        %1673 = sbr.rel (%p1671) target = $region48
      $region47: #{generator_forward.7} parent=43 // pred_region
        %p1674 = scmp.lt.s32.totalorder %s16, 1
        %s1675 = scalar_select %p1674, %s16, 1
        %s1676 = smul.addr %s1675, 8
        %s1677 = smul.addr %s1676, 4
        %s1678 = scalar_lea.vmem %s4, %s1677
      $region48: #{generator_forward.7} parent=43 // pred_fallthru
        _
    $region44: #{generator_forward.7} parent=5 // pred_fallthru
      _
  $region6: #{generator_forward.7} parent=0 // loop_footer
    %s14 = sadd.s32 1, %s10
  $region7: #{generator_forward.7} parent=0 // loop_footer_branch
    %9 = sbr.rel target = $region3
  $region8: #{generator_forward.7} parent=0 // loop_exit
    _

// kernel: generator_forward.6
$region0: #{generator_forward.6}
  #allocation0 [shape = 'u32[]', space=smem, size = 0x4, offset = 0x4, fixed_abs, tag = 'smem constant byte address 0x4 - core index']
  #allocation1 [shape = 'u32[144,128]{1,0:T(1,128)}', space=vmem, size = 0x12000, scoped, tag = 'internal scratch']
  %s0 = inlined_call_operand.vmem [shape: bf16[2,64,26], index: 0, kind: input, shape index: {}]
  %s1 = inlined_call_operand.vmem [shape: bf16[9,128,64], index: 1, kind: input, shape index: {}]
  %s2 = inlined_call_operand.vmem [shape: f32[128,1], index: 2, kind: input, shape index: {}]
  %s3 = inlined_call_operand.vmem [shape: f32[128,1], index: 3, kind: input, shape index: {}]
  %s4 = inlined_call_operand.vmem [shape: bf16[2,128,16], index: 4, kind: output, shape index: {}]
  %s5 = sld [smem:[#allocation0]]
  $region49: #{generator_forward.6} parent=0
    _
  %s7 = ssub.s32 1, %s5
  %s8 = scalar_select 0, %s7, %s5
  loop: start=0, step=1, limit=4
  $region2: #{generator_forward.6} parent=0 // loop_pre_header
    _
  $region3: #{generator_forward.6} parent=0 // loop_header
    %s10 = sphi 0, %s14
    %p11 = scmp.ge.s32.totalorder %s10, 4
    %s20 = sphi 0, %s22
    %s23 = sphi 0, %s20
    %s24 = sphi 0, %s23
    %s40 = sphi 0, %s24
    %s44 = sphi 0, %s44
    %s46 = sphi 0, %s44
    %s47 = sphi 0, %s46
    %s61 = sphi 0, %s47
    %s65 = sphi 0, %s65
    %s67 = sphi 0, %s65
    %s68 = sphi 0, %s67
    %s82 = sphi 0, %s68
    %s86 = sphi 0, %s86
    %s88 = sphi 0, %s86
    %s89 = sphi 0, %s88
    %s103 = sphi 0, %s89
    %s109 = sphi 0, %s111
    %s112 = sphi 0, %s109
    %s113 = sphi 0, %s112
    %s129 = sphi 0, %s113
  $region4: #{generator_forward.6} parent=0 // loop_header_branch
    %13 = sbr.rel (%p11) target = $region8
  $region5: #{generator_forward.6} parent=0 // loop_body
    %s15 = ssub.s32 %s10, 1
    %s16 = ssub.s32 %s10, 2
    %s17 = sadd.s32 %s10, 1
    %s18 = ssub.s32 %s10, %s17
    %p19 = scmp.eq.s32.totalorder %s18, 0
    %s21 = sadd.s32 %s20, 1
    %s22 = scalar_select %p19, %s20, %s21
    %p25 = pneg %p19
    %p26 = scmp.eq.s32.totalorder %s10, 1
    %p27 = por %p25, %p26
    %p28 = scmp.ne.s32.totalorder %s20, %s23
    %p29 = scmp.eq.s32.totalorder %s10, 0
    %p30 = por %p28, %p29
    %p31 = scmp.ne.s32.totalorder %s20, %s23
    %p32 = scmp.eq.s32.totalorder %s15, 1
    %p33 = por %p31, %p32
    %p34 = scmp.ne.s32.totalorder %s23, %s24
    %p35 = scmp.eq.s32.totalorder %s15, 0
    %p36 = por %p34, %p35
    %p37 = scmp.ne.s32.totalorder %s23, %s24
    %p38 = scmp.eq.s32.totalorder %s16, 1
    %p39 = por %p37, %p38
    %p41 = scmp.ne.s32.totalorder %s24, %s40
    %p42 = scmp.eq.s32.totalorder %s16, 0
    %p43 = por %p41, %p42
    %s45 = sadd.s32 %s44, 1
    %p48 = scmp.eq.s32.totalorder %s10, 1
    %p49 = scmp.ne.s32.totalorder %s44, %s46
    %p50 = scmp.eq.s32.totalorder %s10, 0
    %p51 = por %p49, %p50
    %p52 = scmp.ne.s32.totalorder %s44, %s46
    %p53 = scmp.eq.s32.totalorder %s15, 1
    %p54 = por %p52, %p53
    %p55 = scmp.ne.s32.totalorder %s46, %s47
    %p56 = scmp.eq.s32.totalorder %s15, 0
    %p57 = por %p55, %p56
    %p58 = scmp.ne.s32.totalorder %s46, %s47
    %p59 = scmp.eq.s32.totalorder %s16, 1
    %p60 = por %p58, %p59
    %p62 = scmp.ne.s32.totalorder %s47, %s61
    %p63 = scmp.eq.s32.totalorder %s16, 0
    %p64 = por %p62, %p63
    %s66 = sadd.s32 %s65, 1
    %p69 = scmp.eq.s32.totalorder %s10, 1
    %p70 = scmp.ne.s32.totalorder %s65, %s67
    %p71 = scmp.eq.s32.totalorder %s10, 0
    %p72 = por %p70, %p71
    %p73 = scmp.ne.s32.totalorder %s65, %s67
    %p74 = scmp.eq.s32.totalorder %s15, 1
    %p75 = por %p73, %p74
    %p76 = scmp.ne.s32.totalorder %s67, %s68
    %p77 = scmp.eq.s32.totalorder %s15, 0
    %p78 = por %p76, %p77
    %p79 = scmp.ne.s32.totalorder %s67, %s68
    %p80 = scmp.eq.s32.totalorder %s16, 1
    %p81 = por %p79, %p80
    %p83 = scmp.ne.s32.totalorder %s68, %s82
    %p84 = scmp.eq.s32.totalorder %s16, 0
    %p85 = por %p83, %p84
    %s87 = sadd.s32 %s86, 1
    %p90 = scmp.eq.s32.totalorder %s10, 1
    %p91 = scmp.ne.s32.totalorder %s86, %s88
    %p92 = scmp.eq.s32.totalorder %s10, 0
    %p93 = por %p91, %p92
    %p94 = scmp.ne.s32.totalorder %s86, %s88
    %p95 = scmp.eq.s32.totalorder %s15, 1
    %p96 = por %p94, %p95
    %p97 = scmp.ne.s32.totalorder %s88, %s89
    %p98 = scmp.eq.s32.totalorder %s15, 0
    %p99 = por %p97, %p98
    %p100 = scmp.ne.s32.totalorder %s88, %s89
    %p101 = scmp.eq.s32.totalorder %s16, 1
    %p102 = por %p100, %p101
    %p104 = scmp.ne.s32.totalorder %s89, %s103
    %p105 = scmp.eq.s32.totalorder %s16, 0
    %p106 = por %p104, %p105
    %s107 = ssub.s32 %s10, %s17
    %p108 = scmp.eq.s32.totalorder %s107, 0
    %s110 = sadd.s32 %s109, 1
    %s111 = scalar_select %p108, %s109, %s110
    %p114 = pneg %p108
    %p115 = scmp.eq.s32.totalorder %s10, 1
    %p116 = por %p114, %p115
    %p117 = scmp.ne.s32.totalorder %s109, %s112
    %p118 = scmp.eq.s32.totalorder %s10, 0
    %p119 = por %p117, %p118
    %p120 = scmp.ne.s32.totalorder %s109, %s112
    %p121 = scmp.eq.s32.totalorder %s15, 1
    %p122 = por %p120, %p121
    %p123 = scmp.ne.s32.totalorder %s112, %s113
    %p124 = scmp.eq.s32.totalorder %s15, 0
    %p125 = por %p123, %p124
    %p126 = scmp.ne.s32.totalorder %s112, %s113
    %p127 = scmp.eq.s32.totalorder %s16, 1
    %p128 = por %p126, %p127
    %p130 = scmp.ne.s32.totalorder %s113, %s129
    %p131 = scmp.eq.s32.totalorder %s16, 0
    %p132 = por %p130, %p131
    %p133 = scmp.le.s32.totalorder 1, %s10
    %p134 = scmp.lt.s32.totalorder %s10, 3
    %p135 = pnand %p133, %p134
    %p136 = pneg %p135
    // Predicated region
    $region9: #{generator_forward.6} parent=5 // pred_check
      _
    $region10: #{generator_forward.6} parent=5 // pred_check_branch
      %138 = sbr.rel (%p135) target = $region12
    $region11: #{generator_forward.6} parent=5 // pred_region
      %s139 = ssub.s32 %s10, 1
      // Predicated region
      $region13: #{generator_forward.6} parent=11 // pred_check
        %p140 = pneg %p57
      $region14: #{generator_forward.6} parent=11 // pred_check_branch
        %142 = sbr.rel (%p140) target = $region16
      $region15: #{generator_forward.6} parent=11 // pred_region
        _
      $region16: #{generator_forward.6} parent=11 // pred_fallthru
        _
      // Predicated region
      $region17: #{generator_forward.6} parent=11 // pred_check
        %p143 = pneg %p78
      $region18: #{generator_forward.6} parent=11 // pred_check_branch
        %145 = sbr.rel (%p143) target = $region20
      $region19: #{generator_forward.6} parent=11 // pred_region
        _
      $region20: #{generator_forward.6} parent=11 // pred_fallthru
        _
      // Predicated region
      $region21: #{generator_forward.6} parent=11 // pred_check
        %p146 = pneg %p99
      $region22: #{generator_forward.6} parent=11 // pred_check_branch
        %148 = sbr.rel (%p146) target = $region24
      $region23: #{generator_forward.6} parent=11 // pred_region
        _
      $region24: #{generator_forward.6} parent=11 // pred_fallthru
        _
    $region12: #{generator_forward.6} parent=5 // pred_fallthru
      _
    %p149 = scmp.lt.s32.totalorder %s10, 2
    // Predicated region
    $region25: #{generator_forward.6} parent=5 // pred_check
      %p150 = pneg %p149
    $region26: #{generator_forward.6} parent=5 // pred_check_branch
      %152 = sbr.rel (%p150) target = $region28
    $region27: #{generator_forward.6} parent=5 // pred_region
      // Predicated region
      $region29: #{generator_forward.6} parent=27 // pred_check
        %p153 = pneg %p30
      $region30: #{generator_forward.6} parent=27 // pred_check_branch
        %155 = sbr.rel (%p153) target = $region32
      $region31: #{generator_forward.6} parent=27 // pred_region
        %p156 = scmp.lt.s32.totalorder %s10, 1
        %s157 = scalar_select %p156, %s10, 1
        %s158 = smul.addr %s157, 8
        %s159 = smul.addr %s158, 4
        %s160 = scalar_lea.vmem %s0, %s159
      $region32: #{generator_forward.6} parent=27 // pred_fallthru
        _
    $region28: #{generator_forward.6} parent=5 // pred_fallthru
      _
    %p161 = scmp.le.s32.totalorder 1, %s10
    %p162 = scmp.lt.s32.totalorder %s10, 3
    %p163 = pnand %p161, %p162
    %p164 = pneg %p163
    // Predicated region
    $region33: #{generator_forward.6} parent=5 // pred_check
      _
    $region34: #{generator_forward.6} parent=5 // pred_check_branch
      %166 = sbr.rel (%p163) target = $region36
    $region35: #{generator_forward.6} parent=5 // pred_region
      %s167 = ssub.s32 %s10, 1
      %p168 = scmp.lt.s32.totalorder %s15, 1
      %s169 = scalar_select %p168, %s15, 1
      %s170 = smul.addr %s169, 8
      %s171 = smul.addr %s170, 4
      %s172 = scalar_lea.vmem %s0, %s171
      %p173 = pneg %p36
      %p174 = pneg %p33
      %p175 = pneg %p57
      %p176 = pneg %p54
      %p177 = pneg %p78
      %p178 = pneg %p75
      %p179 = pneg %p99
      %p180 = pneg %p96
      %p181 = pneg %p125
      %p182 = pneg %p122
      %p183 = scmp.lt.s32.totalorder %s15, 1
      %s184 = scalar_select %p183, %s15, 1
      %s185 = smul.addr %s184, 16
      %s186 = smul.addr %s185, 4
      %s187 = scalar_lea.vmem %s4, %s186
      %p188 = scmp.lt.s32.totalorder %s15, 1
      %s189 = scalar_select %p188, %s15, 1
      %s190 = smul.addr %s189, 8
      %s191 = smul.addr %s190, 4
      %s192 = scalar_lea.vmem %s0, %s191
      %p193 = scmp.lt.s32.totalorder %s15, 1
      %s194 = scalar_select %p193, %s15, 1
      %s195 = smul.addr %s194, 16
      %s196 = smul.addr %s195, 4
      %s197 = scalar_lea.vmem %s4, %s196
      %v201 = vlaneseq
      %v202 = vand.u32 %v201, 127
      %vm203 = vcmp.lt.s32.totalorder %v202, 0
      %v204 = vsub.s32 0, %v202
      %v205 = vsel %vm203, %v204, %v202
      %v206 = vshrl.u32 %v205, 2
      %v207 = vand.u32 %v205, 3
      %v208 = vsub.s32 0, %v207
      %v209 = vsel %vm203, %v208, %v207
      %vm210 = vcmp.ne.s32.totalorder %v209, 0
      %vm211 = vcmp.lt.s32.totalorder %v209, 0
      %vm212 = vmand %vm211, %vm210
      %v213 = vadd.s32 %v209, 4
      %v214 = vsel %vm212, %v213, %v209
      %vm215 = vcmp.gt.s32.totalorder %v214, 0
      %vm216 = vcmp.lt.s32.totalorder %v214, 3
      %v217 = vld [vmem:[%s192] sm:$0xf]
      %v218 = vld [vmem:[%s192 + $0x4] sm:$0xf]
      %v219 = vld [vmem:[%s192 + $0x8] sm:$0xf]
      %v220 = vld [vmem:[%s192 + $0xc] sm:$0xf]
      %v221 = vld [vmem:[%s192 + $0x10] sm:$0xf]
      %v222 = vld [vmem:[%s192 + $0x14] sm:$0xf]
      %v223 = vld [vmem:[%s192 + $0x18] sm:$0xf]
      %v224 = vld [vmem:[%s192 + $0x1c] sm:$0xf]
      %vm225 = vmpackc.low %vm215, %vm215
      %v226 = vsel %vm225, %v217, 0
      %v227 = vsel %vm225, %v218, 0
      %v228 = vsel %vm225, %v219, 0
      %v229 = vsel %vm225, %v220, 0
      %v230 = vsel %vm225, %v221, 0
      %v231 = vsel %vm225, %v222, 0
      %v232 = vsel %vm225, %v223, 0
      %v233 = vsel %vm225, %v224, 0
      %v234 = vld [vmem:[%s1] sm:$0xf]
      %v235 = vld [vmem:[%s1 + $0x4] sm:$0xf]
      %v236 = vld [vmem:[%s1 + $0x8] sm:$0xf]
      %v237 = vld [vmem:[%s1 + $0xc] sm:$0xf]
      %v238 = vld [vmem:[%s1 + $0x10] sm:$0xf]
      %v239 = vld [vmem:[%s1 + $0x14] sm:$0xf]
      %v240 = vld [vmem:[%s1 + $0x18] sm:$0xf]
      %v241 = vld [vmem:[%s1 + $0x1c] sm:$0xf]
      %v242 = vld [vmem:[%s1 + $0x20] sm:$0xf]
      %v243 = vld [vmem:[%s1 + $0x24] sm:$0xf]
      %v244 = vld [vmem:[%s1 + $0x28] sm:$0xf]
      %v245 = vld [vmem:[%s1 + $0x2c] sm:$0xf]
      %v246 = vld [vmem:[%s1 + $0x30] sm:$0xf]
      %v247 = vld [vmem:[%s1 + $0x34] sm:$0xf]
      %v248 = vld [vmem:[%s1 + $0x38] sm:$0xf]
      %v249 = vld [vmem:[%s1 + $0x3c] sm:$0xf]
      %s250 = scalar_lea.vmem %s1, 64
      %v251 = vld [vmem:[%s250] sm:$0xf]
      %v252 = vld [vmem:[%s250 + $0x4] sm:$0xf]
      %v253 = vld [vmem:[%s250 + $0x8] sm:$0xf]
      %v254 = vld [vmem:[%s250 + $0xc] sm:$0xf]
      %v255 = vld [vmem:[%s250 + $0x10] sm:$0xf]
      %v256 = vld [vmem:[%s250 + $0x14] sm:$0xf]
      %v257 = vld [vmem:[%s250 + $0x18] sm:$0xf]
      %v258 = vld [vmem:[%s250 + $0x1c] sm:$0xf]
      %v259 = vld [vmem:[%s250 + $0x20] sm:$0xf]
      %v260 = vld [vmem:[%s250 + $0x24] sm:$0xf]
      %v261 = vld [vmem:[%s250 + $0x28] sm:$0xf]
      %v262 = vld [vmem:[%s250 + $0x2c] sm:$0xf]
      %v263 = vld [vmem:[%s250 + $0x30] sm:$0xf]
      %v264 = vld [vmem:[%s250 + $0x34] sm:$0xf]
      %v265 = vld [vmem:[%s250 + $0x38] sm:$0xf]
      %v266 = vld [vmem:[%s250 + $0x3c] sm:$0xf]
      %v283 = vunpack.c.l.b16 %v251
      %v284 = vunpack.c.l.b16 %v252
      %v285 = vunpack.c.l.b16 %v253
      %v286 = vunpack.c.l.b16 %v254
      %v287 = vunpack.c.l.b16 %v255
      %v288 = vunpack.c.l.b16 %v256
      %v289 = vunpack.c.l.b16 %v257
      %v290 = vunpack.c.l.b16 %v258
      %v291 = vunpack.c.l.b16 %v259
      %v292 = vunpack.c.l.b16 %v260
      %v293 = vunpack.c.l.b16 %v261
      %v294 = vunpack.c.l.b16 %v262
      %v295 = vunpack.c.l.b16 %v263
      %v296 = vunpack.c.l.b16 %v264
      %v297 = vunpack.c.l.b16 %v265
      %v298 = vunpack.c.l.b16 %v266
      %v299 = vpack.c.b16 %v284, %v283
      %v300 = vpack.c.b16 %v286, %v285
      %v301 = vpack.c.b16 %v288, %v287
      %v302 = vpack.c.b16 %v290, %v289
      %v303 = vpack.c.b16 %v292, %v291
      %v304 = vpack.c.b16 %v294, %v293
      %v305 = vpack.c.b16 %v296, %v295
      %v306 = vpack.c.b16 %v298, %v297
      %v315 = vunpack.c.l.b16 %v217
      %v316 = vunpack.c.l.b16 %v218
      %v317 = vunpack.c.l.b16 %v219
      %v318 = vunpack.c.l.b16 %v220
      %v319 = vunpack.c.l.b16 %v221
      %v320 = vunpack.c.l.b16 %v222
      %v321 = vunpack.c.l.b16 %v223
      %v322 = vunpack.c.l.b16 %v224
      %v323 = vpack.c.b16 %v316, %v315
      %v324 = vpack.c.b16 %v318, %v317
      %v325 = vpack.c.b16 %v320, %v319
      %v326 = vpack.c.b16 %v322, %v321
      %327 = vrot.lane.b32.xlu0 %v323, 127
      %v328 = vpop.permute.xlu0 %327
      %329 = vrot.lane.b32.xlu0 %v324, 127
      %v330 = vpop.permute.xlu0 %329
      %331 = vrot.lane.b32.xlu0 %v325, 127
      %v332 = vpop.permute.xlu0 %331
      %333 = vrot.lane.b32.xlu0 %v326, 127
      %v334 = vpop.permute.xlu0 %333
      %vm339 = vcmask 523264
      %v341 = vsel %vm339, %v299, 0
      %v344 = vsel %vm339, %v300, 0
      %v347 = vsel %vm339, %v301, 0
      %v350 = vsel %vm339, %v302, 0
      %v353 = vsel %vm339, %v303, 0
      %v356 = vsel %vm339, %v304, 0
      %v359 = vsel %vm339, %v305, 0
      %v362 = vsel %vm339, %v306, 0
      %364 = vmatprep.subr.bf16.mxu0 0
      %365 = vmatpush1.bf16.msra.mxu0 %v328
      %366 = vmatprep.subr.bf16.mxu0 0
      %367 = vmatpush1.bf16.msra.mxu0 %v330
      %368 = vmatprep.subr.bf16.mxu0 0
      %369 = vmatpush1.bf16.msra.mxu0 %v332
      %370 = vmatprep.subr.bf16.mxu0 0
      %371 = vmatpush1.bf16.msra.mxu0 %v334
      %372 = vmatprep.subr.bf16.mxu0 0
      %373 = vmatpush1.bf16.msra.mxu0 0
      %374 = vmatprep.subr.bf16.mxu0 0
      %375 = vmatpush1.bf16.msra.mxu0 0
      %376 = vmatprep.subr.bf16.mxu0 0
      %377 = vmatpush1.bf16.msra.mxu0 0
      %378 = vmatprep.subr.bf16.mxu0 0
      %379 = vmatpush1.bf16.msra.mxu0 0
      %380 = vmatprep.subr.bf16.mxu0 0
      %381 = vmatpush1.bf16.msra.mxu0 0
      %382 = vmatprep.subr.bf16.mxu0 0
      %383 = vmatpush1.bf16.msra.mxu0 0
      %384 = vmatprep.subr.bf16.mxu0 0
      %385 = vmatpush1.bf16.msra.mxu0 0
      %386 = vmatprep.subr.bf16.mxu0 0
      %387 = vmatpush1.bf16.msra.mxu0 0
      %388 = vmatprep.subr.bf16.mxu0 0
      %389 = vmatpush1.bf16.msra.mxu0 0
      %390 = vmatprep.subr.bf16.mxu0 0
      %391 = vmatpush1.bf16.msra.mxu0 0
      %392 = vmatprep.subr.bf16.mxu0 0
      %393 = vmatpush1.bf16.msra.mxu0 0
      %394 = vmatprep.subr.bf16.mxu0 0
      %395 = vmatpush1.bf16.msra.mxu0 0
      %396 = vmatprep.mubr.bf16.mxu0 0
      %397 = vmatmul.mubr.bf16.gmra.mrb[0].mxu0 %v341
      %v398 = vpop.f32.mrb[0].mxu0
      %v399 = vadd.f32 0.0, %v398
      %v400 = vpop.f32.mrb[0].mxu0
      %v401 = vpop.f32.mrb[0].mxu0
      %v402 = vadd.f32 0.0, %v401
      %v403 = vpop.f32.mrb[0].mxu0
      %404 = vmatprep.mubr.bf16.mxu0 0
      %405 = vmatmul.mubr.bf16.gmra.mrb[0].mxu0 %v344
      %v406 = vpop.f32.mrb[0].mxu0
      %v407 = vadd.f32 0.0, %v406
      %v408 = vpop.f32.mrb[0].mxu0
      %v409 = vpop.f32.mrb[0].mxu0
      %v410 = vadd.f32 0.0, %v409
      %v411 = vpop.f32.mrb[0].mxu0
      %412 = vmatprep.mubr.bf16.mxu0 0
      %413 = vmatmul.mubr.bf16.gmra.mrb[0].mxu0 %v347
      %v414 = vpop.f32.mrb[0].mxu0
      %v415 = vadd.f32 0.0, %v414
      %v416 = vpop.f32.mrb[0].mxu0
      %v417 = vpop.f32.mrb[0].mxu0
      %v418 = vadd.f32 0.0, %v417
      %v419 = vpop.f32.mrb[0].mxu0
      %420 = vmatprep.mubr.bf16.mxu0 0
      %421 = vmatmul.mubr.bf16.gmra.mrb[0].mxu0 %v350
      %v422 = vpop.f32.mrb[0].mxu0
      %v423 = vadd.f32 0.0, %v422
      %v424 = vpop.f32.mrb[0].mxu0
      %v425 = vpop.f32.mrb[0].mxu0
      %v426 = vadd.f32 0.0, %v425
      %v427 = vpop.f32.mrb[0].mxu0
      %428 = vmatprep.mubr.bf16.mxu0 0
      %429 = vmatmul.mubr.bf16.gmra.mrb[0].mxu0 %v353
      %v430 = vpop.f32.mrb[0].mxu0
      %v431 = vadd.f32 0.0, %v430
      %v432 = vpop.f32.mrb[0].mxu0
      %v433 = vpop.f32.mrb[0].mxu0
      %v434 = vadd.f32 0.0, %v433
      %v435 = vpop.f32.mrb[0].mxu0
      %436 = vmatprep.mubr.bf16.mxu0 0
      %437 = vmatmul.mubr.bf16.gmra.mrb[0].mxu0 %v356
      %v438 = vpop.f32.mrb[0].mxu0
      %v439 = vadd.f32 0.0, %v438
      %v440 = vpop.f32.mrb[0].mxu0
      %v441 = vpop.f32.mrb[0].mxu0
      %v442 = vadd.f32 0.0, %v441
      %v443 = vpop.f32.mrb[0].mxu0
      %444 = vmatprep.mubr.bf16.mxu0 0
      %445 = vmatmul.mubr.bf16.gmra.mrb[0].mxu0 %v359
      %v446 = vpop.f32.mrb[0].mxu0
      %v447 = vadd.f32 0.0, %v446
      %v448 = vpop.f32.mrb[0].mxu0
      %v449 = vpop.f32.mrb[0].mxu0
      %v450 = vadd.f32 0.0, %v449
      %v451 = vpop.f32.mrb[0].mxu0
      %452 = vmatprep.mubr.bf16.mxu0 0
      %453 = vmatmul.mubr.bf16.gmra.mrb[0].mxu0 %v362
      %v454 = vpop.f32.mrb[0].mxu0
      %v455 = vadd.f32 0.0, %v454
      %v456 = vpop.f32.mrb[0].mxu0
      %v457 = vpop.f32.mrb[0].mxu0
      %v458 = vadd.f32 0.0, %v457
      %v459 = vpop.f32.mrb[0].mxu0
      %460 = vdwg.mxu0
      %v477 = vunpack.c.l.b16 %v234
      %v478 = vunpack.c.l.b16 %v235
      %v479 = vunpack.c.l.b16 %v236
      %v480 = vunpack.c.l.b16 %v237
      %v481 = vunpack.c.l.b16 %v238
      %v482 = vunpack.c.l.b16 %v239
      %v483 = vunpack.c.l.b16 %v240
      %v484 = vunpack.c.l.b16 %v241
      %v485 = vunpack.c.l.b16 %v242
      %v486 = vunpack.c.l.b16 %v243
      %v487 = vunpack.c.l.b16 %v244
      %v488 = vunpack.c.l.b16 %v245
      %v489 = vunpack.c.l.b16 %v246
      %v490 = vunpack.c.l.b16 %v247
      %v491 = vunpack.c.l.b16 %v248
      %v492 = vunpack.c.l.b16 %v249
      %v493 = vpack.c.b16 %v478, %v477
      %v494 = vpack.c.b16 %v480, %v479
      %v495 = vpack.c.b16 %v482, %v481
      %v496 = vpack.c.b16 %v484, %v483
      %v497 = vpack.c.b16 %v486, %v485
      %v498 = vpack.c.b16 %v488, %v487
      %v499 = vpack.c.b16 %v490, %v489
      %v500 = vpack.c.b16 %v492, %v491
      %v509 = vunpack.c.l.b16 %v226
      %v510 = vunpack.c.l.b16 %v227
      %v511 = vunpack.c.l.b16 %v228
      %v512 = vunpack.c.l.b16 %v229
      %v513 = vunpack.c.l.b16 %v230
      %v514 = vunpack.c.l.b16 %v231
      %v515 = vunpack.c.l.b16 %v232
      %v516 = vunpack.c.l.b16 %v233
      %v517 = vpack.c.b16 %v510, %v509
      %v518 = vpack.c.b16 %v512, %v511
      %v519 = vpack.c.b16 %v514, %v513
      %v520 = vpack.c.b16 %v516, %v515
      %v526 = vsel %vm339, %v493, 0
      %v529 = vsel %vm339, %v494, 0
      %v532 = vsel %vm339, %v495, 0
      %v535 = vsel %vm339, %v496, 0
      %v538 = vsel %vm339, %v497, 0
      %v541 = vsel %vm339, %v498, 0
      %v544 = vsel %vm339, %v499, 0
      %v547 = vsel %vm339, %v500, 0
      %549 = vmatprep.subr.bf16.mxu0 0
      %550 = vmatpush1.bf16.msra.mxu0 %v517
      %551 = vmatprep.subr.bf16.mxu0 0
      %552 = vmatpush1.bf16.msra.mxu0 %v518
      %553 = vmatprep.subr.bf16.mxu0 0
      %554 = vmatpush1.bf16.msra.mxu0 %v519
      %555 = vmatprep.subr.bf16.mxu0 0
      %556 = vmatpush1.bf16.msra.mxu0 %v520
      %557 = vmatprep.subr.bf16.mxu0 0
      %558 = vmatpush1.bf16.msra.mxu0 0
      %559 = vmatprep.subr.bf16.mxu0 0
      %560 = vmatpush1.bf16.msra.mxu0 0
      %561 = vmatprep.subr.bf16.mxu0 0
      %562 = vmatpush1.bf16.msra.mxu0 0
      %563 = vmatprep.subr.bf16.mxu0 0
      %564 = vmatpush1.bf16.msra.mxu0 0
      %565 = vmatprep.subr.bf16.mxu0 0
      %566 = vmatpush1.bf16.msra.mxu0 0
      %567 = vmatprep.subr.bf16.mxu0 0
      %568 = vmatpush1.bf16.msra.mxu0 0
      %569 = vmatprep.subr.bf16.mxu0 0
      %570 = vmatpush1.bf16.msra.mxu0 0
      %571 = vmatprep.subr.bf16.mxu0 0
      %572 = vmatpush1.bf16.msra.mxu0 0
      %573 = vmatprep.subr.bf16.mxu0 0
      %574 = vmatpush1.bf16.msra.mxu0 0
      %575 = vmatprep.subr.bf16.mxu0 0
      %576 = vmatpush1.bf16.msra.mxu0 0
      %577 = vmatprep.subr.bf16.mxu0 0
      %578 = vmatpush1.bf16.msra.mxu0 0
      %579 = vmatprep.subr.bf16.mxu0 0
      %580 = vmatpush1.bf16.msra.mxu0 0
      %581 = vmatprep.mubr.bf16.mxu0 0
      %582 = vmatmul.mubr.bf16.gmra.mrb[0].mxu0 %v526
      %v583 = vpop.f32.mrb[0].mxu0
      %v584 = vadd.f32 %v399, %v583
      %v585 = vpop.f32.mrb[0].mxu0
      %v586 = vpop.f32.mrb[0].mxu0
      %v587 = vadd.f32 %v402, %v586
      %v588 = vpop.f32.mrb[0].mxu0
      %589 = vmatprep.mubr.bf16.mxu0 0
      %590 = vmatmul.mubr.bf16.gmra.mrb[0].mxu0 %v529
      %v591 = vpop.f32.mrb[0].mxu0
      %v592 = vadd.f32 %v407, %v591
      %v593 = vpop.f32.mrb[0].mxu0
      %v594 = vpop.f32.mrb[0].mxu0
      %v595 = vadd.f32 %v410, %v594
      %v596 = vpop.f32.mrb[0].mxu0
      %597 = vmatprep.mubr.bf16.mxu0 0
      %598 = vmatmul.mubr.bf16.gmra.mrb[0].mxu0 %v532
      %v599 = vpop.f32.mrb[0].mxu0
      %v600 = vadd.f32 %v415, %v599
      %v601 = vpop.f32.mrb[0].mxu0
      %v602 = vpop.f32.mrb[0].mxu0
      %v603 = vadd.f32 %v418, %v602
      %v604 = vpop.f32.mrb[0].mxu0
      %605 = vmatprep.mubr.bf16.mxu0 0
      %606 = vmatmul.mubr.bf16.gmra.mrb[0].mxu0 %v535
      %v607 = vpop.f32.mrb[0].mxu0
      %v608 = vadd.f32 %v423, %v607
      %v609 = vpop.f32.mrb[0].mxu0
      %v610 = vpop.f32.mrb[0].mxu0
      %v611 = vadd.f32 %v426, %v610
      %v612 = vpop.f32.mrb[0].mxu0
      %613 = vmatprep.mubr.bf16.mxu0 0
      %614 = vmatmul.mubr.bf16.gmra.mrb[0].mxu0 %v538
      %v615 = vpop.f32.mrb[0].mxu0
      %v616 = vadd.f32 %v431, %v615
      %v617 = vpop.f32.mrb[0].mxu0
      %v618 = vpop.f32.mrb[0].mxu0
      %v619 = vadd.f32 %v434, %v618
      %v620 = vpop.f32.mrb[0].mxu0
      %621 = vmatprep.mubr.bf16.mxu0 0
      %622 = vmatmul.mubr.bf16.gmra.mrb[0].mxu0 %v541
      %v623 = vpop.f32.mrb[0].mxu0
      %v624 = vadd.f32 %v439, %v623
      %v625 = vpop.f32.mrb[0].mxu0
      %v626 = vpop.f32.mrb[0].mxu0
      %v627 = vadd.f32 %v442, %v626
      %v628 = vpop.f32.mrb[0].mxu0
      %629 = vmatprep.mubr.bf16.mxu0 0
      %630 = vmatmul.mubr.bf16.gmra.mrb[0].mxu0 %v544
      %v631 = vpop.f32.mrb[0].mxu0
      %v632 = vadd.f32 %v447, %v631
      %v633 = vpop.f32.mrb[0].mxu0
      %v634 = vpop.f32.mrb[0].mxu0
      %v635 = vadd.f32 %v450, %v634
      %v636 = vpop.f32.mrb[0].mxu0
      %637 = vmatprep.mubr.bf16.mxu0 0
      %638 = vmatmul.mubr.bf16.gmra.mrb[0].mxu0 %v547
      %v639 = vpop.f32.mrb[0].mxu0
      %v640 = vadd.f32 %v455, %v639
      %v641 = vpop.f32.mrb[0].mxu0
      %v642 = vpop.f32.mrb[0].mxu0
      %v643 = vadd.f32 %v458, %v642
      %v644 = vpop.f32.mrb[0].mxu0
      %645 = vdwg.mxu0
      %vm646 = vmpackc.low %vm216, %vm216
      %v647 = vsel %vm646, 65537, 0
      %648 = vrot.lane.b32.xlu0 %v647, 2
      %v649 = vpop.permute.xlu0 %648
      %vm650 = vcmp.ne.s16.totalorder %v649, 0
      %v651 = vsel %vm650, %v217, 0
      %v652 = vsel %vm650, %v218, 0
      %v653 = vsel %vm650, %v219, 0
      %v654 = vsel %vm650, %v220, 0
      %v655 = vsel %vm650, %v221, 0
      %v656 = vsel %vm650, %v222, 0
      %v657 = vsel %vm650, %v223, 0
      %v658 = vsel %vm650, %v224, 0
      %s659 = scalar_lea.vmem %s1, 128
      %v660 = vld [vmem:[%s659] sm:$0xf]
      %v661 = vld [vmem:[%s659 + $0x4] sm:$0xf]
      %v662 = vld [vmem:[%s659 + $0x8] sm:$0xf]
      %v663 = vld [vmem:[%s659 + $0xc] sm:$0xf]
      %v664 = vld [vmem:[%s659 + $0x10] sm:$0xf]
      %v665 = vld [vmem:[%s659 + $0x14] sm:$0xf]
      %v666 = vld [vmem:[%s659 + $0x18] sm:$0xf]
      %v667 = vld [vmem:[%s659 + $0x1c] sm:$0xf]
      %v668 = vld [vmem:[%s659 + $0x20] sm:$0xf]
      %v669 = vld [vmem:[%s659 + $0x24] sm:$0xf]
      %v670 = vld [vmem:[%s659 + $0x28] sm:$0xf]
      %v671 = vld [vmem:[%s659 + $0x2c] sm:$0xf]
      %v672 = vld [vmem:[%s659 + $0x30] sm:$0xf]
      %v673 = vld [vmem:[%s659 + $0x34] sm:$0xf]
      %v674 = vld [vmem:[%s659 + $0x38] sm:$0xf]
      %v675 = vld [vmem:[%s659 + $0x3c] sm:$0xf]
      %v692 = vunpack.c.l.b16 %v660
      %v693 = vunpack.c.l.b16 %v661
      %v694 = vunpack.c.l.b16 %v662
      %v695 = vunpack.c.l.b16 %v663
      %v696 = vunpack.c.l.b16 %v664
      %v697 = vunpack.c.l.b16 %v665
      %v698 = vunpack.c.l.b16 %v666
      %v699 = vunpack.c.l.b16 %v667
      %v700 = vunpack.c.l.b16 %v668
      %v701 = vunpack.c.l.b16 %v669
      %v702 = vunpack.c.l.b16 %v670
      %v703 = vunpack.c.l.b16 %v671
      %v704 = vunpack.c.l.b16 %v672
      %v705 = vunpack.c.l.b16 %v673
      %v706 = vunpack.c.l.b16 %v674
      %v707 = vunpack.c.l.b16 %v675
      %v708 = vpack.c.b16 %v693, %v692
      %v709 = vpack.c.b16 %v695, %v694
      %v710 = vpack.c.b16 %v697, %v696
      %v711 = vpack.c.b16 %v699, %v698
      %v712 = vpack.c.b16 %v701, %v700
      %v713 = vpack.c.b16 %v703, %v702
      %v714 = vpack.c.b16 %v705, %v704
      %v715 = vpack.c.b16 %v707, %v706
      %v724 = vunpack.c.l.b16 %v651
      %v725 = vunpack.c.l.b16 %v652
      %v726 = vunpack.c.l.b16 %v653
      %v727 = vunpack.c.l.b16 %v654
      %v728 = vunpack.c.l.b16 %v655
      %v729 = vunpack.c.l.b16 %v656
      %v730 = vunpack.c.l.b16 %v657
      %v731 = vunpack.c.l.b16 %v658
      %v732 = vpack.c.b16 %v725, %v724
      %v733 = vpack.c.b16 %v727, %v726
      %v734 = vpack.c.b16 %v729, %v728
      %v735 = vpack.c.b16 %v731, %v730
      %736 = vrot.lane.b32.xlu0 %v732, 126
      %v737 = vpop.permute.xlu0 %736
      %738 = vrot.lane.b32.xlu0 %v733, 126
      %v739 = vpop.permute.xlu0 %738
      %740 = vrot.lane.b32.xlu0 %v734, 126
      %v741 = vpop.permute.xlu0 %740
      %742 = vrot.lane.b32.xlu0 %v735, 126
      %v743 = vpop.permute.xlu0 %742
      %v749 = vsel %vm339, %v708, 0
      %v752 = vsel %vm339, %v709, 0
      %v755 = vsel %vm339, %v710, 0
      %v758 = vsel %vm339, %v711, 0
      %v761 = vsel %vm339, %v712, 0
      %v764 = vsel %vm339, %v713, 0
      %v767 = vsel %vm339, %v714, 0
      %v770 = vsel %vm339, %v715, 0
      %772 = vmatprep.subr.bf16.mxu0 0
      %773 = vmatpush1.bf16.msra.mxu0 %v737
      %774 = vmatprep.subr.bf16.mxu0 0
      %775 = vmatpush1.bf16.msra.mxu0 %v739
      %776 = vmatprep.subr.bf16.mxu0 0
      %777 = vmatpush1.bf16.msra.mxu0 %v741
      %778 = vmatprep.subr.bf16.mxu0 0
      %779 = vmatpush1.bf16.msra.mxu0 %v743
      %780 = vmatprep.subr.bf16.mxu0 0
      %781 = vmatpush1.bf16.msra.mxu0 0
      %782 = vmatprep.subr.bf16.mxu0 0
      %783 = vmatpush1.bf16.msra.mxu0 0
      %784 = vmatprep.subr.bf16.mxu0 0
      %785 = vmatpush1.bf16.msra.mxu0 0
      %786 = vmatprep.subr.bf16.mxu0 0
      %787 = vmatpush1.bf16.msra.mxu0 0
      %788 = vmatprep.subr.bf16.mxu0 0
      %789 = vmatpush1.bf16.msra.mxu0 0
      %790 = vmatprep.subr.bf16.mxu0 0
      %791 = vmatpush1.bf16.msra.mxu0 0
      %792 = vmatprep.subr.bf16.mxu0 0
      %793 = vmatpush1.bf16.msra.mxu0 0
      %794 = vmatprep.subr.bf16.mxu0 0
      %795 = vmatpush1.bf16.msra.mxu0 0
      %796 = vmatprep.subr.bf16.mxu0 0
      %797 = vmatpush1.bf16.msra.mxu0 0
      %798 = vmatprep.subr.bf16.mxu0 0
      %799 = vmatpush1.bf16.msra.mxu0 0
      %800 = vmatprep.subr.bf16.mxu0 0
      %801 = vmatpush1.bf16.msra.mxu0 0
      %802 = vmatprep.subr.bf16.mxu0 0
      %803 = vmatpush1.bf16.msra.mxu0 0
      %804 = vmatprep.mubr.bf16.mxu0 0
      %805 = vmatmul.mubr.bf16.gmra.mrb[0].mxu0 %v749
      %v806 = vpop.f32.mrb[0].mxu0
      %v807 = vadd.f32 0.0, %v806
      %v808 = vpop.f32.mrb[0].mxu0
      %v809 = vpop.f32.mrb[0].mxu0
      %v810 = vadd.f32 0.0, %v809
      %v811 = vpop.f32.mrb[0].mxu0
      %812 = vmatprep.mubr.bf16.mxu0 0
      %813 = vmatmul.mubr.bf16.gmra.mrb[0].mxu0 %v752
      %v814 = vpop.f32.mrb[0].mxu0
      %v815 = vadd.f32 0.0, %v814
      %v816 = vpop.f32.mrb[0].mxu0
      %v817 = vpop.f32.mrb[0].mxu0
      %v818 = vadd.f32 0.0, %v817
      %v819 = vpop.f32.mrb[0].mxu0
      %820 = vmatprep.mubr.bf16.mxu0 0
      %821 = vmatmul.mubr.bf16.gmra.mrb[0].mxu0 %v755
      %v822 = vpop.f32.mrb[0].mxu0
      %v823 = vadd.f32 0.0, %v822
      %v824 = vpop.f32.mrb[0].mxu0
      %v825 = vpop.f32.mrb[0].mxu0
      %v826 = vadd.f32 0.0, %v825
      %v827 = vpop.f32.mrb[0].mxu0
      %828 = vmatprep.mubr.bf16.mxu0 0
      %829 = vmatmul.mubr.bf16.gmra.mrb[0].mxu0 %v758
      %v830 = vpop.f32.mrb[0].mxu0
      %v831 = vadd.f32 0.0, %v830
      %v832 = vpop.f32.mrb[0].mxu0
      %v833 = vpop.f32.mrb[0].mxu0
      %v834 = vadd.f32 0.0, %v833
      %v835 = vpop.f32.mrb[0].mxu0
      %836 = vmatprep.mubr.bf16.mxu0 0
      %837 = vmatmul.mubr.bf16.gmra.mrb[0].mxu0 %v761
      %v838 = vpop.f32.mrb[0].mxu0
      %v839 = vadd.f32 0.0, %v838
      %v840 = vpop.f32.mrb[0].mxu0
      %v841 = vpop.f32.mrb[0].mxu0
      %v842 = vadd.f32 0.0, %v841
      %v843 = vpop.f32.mrb[0].mxu0
      %844 = vmatprep.mubr.bf16.mxu0 0
      %845 = vmatmul.mubr.bf16.gmra.mrb[0].mxu0 %v764
      %v846 = vpop.f32.mrb[0].mxu0
      %v847 = vadd.f32 0.0, %v846
      %v848 = vpop.f32.mrb[0].mxu0
      %v849 = vpop.f32.mrb[0].mxu0
      %v850 = vadd.f32 0.0, %v849
      %v851 = vpop.f32.mrb[0].mxu0
      %852 = vmatprep.mubr.bf16.mxu0 0
      %853 = vmatmul.mubr.bf16.gmra.mrb[0].mxu0 %v767
      %v854 = vpop.f32.mrb[0].mxu0
      %v855 = vadd.f32 0.0, %v854
      %v856 = vpop.f32.mrb[0].mxu0
      %v857 = vpop.f32.mrb[0].mxu0
      %v858 = vadd.f32 0.0, %v857
      %v859 = vpop.f32.mrb[0].mxu0
      %860 = vmatprep.mubr.bf16.mxu0 0
      %861 = vmatmul.mubr.bf16.gmra.mrb[0].mxu0 %v770
      %v862 = vpop.f32.mrb[0].mxu0
      %v863 = vadd.f32 0.0, %v862
      %v864 = vpop.f32.mrb[0].mxu0
      %v865 = vpop.f32.mrb[0].mxu0
      %v866 = vadd.f32 0.0, %v865
      %v867 = vpop.f32.mrb[0].mxu0
      %868 = vdwg.mxu0
      %v869 = vadd.f32 %v584, %v807
      %v870 = vadd.f32 %v587, %v810
      %v871 = vadd.f32 %v592, %v815
      %v872 = vadd.f32 %v595, %v818
      %v873 = vadd.f32 %v600, %v823
      %v874 = vadd.f32 %v603, %v826
      %v875 = vadd.f32 %v608, %v831
      %v876 = vadd.f32 %v611, %v834
      %v877 = vadd.f32 %v616, %v839
      %v878 = vadd.f32 %v619, %v842
      %v879 = vadd.f32 %v624, %v847
      %v880 = vadd.f32 %v627, %v850
      %v881 = vadd.f32 %v632, %v855
      %v882 = vadd.f32 %v635, %v858
      %v883 = vadd.f32 %v640, %v863
      %v884 = vadd.f32 %v643, %v866
      %v885 = vsel %vm225, 65537, 0
      %886 = vrot.lane.b32.xlu0 %v885, 4
      %v887 = vpop.permute.xlu0 %886
      %vm888 = vcmp.ne.s16.totalorder %v887, 0
      %v889 = vsel %vm888, %v217, 0
      %v890 = vsel %vm888, %v218, 0
      %v891 = vsel %vm888, %v219, 0
      %v892 = vsel %vm888, %v220, 0
      %v893 = vsel %vm888, %v221, 0
      %v894 = vsel %vm888, %v222, 0
      %v895 = vsel %vm888, %v223, 0
      %v896 = vsel %vm888, %v224, 0
      %s897 = scalar_lea.vmem %s1, 192
      %v898 = vld [vmem:[%s897] sm:$0xf]
      %v899 = vld [vmem:[%s897 + $0x4] sm:$0xf]
      %v900 = vld [vmem:[%s897 + $0x8] sm:$0xf]
      %v901 = vld [vmem:[%s897 + $0xc] sm:$0xf]
      %v902 = vld [vmem:[%s897 + $0x10] sm:$0xf]
      %v903 = vld [vmem:[%s897 + $0x14] sm:$0xf]
      %v904 = vld [vmem:[%s897 + $0x18] sm:$0xf]
      %v905 = vld [vmem:[%s897 + $0x1c] sm:$0xf]
      %v906 = vld [vmem:[%s897 + $0x20] sm:$0xf]
      %v907 = vld [vmem:[%s897 + $0x24] sm:$0xf]
      %v908 = vld [vmem:[%s897 + $0x28] sm:$0xf]
      %v909 = vld [vmem:[%s897 + $0x2c] sm:$0xf]
      %v910 = vld [vmem:[%s897 + $0x30] sm:$0xf]
      %v911 = vld [vmem:[%s897 + $0x34] sm:$0xf]
      %v912 = vld [vmem:[%s897 + $0x38] sm:$0xf]
      %v913 = vld [vmem:[%s897 + $0x3c] sm:$0xf]
      %v930 = vunpack.c.l.b16 %v898
      %v931 = vunpack.c.l.b16 %v899
      %v932 = vunpack.c.l.b16 %v900
      %v933 = vunpack.c.l.b16 %v901
      %v934 = vunpack.c.l.b16 %v902
      %v935 = vunpack.c.l.b16 %v903
      %v936 = vunpack.c.l.b16 %v904
      %v937 = vunpack.c.l.b16 %v905
      %v938 = vunpack.c.l.b16 %v906
      %v939 = vunpack.c.l.b16 %v907
      %v940 = vunpack.c.l.b16 %v908
      %v941 = vunpack.c.l.b16 %v909
      %v942 = vunpack.c.l.b16 %v910
      %v943 = vunpack.c.l.b16 %v911
      %v944 = vunpack.c.l.b16 %v912
      %v945 = vunpack.c.l.b16 %v913
      %v946 = vpack.c.b16 %v931, %v930
      %v947 = vpack.c.b16 %v933, %v932
      %v948 = vpack.c.b16 %v935, %v934
      %v949 = vpack.c.b16 %v937, %v936
      %v950 = vpack.c.b16 %v939, %v938
      %v951 = vpack.c.b16 %v941, %v940
      %v952 = vpack.c.b16 %v943, %v942
      %v953 = vpack.c.b16 %v945, %v944
      %v962 = vunpack.c.l.b16 %v889
      %v963 = vunpack.c.l.b16 %v890
      %v964 = vunpack.c.l.b16 %v891
      %v965 = vunpack.c.l.b16 %v892
      %v966 = vunpack.c.l.b16 %v893
      %v967 = vunpack.c.l.b16 %v894
      %v968 = vunpack.c.l.b16 %v895
      %v969 = vunpack.c.l.b16 %v896
      %v970 = vpack.c.b16 %v963, %v962
      %v971 = vpack.c.b16 %v965, %v964
      %v972 = vpack.c.b16 %v967, %v966
      %v973 = vpack.c.b16 %v969, %v968
      %974 = vrot.lane.b32.xlu0 %v970, 124
      %v975 = vpop.permute.xlu0 %974
      %976 = vrot.lane.b32.xlu0 %v971, 124
      %v977 = vpop.permute.xlu0 %976
      %978 = vrot.lane.b32.xlu0 %v972, 124
      %v979 = vpop.permute.xlu0 %978
      %980 = vrot.lane.b32.xlu0 %v973, 124
      %v981 = vpop.permute.xlu0 %980
      %v987 = vsel %vm339, %v946, 0
      %v990 = vsel %vm339, %v947, 0
      %v993 = vsel %vm339, %v948, 0
      %v996 = vsel %vm339, %v949, 0
      %v999 = vsel %vm339, %v950, 0
      %v1002 = vsel %vm339, %v951, 0
      %v1005 = vsel %vm339, %v952, 0
      %v1008 = vsel %vm339, %v953, 0
      %1010 = vmatprep.subr.bf16.mxu0 0
      %1011 = vmatpush1.bf16.msra.mxu0 %v975
      %1012 = vmatprep.subr.bf16.mxu0 0
      %1013 = vmatpush1.bf16.msra.mxu0 %v977
      %1014 = vmatprep.subr.bf16.mxu0 0
      %1015 = vmatpush1.bf16.msra.mxu0 %v979
      %1016 = vmatprep.subr.bf16.mxu0 0
      %1017 = vmatpush1.bf16.msra.mxu0 %v981
      %1018 = vmatprep.subr.bf16.mxu0 0
      %1019 = vmatpush1.bf16.msra.mxu0 0
      %1020 = vmatprep.subr.bf16.mxu0 0
      %1021 = vmatpush1.bf16.msra.mxu0 0
      %1022 = vmatprep.subr.bf16.mxu0 0
      %1023 = vmatpush1.bf16.msra.mxu0 0
      %1024 = vmatprep.subr.bf16.mxu0 0
      %1025 = vmatpush1.bf16.msra.mxu0 0
      %1026 = vmatprep.subr.bf16.mxu0 0
      %1027 = vmatpush1.bf16.msra.mxu0 0
      %1028 = vmatprep.subr.bf16.mxu0 0
      %1029 = vmatpush1.bf16.msra.mxu0 0
      %1030 = vmatprep.subr.bf16.mxu0 0
      %1031 = vmatpush1.bf16.msra.mxu0 0
      %1032 = vmatprep.subr.bf16.mxu0 0
      %1033 = vmatpush1.bf16.msra.mxu0 0
      %1034 = vmatprep.subr.bf16.mxu0 0
      %1035 = vmatpush1.bf16.msra.mxu0 0
      %1036 = vmatprep.subr.bf16.mxu0 0
      %1037 = vmatpush1.bf16.msra.mxu0 0
      %1038 = vmatprep.subr.bf16.mxu0 0
      %1039 = vmatpush1.bf16.msra.mxu0 0
      %1040 = vmatprep.subr.bf16.mxu0 0
      %1041 = vmatpush1.bf16.msra.mxu0 0
      %1042 = vmatprep.mubr.bf16.mxu0 0
      %1043 = vmatmul.mubr.bf16.gmra.mrb[0].mxu0 %v987
      %v1044 = vpop.f32.mrb[0].mxu0
      %v1045 = vadd.f32 0.0, %v1044
      %v1046 = vpop.f32.mrb[0].mxu0
      %v1047 = vpop.f32.mrb[0].mxu0
      %v1048 = vadd.f32 0.0, %v1047
      %v1049 = vpop.f32.mrb[0].mxu0
      %1050 = vmatprep.mubr.bf16.mxu0 0
      %1051 = vmatmul.mubr.bf16.gmra.mrb[0].mxu0 %v990
      %v1052 = vpop.f32.mrb[0].mxu0
      %v1053 = vadd.f32 0.0, %v1052
      %v1054 = vpop.f32.mrb[0].mxu0
      %v1055 = vpop.f32.mrb[0].mxu0
      %v1056 = vadd.f32 0.0, %v1055
      %v1057 = vpop.f32.mrb[0].mxu0
      %1058 = vmatprep.mubr.bf16.mxu0 0
      %1059 = vmatmul.mubr.bf16.gmra.mrb[0].mxu0 %v993
      %v1060 = vpop.f32.mrb[0].mxu0
      %v1061 = vadd.f32 0.0, %v1060
      %v1062 = vpop.f32.mrb[0].mxu0
      %v1063 = vpop.f32.mrb[0].mxu0
      %v1064 = vadd.f32 0.0, %v1063
      %v1065 = vpop.f32.mrb[0].mxu0
      %1066 = vmatprep.mubr.bf16.mxu0 0
      %1067 = vmatmul.mubr.bf16.gmra.mrb[0].mxu0 %v996
      %v1068 = vpop.f32.mrb[0].mxu0
      %v1069 = vadd.f32 0.0, %v1068
      %v1070 = vpop.f32.mrb[0].mxu0
      %v1071 = vpop.f32.mrb[0].mxu0
      %v1072 = vadd.f32 0.0, %v1071
      %v1073 = vpop.f32.mrb[0].mxu0
      %1074 = vmatprep.mubr.bf16.mxu0 0
      %1075 = vmatmul.mubr.bf16.gmra.mrb[0].mxu0 %v999
      %v1076 = vpop.f32.mrb[0].mxu0
      %v1077 = vadd.f32 0.0, %v1076
      %v1078 = vpop.f32.mrb[0].mxu0
      %v1079 = vpop.f32.mrb[0].mxu0
      %v1080 = vadd.f32 0.0, %v1079
      %v1081 = vpop.f32.mrb[0].mxu0
      %1082 = vmatprep.mubr.bf16.mxu0 0
      %1083 = vmatmul.mubr.bf16.gmra.mrb[0].mxu0 %v1002
      %v1084 = vpop.f32.mrb[0].mxu0
      %v1085 = vadd.f32 0.0, %v1084
      %v1086 = vpop.f32.mrb[0].mxu0
      %v1087 = vpop.f32.mrb[0].mxu0
      %v1088 = vadd.f32 0.0, %v1087
      %v1089 = vpop.f32.mrb[0].mxu0
      %1090 = vmatprep.mubr.bf16.mxu0 0
      %1091 = vmatmul.mubr.bf16.gmra.mrb[0].mxu0 %v1005
      %v1092 = vpop.f32.mrb[0].mxu0
      %v1093 = vadd.f32 0.0, %v1092
      %v1094 = vpop.f32.mrb[0].mxu0
      %v1095 = vpop.f32.mrb[0].mxu0
      %v1096 = vadd.f32 0.0, %v1095
      %v1097 = vpop.f32.mrb[0].mxu0
      %1098 = vmatprep.mubr.bf16.mxu0 0
      %1099 = vmatmul.mubr.bf16.gmra.mrb[0].mxu0 %v1008
      %v1100 = vpop.f32.mrb[0].mxu0
      %v1101 = vadd.f32 0.0, %v1100
      %v1102 = vpop.f32.mrb[0].mxu0
      %v1103 = vpop.f32.mrb[0].mxu0
      %v1104 = vadd.f32 0.0, %v1103
      %v1105 = vpop.f32.mrb[0].mxu0
      %1106 = vdwg.mxu0
      %v1107 = vadd.f32 %v869, %v1045
      %v1108 = vadd.f32 %v870, %v1048
      %v1109 = vadd.f32 %v871, %v1053
      %v1110 = vadd.f32 %v872, %v1056
      %v1111 = vadd.f32 %v873, %v1061
      %v1112 = vadd.f32 %v874, %v1064
      %v1113 = vadd.f32 %v875, %v1069
      %v1114 = vadd.f32 %v876, %v1072
      %v1115 = vadd.f32 %v877, %v1077
      %v1116 = vadd.f32 %v878, %v1080
      %v1117 = vadd.f32 %v879, %v1085
      %v1118 = vadd.f32 %v880, %v1088
      %v1119 = vadd.f32 %v881, %v1093
      %v1120 = vadd.f32 %v882, %v1096
      %v1121 = vadd.f32 %v883, %v1101
      %v1122 = vadd.f32 %v884, %v1104
      %s1123 = scalar_lea.vmem %s1, 256
      %v1124 = vld [vmem:[%s1123] sm:$0xf]
      %v1125 = vld [vmem:[%s1123 + $0x4] sm:$0xf]
      %v1126 = vld [vmem:[%s1123 + $0x8] sm:$0xf]
      %v1127 = vld [vmem:[%s1123 + $0xc] sm:$0xf]
      %v1128 = vld [vmem:[%s1123 + $0x10] sm:$0xf]
      %v1129 = vld [vmem:[%s1123 + $0x14] sm:$0xf]
      %v1130 = vld [vmem:[%s1123 + $0x18] sm:$0xf]
      %v1131 = vld [vmem:[%s1123 + $0x1c] sm:$0xf]
      %v1132 = vld [vmem:[%s1123 + $0x20] sm:$0xf]
      %v1133 = vld [vmem:[%s1123 + $0x24] sm:$0xf]
      %v1134 = vld [vmem:[%s1123 + $0x28] sm:$0xf]
      %v1135 = vld [vmem:[%s1123 + $0x2c] sm:$0xf]
      %v1136 = vld [vmem:[%s1123 + $0x30] sm:$0xf]
      %v1137 = vld [vmem:[%s1123 + $0x34] sm:$0xf]
      %v1138 = vld [vmem:[%s1123 + $0x38] sm:$0xf]
      %v1139 = vld [vmem:[%s1123 + $0x3c] sm:$0xf]
      %v1156 = vunpack.c.l.b16 %v1124
      %v1157 = vunpack.c.l.b16 %v1125
      %v1158 = vunpack.c.l.b16 %v1126
      %v1159 = vunpack.c.l.b16 %v1127
      %v1160 = vunpack.c.l.b16 %v1128
      %v1161 = vunpack.c.l.b16 %v1129
      %v1162 = vunpack.c.l.b16 %v1130
      %v1163 = vunpack.c.l.b16 %v1131
      %v1164 = vunpack.c.l.b16 %v1132
      %v1165 = vunpack.c.l.b16 %v1133
      %v1166 = vunpack.c.l.b16 %v1134
      %v1167 = vunpack.c.l.b16 %v1135
      %v1168 = vunpack.c.l.b16 %v1136
      %v1169 = vunpack.c.l.b16 %v1137
      %v1170 = vunpack.c.l.b16 %v1138
      %v1171 = vunpack.c.l.b16 %v1139
      %v1172 = vpack.c.b16 %v1157, %v1156
      %v1173 = vpack.c.b16 %v1159, %v1158
      %v1174 = vpack.c.b16 %v1161, %v1160
      %v1175 = vpack.c.b16 %v1163, %v1162
      %v1176 = vpack.c.b16 %v1165, %v1164
      %v1177 = vpack.c.b16 %v1167, %v1166
      %v1178 = vpack.c.b16 %v1169, %v1168
      %v1179 = vpack.c.b16 %v1171, %v1170
      %1180 = vrot.lane.b32.xlu0 %v323, 123
      %v1181 = vpop.permute.xlu0 %1180
      %1182 = vrot.lane.b32.xlu0 %v324, 123
      %v1183 = vpop.permute.xlu0 %1182
      %1184 = vrot.lane.b32.xlu0 %v325, 123
      %v1185 = vpop.permute.xlu0 %1184
      %1186 = vrot.lane.b32.xlu0 %v326, 123
      %v1187 = vpop.permute.xlu0 %1186
      %v1193 = vsel %vm339, %v1172, 0
      %v1196 = vsel %vm339, %v1173, 0
      %v1199 = vsel %vm339, %v1174, 0
      %v1202 = vsel %vm339, %v1175, 0
      %v1205 = vsel %vm339, %v1176, 0
      %v1208 = vsel %vm339, %v1177, 0
      %v1211 = vsel %vm339, %v1178, 0
      %v1214 = vsel %vm339, %v1179, 0
      %1216 = vmatprep.subr.bf16.mxu0 0
      %1217 = vmatpush1.bf16.msra.mxu0 %v1181
      %1218 = vmatprep.subr.bf16.mxu0 0
      %1219 = vmatpush1.bf16.msra.mxu0 %v1183
      %1220 = vmatprep.subr.bf16.mxu0 0
      %1221 = vmatpush1.bf16.msra.mxu0 %v1185
      %1222 = vmatprep.subr.bf16.mxu0 0
      %1223 = vmatpush1.bf16.msra.mxu0 %v1187
      %1224 = vmatprep.subr.bf16.mxu0 0
      %1225 = vmatpush1.bf16.msra.mxu0 0
      %1226 = vmatprep.subr.bf16.mxu0 0
      %1227 = vmatpush1.bf16.msra.mxu0 0
      %1228 = vmatprep.subr.bf16.mxu0 0
      %1229 = vmatpush1.bf16.msra.mxu0 0
      %1230 = vmatprep.subr.bf16.mxu0 0
      %1231 = vmatpush1.bf16.msra.mxu0 0
      %1232 = vmatprep.subr.bf16.mxu0 0
      %1233 = vmatpush1.bf16.msra.mxu0 0
      %1234 = vmatprep.subr.bf16.mxu0 0
      %1235 = vmatpush1.bf16.msra.mxu0 0
      %1236 = vmatprep.subr.bf16.mxu0 0
      %1237 = vmatpush1.bf16.msra.mxu0 0
      %1238 = vmatprep.subr.bf16.mxu0 0
      %1239 = vmatpush1.bf16.msra.mxu0 0
      %1240 = vmatprep.subr.bf16.mxu0 0
      %1241 = vmatpush1.bf16.msra.mxu0 0
      %1242 = vmatprep.subr.bf16.mxu0 0
      %1243 = vmatpush1.bf16.msra.mxu0 0
      %1244 = vmatprep.subr.bf16.mxu0 0
      %1245 = vmatpush1.bf16.msra.mxu0 0
      %1246 = vmatprep.subr.bf16.mxu0 0
      %1247 = vmatpush1.bf16.msra.mxu0 0
      %1248 = vmatprep.mubr.bf16.mxu0 0
      %1249 = vmatmul.mubr.bf16.gmra.mrb[0].mxu0 %v1193
      %v1250 = vpop.f32.mrb[0].mxu0
      %v1251 = vadd.f32 0.0, %v1250
      %v1252 = vpop.f32.mrb[0].mxu0
      %v1253 = vpop.f32.mrb[0].mxu0
      %v1254 = vadd.f32 0.0, %v1253
      %v1255 = vpop.f32.mrb[0].mxu0
      %1256 = vmatprep.mubr.bf16.mxu0 0
      %1257 = vmatmul.mubr.bf16.gmra.mrb[0].mxu0 %v1196
      %v1258 = vpop.f32.mrb[0].mxu0
      %v1259 = vadd.f32 0.0, %v1258
      %v1260 = vpop.f32.mrb[0].mxu0
      %v1261 = vpop.f32.mrb[0].mxu0
      %v1262 = vadd.f32 0.0, %v1261
      %v1263 = vpop.f32.mrb[0].mxu0
      %1264 = vmatprep.mubr.bf16.mxu0 0
      %1265 = vmatmul.mubr.bf16.gmra.mrb[0].mxu0 %v1199
      %v1266 = vpop.f32.mrb[0].mxu0
      %v1267 = vadd.f32 0.0, %v1266
      %v1268 = vpop.f32.mrb[0].mxu0
      %v1269 = vpop.f32.mrb[0].mxu0
      %v1270 = vadd.f32 0.0, %v1269
      %v1271 = vpop.f32.mrb[0].mxu0
      %1272 = vmatprep.mubr.bf16.mxu0 0
      %1273 = vmatmul.mubr.bf16.gmra.mrb[0].mxu0 %v1202
      %v1274 = vpop.f32.mrb[0].mxu0
      %v1275 = vadd.f32 0.0, %v1274
      %v1276 = vpop.f32.mrb[0].mxu0
      %v1277 = vpop.f32.mrb[0].mxu0
      %v1278 = vadd.f32 0.0, %v1277
      %v1279 = vpop.f32.mrb[0].mxu0
      %1280 = vmatprep.mubr.bf16.mxu0 0
      %1281 = vmatmul.mubr.bf16.gmra.mrb[0].mxu0 %v1205
      %v1282 = vpop.f32.mrb[0].mxu0
      %v1283 = vadd.f32 0.0, %v1282
      %v1284 = vpop.f32.mrb[0].mxu0
      %v1285 = vpop.f32.mrb[0].mxu0
      %v1286 = vadd.f32 0.0, %v1285
      %v1287 = vpop.f32.mrb[0].mxu0
      %1288 = vmatprep.mubr.bf16.mxu0 0
      %1289 = vmatmul.mubr.bf16.gmra.mrb[0].mxu0 %v1208
      %v1290 = vpop.f32.mrb[0].mxu0
      %v1291 = vadd.f32 0.0, %v1290
      %v1292 = vpop.f32.mrb[0].mxu0
      %v1293 = vpop.f32.mrb[0].mxu0
      %v1294 = vadd.f32 0.0, %v1293
      %v1295 = vpop.f32.mrb[0].mxu0
      %1296 = vmatprep.mubr.bf16.mxu0 0
      %1297 = vmatmul.mubr.bf16.gmra.mrb[0].mxu0 %v1211
      %v1298 = vpop.f32.mrb[0].mxu0
      %v1299 = vadd.f32 0.0, %v1298
      %v1300 = vpop.f32.mrb[0].mxu0
      %v1301 = vpop.f32.mrb[0].mxu0
      %v1302 = vadd.f32 0.0, %v1301
      %v1303 = vpop.f32.mrb[0].mxu0
      %1304 = vmatprep.mubr.bf16.mxu0 0
      %1305 = vmatmul.mubr.bf16.gmra.mrb[0].mxu0 %v1214
      %v1306 = vpop.f32.mrb[0].mxu0
      %v1307 = vadd.f32 0.0, %v1306
      %v1308 = vpop.f32.mrb[0].mxu0
      %v1309 = vpop.f32.mrb[0].mxu0
      %v1310 = vadd.f32 0.0, %v1309
      %v1311 = vpop.f32.mrb[0].mxu0
      %1312 = vdwg.mxu0
      %v1313 = vadd.f32 %v1107, %v1251
      %v1314 = vadd.f32 %v1108, %v1254
      %v1315 = vadd.f32 %v1109, %v1259
      %v1316 = vadd.f32 %v1110, %v1262
      %v1317 = vadd.f32 %v1111, %v1267
      %v1318 = vadd.f32 %v1112, %v1270
      %v1319 = vadd.f32 %v1113, %v1275
      %v1320 = vadd.f32 %v1114, %v1278
      %v1321 = vadd.f32 %v1115, %v1283
      %v1322 = vadd.f32 %v1116, %v1286
      %v1323 = vadd.f32 %v1117, %v1291
      %v1324 = vadd.f32 %v1118, %v1294
      %v1325 = vadd.f32 %v1119, %v1299
      %v1326 = vadd.f32 %v1120, %v1302
      %v1327 = vadd.f32 %v1121, %v1307
      %v1328 = vadd.f32 %v1122, %v1310
      %1329 = vrot.lane.b32.xlu0 %v647, 6
      %v1330 = vpop.permute.xlu0 %1329
      %vm1331 = vcmp.ne.s16.totalorder %v1330, 0
      %v1332 = vsel %vm1331, %v217, 0
      %v1333 = vsel %vm1331, %v218, 0
      %v1334 = vsel %vm1331, %v219, 0
      %v1335 = vsel %vm1331, %v220, 0
      %v1336 = vsel %vm1331, %v221, 0
      %v1337 = vsel %vm1331, %v222, 0
      %v1338 = vsel %vm1331, %v223, 0
      %v1339 = vsel %vm1331, %v224, 0
      %s1340 = scalar_lea.vmem %s1, 320
      %v1341 = vld [vmem:[%s1340] sm:$0xf]
      %v1342 = vld [vmem:[%s1340 + $0x4] sm:$0xf]
      %v1343 = vld [vmem:[%s1340 + $0x8] sm:$0xf]
      %v1344 = vld [vmem:[%s1340 + $0xc] sm:$0xf]
      %v1345 = vld [vmem:[%s1340 + $0x10] sm:$0xf]
      %v1346 = vld [vmem:[%s1340 + $0x14] sm:$0xf]
      %v1347 = vld [vmem:[%s1340 + $0x18] sm:$0xf]
      %v1348 = vld [vmem:[%s1340 + $0x1c] sm:$0xf]
      %v1349 = vld [vmem:[%s1340 + $0x20] sm:$0xf]
      %v1350 = vld [vmem:[%s1340 + $0x24] sm:$0xf]
      %v1351 = vld [vmem:[%s1340 + $0x28] sm:$0xf]
      %v1352 = vld [vmem:[%s1340 + $0x2c] sm:$0xf]
      %v1353 = vld [vmem:[%s1340 + $0x30] sm:$0xf]
      %v1354 = vld [vmem:[%s1340 + $0x34] sm:$0xf]
      %v1355 = vld [vmem:[%s1340 + $0x38] sm:$0xf]
      %v1356 = vld [vmem:[%s1340 + $0x3c] sm:$0xf]
      %v1373 = vunpack.c.l.b16 %v1341
      %v1374 = vunpack.c.l.b16 %v1342
      %v1375 = vunpack.c.l.b16 %v1343
      %v1376 = vunpack.c.l.b16 %v1344
      %v1377 = vunpack.c.l.b16 %v1345
      %v1378 = vunpack.c.l.b16 %v1346
      %v1379 = vunpack.c.l.b16 %v1347
      %v1380 = vunpack.c.l.b16 %v1348
      %v1381 = vunpack.c.l.b16 %v1349
      %v1382 = vunpack.c.l.b16 %v1350
      %v1383 = vunpack.c.l.b16 %v1351
      %v1384 = vunpack.c.l.b16 %v1352
      %v1385 = vunpack.c.l.b16 %v1353
      %v1386 = vunpack.c.l.b16 %v1354
      %v1387 = vunpack.c.l.b16 %v1355
      %v1388 = vunpack.c.l.b16 %v1356
      %v1389 = vpack.c.b16 %v1374, %v1373
      %v1390 = vpack.c.b16 %v1376, %v1375
      %v1391 = vpack.c.b16 %v1378, %v1377
      %v1392 = vpack.c.b16 %v1380, %v1379
      %v1393 = vpack.c.b16 %v1382, %v1381
      %v1394 = vpack.c.b16 %v1384, %v1383
      %v1395 = vpack.c.b16 %v1386, %v1385
      %v1396 = vpack.c.b16 %v1388, %v1387
      %v1405 = vunpack.c.l.b16 %v1332
      %v1406 = vunpack.c.l.b16 %v1333
      %v1407 = vunpack.c.l.b16 %v1334
      %v1408 = vunpack.c.l.b16 %v1335
      %v1409 = vunpack.c.l.b16 %v1336
      %v1410 = vunpack.c.l.b16 %v1337
      %v1411 = vunpack.c.l.b16 %v1338
      %v1412 = vunpack.c.l.b16 %v1339
      %v1413 = vpack.c.b16 %v1406, %v1405
      %v1414 = vpack.c.b16 %v1408, %v1407
      %v1415 = vpack.c.b16 %v1410, %v1409
      %v1416 = vpack.c.b16 %v1412, %v1411
      %1417 = vrot.lane.b32.xlu0 %v1413, 122
      %v1418 = vpop.permute.xlu0 %1417
      %1419 = vrot.lane.b32.xlu0 %v1414, 122
      %v1420 = vpop.permute.xlu0 %1419
      %1421 = vrot.lane.b32.xlu0 %v1415, 122
      %v1422 = vpop.permute.xlu0 %1421
      %1423 = vrot.lane.b32.xlu0 %v1416, 122
      %v1424 = vpop.permute.xlu0 %1423
      %v1430 = vsel %vm339, %v1389, 0
      %v1433 = vsel %vm339, %v1390, 0
      %v1436 = vsel %vm339, %v1391, 0
      %v1439 = vsel %vm339, %v1392, 0
      %v1442 = vsel %vm339, %v1393, 0
      %v1445 = vsel %vm339, %v1394, 0
      %v1448 = vsel %vm339, %v1395, 0
      %v1451 = vsel %vm339, %v1396, 0
      %1453 = vmatprep.subr.bf16.mxu0 0
      %1454 = vmatpush1.bf16.msra.mxu0 %v1418
      %1455 = vmatprep.subr.bf16.mxu0 0
      %1456 = vmatpush1.bf16.msra.mxu0 %v1420
      %1457 = vmatprep.subr.bf16.mxu0 0
      %1458 = vmatpush1.bf16.msra.mxu0 %v1422
      %1459 = vmatprep.subr.bf16.mxu0 0
      %1460 = vmatpush1.bf16.msra.mxu0 %v1424
      %1461 = vmatprep.subr.bf16.mxu0 0
      %1462 = vmatpush1.bf16.msra.mxu0 0
      %1463 = vmatprep.subr.bf16.mxu0 0
      %1464 = vmatpush1.bf16.msra.mxu0 0
      %1465 = vmatprep.subr.bf16.mxu0 0
      %1466 = vmatpush1.bf16.msra.mxu0 0
      %1467 = vmatprep.subr.bf16.mxu0 0
      %1468 = vmatpush1.bf16.msra.mxu0 0
      %1469 = vmatprep.subr.bf16.mxu0 0
      %1470 = vmatpush1.bf16.msra.mxu0 0
      %1471 = vmatprep.subr.bf16.mxu0 0
      %1472 = vmatpush1.bf16.msra.mxu0 0
      %1473 = vmatprep.subr.bf16.mxu0 0
      %1474 = vmatpush1.bf16.msra.mxu0 0
      %1475 = vmatprep.subr.bf16.mxu0 0
      %1476 = vmatpush1.bf16.msra.mxu0 0
      %1477 = vmatprep.subr.bf16.mxu0 0
      %1478 = vmatpush1.bf16.msra.mxu0 0
      %1479 = vmatprep.subr.bf16.mxu0 0
      %1480 = vmatpush1.bf16.msra.mxu0 0
      %1481 = vmatprep.subr.bf16.mxu0 0
      %1482 = vmatpush1.bf16.msra.mxu0 0
      %1483 = vmatprep.subr.bf16.mxu0 0
      %1484 = vmatpush1.bf16.msra.mxu0 0
      %1485 = vmatprep.mubr.bf16.mxu0 0
      %1486 = vmatmul.mubr.bf16.gmra.mrb[0].mxu0 %v1430
      %v1487 = vpop.f32.mrb[0].mxu0
      %v1488 = vadd.f32 0.0, %v1487
      %v1489 = vpop.f32.mrb[0].mxu0
      %v1490 = vpop.f32.mrb[0].mxu0
      %v1491 = vadd.f32 0.0, %v1490
      %v1492 = vpop.f32.mrb[0].mxu0
      %1493 = vmatprep.mubr.bf16.mxu0 0
      %1494 = vmatmul.mubr.bf16.gmra.mrb[0].mxu0 %v1433
      %v1495 = vpop.f32.mrb[0].mxu0
      %v1496 = vadd.f32 0.0, %v1495
      %v1497 = vpop.f32.mrb[0].mxu0
      %v1498 = vpop.f32.mrb[0].mxu0
      %v1499 = vadd.f32 0.0, %v1498
      %v1500 = vpop.f32.mrb[0].mxu0
      %1501 = vmatprep.mubr.bf16.mxu0 0
      %1502 = vmatmul.mubr.bf16.gmra.mrb[0].mxu0 %v1436
      %v1503 = vpop.f32.mrb[0].mxu0
      %v1504 = vadd.f32 0.0, %v1503
      %v1505 = vpop.f32.mrb[0].mxu0
      %v1506 = vpop.f32.mrb[0].mxu0
      %v1507 = vadd.f32 0.0, %v1506
      %v1508 = vpop.f32.mrb[0].mxu0
      %1509 = vmatprep.mubr.bf16.mxu0 0
      %1510 = vmatmul.mubr.bf16.gmra.mrb[0].mxu0 %v1439
      %v1511 = vpop.f32.mrb[0].mxu0
      %v1512 = vadd.f32 0.0, %v1511
      %v1513 = vpop.f32.mrb[0].mxu0
      %v1514 = vpop.f32.mrb[0].mxu0
      %v1515 = vadd.f32 0.0, %v1514
      %v1516 = vpop.f32.mrb[0].mxu0
      %1517 = vmatprep.mubr.bf16.mxu0 0
      %1518 = vmatmul.mubr.bf16.gmra.mrb[0].mxu0 %v1442
      %v1519 = vpop.f32.mrb[0].mxu0
      %v1520 = vadd.f32 0.0, %v1519
      %v1521 = vpop.f32.mrb[0].mxu0
      %v1522 = vpop.f32.mrb[0].mxu0
      %v1523 = vadd.f32 0.0, %v1522
      %v1524 = vpop.f32.mrb[0].mxu0
      %1525 = vmatprep.mubr.bf16.mxu0 0
      %1526 = vmatmul.mubr.bf16.gmra.mrb[0].mxu0 %v1445
      %v1527 = vpop.f32.mrb[0].mxu0
      %v1528 = vadd.f32 0.0, %v1527
      %v1529 = vpop.f32.mrb[0].mxu0
      %v1530 = vpop.f32.mrb[0].mxu0
      %v1531 = vadd.f32 0.0, %v1530
      %v1532 = vpop.f32.mrb[0].mxu0
      %1533 = vmatprep.mubr.bf16.mxu0 0
      %1534 = vmatmul.mubr.bf16.gmra.mrb[0].mxu0 %v1448
      %v1535 = vpop.f32.mrb[0].mxu0
      %v1536 = vadd.f32 0.0, %v1535
      %v1537 = vpop.f32.mrb[0].mxu0
      %v1538 = vpop.f32.mrb[0].mxu0
      %v1539 = vadd.f32 0.0, %v1538
      %v1540 = vpop.f32.mrb[0].mxu0
      %1541 = vmatprep.mubr.bf16.mxu0 0
      %1542 = vmatmul.mubr.bf16.gmra.mrb[0].mxu0 %v1451
      %v1543 = vpop.f32.mrb[0].mxu0
      %v1544 = vadd.f32 0.0, %v1543
      %v1545 = vpop.f32.mrb[0].mxu0
      %v1546 = vpop.f32.mrb[0].mxu0
      %v1547 = vadd.f32 0.0, %v1546
      %v1548 = vpop.f32.mrb[0].mxu0
      %1549 = vdwg.mxu0
      %v1550 = vadd.f32 %v1313, %v1488
      %v1551 = vadd.f32 %v1314, %v1491
      %v1552 = vadd.f32 %v1315, %v1496
      %v1553 = vadd.f32 %v1316, %v1499
      %v1554 = vadd.f32 %v1317, %v1504
      %v1555 = vadd.f32 %v1318, %v1507
      %v1556 = vadd.f32 %v1319, %v1512
      %v1557 = vadd.f32 %v1320, %v1515
      %v1558 = vadd.f32 %v1321, %v1520
      %v1559 = vadd.f32 %v1322, %v1523
      %v1560 = vadd.f32 %v1323, %v1528
      %v1561 = vadd.f32 %v1324, %v1531
      %v1562 = vadd.f32 %v1325, %v1536
      %v1563 = vadd.f32 %v1326, %v1539
      %v1564 = vadd.f32 %v1327, %v1544
      %v1565 = vadd.f32 %v1328, %v1547
      %1566 = vrot.lane.b32.xlu0 %v885, 8
      %v1567 = vpop.permute.xlu0 %1566
      %vm1568 = vcmp.ne.s16.totalorder %v1567, 0
      %v1569 = vsel %vm1568, %v217, 0
      %v1570 = vsel %vm1568, %v218, 0
      %v1571 = vsel %vm1568, %v219, 0
      %v1572 = vsel %vm1568, %v220, 0
      %v1573 = vsel %vm1568, %v221, 0
      %v1574 = vsel %vm1568, %v222, 0
      %v1575 = vsel %vm1568, %v223, 0
      %v1576 = vsel %vm1568, %v224, 0
      %s1577 = scalar_lea.vmem %s1, 384
      %v1578 = vld [vmem:[%s1577] sm:$0xf]
      %v1579 = vld [vmem:[%s1577 + $0x4] sm:$0xf]
      %v1580 = vld [vmem:[%s1577 + $0x8] sm:$0xf]
      %v1581 = vld [vmem:[%s1577 + $0xc] sm:$0xf]
      %v1582 = vld [vmem:[%s1577 + $0x10] sm:$0xf]
      %v1583 = vld [vmem:[%s1577 + $0x14] sm:$0xf]
      %v1584 = vld [vmem:[%s1577 + $0x18] sm:$0xf]
      %v1585 = vld [vmem:[%s1577 + $0x1c] sm:$0xf]
      %v1586 = vld [vmem:[%s1577 + $0x20] sm:$0xf]
      %v1587 = vld [vmem:[%s1577 + $0x24] sm:$0xf]
      %v1588 = vld [vmem:[%s1577 + $0x28] sm:$0xf]
      %v1589 = vld [vmem:[%s1577 + $0x2c] sm:$0xf]
      %v1590 = vld [vmem:[%s1577 + $0x30] sm:$0xf]
      %v1591 = vld [vmem:[%s1577 + $0x34] sm:$0xf]
      %v1592 = vld [vmem:[%s1577 + $0x38] sm:$0xf]
      %v1593 = vld [vmem:[%s1577 + $0x3c] sm:$0xf]
      %v1610 = vunpack.c.l.b16 %v1578
      %v1611 = vunpack.c.l.b16 %v1579
      %v1612 = vunpack.c.l.b16 %v1580
      %v1613 = vunpack.c.l.b16 %v1581
      %v1614 = vunpack.c.l.b16 %v1582
      %v1615 = vunpack.c.l.b16 %v1583
      %v1616 = vunpack.c.l.b16 %v1584
      %v1617 = vunpack.c.l.b16 %v1585
      %v1618 = vunpack.c.l.b16 %v1586
      %v1619 = vunpack.c.l.b16 %v1587
      %v1620 = vunpack.c.l.b16 %v1588
      %v1621 = vunpack.c.l.b16 %v1589
      %v1622 = vunpack.c.l.b16 %v1590
      %v1623 = vunpack.c.l.b16 %v1591
      %v1624 = vunpack.c.l.b16 %v1592
      %v1625 = vunpack.c.l.b16 %v1593
      %v1626 = vpack.c.b16 %v1611, %v1610
      %v1627 = vpack.c.b16 %v1613, %v1612
      %v1628 = vpack.c.b16 %v1615, %v1614
      %v1629 = vpack.c.b16 %v1617, %v1616
      %v1630 = vpack.c.b16 %v1619, %v1618
      %v1631 = vpack.c.b16 %v1621, %v1620
      %v1632 = vpack.c.b16 %v1623, %v1622
      %v1633 = vpack.c.b16 %v1625, %v1624
      %v1642 = vunpack.c.l.b16 %v1569
      %v1643 = vunpack.c.l.b16 %v1570
      %v1644 = vunpack.c.l.b16 %v1571
      %v1645 = vunpack.c.l.b16 %v1572
      %v1646 = vunpack.c.l.b16 %v1573
      %v1647 = vunpack.c.l.b16 %v1574
      %v1648 = vunpack.c.l.b16 %v1575
      %v1649 = vunpack.c.l.b16 %v1576
      %v1650 = vpack.c.b16 %v1643, %v1642
      %v1651 = vpack.c.b16 %v1645, %v1644
      %v1652 = vpack.c.b16 %v1647, %v1646
      %v1653 = vpack.c.b16 %v1649, %v1648
      %1654 = vrot.lane.b32.xlu0 %v1650, 120
      %v1655 = vpop.permute.xlu0 %1654
      %1656 = vrot.lane.b32.xlu0 %v1651, 120
      %v1657 = vpop.permute.xlu0 %1656
      %1658 = vrot.lane.b32.xlu0 %v1652, 120
      %v1659 = vpop.permute.xlu0 %1658
      %1660 = vrot.lane.b32.xlu0 %v1653, 120
      %v1661 = vpop.permute.xlu0 %1660
      %v1667 = vsel %vm339, %v1626, 0
      %v1670 = vsel %vm339, %v1627, 0
      %v1673 = vsel %vm339, %v1628, 0
      %v1676 = vsel %vm339, %v1629, 0
      %v1679 = vsel %vm339, %v1630, 0
      %v1682 = vsel %vm339, %v1631, 0
      %v1685 = vsel %vm339, %v1632, 0
      %v1688 = vsel %vm339, %v1633, 0
      %1690 = vmatprep.subr.bf16.mxu0 0
      %1691 = vmatpush1.bf16.msra.mxu0 %v1655
      %1692 = vmatprep.subr.bf16.mxu0 0
      %1693 = vmatpush1.bf16.msra.mxu0 %v1657
      %1694 = vmatprep.subr.bf16.mxu0 0
      %1695 = vmatpush1.bf16.msra.mxu0 %v1659
      %1696 = vmatprep.subr.bf16.mxu0 0
      %1697 = vmatpush1.bf16.msra.mxu0 %v1661
      %1698 = vmatprep.subr.bf16.mxu0 0
      %1699 = vmatpush1.bf16.msra.mxu0 0
      %1700 = vmatprep.subr.bf16.mxu0 0
      %1701 = vmatpush1.bf16.msra.mxu0 0
      %1702 = vmatprep.subr.bf16.mxu0 0
      %1703 = vmatpush1.bf16.msra.mxu0 0
      %1704 = vmatprep.subr.bf16.mxu0 0
      %1705 = vmatpush1.bf16.msra.mxu0 0
      %1706 = vmatprep.subr.bf16.mxu0 0
      %1707 = vmatpush1.bf16.msra.mxu0 0
      %1708 = vmatprep.subr.bf16.mxu0 0
      %1709 = vmatpush1.bf16.msra.mxu0 0
      %1710 = vmatprep.subr.bf16.mxu0 0
      %1711 = vmatpush1.bf16.msra.mxu0 0
      %1712 = vmatprep.subr.bf16.mxu0 0
      %1713 = vmatpush1.bf16.msra.mxu0 0
      %1714 = vmatprep.subr.bf16.mxu0 0
      %1715 = vmatpush1.bf16.msra.mxu0 0
      %1716 = vmatprep.subr.bf16.mxu0 0
      %1717 = vmatpush1.bf16.msra.mxu0 0
      %1718 = vmatprep.subr.bf16.mxu0 0
      %1719 = vmatpush1.bf16.msra.mxu0 0
      %1720 = vmatprep.subr.bf16.mxu0 0
      %1721 = vmatpush1.bf16.msra.mxu0 0
      %1722 = vmatprep.mubr.bf16.mxu0 0
      %1723 = vmatmul.mubr.bf16.gmra.mrb[0].mxu0 %v1667
      %v1724 = vpop.f32.mrb[0].mxu0
      %v1725 = vadd.f32 0.0, %v1724
      %v1726 = vpop.f32.mrb[0].mxu0
      %v1727 = vpop.f32.mrb[0].mxu0
      %v1728 = vadd.f32 0.0, %v1727
      %v1729 = vpop.f32.mrb[0].mxu0
      %1730 = vmatprep.mubr.bf16.mxu0 0
      %1731 = vmatmul.mubr.bf16.gmra.mrb[0].mxu0 %v1670
      %v1732 = vpop.f32.mrb[0].mxu0
      %v1733 = vadd.f32 0.0, %v1732
      %v1734 = vpop.f32.mrb[0].mxu0
      %v1735 = vpop.f32.mrb[0].mxu0
      %v1736 = vadd.f32 0.0, %v1735
      %v1737 = vpop.f32.mrb[0].mxu0
      %1738 = vmatprep.mubr.bf16.mxu0 0
      %1739 = vmatmul.mubr.bf16.gmra.mrb[0].mxu0 %v1673
      %v1740 = vpop.f32.mrb[0].mxu0
      %v1741 = vadd.f32 0.0, %v1740
      %v1742 = vpop.f32.mrb[0].mxu0
      %v1743 = vpop.f32.mrb[0].mxu0
      %v1744 = vadd.f32 0.0, %v1743
      %v1745 = vpop.f32.mrb[0].mxu0
      %1746 = vmatprep.mubr.bf16.mxu0 0
      %1747 = vmatmul.mubr.bf16.gmra.mrb[0].mxu0 %v1676
      %v1748 = vpop.f32.mrb[0].mxu0
      %v1749 = vadd.f32 0.0, %v1748
      %v1750 = vpop.f32.mrb[0].mxu0
      %v1751 = vpop.f32.mrb[0].mxu0
      %v1752 = vadd.f32 0.0, %v1751
      %v1753 = vpop.f32.mrb[0].mxu0
      %1754 = vmatprep.mubr.bf16.mxu0 0
      %1755 = vmatmul.mubr.bf16.gmra.mrb[0].mxu0 %v1679
      %v1756 = vpop.f32.mrb[0].mxu0
      %v1757 = vadd.f32 0.0, %v1756
      %v1758 = vpop.f32.mrb[0].mxu0
      %v1759 = vpop.f32.mrb[0].mxu0
      %v1760 = vadd.f32 0.0, %v1759
      %v1761 = vpop.f32.mrb[0].mxu0
      %1762 = vmatprep.mubr.bf16.mxu0 0
      %1763 = vmatmul.mubr.bf16.gmra.mrb[0].mxu0 %v1682
      %v1764 = vpop.f32.mrb[0].mxu0
      %v1765 = vadd.f32 0.0, %v1764
      %v1766 = vpop.f32.mrb[0].mxu0
      %v1767 = vpop.f32.mrb[0].mxu0
      %v1768 = vadd.f32 0.0, %v1767
      %v1769 = vpop.f32.mrb[0].mxu0
      %1770 = vmatprep.mubr.bf16.mxu0 0
      %1771 = vmatmul.mubr.bf16.gmra.mrb[0].mxu0 %v1685
      %v1772 = vpop.f32.mrb[0].mxu0
      %v1773 = vadd.f32 0.0, %v1772
      %v1774 = vpop.f32.mrb[0].mxu0
      %v1775 = vpop.f32.mrb[0].mxu0
      %v1776 = vadd.f32 0.0, %v1775
      %v1777 = vpop.f32.mrb[0].mxu0
      %1778 = vmatprep.mubr.bf16.mxu0 0
      %1779 = vmatmul.mubr.bf16.gmra.mrb[0].mxu0 %v1688
      %v1780 = vpop.f32.mrb[0].mxu0
      %v1781 = vadd.f32 0.0, %v1780
      %v1782 = vpop.f32.mrb[0].mxu0
      %v1783 = vpop.f32.mrb[0].mxu0
      %v1784 = vadd.f32 0.0, %v1783
      %v1785 = vpop.f32.mrb[0].mxu0
      %1786 = vdwg.mxu0
      %v1787 = vadd.f32 %v1550, %v1725
      %v1788 = vadd.f32 %v1551, %v1728
      %v1789 = vadd.f32 %v1552, %v1733
      %v1790 = vadd.f32 %v1553, %v1736
      %v1791 = vadd.f32 %v1554, %v1741
      %v1792 = vadd.f32 %v1555, %v1744
      %v1793 = vadd.f32 %v1556, %v1749
      %v1794 = vadd.f32 %v1557, %v1752
      %v1795 = vadd.f32 %v1558, %v1757
      %v1796 = vadd.f32 %v1559, %v1760
      %v1797 = vadd.f32 %v1560, %v1765
      %v1798 = vadd.f32 %v1561, %v1768
      %v1799 = vadd.f32 %v1562, %v1773
      %v1800 = vadd.f32 %v1563, %v1776
      %v1801 = vadd.f32 %v1564, %v1781
      %v1802 = vadd.f32 %v1565, %v1784
      %s1803 = scalar_lea.vmem %s1, 448
      %v1804 = vld [vmem:[%s1803] sm:$0xf]
      %v1805 = vld [vmem:[%s1803 + $0x4] sm:$0xf]
      %v1806 = vld [vmem:[%s1803 + $0x8] sm:$0xf]
      %v1807 = vld [vmem:[%s1803 + $0xc] sm:$0xf]
      %v1808 = vld [vmem:[%s1803 + $0x10] sm:$0xf]
      %v1809 = vld [vmem:[%s1803 + $0x14] sm:$0xf]
      %v1810 = vld [vmem:[%s1803 + $0x18] sm:$0xf]
      %v1811 = vld [vmem:[%s1803 + $0x1c] sm:$0xf]
      %v1812 = vld [vmem:[%s1803 + $0x20] sm:$0xf]
      %v1813 = vld [vmem:[%s1803 + $0x24] sm:$0xf]
      %v1814 = vld [vmem:[%s1803 + $0x28] sm:$0xf]
      %v1815 = vld [vmem:[%s1803 + $0x2c] sm:$0xf]
      %v1816 = vld [vmem:[%s1803 + $0x30] sm:$0xf]
      %v1817 = vld [vmem:[%s1803 + $0x34] sm:$0xf]
      %v1818 = vld [vmem:[%s1803 + $0x38] sm:$0xf]
      %v1819 = vld [vmem:[%s1803 + $0x3c] sm:$0xf]
      %v1836 = vunpack.c.l.b16 %v1804
      %v1837 = vunpack.c.l.b16 %v1805
      %v1838 = vunpack.c.l.b16 %v1806
      %v1839 = vunpack.c.l.b16 %v1807
      %v1840 = vunpack.c.l.b16 %v1808
      %v1841 = vunpack.c.l.b16 %v1809
      %v1842 = vunpack.c.l.b16 %v1810
      %v1843 = vunpack.c.l.b16 %v1811
      %v1844 = vunpack.c.l.b16 %v1812
      %v1845 = vunpack.c.l.b16 %v1813
      %v1846 = vunpack.c.l.b16 %v1814
      %v1847 = vunpack.c.l.b16 %v1815
      %v1848 = vunpack.c.l.b16 %v1816
      %v1849 = vunpack.c.l.b16 %v1817
      %v1850 = vunpack.c.l.b16 %v1818
      %v1851 = vunpack.c.l.b16 %v1819
      %v1852 = vpack.c.b16 %v1837, %v1836
      %v1853 = vpack.c.b16 %v1839, %v1838
      %v1854 = vpack.c.b16 %v1841, %v1840
      %v1855 = vpack.c.b16 %v1843, %v1842
      %v1856 = vpack.c.b16 %v1845, %v1844
      %v1857 = vpack.c.b16 %v1847, %v1846
      %v1858 = vpack.c.b16 %v1849, %v1848
      %v1859 = vpack.c.b16 %v1851, %v1850
      %1860 = vrot.lane.b32.xlu0 %v323, 119
      %v1861 = vpop.permute.xlu0 %1860
      %1862 = vrot.lane.b32.xlu0 %v324, 119
      %v1863 = vpop.permute.xlu0 %1862
      %1864 = vrot.lane.b32.xlu0 %v325, 119
      %v1865 = vpop.permute.xlu0 %1864
      %1866 = vrot.lane.b32.xlu0 %v326, 119
      %v1867 = vpop.permute.xlu0 %1866
      %v1873 = vsel %vm339, %v1852, 0
      %v1876 = vsel %vm339, %v1853, 0
      %v1879 = vsel %vm339, %v1854, 0
      %v1882 = vsel %vm339, %v1855, 0
      %v1885 = vsel %vm339, %v1856, 0
      %v1888 = vsel %vm339, %v1857, 0
      %v1891 = vsel %vm339, %v1858, 0
      %v1894 = vsel %vm339, %v1859, 0
      %1896 = vmatprep.subr.bf16.mxu0 0
      %1897 = vmatpush1.bf16.msra.mxu0 %v1861
      %1898 = vmatprep.subr.bf16.mxu0 0
      %1899 = vmatpush1.bf16.msra.mxu0 %v1863
      %1900 = vmatprep.subr.bf16.mxu0 0
      %1901 = vmatpush1.bf16.msra.mxu0 %v1865
      %1902 = vmatprep.subr.bf16.mxu0 0
      %1903 = vmatpush1.bf16.msra.mxu0 %v1867
      %1904 = vmatprep.subr.bf16.mxu0 0
      %1905 = vmatpush1.bf16.msra.mxu0 0
      %1906 = vmatprep.subr.bf16.mxu0 0
      %1907 = vmatpush1.bf16.msra.mxu0 0
      %1908 = vmatprep.subr.bf16.mxu0 0
      %1909 = vmatpush1.bf16.msra.mxu0 0
      %1910 = vmatprep.subr.bf16.mxu0 0
      %1911 = vmatpush1.bf16.msra.mxu0 0
      %1912 = vmatprep.subr.bf16.mxu0 0
      %1913 = vmatpush1.bf16.msra.mxu0 0
      %1914 = vmatprep.subr.bf16.mxu0 0
      %1915 = vmatpush1.bf16.msra.mxu0 0
      %1916 = vmatprep.subr.bf16.mxu0 0
      %1917 = vmatpush1.bf16.msra.mxu0 0
      %1918 = vmatprep.subr.bf16.mxu0 0
      %1919 = vmatpush1.bf16.msra.mxu0 0
      %1920 = vmatprep.subr.bf16.mxu0 0
      %1921 = vmatpush1.bf16.msra.mxu0 0
      %1922 = vmatprep.subr.bf16.mxu0 0
      %1923 = vmatpush1.bf16.msra.mxu0 0
      %1924 = vmatprep.subr.bf16.mxu0 0
      %1925 = vmatpush1.bf16.msra.mxu0 0
      %1926 = vmatprep.subr.bf16.mxu0 0
      %1927 = vmatpush1.bf16.msra.mxu0 0
      %1928 = vmatprep.mubr.bf16.mxu0 0
      %1929 = vmatmul.mubr.bf16.gmra.mrb[0].mxu0 %v1873
      %v1930 = vpop.f32.mrb[0].mxu0
      %v1931 = vadd.f32 0.0, %v1930
      %v1932 = vpop.f32.mrb[0].mxu0
      %v1933 = vpop.f32.mrb[0].mxu0
      %v1934 = vadd.f32 0.0, %v1933
      %v1935 = vpop.f32.mrb[0].mxu0
      %1936 = vmatprep.mubr.bf16.mxu0 0
      %1937 = vmatmul.mubr.bf16.gmra.mrb[0].mxu0 %v1876
      %v1938 = vpop.f32.mrb[0].mxu0
      %v1939 = vadd.f32 0.0, %v1938
      %v1940 = vpop.f32.mrb[0].mxu0
      %v1941 = vpop.f32.mrb[0].mxu0
      %v1942 = vadd.f32 0.0, %v1941
      %v1943 = vpop.f32.mrb[0].mxu0
      %1944 = vmatprep.mubr.bf16.mxu0 0
      %1945 = vmatmul.mubr.bf16.gmra.mrb[0].mxu0 %v1879
      %v1946 = vpop.f32.mrb[0].mxu0
      %v1947 = vadd.f32 0.0, %v1946
      %v1948 = vpop.f32.mrb[0].mxu0
      %v1949 = vpop.f32.mrb[0].mxu0
      %v1950 = vadd.f32 0.0, %v1949
      %v1951 = vpop.f32.mrb[0].mxu0
      %1952 = vmatprep.mubr.bf16.mxu0 0
      %1953 = vmatmul.mubr.bf16.gmra.mrb[0].mxu0 %v1882
      %v1954 = vpop.f32.mrb[0].mxu0
      %v1955 = vadd.f32 0.0, %v1954
      %v1956 = vpop.f32.mrb[0].mxu0
      %v1957 = vpop.f32.mrb[0].mxu0
      %v1958 = vadd.f32 0.0, %v1957
      %v1959 = vpop.f32.mrb[0].mxu0
      %1960 = vmatprep.mubr.bf16.mxu0 0
      %1961 = vmatmul.mubr.bf16.gmra.mrb[0].mxu0 %v1885
      %v1962 = vpop.f32.mrb[0].mxu0
      %v1963 = vadd.f32 0.0, %v1962
      %v1964 = vpop.f32.mrb[0].mxu0
      %v1965 = vpop.f32.mrb[0].mxu0
      %v1966 = vadd.f32 0.0, %v1965
      %v1967 = vpop.f32.mrb[0].mxu0
      %1968 = vmatprep.mubr.bf16.mxu0 0
      %1969 = vmatmul.mubr.bf16.gmra.mrb[0].mxu0 %v1888
      %v1970 = vpop.f32.mrb[0].mxu0
      %v1971 = vadd.f32 0.0, %v1970
      %v1972 = vpop.f32.mrb[0].mxu0
      %v1973 = vpop.f32.mrb[0].mxu0
      %v1974 = vadd.f32 0.0, %v1973
      %v1975 = vpop.f32.mrb[0].mxu0
      %1976 = vmatprep.mubr.bf16.mxu0 0
      %1977 = vmatmul.mubr.bf16.gmra.mrb[0].mxu0 %v1891
      %v1978 = vpop.f32.mrb[0].mxu0
      %v1979 = vadd.f32 0.0, %v1978
      %v1980 = vpop.f32.mrb[0].mxu0
      %v1981 = vpop.f32.mrb[0].mxu0
      %v1982 = vadd.f32 0.0, %v1981
      %v1983 = vpop.f32.mrb[0].mxu0
      %1984 = vmatprep.mubr.bf16.mxu0 0
      %1985 = vmatmul.mubr.bf16.gmra.mrb[0].mxu0 %v1894
      %v1986 = vpop.f32.mrb[0].mxu0
      %v1987 = vadd.f32 0.0, %v1986
      %v1988 = vpop.f32.mrb[0].mxu0
      %v1989 = vpop.f32.mrb[0].mxu0
      %v1990 = vadd.f32 0.0, %v1989
      %v1991 = vpop.f32.mrb[0].mxu0
      %1992 = vdwg.mxu0
      %v1993 = vadd.f32 %v1787, %v1931
      %v1994 = vadd.f32 %v1788, %v1934
      %v1995 = vadd.f32 %v1789, %v1939
      %v1996 = vadd.f32 %v1790, %v1942
      %v1997 = vadd.f32 %v1791, %v1947
      %v1998 = vadd.f32 %v1792, %v1950
      %v1999 = vadd.f32 %v1793, %v1955
      %v2000 = vadd.f32 %v1794, %v1958
      %v2001 = vadd.f32 %v1795, %v1963
      %v2002 = vadd.f32 %v1796, %v1966
      %v2003 = vadd.f32 %v1797, %v1971
      %v2004 = vadd.f32 %v1798, %v1974
      %v2005 = vadd.f32 %v1799, %v1979
      %v2006 = vadd.f32 %v1800, %v1982
      %v2007 = vadd.f32 %v1801, %v1987
      %v2008 = vadd.f32 %v1802, %v1990
      %2009 = vrot.lane.b32.xlu0 %v647, 10
      %v2010 = vpop.permute.xlu0 %2009
      %vm2011 = vcmp.ne.s16.totalorder %v2010, 0
      %v2012 = vsel %vm2011, %v217, 0
      %v2013 = vsel %vm2011, %v218, 0
      %v2014 = vsel %vm2011, %v219, 0
      %v2015 = vsel %vm2011, %v220, 0
      %v2016 = vsel %vm2011, %v221, 0
      %v2017 = vsel %vm2011, %v222, 0
      %v2018 = vsel %vm2011, %v223, 0
      %v2019 = vsel %vm2011, %v224, 0
      %s2020 = scalar_lea.vmem %s1, 512
      %v2021 = vld [vmem:[%s2020] sm:$0xf]
      %v2022 = vld [vmem:[%s2020 + $0x4] sm:$0xf]
      %v2023 = vld [vmem:[%s2020 + $0x8] sm:$0xf]
      %v2024 = vld [vmem:[%s2020 + $0xc] sm:$0xf]
      %v2025 = vld [vmem:[%s2020 + $0x10] sm:$0xf]
      %v2026 = vld [vmem:[%s2020 + $0x14] sm:$0xf]
      %v2027 = vld [vmem:[%s2020 + $0x18] sm:$0xf]
      %v2028 = vld [vmem:[%s2020 + $0x1c] sm:$0xf]
      %v2029 = vld [vmem:[%s2020 + $0x20] sm:$0xf]
      %v2030 = vld [vmem:[%s2020 + $0x24] sm:$0xf]
      %v2031 = vld [vmem:[%s2020 + $0x28] sm:$0xf]
      %v2032 = vld [vmem:[%s2020 + $0x2c] sm:$0xf]
      %v2033 = vld [vmem:[%s2020 + $0x30] sm:$0xf]
      %v2034 = vld [vmem:[%s2020 + $0x34] sm:$0xf]
      %v2035 = vld [vmem:[%s2020 + $0x38] sm:$0xf]
      %v2036 = vld [vmem:[%s2020 + $0x3c] sm:$0xf]
      %v2053 = vunpack.c.l.b16 %v2021
      %v2054 = vunpack.c.l.b16 %v2022
      %v2055 = vunpack.c.l.b16 %v2023
      %v2056 = vunpack.c.l.b16 %v2024
      %v2057 = vunpack.c.l.b16 %v2025
      %v2058 = vunpack.c.l.b16 %v2026
      %v2059 = vunpack.c.l.b16 %v2027
      %v2060 = vunpack.c.l.b16 %v2028
      %v2061 = vunpack.c.l.b16 %v2029
      %v2062 = vunpack.c.l.b16 %v2030
      %v2063 = vunpack.c.l.b16 %v2031
      %v2064 = vunpack.c.l.b16 %v2032
      %v2065 = vunpack.c.l.b16 %v2033
      %v2066 = vunpack.c.l.b16 %v2034
      %v2067 = vunpack.c.l.b16 %v2035
      %v2068 = vunpack.c.l.b16 %v2036
      %v2069 = vpack.c.b16 %v2054, %v2053
      %v2070 = vpack.c.b16 %v2056, %v2055
      %v2071 = vpack.c.b16 %v2058, %v2057
      %v2072 = vpack.c.b16 %v2060, %v2059
      %v2073 = vpack.c.b16 %v2062, %v2061
      %v2074 = vpack.c.b16 %v2064, %v2063
      %v2075 = vpack.c.b16 %v2066, %v2065
      %v2076 = vpack.c.b16 %v2068, %v2067
      %v2085 = vunpack.c.l.b16 %v2012
      %v2086 = vunpack.c.l.b16 %v2013
      %v2087 = vunpack.c.l.b16 %v2014
      %v2088 = vunpack.c.l.b16 %v2015
      %v2089 = vunpack.c.l.b16 %v2016
      %v2090 = vunpack.c.l.b16 %v2017
      %v2091 = vunpack.c.l.b16 %v2018
      %v2092 = vunpack.c.l.b16 %v2019
      %v2093 = vpack.c.b16 %v2086, %v2085
      %v2094 = vpack.c.b16 %v2088, %v2087
      %v2095 = vpack.c.b16 %v2090, %v2089
      %v2096 = vpack.c.b16 %v2092, %v2091
      %2097 = vrot.lane.b32.xlu0 %v2093, 118
      %v2098 = vpop.permute.xlu0 %2097
      %2099 = vrot.lane.b32.xlu0 %v2094, 118
      %v2100 = vpop.permute.xlu0 %2099
      %2101 = vrot.lane.b32.xlu0 %v2095, 118
      %v2102 = vpop.permute.xlu0 %2101
      %2103 = vrot.lane.b32.xlu0 %v2096, 118
      %v2104 = vpop.permute.xlu0 %2103
      %v2110 = vsel %vm339, %v2069, 0
      %v2113 = vsel %vm339, %v2070, 0
      %v2116 = vsel %vm339, %v2071, 0
      %v2119 = vsel %vm339, %v2072, 0
      %v2122 = vsel %vm339, %v2073, 0
      %v2125 = vsel %vm339, %v2074, 0
      %v2128 = vsel %vm339, %v2075, 0
      %v2131 = vsel %vm339, %v2076, 0
      %2133 = vmatprep.subr.bf16.mxu0 0
      %2134 = vmatpush1.bf16.msra.mxu0 %v2098
      %2135 = vmatprep.subr.bf16.mxu0 0
      %2136 = vmatpush1.bf16.msra.mxu0 %v2100
      %2137 = vmatprep.subr.bf16.mxu0 0
      %2138 = vmatpush1.bf16.msra.mxu0 %v2102
      %2139 = vmatprep.subr.bf16.mxu0 0
      %2140 = vmatpush1.bf16.msra.mxu0 %v2104
      %2141 = vmatprep.subr.bf16.mxu0 0
      %2142 = vmatpush1.bf16.msra.mxu0 0
      %2143 = vmatprep.subr.bf16.mxu0 0
      %2144 = vmatpush1.bf16.msra.mxu0 0
      %2145 = vmatprep.subr.bf16.mxu0 0
      %2146 = vmatpush1.bf16.msra.mxu0 0
      %2147 = vmatprep.subr.bf16.mxu0 0
      %2148 = vmatpush1.bf16.msra.mxu0 0
      %2149 = vmatprep.subr.bf16.mxu0 0
      %2150 = vmatpush1.bf16.msra.mxu0 0
      %2151 = vmatprep.subr.bf16.mxu0 0
      %2152 = vmatpush1.bf16.msra.mxu0 0
      %2153 = vmatprep.subr.bf16.mxu0 0
      %2154 = vmatpush1.bf16.msra.mxu0 0
      %2155 = vmatprep.subr.bf16.mxu0 0
      %2156 = vmatpush1.bf16.msra.mxu0 0
      %2157 = vmatprep.subr.bf16.mxu0 0
      %2158 = vmatpush1.bf16.msra.mxu0 0
      %2159 = vmatprep.subr.bf16.mxu0 0
      %2160 = vmatpush1.bf16.msra.mxu0 0
      %2161 = vmatprep.subr.bf16.mxu0 0
      %2162 = vmatpush1.bf16.msra.mxu0 0
      %2163 = vmatprep.subr.bf16.mxu0 0
      %2164 = vmatpush1.bf16.msra.mxu0 0
      %2165 = vmatprep.mubr.bf16.mxu0 0
      %2166 = vmatmul.mubr.bf16.gmra.mrb[0].mxu0 %v2110
      %v2167 = vpop.f32.mrb[0].mxu0
      %v2168 = vadd.f32 0.0, %v2167
      %v2169 = vpop.f32.mrb[0].mxu0
      %v2170 = vpop.f32.mrb[0].mxu0
      %v2171 = vadd.f32 0.0, %v2170
      %v2172 = vpop.f32.mrb[0].mxu0
      %2173 = vmatprep.mubr.bf16.mxu0 0
      %2174 = vmatmul.mubr.bf16.gmra.mrb[0].mxu0 %v2113
      %v2175 = vpop.f32.mrb[0].mxu0
      %v2176 = vadd.f32 0.0, %v2175
      %v2177 = vpop.f32.mrb[0].mxu0
      %v2178 = vpop.f32.mrb[0].mxu0
      %v2179 = vadd.f32 0.0, %v2178
      %v2180 = vpop.f32.mrb[0].mxu0
      %2181 = vmatprep.mubr.bf16.mxu0 0
      %2182 = vmatmul.mubr.bf16.gmra.mrb[0].mxu0 %v2116
      %v2183 = vpop.f32.mrb[0].mxu0
      %v2184 = vadd.f32 0.0, %v2183
      %v2185 = vpop.f32.mrb[0].mxu0
      %v2186 = vpop.f32.mrb[0].mxu0
      %v2187 = vadd.f32 0.0, %v2186
      %v2188 = vpop.f32.mrb[0].mxu0
      %2189 = vmatprep.mubr.bf16.mxu0 0
      %2190 = vmatmul.mubr.bf16.gmra.mrb[0].mxu0 %v2119
      %v2191 = vpop.f32.mrb[0].mxu0
      %v2192 = vadd.f32 0.0, %v2191
      %v2193 = vpop.f32.mrb[0].mxu0
      %v2194 = vpop.f32.mrb[0].mxu0
      %v2195 = vadd.f32 0.0, %v2194
      %v2196 = vpop.f32.mrb[0].mxu0
      %2197 = vmatprep.mubr.bf16.mxu0 0
      %2198 = vmatmul.mubr.bf16.gmra.mrb[0].mxu0 %v2122
      %v2199 = vpop.f32.mrb[0].mxu0
      %v2200 = vadd.f32 0.0, %v2199
      %v2201 = vpop.f32.mrb[0].mxu0
      %v2202 = vpop.f32.mrb[0].mxu0
      %v2203 = vadd.f32 0.0, %v2202
      %v2204 = vpop.f32.mrb[0].mxu0
      %2205 = vmatprep.mubr.bf16.mxu0 0
      %2206 = vmatmul.mubr.bf16.gmra.mrb[0].mxu0 %v2125
      %v2207 = vpop.f32.mrb[0].mxu0
      %v2208 = vadd.f32 0.0, %v2207
      %v2209 = vpop.f32.mrb[0].mxu0
      %v2210 = vpop.f32.mrb[0].mxu0
      %v2211 = vadd.f32 0.0, %v2210
      %v2212 = vpop.f32.mrb[0].mxu0
      %2213 = vmatprep.mubr.bf16.mxu0 0
      %2214 = vmatmul.mubr.bf16.gmra.mrb[0].mxu0 %v2128
      %v2215 = vpop.f32.mrb[0].mxu0
      %v2216 = vadd.f32 0.0, %v2215
      %v2217 = vpop.f32.mrb[0].mxu0
      %v2218 = vpop.f32.mrb[0].mxu0
      %v2219 = vadd.f32 0.0, %v2218
      %v2220 = vpop.f32.mrb[0].mxu0
      %2221 = vmatprep.mubr.bf16.mxu0 0
      %2222 = vmatmul.mubr.bf16.gmra.mrb[0].mxu0 %v2131
      %v2223 = vpop.f32.mrb[0].mxu0
      %v2224 = vadd.f32 0.0, %v2223
      %v2225 = vpop.f32.mrb[0].mxu0
      %v2226 = vpop.f32.mrb[0].mxu0
      %v2227 = vadd.f32 0.0, %v2226
      %v2228 = vpop.f32.mrb[0].mxu0
      %2229 = vdwg.mxu0
      %v2230 = vadd.f32 %v1993, %v2168
      %v2231 = vadd.f32 %v1994, %v2171
      %v2232 = vadd.f32 %v1995, %v2176
      %v2233 = vadd.f32 %v1996, %v2179
      %v2234 = vadd.f32 %v1997, %v2184
      %v2235 = vadd.f32 %v1998, %v2187
      %v2236 = vadd.f32 %v1999, %v2192
      %v2237 = vadd.f32 %v2000, %v2195
      %v2238 = vadd.f32 %v2001, %v2200
      %v2239 = vadd.f32 %v2002, %v2203
      %v2240 = vadd.f32 %v2003, %v2208
      %v2241 = vadd.f32 %v2004, %v2211
      %v2242 = vadd.f32 %v2005, %v2216
      %v2243 = vadd.f32 %v2006, %v2219
      %v2244 = vadd.f32 %v2007, %v2224
      %v2245 = vadd.f32 %v2008, %v2227
      %vm2246 = vcmask 130048
      %v2247 = vsel %vm2246, %v2230, 0.0
      %2248 = vadd.xlane.f32.xlu0 %v2247
      %v2249 = vpop.xlane.xlu0 %2248
      %v2250 = vsel %vm2246, %v2231, 0.0
      %2251 = vadd.xlane.f32.xlu0 %v2250
      %v2252 = vpop.xlane.xlu0 %2251
      %v2253 = vsel %vm2246, %v2232, 0.0
      %2254 = vadd.xlane.f32.xlu0 %v2253
      %v2255 = vpop.xlane.xlu0 %2254
      %v2256 = vsel %vm2246, %v2233, 0.0
      %2257 = vadd.xlane.f32.xlu0 %v2256
      %v2258 = vpop.xlane.xlu0 %2257
      %v2259 = vsel %vm2246, %v2234, 0.0
      %2260 = vadd.xlane.f32.xlu0 %v2259
      %v2261 = vpop.xlane.xlu0 %2260
      %v2262 = vsel %vm2246, %v2235, 0.0
      %2263 = vadd.xlane.f32.xlu0 %v2262
      %v2264 = vpop.xlane.xlu0 %2263
      %v2265 = vsel %vm2246, %v2236, 0.0
      %2266 = vadd.xlane.f32.xlu0 %v2265
      %v2267 = vpop.xlane.xlu0 %2266
      %v2268 = vsel %vm2246, %v2237, 0.0
      %2269 = vadd.xlane.f32.xlu0 %v2268
      %v2270 = vpop.xlane.xlu0 %2269
      %v2271 = vsel %vm2246, %v2238, 0.0
      %2272 = vadd.xlane.f32.xlu0 %v2271
      %v2273 = vpop.xlane.xlu0 %2272
      %v2274 = vsel %vm2246, %v2239, 0.0
      %2275 = vadd.xlane.f32.xlu0 %v2274
      %v2276 = vpop.xlane.xlu0 %2275
      %v2277 = vsel %vm2246, %v2240, 0.0
      %2278 = vadd.xlane.f32.xlu0 %v2277
      %v2279 = vpop.xlane.xlu0 %2278
      %v2280 = vsel %vm2246, %v2241, 0.0
      %2281 = vadd.xlane.f32.xlu0 %v2280
      %v2282 = vpop.xlane.xlu0 %2281
      %v2283 = vsel %vm2246, %v2242, 0.0
      %2284 = vadd.xlane.f32.xlu0 %v2283
      %v2285 = vpop.xlane.xlu0 %2284
      %v2286 = vsel %vm2246, %v2243, 0.0
      %2287 = vadd.xlane.f32.xlu0 %v2286
      %v2288 = vpop.xlane.xlu0 %2287
      %v2289 = vsel %vm2246, %v2244, 0.0
      %2290 = vadd.xlane.f32.xlu0 %v2289
      %v2291 = vpop.xlane.xlu0 %2290
      %v2292 = vsel %vm2246, %v2245, 0.0
      %2293 = vadd.xlane.f32.xlu0 %v2292
      %v2294 = vpop.xlane.xlu0 %2293
      %v2295 = vadd.f32 %v2249, %v2261
      %v2296 = vadd.f32 %v2252, %v2264
      %v2297 = vadd.f32 %v2255, %v2267
      %v2298 = vadd.f32 %v2258, %v2270
      %v2299 = vadd.f32 %v2295, %v2273
      %v2300 = vadd.f32 %v2296, %v2276
      %v2301 = vadd.f32 %v2297, %v2279
      %v2302 = vadd.f32 %v2298, %v2282
      %v2303 = vadd.f32 %v2299, %v2285
      %v2304 = vadd.f32 %v2300, %v2288
      %v2305 = vadd.f32 %v2301, %v2291
      %v2306 = vadd.f32 %v2302, %v2294
      %v2307 = vmul.f32 %v2303, 0.015625
      %v2308 = vmul.f32 %v2304, 0.015625
      %v2309 = vmul.f32 %v2305, 0.015625
      %v2310 = vmul.f32 %v2306, 0.015625
      %2312 = vset.pattern.permute.xlu0 0
      %2313 = vperm.xlu0 %2312, %v2307
      %v2314 = vpop.permute.xlu0 %2313
      %2317 = vset.pattern.permute.xlu0 0
      %2318 = vperm.xlu0 %2317, %v2308
      %v2319 = vpop.permute.xlu0 %2318
      %2322 = vset.pattern.permute.xlu0 0
      %2323 = vperm.xlu0 %2322, %v2309
      %v2324 = vpop.permute.xlu0 %2323
      %2327 = vset.pattern.permute.xlu0 0
      %2328 = vperm.xlu0 %2327, %v2310
      %v2329 = vpop.permute.xlu0 %2328
      %v2331 = vsub.f32 %v2230, %v2314
      %v2332 = vsub.f32 %v2231, %v2319
      %v2333 = vsub.f32 %v2232, %v2324
      %v2334 = vsub.f32 %v2233, %v2329
      %v2335 = vsub.f32 %v2234, %v2314
      %v2336 = vsub.f32 %v2235, %v2319
      %v2337 = vsub.f32 %v2236, %v2324
      %v2338 = vsub.f32 %v2237, %v2329
      %v2339 = vsub.f32 %v2238, %v2314
      %v2340 = vsub.f32 %v2239, %v2319
      %v2341 = vsub.f32 %v2240, %v2324
      %v2342 = vsub.f32 %v2241, %v2329
      %v2343 = vsub.f32 %v2242, %v2314
      %v2344 = vsub.f32 %v2243, %v2319
      %v2345 = vsub.f32 %v2244, %v2324
      %v2346 = vsub.f32 %v2245, %v2329
      %v2347 = vmul.f32 %v2331, %v2331
      %v2348 = vmul.f32 %v2332, %v2332
      %v2349 = vmul.f32 %v2333, %v2333
      %v2350 = vmul.f32 %v2334, %v2334
      %v2351 = vmul.f32 %v2335, %v2335
      %v2352 = vmul.f32 %v2336, %v2336
      %v2353 = vmul.f32 %v2337, %v2337
      %v2354 = vmul.f32 %v2338, %v2338
      %v2355 = vmul.f32 %v2339, %v2339
      %v2356 = vmul.f32 %v2340, %v2340
      %v2357 = vmul.f32 %v2341, %v2341
      %v2358 = vmul.f32 %v2342, %v2342
      %v2359 = vmul.f32 %v2343, %v2343
      %v2360 = vmul.f32 %v2344, %v2344
      %v2361 = vmul.f32 %v2345, %v2345
      %v2362 = vmul.f32 %v2346, %v2346
      %v2363 = vsel %vm2246, %v2347, 0.0
      %2364 = vadd.xlane.f32.xlu0 %v2363
      %v2365 = vpop.xlane.xlu0 %2364
      %v2366 = vsel %vm2246, %v2348, 0.0
      %2367 = vadd.xlane.f32.xlu0 %v2366
      %v2368 = vpop.xlane.xlu0 %2367
      %v2369 = vsel %vm2246, %v2349, 0.0
      %2370 = vadd.xlane.f32.xlu0 %v2369
      %v2371 = vpop.xlane.xlu0 %2370
      %v2372 = vsel %vm2246, %v2350, 0.0
      %2373 = vadd.xlane.f32.xlu0 %v2372
      %v2374 = vpop.xlane.xlu0 %2373
      %v2375 = vsel %vm2246, %v2351, 0.0
      %2376 = vadd.xlane.f32.xlu0 %v2375
      %v2377 = vpop.xlane.xlu0 %2376
      %v2378 = vsel %vm2246, %v2352, 0.0
      %2379 = vadd.xlane.f32.xlu0 %v2378
      %v2380 = vpop.xlane.xlu0 %2379
      %v2381 = vsel %vm2246, %v2353, 0.0
      %2382 = vadd.xlane.f32.xlu0 %v2381
      %v2383 = vpop.xlane.xlu0 %2382
      %v2384 = vsel %vm2246, %v2354, 0.0
      %2385 = vadd.xlane.f32.xlu0 %v2384
      %v2386 = vpop.xlane.xlu0 %2385
      %v2387 = vsel %vm2246, %v2355, 0.0
      %2388 = vadd.xlane.f32.xlu0 %v2387
      %v2389 = vpop.xlane.xlu0 %2388
      %v2390 = vsel %vm2246, %v2356, 0.0
      %2391 = vadd.xlane.f32.xlu0 %v2390
      %v2392 = vpop.xlane.xlu0 %2391
      %v2393 = vsel %vm2246, %v2357, 0.0
      %2394 = vadd.xlane.f32.xlu0 %v2393
      %v2395 = vpop.xlane.xlu0 %2394
      %v2396 = vsel %vm2246, %v2358, 0.0
      %2397 = vadd.xlane.f32.xlu0 %v2396
      %v2398 = vpop.xlane.xlu0 %2397
      %v2399 = vsel %vm2246, %v2359, 0.0
      %2400 = vadd.xlane.f32.xlu0 %v2399
      %v2401 = vpop.xlane.xlu0 %2400
      %v2402 = vsel %vm2246, %v2360, 0.0
      %2403 = vadd.xlane.f32.xlu0 %v2402
      %v2404 = vpop.xlane.xlu0 %2403
      %v2405 = vsel %vm2246, %v2361, 0.0
      %2406 = vadd.xlane.f32.xlu0 %v2405
      %v2407 = vpop.xlane.xlu0 %2406
      %v2408 = vsel %vm2246, %v2362, 0.0
      %2409 = vadd.xlane.f32.xlu0 %v2408
      %v2410 = vpop.xlane.xlu0 %2409
      %v2411 = vadd.f32 %v2365, %v2377
      %v2412 = vadd.f32 %v2368, %v2380
      %v2413 = vadd.f32 %v2371, %v2383
      %v2414 = vadd.f32 %v2374, %v2386
      %v2415 = vadd.f32 %v2411, %v2389
      %v2416 = vadd.f32 %v2412, %v2392
      %v2417 = vadd.f32 %v2413, %v2395
      %v2418 = vadd.f32 %v2414, %v2398
      %v2419 = vadd.f32 %v2415, %v2401
      %v2420 = vadd.f32 %v2416, %v2404
      %v2421 = vadd.f32 %v2417, %v2407
      %v2422 = vadd.f32 %v2418, %v2410
      %v2423 = vmul.f32 %v2419, 0.015625
      %v2424 = vmul.f32 %v2420, 0.015625
      %v2425 = vmul.f32 %v2421, 0.015625
      %v2426 = vmul.f32 %v2422, 0.015625
      %v2427 = vld [vmem:[%s2] sm:$0xff]
      %v2428 = vld [vmem:[%s2 + $0x8] sm:$0xff]
      %v2429 = vld [vmem:[%s2 + $0x10] sm:$0xff]
      %v2430 = vld [vmem:[%s2 + $0x18] sm:$0xff]
      %v2431 = vld [vmem:[%s2 + $0x20] sm:$0xff]
      %v2432 = vld [vmem:[%s2 + $0x28] sm:$0xff]
      %v2433 = vld [vmem:[%s2 + $0x30] sm:$0xff]
      %v2434 = vld [vmem:[%s2 + $0x38] sm:$0xff]
      %v2435 = vld [vmem:[%s2 + $0x40] sm:$0xff]
      %v2436 = vld [vmem:[%s2 + $0x48] sm:$0xff]
      %v2437 = vld [vmem:[%s2 + $0x50] sm:$0xff]
      %v2438 = vld [vmem:[%s2 + $0x58] sm:$0xff]
      %v2439 = vld [vmem:[%s2 + $0x60] sm:$0xff]
      %v2440 = vld [vmem:[%s2 + $0x68] sm:$0xff]
      %v2441 = vld [vmem:[%s2 + $0x70] sm:$0xff]
      %v2442 = vld [vmem:[%s2 + $0x78] sm:$0xff]
      %v2443 = vadd.f32 %v2423, 1e-05
      %v2444 = vadd.f32 %v2424, 1e-05
      %v2445 = vadd.f32 %v2425, 1e-05
      %v2446 = vadd.f32 %v2426, 1e-05
      %v2447 = vrsqrt.pop %v2443
      %v2448 = vrsqrt.pop %v2444
      %v2449 = vrsqrt.pop %v2445
      %v2450 = vrsqrt.pop %v2446
      %v2451 = vmul.f32 %v2427, %v2447
      %v2452 = vmul.f32 %v2428, %v2448
      %v2453 = vmul.f32 %v2429, %v2449
      %v2454 = vmul.f32 %v2430, %v2450
      %v2455 = vmul.f32 %v2431, %v2447
      %v2456 = vmul.f32 %v2432, %v2448
      %v2457 = vmul.f32 %v2433, %v2449
      %v2458 = vmul.f32 %v2434, %v2450
      %v2459 = vmul.f32 %v2435, %v2447
      %v2460 = vmul.f32 %v2436, %v2448
      %v2461 = vmul.f32 %v2437, %v2449
      %v2462 = vmul.f32 %v2438, %v2450
      %v2463 = vmul.f32 %v2439, %v2447
      %v2464 = vmul.f32 %v2440, %v2448
      %v2465 = vmul.f32 %v2441, %v2449
      %v2466 = vmul.f32 %v2442, %v2450
      %2468 = vset.pattern.permute.xlu0 0
      %2469 = vperm.xlu0 %2468, %v2451
      %v2470 = vpop.permute.xlu0 %2469
      %2473 = vset.pattern.permute.xlu0 0
      %2474 = vperm.xlu0 %2473, %v2452
      %v2475 = vpop.permute.xlu0 %2474
      %2478 = vset.pattern.permute.xlu0 0
      %2479 = vperm.xlu0 %2478, %v2453
      %v2480 = vpop.permute.xlu0 %2479
      %2483 = vset.pattern.permute.xlu0 0
      %2484 = vperm.xlu0 %2483, %v2454
      %v2485 = vpop.permute.xlu0 %2484
      %2488 = vset.pattern.permute.xlu0 0
      %2489 = vperm.xlu0 %2488, %v2455
      %v2490 = vpop.permute.xlu0 %2489
      %2493 = vset.pattern.permute.xlu0 0
      %2494 = vperm.xlu0 %2493, %v2456
      %v2495 = vpop.permute.xlu0 %2494
      %2498 = vset.pattern.permute.xlu0 0
      %2499 = vperm.xlu0 %2498, %v2457
      %v2500 = vpop.permute.xlu0 %2499
      %2503 = vset.pattern.permute.xlu0 0
      %2504 = vperm.xlu0 %2503, %v2458
      %v2505 = vpop.permute.xlu0 %2504
      %2508 = vset.pattern.permute.xlu0 0
      %2509 = vperm.xlu0 %2508, %v2459
      %v2510 = vpop.permute.xlu0 %2509
      %2513 = vset.pattern.permute.xlu0 0
      %2514 = vperm.xlu0 %2513, %v2460
      %v2515 = vpop.permute.xlu0 %2514
      %2518 = vset.pattern.permute.xlu0 0
      %2519 = vperm.xlu0 %2518, %v2461
      %v2520 = vpop.permute.xlu0 %2519
      %2523 = vset.pattern.permute.xlu0 0
      %2524 = vperm.xlu0 %2523, %v2462
      %v2525 = vpop.permute.xlu0 %2524
      %2528 = vset.pattern.permute.xlu0 0
      %2529 = vperm.xlu0 %2528, %v2463
      %v2530 = vpop.permute.xlu0 %2529
      %2533 = vset.pattern.permute.xlu0 0
      %2534 = vperm.xlu0 %2533, %v2464
      %v2535 = vpop.permute.xlu0 %2534
      %2538 = vset.pattern.permute.xlu0 0
      %2539 = vperm.xlu0 %2538, %v2465
      %v2540 = vpop.permute.xlu0 %2539
      %2543 = vset.pattern.permute.xlu0 0
      %2544 = vperm.xlu0 %2543, %v2466
      %v2545 = vpop.permute.xlu0 %2544
      %v2547 = vmul.f32 %v2331, %v2470
      %v2548 = vmul.f32 %v2332, %v2475
      %v2549 = vmul.f32 %v2333, %v2480
      %v2550 = vmul.f32 %v2334, %v2485
      %v2551 = vmul.f32 %v2335, %v2490
      %v2552 = vmul.f32 %v2336, %v2495
      %v2553 = vmul.f32 %v2337, %v2500
      %v2554 = vmul.f32 %v2338, %v2505
      %v2555 = vmul.f32 %v2339, %v2510
      %v2556 = vmul.f32 %v2340, %v2515
      %v2557 = vmul.f32 %v2341, %v2520
      %v2558 = vmul.f32 %v2342, %v2525
      %v2559 = vmul.f32 %v2343, %v2530
      %v2560 = vmul.f32 %v2344, %v2535
      %v2561 = vmul.f32 %v2345, %v2540
      %v2562 = vmul.f32 %v2346, %v2545
      %v2563 = vld [vmem:[%s3] sm:$0xff]
      %v2564 = vld [vmem:[%s3 + $0x8] sm:$0xff]
      %v2565 = vld [vmem:[%s3 + $0x10] sm:$0xff]
      %v2566 = vld [vmem:[%s3 + $0x18] sm:$0xff]
      %v2567 = vld [vmem:[%s3 + $0x20] sm:$0xff]
      %v2568 = vld [vmem:[%s3 + $0x28] sm:$0xff]
      %v2569 = vld [vmem:[%s3 + $0x30] sm:$0xff]
      %v2570 = vld [vmem:[%s3 + $0x38] sm:$0xff]
      %v2571 = vld [vmem:[%s3 + $0x40] sm:$0xff]
      %v2572 = vld [vmem:[%s3 + $0x48] sm:$0xff]
      %v2573 = vld [vmem:[%s3 + $0x50] sm:$0xff]
      %v2574 = vld [vmem:[%s3 + $0x58] sm:$0xff]
      %v2575 = vld [vmem:[%s3 + $0x60] sm:$0xff]
      %v2576 = vld [vmem:[%s3 + $0x68] sm:$0xff]
      %v2577 = vld [vmem:[%s3 + $0x70] sm:$0xff]
      %v2578 = vld [vmem:[%s3 + $0x78] sm:$0xff]
      %2580 = vset.pattern.permute.xlu0 0
      %2581 = vperm.xlu0 %2580, %v2563
      %v2582 = vpop.permute.xlu0 %2581
      %2585 = vset.pattern.permute.xlu0 0
      %2586 = vperm.xlu0 %2585, %v2564
      %v2587 = vpop.permute.xlu0 %2586
      %2590 = vset.pattern.permute.xlu0 0
      %2591 = vperm.xlu0 %2590, %v2565
      %v2592 = vpop.permute.xlu0 %2591
      %2595 = vset.pattern.permute.xlu0 0
      %2596 = vperm.xlu0 %2595, %v2566
      %v2597 = vpop.permute.xlu0 %2596
      %2600 = vset.pattern.permute.xlu0 0
      %2601 = vperm.xlu0 %2600, %v2567
      %v2602 = vpop.permute.xlu0 %2601
      %2605 = vset.pattern.permute.xlu0 0
      %2606 = vperm.xlu0 %2605, %v2568
      %v2607 = vpop.permute.xlu0 %2606
      %2610 = vset.pattern.permute.xlu0 0
      %2611 = vperm.xlu0 %2610, %v2569
      %v2612 = vpop.permute.xlu0 %2611
      %2615 = vset.pattern.permute.xlu0 0
      %2616 = vperm.xlu0 %2615, %v2570
      %v2617 = vpop.permute.xlu0 %2616
      %2620 = vset.pattern.permute.xlu0 0
      %2621 = vperm.xlu0 %2620, %v2571
      %v2622 = vpop.permute.xlu0 %2621
      %2625 = vset.pattern.permute.xlu0 0
      %2626 = vperm.xlu0 %2625, %v2572
      %v2627 = vpop.permute.xlu0 %2626
      %2630 = vset.pattern.permute.xlu0 0
      %2631 = vperm.xlu0 %2630, %v2573
      %v2632 = vpop.permute.xlu0 %2631
      %2635 = vset.pattern.permute.xlu0 0
      %2636 = vperm.xlu0 %2635, %v2574
      %v2637 = vpop.permute.xlu0 %2636
      %2640 = vset.pattern.permute.xlu0 0
      %2641 = vperm.xlu0 %2640, %v2575
      %v2642 = vpop.permute.xlu0 %2641
      %2645 = vset.pattern.permute.xlu0 0
      %2646 = vperm.xlu0 %2645, %v2576
      %v2647 = vpop.permute.xlu0 %2646
      %2650 = vset.pattern.permute.xlu0 0
      %2651 = vperm.xlu0 %2650, %v2577
      %v2652 = vpop.permute.xlu0 %2651
      %2655 = vset.pattern.permute.xlu0 0
      %2656 = vperm.xlu0 %2655, %v2578
      %v2657 = vpop.permute.xlu0 %2656
      %v2659 = vadd.f32 %v2547, %v2582
      %v2660 = vadd.f32 %v2548, %v2587
      %v2661 = vadd.f32 %v2549, %v2592
      %v2662 = vadd.f32 %v2550, %v2597
      %v2663 = vadd.f32 %v2551, %v2602
      %v2664 = vadd.f32 %v2552, %v2607
      %v2665 = vadd.f32 %v2553, %v2612
      %v2666 = vadd.f32 %v2554, %v2617
      %v2667 = vadd.f32 %v2555, %v2622
      %v2668 = vadd.f32 %v2556, %v2627
      %v2669 = vadd.f32 %v2557, %v2632
      %v2670 = vadd.f32 %v2558, %v2637
      %v2671 = vadd.f32 %v2559, %v2642
      %v2672 = vadd.f32 %v2560, %v2647
      %v2673 = vadd.f32 %v2561, %v2652
      %v2674 = vadd.f32 %v2562, %v2657
      %v2675 = vmax.f32 %v2659, 0.0
      %v2676 = vmax.f32 %v2660, 0.0
      %v2677 = vmax.f32 %v2661, 0.0
      %v2678 = vmax.f32 %v2662, 0.0
      %v2679 = vmax.f32 %v2663, 0.0
      %v2680 = vmax.f32 %v2664, 0.0
      %v2681 = vmax.f32 %v2665, 0.0
      %v2682 = vmax.f32 %v2666, 0.0
      %v2683 = vmax.f32 %v2667, 0.0
      %v2684 = vmax.f32 %v2668, 0.0
      %v2685 = vmax.f32 %v2669, 0.0
      %v2686 = vmax.f32 %v2670, 0.0
      %v2687 = vmax.f32 %v2671, 0.0
      %v2688 = vmax.f32 %v2672, 0.0
      %v2689 = vmax.f32 %v2673, 0.0
      %v2690 = vmax.f32 %v2674, 0.0
      %v2691 = vpack.c.bf16 %v2676, %v2675
      %v2692 = vpack.c.bf16 %v2678, %v2677
      %v2693 = vpack.c.bf16 %v2680, %v2679
      %v2694 = vpack.c.bf16 %v2682, %v2681
      %v2695 = vpack.c.bf16 %v2684, %v2683
      %v2696 = vpack.c.bf16 %v2686, %v2685
      %v2697 = vpack.c.bf16 %v2688, %v2687
      %v2698 = vpack.c.bf16 %v2690, %v2689
      %v2707 = vunpack.c.l.b16 %v2691
      %v2708 = vunpack.c.h.b16 %v2691
      %v2709 = vunpack.c.l.b16 %v2692
      %v2710 = vunpack.c.h.b16 %v2692
      %v2711 = vunpack.c.l.b16 %v2693
      %v2712 = vunpack.c.h.b16 %v2693
      %v2713 = vunpack.c.l.b16 %v2694
      %v2714 = vunpack.c.h.b16 %v2694
      %v2715 = vunpack.c.l.b16 %v2695
      %v2716 = vunpack.c.h.b16 %v2695
      %v2717 = vunpack.c.l.b16 %v2696
      %v2718 = vunpack.c.h.b16 %v2696
      %v2719 = vunpack.c.l.b16 %v2697
      %v2720 = vunpack.c.h.b16 %v2697
      %v2721 = vunpack.c.l.b16 %v2698
      %v2722 = vunpack.c.h.b16 %v2698
      %v2723 = vpack.c.b16 %v2707, %v2707
      %v2724 = vpack.c.b16 %v2708, %v2708
      %v2725 = vpack.c.b16 %v2709, %v2709
      %v2726 = vpack.c.b16 %v2710, %v2710
      %v2727 = vpack.c.b16 %v2711, %v2711
      %v2728 = vpack.c.b16 %v2712, %v2712
      %v2729 = vpack.c.b16 %v2713, %v2713
      %v2730 = vpack.c.b16 %v2714, %v2714
      %v2731 = vpack.c.b16 %v2715, %v2715
      %v2732 = vpack.c.b16 %v2716, %v2716
      %v2733 = vpack.c.b16 %v2717, %v2717
      %v2734 = vpack.c.b16 %v2718, %v2718
      %v2735 = vpack.c.b16 %v2719, %v2719
      %v2736 = vpack.c.b16 %v2720, %v2720
      %v2737 = vpack.c.b16 %v2721, %v2721
      %v2738 = vpack.c.b16 %v2722, %v2722
      %vm2755 = vcmask 125952
      %2756 = vst.msk [vmem:[%s197] sm:$0xf] %vm2755, %v2723
      %2757 = vst.msk [vmem:[%s197 + $0x4] sm:$0xf] %vm2755, %v2724
      %2758 = vst.msk [vmem:[%s197 + $0x8] sm:$0xf] %vm2755, %v2725
      %2759 = vst.msk [vmem:[%s197 + $0xc] sm:$0xf] %vm2755, %v2726
      %2760 = vst.msk [vmem:[%s197 + $0x10] sm:$0xf] %vm2755, %v2727
      %2761 = vst.msk [vmem:[%s197 + $0x14] sm:$0xf] %vm2755, %v2728
      %2762 = vst.msk [vmem:[%s197 + $0x18] sm:$0xf] %vm2755, %v2729
      %2763 = vst.msk [vmem:[%s197 + $0x1c] sm:$0xf] %vm2755, %v2730
      %2764 = vst.msk [vmem:[%s197 + $0x20] sm:$0xf] %vm2755, %v2731
      %2765 = vst.msk [vmem:[%s197 + $0x24] sm:$0xf] %vm2755, %v2732
      %2766 = vst.msk [vmem:[%s197 + $0x28] sm:$0xf] %vm2755, %v2733
      %2767 = vst.msk [vmem:[%s197 + $0x2c] sm:$0xf] %vm2755, %v2734
      %2768 = vst.msk [vmem:[%s197 + $0x30] sm:$0xf] %vm2755, %v2735
      %2769 = vst.msk [vmem:[%s197 + $0x34] sm:$0xf] %vm2755, %v2736
      %2770 = vst.msk [vmem:[%s197 + $0x38] sm:$0xf] %vm2755, %v2737
      %2771 = vst.msk [vmem:[%s197 + $0x3c] sm:$0xf] %vm2755, %v2738
      %p2772 = scmp.lt.s32.totalorder %s15, 1
      %s2773 = scalar_select %p2772, %s15, 1
      %s2774 = smul.addr %s2773, 16
      %s2775 = smul.addr %s2774, 4
      %s2776 = scalar_lea.vmem %s4, %s2775
      // Predicated region
      $region37: #{generator_forward.6} parent=35 // pred_check
        %p2777 = pneg %p122
      $region38: #{generator_forward.6} parent=35 // pred_check_branch
        %2779 = sbr.rel (%p2777) target = $region40
      $region39: #{generator_forward.6} parent=35 // pred_region
        _
      $region40: #{generator_forward.6} parent=35 // pred_fallthru
        _
    $region36: #{generator_forward.6} parent=5 // pred_fallthru
      _
    %p2780 = scmp.le.s32.totalorder 2, %s10
    // Predicated region
    $region41: #{generator_forward.6} parent=5 // pred_check
      %p2781 = pneg %p2780
    $region42: #{generator_forward.6} parent=5 // pred_check_branch
      %2783 = sbr.rel (%p2781) target = $region44
    $region43: #{generator_forward.6} parent=5 // pred_region
      %s2784 = ssub.s32 %s10, 2
      // Predicated region
      $region45: #{generator_forward.6} parent=43 // pred_check
        %p2785 = pneg %p128
      $region46: #{generator_forward.6} parent=43 // pred_check_branch
        %2787 = sbr.rel (%p2785) target = $region48
      $region47: #{generator_forward.6} parent=43 // pred_region
        %p2788 = scmp.lt.s32.totalorder %s16, 1
        %s2789 = scalar_select %p2788, %s16, 1
        %s2790 = smul.addr %s2789, 16
        %s2791 = smul.addr %s2790, 4
        %s2792 = scalar_lea.vmem %s4, %s2791
      $region48: #{generator_forward.6} parent=43 // pred_fallthru
        _
    $region44: #{generator_forward.6} parent=5 // pred_fallthru
      _
  $region6: #{generator_forward.6} parent=0 // loop_footer
    %s14 = sadd.s32 1, %s10
  $region7: #{generator_forward.6} parent=0 // loop_footer_branch
    %9 = sbr.rel target = $region3
  $region8: #{generator_forward.6} parent=0 // loop_exit
    _

// kernel: generator_forward.8
$region0: #{generator_forward.8}
  #allocation0 [shape = 'u32[]', space=smem, size = 0x4, offset = 0x4, fixed_abs, tag = 'smem constant byte address 0x4 - core index']
  #allocation1 [shape = 'u32[144,128]{1,0:T(1,128)}', space=vmem, size = 0x12000, scoped, tag = 'internal scratch']
  %s0 = inlined_call_operand.vmem [shape: bf16[2,16,290], index: 0, kind: input, shape index: {}]
  %s1 = inlined_call_operand.vmem [shape: bf16[9,32,16], index: 1, kind: input, shape index: {}]
  %s2 = inlined_call_operand.vmem [shape: f32[32,1], index: 2, kind: input, shape index: {}]
  %s3 = inlined_call_operand.vmem [shape: f32[32,1], index: 3, kind: input, shape index: {}]
  %s4 = inlined_call_operand.vmem [shape: bf16[2,32,256], index: 4, kind: output, shape index: {}]
  %s5 = sld [smem:[#allocation0]]
  $region49: #{generator_forward.8} parent=0
    _
  %s7 = ssub.s32 1, %s5
  %s8 = scalar_select 0, %s7, %s5
  loop: start=0, step=1, limit=4
  $region2: #{generator_forward.8} parent=0 // loop_pre_header
    _
  $region3: #{generator_forward.8} parent=0 // loop_header
    %s10 = sphi 0, %s14
    %p11 = scmp.ge.s32.totalorder %s10, 4
    %s20 = sphi 0, %s22
    %s23 = sphi 0, %s20
    %s24 = sphi 0, %s23
    %s40 = sphi 0, %s24
    %s44 = sphi 0, %s44
    %s46 = sphi 0, %s44
    %s47 = sphi 0, %s46
    %s61 = sphi 0, %s47
    %s65 = sphi 0, %s65
    %s67 = sphi 0, %s65
    %s68 = sphi 0, %s67
    %s82 = sphi 0, %s68
    %s86 = sphi 0, %s86
    %s88 = sphi 0, %s86
    %s89 = sphi 0, %s88
    %s103 = sphi 0, %s89
    %s109 = sphi 0, %s111
    %s112 = sphi 0, %s109
    %s113 = sphi 0, %s112
    %s129 = sphi 0, %s113
  $region4: #{generator_forward.8} parent=0 // loop_header_branch
    %13 = sbr.rel (%p11) target = $region8
  $region5: #{generator_forward.8} parent=0 // loop_body
    %s15 = ssub.s32 %s10, 1
    %s16 = ssub.s32 %s10, 2
    %s17 = sadd.s32 %s10, 1
    %s18 = ssub.s32 %s10, %s17
    %p19 = scmp.eq.s32.totalorder %s18, 0
    %s21 = sadd.s32 %s20, 1
    %s22 = scalar_select %p19, %s20, %s21
    %p25 = pneg %p19
    %p26 = scmp.eq.s32.totalorder %s10, 1
    %p27 = por %p25, %p26
    %p28 = scmp.ne.s32.totalorder %s20, %s23
    %p29 = scmp.eq.s32.totalorder %s10, 0
    %p30 = por %p28, %p29
    %p31 = scmp.ne.s32.totalorder %s20, %s23
    %p32 = scmp.eq.s32.totalorder %s15, 1
    %p33 = por %p31, %p32
    %p34 = scmp.ne.s32.totalorder %s23, %s24
    %p35 = scmp.eq.s32.totalorder %s15, 0
    %p36 = por %p34, %p35
    %p37 = scmp.ne.s32.totalorder %s23, %s24
    %p38 = scmp.eq.s32.totalorder %s16, 1
    %p39 = por %p37, %p38
    %p41 = scmp.ne.s32.totalorder %s24, %s40
    %p42 = scmp.eq.s32.totalorder %s16, 0
    %p43 = por %p41, %p42
    %s45 = sadd.s32 %s44, 1
    %p48 = scmp.eq.s32.totalorder %s10, 1
    %p49 = scmp.ne.s32.totalorder %s44, %s46
    %p50 = scmp.eq.s32.totalorder %s10, 0
    %p51 = por %p49, %p50
    %p52 = scmp.ne.s32.totalorder %s44, %s46
    %p53 = scmp.eq.s32.totalorder %s15, 1
    %p54 = por %p52, %p53
    %p55 = scmp.ne.s32.totalorder %s46, %s47
    %p56 = scmp.eq.s32.totalorder %s15, 0
    %p57 = por %p55, %p56
    %p58 = scmp.ne.s32.totalorder %s46, %s47
    %p59 = scmp.eq.s32.totalorder %s16, 1
    %p60 = por %p58, %p59
    %p62 = scmp.ne.s32.totalorder %s47, %s61
    %p63 = scmp.eq.s32.totalorder %s16, 0
    %p64 = por %p62, %p63
    %s66 = sadd.s32 %s65, 1
    %p69 = scmp.eq.s32.totalorder %s10, 1
    %p70 = scmp.ne.s32.totalorder %s65, %s67
    %p71 = scmp.eq.s32.totalorder %s10, 0
    %p72 = por %p70, %p71
    %p73 = scmp.ne.s32.totalorder %s65, %s67
    %p74 = scmp.eq.s32.totalorder %s15, 1
    %p75 = por %p73, %p74
    %p76 = scmp.ne.s32.totalorder %s67, %s68
    %p77 = scmp.eq.s32.totalorder %s15, 0
    %p78 = por %p76, %p77
    %p79 = scmp.ne.s32.totalorder %s67, %s68
    %p80 = scmp.eq.s32.totalorder %s16, 1
    %p81 = por %p79, %p80
    %p83 = scmp.ne.s32.totalorder %s68, %s82
    %p84 = scmp.eq.s32.totalorder %s16, 0
    %p85 = por %p83, %p84
    %s87 = sadd.s32 %s86, 1
    %p90 = scmp.eq.s32.totalorder %s10, 1
    %p91 = scmp.ne.s32.totalorder %s86, %s88
    %p92 = scmp.eq.s32.totalorder %s10, 0
    %p93 = por %p91, %p92
    %p94 = scmp.ne.s32.totalorder %s86, %s88
    %p95 = scmp.eq.s32.totalorder %s15, 1
    %p96 = por %p94, %p95
    %p97 = scmp.ne.s32.totalorder %s88, %s89
    %p98 = scmp.eq.s32.totalorder %s15, 0
    %p99 = por %p97, %p98
    %p100 = scmp.ne.s32.totalorder %s88, %s89
    %p101 = scmp.eq.s32.totalorder %s16, 1
    %p102 = por %p100, %p101
    %p104 = scmp.ne.s32.totalorder %s89, %s103
    %p105 = scmp.eq.s32.totalorder %s16, 0
    %p106 = por %p104, %p105
    %s107 = ssub.s32 %s10, %s17
    %p108 = scmp.eq.s32.totalorder %s107, 0
    %s110 = sadd.s32 %s109, 1
    %s111 = scalar_select %p108, %s109, %s110
    %p114 = pneg %p108
    %p115 = scmp.eq.s32.totalorder %s10, 1
    %p116 = por %p114, %p115
    %p117 = scmp.ne.s32.totalorder %s109, %s112
    %p118 = scmp.eq.s32.totalorder %s10, 0
    %p119 = por %p117, %p118
    %p120 = scmp.ne.s32.totalorder %s109, %s112
    %p121 = scmp.eq.s32.totalorder %s15, 1
    %p122 = por %p120, %p121
    %p123 = scmp.ne.s32.totalorder %s112, %s113
    %p124 = scmp.eq.s32.totalorder %s15, 0
    %p125 = por %p123, %p124
    %p126 = scmp.ne.s32.totalorder %s112, %s113
    %p127 = scmp.eq.s32.totalorder %s16, 1
    %p128 = por %p126, %p127
    %p130 = scmp.ne.s32.totalorder %s113, %s129
    %p131 = scmp.eq.s32.totalorder %s16, 0
    %p132 = por %p130, %p131
    %p133 = scmp.le.s32.totalorder 1, %s10
    %p134 = scmp.lt.s32.totalorder %s10, 3
    %p135 = pnand %p133, %p134
    %p136 = pneg %p135
    // Predicated region
    $region9: #{generator_forward.8} parent=5 // pred_check
      _
    $region10: #{generator_forward.8} parent=5 // pred_check_branch
      %138 = sbr.rel (%p135) target = $region12
    $region11: #{generator_forward.8} parent=5 // pred_region
      %s139 = ssub.s32 %s10, 1
      // Predicated region
      $region13: #{generator_forward.8} parent=11 // pred_check
        %p140 = pneg %p57
      $region14: #{generator_forward.8} parent=11 // pred_check_branch
        %142 = sbr.rel (%p140) target = $region16
      $region15: #{generator_forward.8} parent=11 // pred_region
        _
      $region16: #{generator_forward.8} parent=11 // pred_fallthru
        _
      // Predicated region
      $region17: #{generator_forward.8} parent=11 // pred_check
        %p143 = pneg %p78
      $region18: #{generator_forward.8} parent=11 // pred_check_branch
        %145 = sbr.rel (%p143) target = $region20
      $region19: #{generator_forward.8} parent=11 // pred_region
        _
      $region20: #{generator_forward.8} parent=11 // pred_fallthru
        _
      // Predicated region
      $region21: #{generator_forward.8} parent=11 // pred_check
        %p146 = pneg %p99
      $region22: #{generator_forward.8} parent=11 // pred_check_branch
        %148 = sbr.rel (%p146) target = $region24
      $region23: #{generator_forward.8} parent=11 // pred_region
        _
      $region24: #{generator_forward.8} parent=11 // pred_fallthru
        _
    $region12: #{generator_forward.8} parent=5 // pred_fallthru
      _
    %p149 = scmp.lt.s32.totalorder %s10, 2
    // Predicated region
    $region25: #{generator_forward.8} parent=5 // pred_check
      %p150 = pneg %p149
    $region26: #{generator_forward.8} parent=5 // pred_check_branch
      %152 = sbr.rel (%p150) target = $region28
    $region27: #{generator_forward.8} parent=5 // pred_region
      // Predicated region
      $region29: #{generator_forward.8} parent=27 // pred_check
        %p153 = pneg %p30
      $region30: #{generator_forward.8} parent=27 // pred_check_branch
        %155 = sbr.rel (%p153) target = $region32
      $region31: #{generator_forward.8} parent=27 // pred_region
        %p156 = scmp.lt.s32.totalorder %s10, 1
        %s157 = scalar_select %p156, %s10, 1
        %s158 = smul.addr %s157, 6
        %s159 = smul.addr %s158, 4
        %s160 = scalar_lea.vmem %s0, %s159
      $region32: #{generator_forward.8} parent=27 // pred_fallthru
        _
    $region28: #{generator_forward.8} parent=5 // pred_fallthru
      _
    %p161 = scmp.le.s32.totalorder 1, %s10
    %p162 = scmp.lt.s32.totalorder %s10, 3
    %p163 = pnand %p161, %p162
    %p164 = pneg %p163
    // Predicated region
    $region33: #{generator_forward.8} parent=5 // pred_check
      _
    $region34: #{generator_forward.8} parent=5 // pred_check_branch
      %166 = sbr.rel (%p163) target = $region36
    $region35: #{generator_forward.8} parent=5 // pred_region
      %s167 = ssub.s32 %s10, 1
      %p168 = scmp.lt.s32.totalorder %s15, 1
      %s169 = scalar_select %p168, %s15, 1
      %s170 = smul.addr %s169, 6
      %s171 = smul.addr %s170, 4
      %s172 = scalar_lea.vmem %s0, %s171
      %p173 = pneg %p36
      %p174 = pneg %p33
      %p175 = pneg %p57
      %p176 = pneg %p54
      %p177 = pneg %p78
      %p178 = pneg %p75
      %p179 = pneg %p99
      %p180 = pneg %p96
      %p181 = pneg %p125
      %p182 = pneg %p122
      %p183 = scmp.lt.s32.totalorder %s15, 1
      %s184 = scalar_select %p183, %s15, 1
      %s185 = smul.addr %s184, 8
      %s186 = smul.addr %s185, 4
      %s187 = scalar_lea.vmem %s4, %s186
      %p188 = scmp.lt.s32.totalorder %s15, 1
      %s189 = scalar_select %p188, %s15, 1
      %s190 = smul.addr %s189, 6
      %s191 = smul.addr %s190, 4
      %s192 = scalar_lea.vmem %s0, %s191
      %p193 = scmp.lt.s32.totalorder %s15, 1
      %s194 = scalar_select %p193, %s15, 1
      %s195 = smul.addr %s194, 8
      %s196 = smul.addr %s195, 4
      %s197 = scalar_lea.vmem %s4, %s196
      %v201 = vlaneseq
      %v202 = vand.u32 %v201, 127
      %v203 = vadd.s32 %v202, 128
      %vm204 = vcmp.lt.s32.totalorder %v202, 0
      %v205 = vsub.s32 0, %v202
      %v206 = vsel %vm204, %v205, %v202
      %v207 = vshrl.u32 %v206, 4
      %v208 = vand.u32 %v206, 15
      %v209 = vsub.s32 0, %v208
      %v210 = vsel %vm204, %v209, %v208
      %vm211 = vcmp.lt.s32.totalorder %v203, 0
      %v212 = vsub.s32 0, %v203
      %v213 = vsel %vm211, %v212, %v203
      %v214 = vshrl.u32 %v213, 4
      %v215 = vand.u32 %v213, 15
      %v216 = vsub.s32 0, %v215
      %v217 = vsel %vm211, %v216, %v215
      %vm218 = vcmp.ne.s32.totalorder %v210, 0
      %vm219 = vcmp.ne.s32.totalorder %v217, 0
      %vm220 = vcmp.lt.s32.totalorder %v210, 0
      %vm221 = vcmp.lt.s32.totalorder %v217, 0
      %vm222 = vmand %vm220, %vm218
      %vm223 = vmand %vm221, %vm219
      %v224 = vadd.s32 %v210, 16
      %v225 = vadd.s32 %v217, 16
      %v226 = vsel %vm222, %v224, %v210
      %v227 = vsel %vm223, %v225, %v217
      %vm228 = vcmp.gt.s32.totalorder %v226, 0
      %vm229 = vcmp.gt.s32.totalorder %v227, 0
      %vm230 = vcmp.lt.s32.totalorder %v226, 15
      %vm231 = vcmp.lt.s32.totalorder %v227, 15
      %v232 = vld [vmem:[%s192] sm:$0xff]
      %v233 = vld [vmem:[%s192 + $0xc] sm:$0xff]
      %vm234 = vmpackc.low %vm229, %vm228
      %v235 = vsel %vm234, %v232, 0
      %v236 = vsel %vm234, %v233, 0
      %v237 = vld [vmem:[%s1] sm:$0xf]
      %v238 = vld [vmem:[%s1 + $0x4] sm:$0xf]
      %v239 = vld [vmem:[%s1 + $0x8] sm:$0xf]
      %v240 = vld [vmem:[%s1 + $0xc] sm:$0xf]
      %v241 = vld [vmem:[%s192 + $0x8] sm:$0xf]
      %v242 = vld [vmem:[%s192 + $0x14] sm:$0xf]
      %s243 = scalar_lea.vmem %s1, 16
      %v244 = vld [vmem:[%s243] sm:$0xf]
      %v245 = vld [vmem:[%s243 + $0x4] sm:$0xf]
      %v246 = vld [vmem:[%s243 + $0x8] sm:$0xf]
      %v247 = vld [vmem:[%s243 + $0xc] sm:$0xf]
      %v252 = vunpack.c.l.b16 %v244
      %v253 = vunpack.c.l.b16 %v245
      %v254 = vunpack.c.l.b16 %v246
      %v255 = vunpack.c.l.b16 %v247
      %v256 = vpack.c.b16 %v253, %v252
      %v257 = vpack.c.b16 %v255, %v254
      %v262 = vunpack.c.l.b16 %v232
      %v263 = vunpack.c.h.b16 %v232
      %v264 = vunpack.c.l.b16 %v241
      %v265 = vunpack.c.l.b16 %v233
      %v266 = vunpack.c.h.b16 %v233
      %v267 = vunpack.c.l.b16 %v242
      %v268 = vpack.c.b16 %v265, %v262
      %v269 = vpack.c.b16 %v266, %v263
      %v270 = vpack.c.b16 %v267, %v264
      %271 = vrot.lane.b32.xlu0 %v268, 127
      %v272 = vpop.permute.xlu0 %271
      %273 = vrot.lane.b32.xlu0 %v269, 127
      %v274 = vpop.permute.xlu0 %273
      %275 = vrot.lane.b32.xlu0 %v270, 127
      %v276 = vpop.permute.xlu0 %275
      %vm277 = vcmask 1039360
      %v278 = vsel %vm277, %v272, %v274
      %v279 = vsel %vm277, %v274, %v276
      %vm282 = vcmask 130048
      %v284 = vsel %vm282, %v256, 0
      %v287 = vsel %vm282, %v257, 0
      %289 = vmatprep.subr.bf16.mxu0 %v279
      %290 = vmatpush1.bf16.msra.mxu0 %v278
      %291 = vmatprep.subr.bf16.mxu0 0
      %292 = vmatpush1.bf16.msra.mxu0 0
      %293 = vmatprep.subr.bf16.mxu0 0
      %294 = vmatpush1.bf16.msra.mxu0 0
      %295 = vmatprep.subr.bf16.mxu0 0
      %296 = vmatpush1.bf16.msra.mxu0 0
      %297 = vmatprep.subr.bf16.mxu0 0
      %298 = vmatpush1.bf16.msra.mxu0 0
      %299 = vmatprep.subr.bf16.mxu0 0
      %300 = vmatpush1.bf16.msra.mxu0 0
      %301 = vmatprep.subr.bf16.mxu0 0
      %302 = vmatpush1.bf16.msra.mxu0 0
      %303 = vmatprep.subr.bf16.mxu0 0
      %304 = vmatpush1.bf16.msra.mxu0 0
      %305 = vmatprep.subr.bf16.mxu0 0
      %306 = vmatpush1.bf16.msra.mxu0 0
      %307 = vmatprep.subr.bf16.mxu0 0
      %308 = vmatpush1.bf16.msra.mxu0 0
      %309 = vmatprep.subr.bf16.mxu0 0
      %310 = vmatpush1.bf16.msra.mxu0 0
      %311 = vmatprep.subr.bf16.mxu0 0
      %312 = vmatpush1.bf16.msra.mxu0 0
      %313 = vmatprep.subr.bf16.mxu0 0
      %314 = vmatpush1.bf16.msra.mxu0 0
      %315 = vmatprep.subr.bf16.mxu0 0
      %316 = vmatpush1.bf16.msra.mxu0 0
      %317 = vmatprep.subr.bf16.mxu0 0
      %318 = vmatpush1.bf16.msra.mxu0 0
      %319 = vmatprep.subr.bf16.mxu0 0
      %320 = vmatpush1.bf16.msra.mxu0 0
      %321 = vmatprep.mubr.bf16.mxu0 0
      %322 = vmatmul.mubr.bf16.gmra.mrb[0].mxu0 %v284
      %v323 = vpop.f32.mrb[0].mxu0
      %v324 = vadd.f32 0.0, %v323
      %v325 = vpop.f32.mrb[0].mxu0
      %v326 = vadd.f32 0.0, %v325
      %v327 = vpop.f32.mrb[0].mxu0
      %v328 = vadd.f32 0.0, %v327
      %v329 = vpop.f32.mrb[0].mxu0
      %v330 = vadd.f32 0.0, %v329
      %331 = vmatprep.mubr.bf16.mxu0 0
      %332 = vmatmul.mubr.bf16.gmra.mrb[0].mxu0 %v287
      %v333 = vpop.f32.mrb[0].mxu0
      %v334 = vadd.f32 0.0, %v333
      %v335 = vpop.f32.mrb[0].mxu0
      %v336 = vadd.f32 0.0, %v335
      %v337 = vpop.f32.mrb[0].mxu0
      %v338 = vadd.f32 0.0, %v337
      %v339 = vpop.f32.mrb[0].mxu0
      %v340 = vadd.f32 0.0, %v339
      %341 = vdwg.mxu0
      %v346 = vunpack.c.l.b16 %v237
      %v347 = vunpack.c.l.b16 %v238
      %v348 = vunpack.c.l.b16 %v239
      %v349 = vunpack.c.l.b16 %v240
      %v350 = vpack.c.b16 %v347, %v346
      %v351 = vpack.c.b16 %v349, %v348
      %v354 = vunpack.c.l.b16 %v235
      %v355 = vunpack.c.h.b16 %v235
      %v356 = vunpack.c.l.b16 %v236
      %v357 = vunpack.c.h.b16 %v236
      %v358 = vpack.c.b16 %v356, %v354
      %v359 = vpack.c.b16 %v357, %v355
      %v363 = vsel %vm282, %v350, 0
      %v366 = vsel %vm282, %v351, 0
      %368 = vmatprep.subr.bf16.mxu0 %v359
      %369 = vmatpush1.bf16.msra.mxu0 %v358
      %370 = vmatprep.subr.bf16.mxu0 0
      %371 = vmatpush1.bf16.msra.mxu0 0
      %372 = vmatprep.subr.bf16.mxu0 0
      %373 = vmatpush1.bf16.msra.mxu0 0
      %374 = vmatprep.subr.bf16.mxu0 0
      %375 = vmatpush1.bf16.msra.mxu0 0
      %376 = vmatprep.subr.bf16.mxu0 0
      %377 = vmatpush1.bf16.msra.mxu0 0
      %378 = vmatprep.subr.bf16.mxu0 0
      %379 = vmatpush1.bf16.msra.mxu0 0
      %380 = vmatprep.subr.bf16.mxu0 0
      %381 = vmatpush1.bf16.msra.mxu0 0
      %382 = vmatprep.subr.bf16.mxu0 0
      %383 = vmatpush1.bf16.msra.mxu0 0
      %384 = vmatprep.subr.bf16.mxu0 0
      %385 = vmatpush1.bf16.msra.mxu0 0
      %386 = vmatprep.subr.bf16.mxu0 0
      %387 = vmatpush1.bf16.msra.mxu0 0
      %388 = vmatprep.subr.bf16.mxu0 0
      %389 = vmatpush1.bf16.msra.mxu0 0
      %390 = vmatprep.subr.bf16.mxu0 0
      %391 = vmatpush1.bf16.msra.mxu0 0
      %392 = vmatprep.subr.bf16.mxu0 0
      %393 = vmatpush1.bf16.msra.mxu0 0
      %394 = vmatprep.subr.bf16.mxu0 0
      %395 = vmatpush1.bf16.msra.mxu0 0
      %396 = vmatprep.subr.bf16.mxu0 0
      %397 = vmatpush1.bf16.msra.mxu0 0
      %398 = vmatprep.subr.bf16.mxu0 0
      %399 = vmatpush1.bf16.msra.mxu0 0
      %400 = vmatprep.mubr.bf16.mxu0 0
      %401 = vmatmul.mubr.bf16.gmra.mrb[0].mxu0 %v363
      %v402 = vpop.f32.mrb[0].mxu0
      %v403 = vadd.f32 %v324, %v402
      %v404 = vpop.f32.mrb[0].mxu0
      %v405 = vadd.f32 %v326, %v404
      %v406 = vpop.f32.mrb[0].mxu0
      %v407 = vadd.f32 %v328, %v406
      %v408 = vpop.f32.mrb[0].mxu0
      %v409 = vadd.f32 %v330, %v408
      %410 = vmatprep.mubr.bf16.mxu0 0
      %411 = vmatmul.mubr.bf16.gmra.mrb[0].mxu0 %v366
      %v412 = vpop.f32.mrb[0].mxu0
      %v413 = vadd.f32 %v334, %v412
      %v414 = vpop.f32.mrb[0].mxu0
      %v415 = vadd.f32 %v336, %v414
      %v416 = vpop.f32.mrb[0].mxu0
      %v417 = vadd.f32 %v338, %v416
      %v418 = vpop.f32.mrb[0].mxu0
      %v419 = vadd.f32 %v340, %v418
      %420 = vdwg.mxu0
      %vm421 = vmpackc.low %vm231, %vm230
      %v422 = vsel %vm421, 65537, 0
      %423 = vrot.lane.b32.xlu0 %v422, 2
      %v424 = vpop.permute.xlu0 %423
      %v425 = vrot.slane %v424, 4
      %vm426 = vcmask 15360
      %v427 = vsel %vm426, %v425, %v424
      %vm428 = vcmp.ne.s16.totalorder %v427, 0
      %vm429 = vcmp.ne.s16.totalorder %v425, 0
      %v430 = vsel %vm428, %v232, 0
      %v431 = vsel %vm429, %v241, 0
      %v432 = vsel %vm428, %v233, 0
      %v433 = vsel %vm429, %v242, 0
      %s434 = scalar_lea.vmem %s1, 32
      %v435 = vld [vmem:[%s434] sm:$0xf]
      %v436 = vld [vmem:[%s434 + $0x4] sm:$0xf]
      %v437 = vld [vmem:[%s434 + $0x8] sm:$0xf]
      %v438 = vld [vmem:[%s434 + $0xc] sm:$0xf]
      %v443 = vunpack.c.l.b16 %v435
      %v444 = vunpack.c.l.b16 %v436
      %v445 = vunpack.c.l.b16 %v437
      %v446 = vunpack.c.l.b16 %v438
      %v447 = vpack.c.b16 %v444, %v443
      %v448 = vpack.c.b16 %v446, %v445
      %v453 = vunpack.c.l.b16 %v430
      %v454 = vunpack.c.h.b16 %v430
      %v455 = vunpack.c.l.b16 %v431
      %v456 = vunpack.c.l.b16 %v432
      %v457 = vunpack.c.h.b16 %v432
      %v458 = vunpack.c.l.b16 %v433
      %v459 = vpack.c.b16 %v456, %v453
      %v460 = vpack.c.b16 %v457, %v454
      %v461 = vpack.c.b16 %v458, %v455
      %462 = vrot.lane.b32.xlu0 %v459, 126
      %v463 = vpop.permute.xlu0 %462
      %464 = vrot.lane.b32.xlu0 %v460, 126
      %v465 = vpop.permute.xlu0 %464
      %466 = vrot.lane.b32.xlu0 %v461, 126
      %v467 = vpop.permute.xlu0 %466
      %vm468 = vcmask 1031168
      %v469 = vsel %vm468, %v463, %v465
      %v470 = vsel %vm468, %v465, %v467
      %v474 = vsel %vm282, %v447, 0
      %v477 = vsel %vm282, %v448, 0
      %479 = vmatprep.subr.bf16.mxu0 %v470
      %480 = vmatpush1.bf16.msra.mxu0 %v469
      %481 = vmatprep.subr.bf16.mxu0 0
      %482 = vmatpush1.bf16.msra.mxu0 0
      %483 = vmatprep.subr.bf16.mxu0 0
      %484 = vmatpush1.bf16.msra.mxu0 0
      %485 = vmatprep.subr.bf16.mxu0 0
      %486 = vmatpush1.bf16.msra.mxu0 0
      %487 = vmatprep.subr.bf16.mxu0 0
      %488 = vmatpush1.bf16.msra.mxu0 0
      %489 = vmatprep.subr.bf16.mxu0 0
      %490 = vmatpush1.bf16.msra.mxu0 0
      %491 = vmatprep.subr.bf16.mxu0 0
      %492 = vmatpush1.bf16.msra.mxu0 0
      %493 = vmatprep.subr.bf16.mxu0 0
      %494 = vmatpush1.bf16.msra.mxu0 0
      %495 = vmatprep.subr.bf16.mxu0 0
      %496 = vmatpush1.bf16.msra.mxu0 0
      %497 = vmatprep.subr.bf16.mxu0 0
      %498 = vmatpush1.bf16.msra.mxu0 0
      %499 = vmatprep.subr.bf16.mxu0 0
      %500 = vmatpush1.bf16.msra.mxu0 0
      %501 = vmatprep.subr.bf16.mxu0 0
      %502 = vmatpush1.bf16.msra.mxu0 0
      %503 = vmatprep.subr.bf16.mxu0 0
      %504 = vmatpush1.bf16.msra.mxu0 0
      %505 = vmatprep.subr.bf16.mxu0 0
      %506 = vmatpush1.bf16.msra.mxu0 0
      %507 = vmatprep.subr.bf16.mxu0 0
      %508 = vmatpush1.bf16.msra.mxu0 0
      %509 = vmatprep.subr.bf16.mxu0 0
      %510 = vmatpush1.bf16.msra.mxu0 0
      %511 = vmatprep.mubr.bf16.mxu0 0
      %512 = vmatmul.mubr.bf16.gmra.mrb[0].mxu0 %v474
      %v513 = vpop.f32.mrb[0].mxu0
      %v514 = vadd.f32 0.0, %v513
      %v515 = vpop.f32.mrb[0].mxu0
      %v516 = vadd.f32 0.0, %v515
      %v517 = vpop.f32.mrb[0].mxu0
      %v518 = vadd.f32 0.0, %v517
      %v519 = vpop.f32.mrb[0].mxu0
      %v520 = vadd.f32 0.0, %v519
      %521 = vmatprep.mubr.bf16.mxu0 0
      %522 = vmatmul.mubr.bf16.gmra.mrb[0].mxu0 %v477
      %v523 = vpop.f32.mrb[0].mxu0
      %v524 = vadd.f32 0.0, %v523
      %v525 = vpop.f32.mrb[0].mxu0
      %v526 = vadd.f32 0.0, %v525
      %v527 = vpop.f32.mrb[0].mxu0
      %v528 = vadd.f32 0.0, %v527
      %v529 = vpop.f32.mrb[0].mxu0
      %v530 = vadd.f32 0.0, %v529
      %531 = vdwg.mxu0
      %v532 = vadd.f32 %v403, %v514
      %v533 = vadd.f32 %v405, %v516
      %v534 = vadd.f32 %v407, %v518
      %v535 = vadd.f32 %v409, %v520
      %v536 = vadd.f32 %v413, %v524
      %v537 = vadd.f32 %v415, %v526
      %v538 = vadd.f32 %v417, %v528
      %v539 = vadd.f32 %v419, %v530
      %v540 = vsel %vm234, 65537, 0
      %541 = vrot.lane.b32.xlu0 %v540, 16
      %v542 = vpop.permute.xlu0 %541
      %v543 = vrot.slane %v542, 4
      %vm544 = vcmask 130048
      %v545 = vsel %vm544, %v543, %v542
      %vm546 = vcmp.ne.s16.totalorder %v545, 0
      %vm547 = vcmp.ne.s16.totalorder %v543, 0
      %v548 = vsel %vm546, %v232, 0
      %v549 = vsel %vm547, %v241, 0
      %v550 = vsel %vm546, %v233, 0
      %v551 = vsel %vm547, %v242, 0
      %s552 = scalar_lea.vmem %s1, 48
      %v553 = vld [vmem:[%s552] sm:$0xf]
      %v554 = vld [vmem:[%s552 + $0x4] sm:$0xf]
      %v555 = vld [vmem:[%s552 + $0x8] sm:$0xf]
      %v556 = vld [vmem:[%s552 + $0xc] sm:$0xf]
      %v561 = vunpack.c.l.b16 %v553
      %v562 = vunpack.c.l.b16 %v554
      %v563 = vunpack.c.l.b16 %v555
      %v564 = vunpack.c.l.b16 %v556
      %v565 = vpack.c.b16 %v562, %v561
      %v566 = vpack.c.b16 %v564, %v563
      %v571 = vunpack.c.l.b16 %v548
      %v572 = vunpack.c.h.b16 %v548
      %v573 = vunpack.c.l.b16 %v549
      %v574 = vunpack.c.l.b16 %v550
      %v575 = vunpack.c.h.b16 %v550
      %v576 = vunpack.c.l.b16 %v551
      %v577 = vpack.c.b16 %v574, %v571
      %v578 = vpack.c.b16 %v575, %v572
      %v579 = vpack.c.b16 %v576, %v573
      %580 = vrot.lane.b32.xlu0 %v577, 112
      %v581 = vpop.permute.xlu0 %580
      %582 = vrot.lane.b32.xlu0 %v578, 112
      %v583 = vpop.permute.xlu0 %582
      %584 = vrot.lane.b32.xlu0 %v579, 112
      %v585 = vpop.permute.xlu0 %584
      %vm586 = vcmask 916480
      %v587 = vsel %vm586, %v581, %v583
      %v588 = vsel %vm586, %v583, %v585
      %v592 = vsel %vm282, %v565, 0
      %v595 = vsel %vm282, %v566, 0
      %597 = vmatprep.subr.bf16.mxu0 %v588
      %598 = vmatpush1.bf16.msra.mxu0 %v587
      %599 = vmatprep.subr.bf16.mxu0 0
      %600 = vmatpush1.bf16.msra.mxu0 0
      %601 = vmatprep.subr.bf16.mxu0 0
      %602 = vmatpush1.bf16.msra.mxu0 0
      %603 = vmatprep.subr.bf16.mxu0 0
      %604 = vmatpush1.bf16.msra.mxu0 0
      %605 = vmatprep.subr.bf16.mxu0 0
      %606 = vmatpush1.bf16.msra.mxu0 0
      %607 = vmatprep.subr.bf16.mxu0 0
      %608 = vmatpush1.bf16.msra.mxu0 0
      %609 = vmatprep.subr.bf16.mxu0 0
      %610 = vmatpush1.bf16.msra.mxu0 0
      %611 = vmatprep.subr.bf16.mxu0 0
      %612 = vmatpush1.bf16.msra.mxu0 0
      %613 = vmatprep.subr.bf16.mxu0 0
      %614 = vmatpush1.bf16.msra.mxu0 0
      %615 = vmatprep.subr.bf16.mxu0 0
      %616 = vmatpush1.bf16.msra.mxu0 0
      %617 = vmatprep.subr.bf16.mxu0 0
      %618 = vmatpush1.bf16.msra.mxu0 0
      %619 = vmatprep.subr.bf16.mxu0 0
      %620 = vmatpush1.bf16.msra.mxu0 0
      %621 = vmatprep.subr.bf16.mxu0 0
      %622 = vmatpush1.bf16.msra.mxu0 0
      %623 = vmatprep.subr.bf16.mxu0 0
      %624 = vmatpush1.bf16.msra.mxu0 0
      %625 = vmatprep.subr.bf16.mxu0 0
      %626 = vmatpush1.bf16.msra.mxu0 0
      %627 = vmatprep.subr.bf16.mxu0 0
      %628 = vmatpush1.bf16.msra.mxu0 0
      %629 = vmatprep.mubr.bf16.mxu0 0
      %630 = vmatmul.mubr.bf16.gmra.mrb[0].mxu0 %v592
      %v631 = vpop.f32.mrb[0].mxu0
      %v632 = vadd.f32 0.0, %v631
      %v633 = vpop.f32.mrb[0].mxu0
      %v634 = vadd.f32 0.0, %v633
      %v635 = vpop.f32.mrb[0].mxu0
      %v636 = vadd.f32 0.0, %v635
      %v637 = vpop.f32.mrb[0].mxu0
      %v638 = vadd.f32 0.0, %v637
      %639 = vmatprep.mubr.bf16.mxu0 0
      %640 = vmatmul.mubr.bf16.gmra.mrb[0].mxu0 %v595
      %v641 = vpop.f32.mrb[0].mxu0
      %v642 = vadd.f32 0.0, %v641
      %v643 = vpop.f32.mrb[0].mxu0
      %v644 = vadd.f32 0.0, %v643
      %v645 = vpop.f32.mrb[0].mxu0
      %v646 = vadd.f32 0.0, %v645
      %v647 = vpop.f32.mrb[0].mxu0
      %v648 = vadd.f32 0.0, %v647
      %649 = vdwg.mxu0
      %v650 = vadd.f32 %v532, %v632
      %v651 = vadd.f32 %v533, %v634
      %v652 = vadd.f32 %v534, %v636
      %v653 = vadd.f32 %v535, %v638
      %v654 = vadd.f32 %v536, %v642
      %v655 = vadd.f32 %v537, %v644
      %v656 = vadd.f32 %v538, %v646
      %v657 = vadd.f32 %v539, %v648
      %s658 = scalar_lea.vmem %s1, 64
      %v659 = vld [vmem:[%s658] sm:$0xf]
      %v660 = vld [vmem:[%s658 + $0x4] sm:$0xf]
      %v661 = vld [vmem:[%s658 + $0x8] sm:$0xf]
      %v662 = vld [vmem:[%s658 + $0xc] sm:$0xf]
      %v667 = vunpack.c.l.b16 %v659
      %v668 = vunpack.c.l.b16 %v660
      %v669 = vunpack.c.l.b16 %v661
      %v670 = vunpack.c.l.b16 %v662
      %v671 = vpack.c.b16 %v668, %v667
      %v672 = vpack.c.b16 %v670, %v669
      %673 = vrot.lane.b32.xlu0 %v268, 111
      %v674 = vpop.permute.xlu0 %673
      %675 = vrot.lane.b32.xlu0 %v269, 111
      %v676 = vpop.permute.xlu0 %675
      %677 = vrot.lane.b32.xlu0 %v270, 111
      %v678 = vpop.permute.xlu0 %677
      %vm679 = vcmask 908288
      %v680 = vsel %vm679, %v674, %v676
      %v681 = vsel %vm679, %v676, %v678
      %v685 = vsel %vm282, %v671, 0
      %v688 = vsel %vm282, %v672, 0
      %690 = vmatprep.subr.bf16.mxu0 %v681
      %691 = vmatpush1.bf16.msra.mxu0 %v680
      %692 = vmatprep.subr.bf16.mxu0 0
      %693 = vmatpush1.bf16.msra.mxu0 0
      %694 = vmatprep.subr.bf16.mxu0 0
      %695 = vmatpush1.bf16.msra.mxu0 0
      %696 = vmatprep.subr.bf16.mxu0 0
      %697 = vmatpush1.bf16.msra.mxu0 0
      %698 = vmatprep.subr.bf16.mxu0 0
      %699 = vmatpush1.bf16.msra.mxu0 0
      %700 = vmatprep.subr.bf16.mxu0 0
      %701 = vmatpush1.bf16.msra.mxu0 0
      %702 = vmatprep.subr.bf16.mxu0 0
      %703 = vmatpush1.bf16.msra.mxu0 0
      %704 = vmatprep.subr.bf16.mxu0 0
      %705 = vmatpush1.bf16.msra.mxu0 0
      %706 = vmatprep.subr.bf16.mxu0 0
      %707 = vmatpush1.bf16.msra.mxu0 0
      %708 = vmatprep.subr.bf16.mxu0 0
      %709 = vmatpush1.bf16.msra.mxu0 0
      %710 = vmatprep.subr.bf16.mxu0 0
      %711 = vmatpush1.bf16.msra.mxu0 0
      %712 = vmatprep.subr.bf16.mxu0 0
      %713 = vmatpush1.bf16.msra.mxu0 0
      %714 = vmatprep.subr.bf16.mxu0 0
      %715 = vmatpush1.bf16.msra.mxu0 0
      %716 = vmatprep.subr.bf16.mxu0 0
      %717 = vmatpush1.bf16.msra.mxu0 0
      %718 = vmatprep.subr.bf16.mxu0 0
      %719 = vmatpush1.bf16.msra.mxu0 0
      %720 = vmatprep.subr.bf16.mxu0 0
      %721 = vmatpush1.bf16.msra.mxu0 0
      %722 = vmatprep.mubr.bf16.mxu0 0
      %723 = vmatmul.mubr.bf16.gmra.mrb[0].mxu0 %v685
      %v724 = vpop.f32.mrb[0].mxu0
      %v725 = vadd.f32 0.0, %v724
      %v726 = vpop.f32.mrb[0].mxu0
      %v727 = vadd.f32 0.0, %v726
      %v728 = vpop.f32.mrb[0].mxu0
      %v729 = vadd.f32 0.0, %v728
      %v730 = vpop.f32.mrb[0].mxu0
      %v731 = vadd.f32 0.0, %v730
      %732 = vmatprep.mubr.bf16.mxu0 0
      %733 = vmatmul.mubr.bf16.gmra.mrb[0].mxu0 %v688
      %v734 = vpop.f32.mrb[0].mxu0
      %v735 = vadd.f32 0.0, %v734
      %v736 = vpop.f32.mrb[0].mxu0
      %v737 = vadd.f32 0.0, %v736
      %v738 = vpop.f32.mrb[0].mxu0
      %v739 = vadd.f32 0.0, %v738
      %v740 = vpop.f32.mrb[0].mxu0
      %v741 = vadd.f32 0.0, %v740
      %742 = vdwg.mxu0
      %v743 = vadd.f32 %v650, %v725
      %v744 = vadd.f32 %v651, %v727
      %v745 = vadd.f32 %v652, %v729
      %v746 = vadd.f32 %v653, %v731
      %v747 = vadd.f32 %v654, %v735
      %v748 = vadd.f32 %v655, %v737
      %v749 = vadd.f32 %v656, %v739
      %v750 = vadd.f32 %v657, %v741
      %751 = vrot.lane.b32.xlu0 %v422, 18
      %v752 = vpop.permute.xlu0 %751
      %v753 = vrot.slane %v752, 4
      %vm754 = vcmask 146432
      %v755 = vsel %vm754, %v753, %v752
      %vm756 = vcmp.ne.s16.totalorder %v755, 0
      %vm757 = vcmp.ne.s16.totalorder %v753, 0
      %v758 = vsel %vm756, %v232, 0
      %v759 = vsel %vm757, %v241, 0
      %v760 = vsel %vm756, %v233, 0
      %v761 = vsel %vm757, %v242, 0
      %s762 = scalar_lea.vmem %s1, 80
      %v763 = vld [vmem:[%s762] sm:$0xf]
      %v764 = vld [vmem:[%s762 + $0x4] sm:$0xf]
      %v765 = vld [vmem:[%s762 + $0x8] sm:$0xf]
      %v766 = vld [vmem:[%s762 + $0xc] sm:$0xf]
      %v771 = vunpack.c.l.b16 %v763
      %v772 = vunpack.c.l.b16 %v764
      %v773 = vunpack.c.l.b16 %v765
      %v774 = vunpack.c.l.b16 %v766
      %v775 = vpack.c.b16 %v772, %v771
      %v776 = vpack.c.b16 %v774, %v773
      %v781 = vunpack.c.l.b16 %v758
      %v782 = vunpack.c.h.b16 %v758
      %v783 = vunpack.c.l.b16 %v759
      %v784 = vunpack.c.l.b16 %v760
      %v785 = vunpack.c.h.b16 %v760
      %v786 = vunpack.c.l.b16 %v761
      %v787 = vpack.c.b16 %v784, %v781
      %v788 = vpack.c.b16 %v785, %v782
      %v789 = vpack.c.b16 %v786, %v783
      %790 = vrot.lane.b32.xlu0 %v787, 110
      %v791 = vpop.permute.xlu0 %790
      %792 = vrot.lane.b32.xlu0 %v788, 110
      %v793 = vpop.permute.xlu0 %792
      %794 = vrot.lane.b32.xlu0 %v789, 110
      %v795 = vpop.permute.xlu0 %794
      %vm796 = vcmask 900096
      %v797 = vsel %vm796, %v791, %v793
      %v798 = vsel %vm796, %v793, %v795
      %v802 = vsel %vm282, %v775, 0
      %v805 = vsel %vm282, %v776, 0
      %807 = vmatprep.subr.bf16.mxu0 %v798
      %808 = vmatpush1.bf16.msra.mxu0 %v797
      %809 = vmatprep.subr.bf16.mxu0 0
      %810 = vmatpush1.bf16.msra.mxu0 0
      %811 = vmatprep.subr.bf16.mxu0 0
      %812 = vmatpush1.bf16.msra.mxu0 0
      %813 = vmatprep.subr.bf16.mxu0 0
      %814 = vmatpush1.bf16.msra.mxu0 0
      %815 = vmatprep.subr.bf16.mxu0 0
      %816 = vmatpush1.bf16.msra.mxu0 0
      %817 = vmatprep.subr.bf16.mxu0 0
      %818 = vmatpush1.bf16.msra.mxu0 0
      %819 = vmatprep.subr.bf16.mxu0 0
      %820 = vmatpush1.bf16.msra.mxu0 0
      %821 = vmatprep.subr.bf16.mxu0 0
      %822 = vmatpush1.bf16.msra.mxu0 0
      %823 = vmatprep.subr.bf16.mxu0 0
      %824 = vmatpush1.bf16.msra.mxu0 0
      %825 = vmatprep.subr.bf16.mxu0 0
      %826 = vmatpush1.bf16.msra.mxu0 0
      %827 = vmatprep.subr.bf16.mxu0 0
      %828 = vmatpush1.bf16.msra.mxu0 0
      %829 = vmatprep.subr.bf16.mxu0 0
      %830 = vmatpush1.bf16.msra.mxu0 0
      %831 = vmatprep.subr.bf16.mxu0 0
      %832 = vmatpush1.bf16.msra.mxu0 0
      %833 = vmatprep.subr.bf16.mxu0 0
      %834 = vmatpush1.bf16.msra.mxu0 0
      %835 = vmatprep.subr.bf16.mxu0 0
      %836 = vmatpush1.bf16.msra.mxu0 0
      %837 = vmatprep.subr.bf16.mxu0 0
      %838 = vmatpush1.bf16.msra.mxu0 0
      %839 = vmatprep.mubr.bf16.mxu0 0
      %840 = vmatmul.mubr.bf16.gmra.mrb[0].mxu0 %v802
      %v841 = vpop.f32.mrb[0].mxu0
      %v842 = vadd.f32 0.0, %v841
      %v843 = vpop.f32.mrb[0].mxu0
      %v844 = vadd.f32 0.0, %v843
      %v845 = vpop.f32.mrb[0].mxu0
      %v846 = vadd.f32 0.0, %v845
      %v847 = vpop.f32.mrb[0].mxu0
      %v848 = vadd.f32 0.0, %v847
      %849 = vmatprep.mubr.bf16.mxu0 0
      %850 = vmatmul.mubr.bf16.gmra.mrb[0].mxu0 %v805
      %v851 = vpop.f32.mrb[0].mxu0
      %v852 = vadd.f32 0.0, %v851
      %v853 = vpop.f32.mrb[0].mxu0
      %v854 = vadd.f32 0.0, %v853
      %v855 = vpop.f32.mrb[0].mxu0
      %v856 = vadd.f32 0.0, %v855
      %v857 = vpop.f32.mrb[0].mxu0
      %v858 = vadd.f32 0.0, %v857
      %859 = vdwg.mxu0
      %v860 = vadd.f32 %v743, %v842
      %v861 = vadd.f32 %v744, %v844
      %v862 = vadd.f32 %v745, %v846
      %v863 = vadd.f32 %v746, %v848
      %v864 = vadd.f32 %v747, %v852
      %v865 = vadd.f32 %v748, %v854
      %v866 = vadd.f32 %v749, %v856
      %v867 = vadd.f32 %v750, %v858
      %868 = vrot.lane.b32.xlu0 %v540, 32
      %v869 = vpop.permute.xlu0 %868
      %v870 = vrot.slane %v869, 4
      %vm871 = vcmask 261120
      %v872 = vsel %vm871, %v870, %v869
      %vm873 = vcmp.ne.s16.totalorder %v872, 0
      %vm874 = vcmp.ne.s16.totalorder %v870, 0
      %v875 = vsel %vm873, %v232, 0
      %v876 = vsel %vm874, %v241, 0
      %v877 = vsel %vm873, %v233, 0
      %v878 = vsel %vm874, %v242, 0
      %s879 = scalar_lea.vmem %s1, 96
      %v880 = vld [vmem:[%s879] sm:$0xf]
      %v881 = vld [vmem:[%s879 + $0x4] sm:$0xf]
      %v882 = vld [vmem:[%s879 + $0x8] sm:$0xf]
      %v883 = vld [vmem:[%s879 + $0xc] sm:$0xf]
      %v888 = vunpack.c.l.b16 %v880
      %v889 = vunpack.c.l.b16 %v881
      %v890 = vunpack.c.l.b16 %v882
      %v891 = vunpack.c.l.b16 %v883
      %v892 = vpack.c.b16 %v889, %v888
      %v893 = vpack.c.b16 %v891, %v890
      %v898 = vunpack.c.l.b16 %v875
      %v899 = vunpack.c.h.b16 %v875
      %v900 = vunpack.c.l.b16 %v876
      %v901 = vunpack.c.l.b16 %v877
      %v902 = vunpack.c.h.b16 %v877
      %v903 = vunpack.c.l.b16 %v878
      %v904 = vpack.c.b16 %v901, %v898
      %v905 = vpack.c.b16 %v902, %v899
      %v906 = vpack.c.b16 %v903, %v900
      %907 = vrot.lane.b32.xlu0 %v904, 96
      %v908 = vpop.permute.xlu0 %907
      %909 = vrot.lane.b32.xlu0 %v905, 96
      %v910 = vpop.permute.xlu0 %909
      %911 = vrot.lane.b32.xlu0 %v906, 96
      %v912 = vpop.permute.xlu0 %911
      %vm913 = vcmask 785408
      %v914 = vsel %vm913, %v908, %v910
      %v915 = vsel %vm913, %v910, %v912
      %v919 = vsel %vm282, %v892, 0
      %v922 = vsel %vm282, %v893, 0
      %924 = vmatprep.subr.bf16.mxu0 %v915
      %925 = vmatpush1.bf16.msra.mxu0 %v914
      %926 = vmatprep.subr.bf16.mxu0 0
      %927 = vmatpush1.bf16.msra.mxu0 0
      %928 = vmatprep.subr.bf16.mxu0 0
      %929 = vmatpush1.bf16.msra.mxu0 0
      %930 = vmatprep.subr.bf16.mxu0 0
      %931 = vmatpush1.bf16.msra.mxu0 0
      %932 = vmatprep.subr.bf16.mxu0 0
      %933 = vmatpush1.bf16.msra.mxu0 0
      %934 = vmatprep.subr.bf16.mxu0 0
      %935 = vmatpush1.bf16.msra.mxu0 0
      %936 = vmatprep.subr.bf16.mxu0 0
      %937 = vmatpush1.bf16.msra.mxu0 0
      %938 = vmatprep.subr.bf16.mxu0 0
      %939 = vmatpush1.bf16.msra.mxu0 0
      %940 = vmatprep.subr.bf16.mxu0 0
      %941 = vmatpush1.bf16.msra.mxu0 0
      %942 = vmatprep.subr.bf16.mxu0 0
      %943 = vmatpush1.bf16.msra.mxu0 0
      %944 = vmatprep.subr.bf16.mxu0 0
      %945 = vmatpush1.bf16.msra.mxu0 0
      %946 = vmatprep.subr.bf16.mxu0 0
      %947 = vmatpush1.bf16.msra.mxu0 0
      %948 = vmatprep.subr.bf16.mxu0 0
      %949 = vmatpush1.bf16.msra.mxu0 0
      %950 = vmatprep.subr.bf16.mxu0 0
      %951 = vmatpush1.bf16.msra.mxu0 0
      %952 = vmatprep.subr.bf16.mxu0 0
      %953 = vmatpush1.bf16.msra.mxu0 0
      %954 = vmatprep.subr.bf16.mxu0 0
      %955 = vmatpush1.bf16.msra.mxu0 0
      %956 = vmatprep.mubr.bf16.mxu0 0
      %957 = vmatmul.mubr.bf16.gmra.mrb[0].mxu0 %v919
      %v958 = vpop.f32.mrb[0].mxu0
      %v959 = vadd.f32 0.0, %v958
      %v960 = vpop.f32.mrb[0].mxu0
      %v961 = vadd.f32 0.0, %v960
      %v962 = vpop.f32.mrb[0].mxu0
      %v963 = vadd.f32 0.0, %v962
      %v964 = vpop.f32.mrb[0].mxu0
      %v965 = vadd.f32 0.0, %v964
      %966 = vmatprep.mubr.bf16.mxu0 0
      %967 = vmatmul.mubr.bf16.gmra.mrb[0].mxu0 %v922
      %v968 = vpop.f32.mrb[0].mxu0
      %v969 = vadd.f32 0.0, %v968
      %v970 = vpop.f32.mrb[0].mxu0
      %v971 = vadd.f32 0.0, %v970
      %v972 = vpop.f32.mrb[0].mxu0
      %v973 = vadd.f32 0.0, %v972
      %v974 = vpop.f32.mrb[0].mxu0
      %v975 = vadd.f32 0.0, %v974
      %976 = vdwg.mxu0
      %v977 = vadd.f32 %v860, %v959
      %v978 = vadd.f32 %v861, %v961
      %v979 = vadd.f32 %v862, %v963
      %v980 = vadd.f32 %v863, %v965
      %v981 = vadd.f32 %v864, %v969
      %v982 = vadd.f32 %v865, %v971
      %v983 = vadd.f32 %v866, %v973
      %v984 = vadd.f32 %v867, %v975
      %s985 = scalar_lea.vmem %s1, 112
      %v986 = vld [vmem:[%s985] sm:$0xf]
      %v987 = vld [vmem:[%s985 + $0x4] sm:$0xf]
      %v988 = vld [vmem:[%s985 + $0x8] sm:$0xf]
      %v989 = vld [vmem:[%s985 + $0xc] sm:$0xf]
      %v994 = vunpack.c.l.b16 %v986
      %v995 = vunpack.c.l.b16 %v987
      %v996 = vunpack.c.l.b16 %v988
      %v997 = vunpack.c.l.b16 %v989
      %v998 = vpack.c.b16 %v995, %v994
      %v999 = vpack.c.b16 %v997, %v996
      %1000 = vrot.lane.b32.xlu0 %v268, 95
      %v1001 = vpop.permute.xlu0 %1000
      %1002 = vrot.lane.b32.xlu0 %v269, 95
      %v1003 = vpop.permute.xlu0 %1002
      %1004 = vrot.lane.b32.xlu0 %v270, 95
      %v1005 = vpop.permute.xlu0 %1004
      %vm1006 = vcmask 777216
      %v1007 = vsel %vm1006, %v1001, %v1003
      %v1008 = vsel %vm1006, %v1003, %v1005
      %v1012 = vsel %vm282, %v998, 0
      %v1015 = vsel %vm282, %v999, 0
      %1017 = vmatprep.subr.bf16.mxu0 %v1008
      %1018 = vmatpush1.bf16.msra.mxu0 %v1007
      %1019 = vmatprep.subr.bf16.mxu0 0
      %1020 = vmatpush1.bf16.msra.mxu0 0
      %1021 = vmatprep.subr.bf16.mxu0 0
      %1022 = vmatpush1.bf16.msra.mxu0 0
      %1023 = vmatprep.subr.bf16.mxu0 0
      %1024 = vmatpush1.bf16.msra.mxu0 0
      %1025 = vmatprep.subr.bf16.mxu0 0
      %1026 = vmatpush1.bf16.msra.mxu0 0
      %1027 = vmatprep.subr.bf16.mxu0 0
      %1028 = vmatpush1.bf16.msra.mxu0 0
      %1029 = vmatprep.subr.bf16.mxu0 0
      %1030 = vmatpush1.bf16.msra.mxu0 0
      %1031 = vmatprep.subr.bf16.mxu0 0
      %1032 = vmatpush1.bf16.msra.mxu0 0
      %1033 = vmatprep.subr.bf16.mxu0 0
      %1034 = vmatpush1.bf16.msra.mxu0 0
      %1035 = vmatprep.subr.bf16.mxu0 0
      %1036 = vmatpush1.bf16.msra.mxu0 0
      %1037 = vmatprep.subr.bf16.mxu0 0
      %1038 = vmatpush1.bf16.msra.mxu0 0
      %1039 = vmatprep.subr.bf16.mxu0 0
      %1040 = vmatpush1.bf16.msra.mxu0 0
      %1041 = vmatprep.subr.bf16.mxu0 0
      %1042 = vmatpush1.bf16.msra.mxu0 0
      %1043 = vmatprep.subr.bf16.mxu0 0
      %1044 = vmatpush1.bf16.msra.mxu0 0
      %1045 = vmatprep.subr.bf16.mxu0 0
      %1046 = vmatpush1.bf16.msra.mxu0 0
      %1047 = vmatprep.subr.bf16.mxu0 0
      %1048 = vmatpush1.bf16.msra.mxu0 0
      %1049 = vmatprep.mubr.bf16.mxu0 0
      %1050 = vmatmul.mubr.bf16.gmra.mrb[0].mxu0 %v1012
      %v1051 = vpop.f32.mrb[0].mxu0
      %v1052 = vadd.f32 0.0, %v1051
      %v1053 = vpop.f32.mrb[0].mxu0
      %v1054 = vadd.f32 0.0, %v1053
      %v1055 = vpop.f32.mrb[0].mxu0
      %v1056 = vadd.f32 0.0, %v1055
      %v1057 = vpop.f32.mrb[0].mxu0
      %v1058 = vadd.f32 0.0, %v1057
      %1059 = vmatprep.mubr.bf16.mxu0 0
      %1060 = vmatmul.mubr.bf16.gmra.mrb[0].mxu0 %v1015
      %v1061 = vpop.f32.mrb[0].mxu0
      %v1062 = vadd.f32 0.0, %v1061
      %v1063 = vpop.f32.mrb[0].mxu0
      %v1064 = vadd.f32 0.0, %v1063
      %v1065 = vpop.f32.mrb[0].mxu0
      %v1066 = vadd.f32 0.0, %v1065
      %v1067 = vpop.f32.mrb[0].mxu0
      %v1068 = vadd.f32 0.0, %v1067
      %1069 = vdwg.mxu0
      %v1070 = vadd.f32 %v977, %v1052
      %v1071 = vadd.f32 %v978, %v1054
      %v1072 = vadd.f32 %v979, %v1056
      %v1073 = vadd.f32 %v980, %v1058
      %v1074 = vadd.f32 %v981, %v1062
      %v1075 = vadd.f32 %v982, %v1064
      %v1076 = vadd.f32 %v983, %v1066
      %v1077 = vadd.f32 %v984, %v1068
      %1078 = vrot.lane.b32.xlu0 %v422, 34
      %v1079 = vpop.permute.xlu0 %1078
      %v1080 = vrot.slane %v1079, 4
      %vm1081 = vcmask 277504
      %v1082 = vsel %vm1081, %v1080, %v1079
      %vm1083 = vcmp.ne.s16.totalorder %v1082, 0
      %vm1084 = vcmp.ne.s16.totalorder %v1080, 0
      %v1085 = vsel %vm1083, %v232, 0
      %v1086 = vsel %vm1084, %v241, 0
      %v1087 = vsel %vm1083, %v233, 0
      %v1088 = vsel %vm1084, %v242, 0
      %s1089 = scalar_lea.vmem %s1, 128
      %v1090 = vld [vmem:[%s1089] sm:$0xf]
      %v1091 = vld [vmem:[%s1089 + $0x4] sm:$0xf]
      %v1092 = vld [vmem:[%s1089 + $0x8] sm:$0xf]
      %v1093 = vld [vmem:[%s1089 + $0xc] sm:$0xf]
      %v1098 = vunpack.c.l.b16 %v1090
      %v1099 = vunpack.c.l.b16 %v1091
      %v1100 = vunpack.c.l.b16 %v1092
      %v1101 = vunpack.c.l.b16 %v1093
      %v1102 = vpack.c.b16 %v1099, %v1098
      %v1103 = vpack.c.b16 %v1101, %v1100
      %v1108 = vunpack.c.l.b16 %v1085
      %v1109 = vunpack.c.h.b16 %v1085
      %v1110 = vunpack.c.l.b16 %v1086
      %v1111 = vunpack.c.l.b16 %v1087
      %v1112 = vunpack.c.h.b16 %v1087
      %v1113 = vunpack.c.l.b16 %v1088
      %v1114 = vpack.c.b16 %v1111, %v1108
      %v1115 = vpack.c.b16 %v1112, %v1109
      %v1116 = vpack.c.b16 %v1113, %v1110
      %1117 = vrot.lane.b32.xlu0 %v1114, 94
      %v1118 = vpop.permute.xlu0 %1117
      %1119 = vrot.lane.b32.xlu0 %v1115, 94
      %v1120 = vpop.permute.xlu0 %1119
      %1121 = vrot.lane.b32.xlu0 %v1116, 94
      %v1122 = vpop.permute.xlu0 %1121
      %vm1123 = vcmask 769024
      %v1124 = vsel %vm1123, %v1118, %v1120
      %v1125 = vsel %vm1123, %v1120, %v1122
      %v1129 = vsel %vm282, %v1102, 0
      %v1132 = vsel %vm282, %v1103, 0
      %1134 = vmatprep.subr.bf16.mxu0 %v1125
      %1135 = vmatpush1.bf16.msra.mxu0 %v1124
      %1136 = vmatprep.subr.bf16.mxu0 0
      %1137 = vmatpush1.bf16.msra.mxu0 0
      %1138 = vmatprep.subr.bf16.mxu0 0
      %1139 = vmatpush1.bf16.msra.mxu0 0
      %1140 = vmatprep.subr.bf16.mxu0 0
      %1141 = vmatpush1.bf16.msra.mxu0 0
      %1142 = vmatprep.subr.bf16.mxu0 0
      %1143 = vmatpush1.bf16.msra.mxu0 0
      %1144 = vmatprep.subr.bf16.mxu0 0
      %1145 = vmatpush1.bf16.msra.mxu0 0
      %1146 = vmatprep.subr.bf16.mxu0 0
      %1147 = vmatpush1.bf16.msra.mxu0 0
      %1148 = vmatprep.subr.bf16.mxu0 0
      %1149 = vmatpush1.bf16.msra.mxu0 0
      %1150 = vmatprep.subr.bf16.mxu0 0
      %1151 = vmatpush1.bf16.msra.mxu0 0
      %1152 = vmatprep.subr.bf16.mxu0 0
      %1153 = vmatpush1.bf16.msra.mxu0 0
      %1154 = vmatprep.subr.bf16.mxu0 0
      %1155 = vmatpush1.bf16.msra.mxu0 0
      %1156 = vmatprep.subr.bf16.mxu0 0
      %1157 = vmatpush1.bf16.msra.mxu0 0
      %1158 = vmatprep.subr.bf16.mxu0 0
      %1159 = vmatpush1.bf16.msra.mxu0 0
      %1160 = vmatprep.subr.bf16.mxu0 0
      %1161 = vmatpush1.bf16.msra.mxu0 0
      %1162 = vmatprep.subr.bf16.mxu0 0
      %1163 = vmatpush1.bf16.msra.mxu0 0
      %1164 = vmatprep.subr.bf16.mxu0 0
      %1165 = vmatpush1.bf16.msra.mxu0 0
      %1166 = vmatprep.mubr.bf16.mxu0 0
      %1167 = vmatmul.mubr.bf16.gmra.mrb[0].mxu0 %v1129
      %v1168 = vpop.f32.mrb[0].mxu0
      %v1169 = vadd.f32 0.0, %v1168
      %v1170 = vpop.f32.mrb[0].mxu0
      %v1171 = vadd.f32 0.0, %v1170
      %v1172 = vpop.f32.mrb[0].mxu0
      %v1173 = vadd.f32 0.0, %v1172
      %v1174 = vpop.f32.mrb[0].mxu0
      %v1175 = vadd.f32 0.0, %v1174
      %1176 = vmatprep.mubr.bf16.mxu0 0
      %1177 = vmatmul.mubr.bf16.gmra.mrb[0].mxu0 %v1132
      %v1178 = vpop.f32.mrb[0].mxu0
      %v1179 = vadd.f32 0.0, %v1178
      %v1180 = vpop.f32.mrb[0].mxu0
      %v1181 = vadd.f32 0.0, %v1180
      %v1182 = vpop.f32.mrb[0].mxu0
      %v1183 = vadd.f32 0.0, %v1182
      %v1184 = vpop.f32.mrb[0].mxu0
      %v1185 = vadd.f32 0.0, %v1184
      %1186 = vdwg.mxu0
      %v1187 = vadd.f32 %v1070, %v1169
      %v1188 = vadd.f32 %v1071, %v1171
      %v1189 = vadd.f32 %v1072, %v1173
      %v1190 = vadd.f32 %v1073, %v1175
      %v1191 = vadd.f32 %v1074, %v1179
      %v1192 = vadd.f32 %v1075, %v1181
      %v1193 = vadd.f32 %v1076, %v1183
      %v1194 = vadd.f32 %v1077, %v1185
      %v1195 = vadd.f32 %v1187, %v1188
      %1196 = vadd.xlane.f32.xlu0 %v1195
      %v1197 = vpop.xlane.xlu0 %1196
      %v1198 = vadd.f32 %v1189, %v1190
      %1199 = vadd.xlane.f32.xlu0 %v1198
      %v1200 = vpop.xlane.xlu0 %1199
      %v1201 = vadd.f32 %v1191, %v1192
      %1202 = vadd.xlane.f32.xlu0 %v1201
      %v1203 = vpop.xlane.xlu0 %1202
      %v1204 = vadd.f32 %v1193, %v1194
      %1205 = vadd.xlane.f32.xlu0 %v1204
      %v1206 = vpop.xlane.xlu0 %1205
      %v1207 = vadd.f32 %v1197, %v1200
      %v1208 = vadd.f32 %v1207, %v1203
      %v1209 = vadd.f32 %v1208, %v1206
      %v1210 = vmul.f32 %v1209, 0.0009765625
      %1212 = vset.pattern.permute.xlu0 0
      %1213 = vperm.xlu0 %1212, %v1210
      %v1214 = vpop.permute.xlu0 %1213
      %v1216 = vsub.f32 %v1187, %v1214
      %v1217 = vsub.f32 %v1188, %v1214
      %v1218 = vsub.f32 %v1189, %v1214
      %v1219 = vsub.f32 %v1190, %v1214
      %v1220 = vsub.f32 %v1191, %v1214
      %v1221 = vsub.f32 %v1192, %v1214
      %v1222 = vsub.f32 %v1193, %v1214
      %v1223 = vsub.f32 %v1194, %v1214
      %v1224 = vmul.f32 %v1216, %v1216
      %v1225 = vmul.f32 %v1217, %v1217
      %v1226 = vmul.f32 %v1218, %v1218
      %v1227 = vmul.f32 %v1219, %v1219
      %v1228 = vmul.f32 %v1220, %v1220
      %v1229 = vmul.f32 %v1221, %v1221
      %v1230 = vmul.f32 %v1222, %v1222
      %v1231 = vmul.f32 %v1223, %v1223
      %v1232 = vadd.f32 %v1224, %v1225
      %1233 = vadd.xlane.f32.xlu0 %v1232
      %v1234 = vpop.xlane.xlu0 %1233
      %v1235 = vadd.f32 %v1226, %v1227
      %1236 = vadd.xlane.f32.xlu0 %v1235
      %v1237 = vpop.xlane.xlu0 %1236
      %v1238 = vadd.f32 %v1228, %v1229
      %1239 = vadd.xlane.f32.xlu0 %v1238
      %v1240 = vpop.xlane.xlu0 %1239
      %v1241 = vadd.f32 %v1230, %v1231
      %1242 = vadd.xlane.f32.xlu0 %v1241
      %v1243 = vpop.xlane.xlu0 %1242
      %v1244 = vadd.f32 %v1234, %v1237
      %v1245 = vadd.f32 %v1244, %v1240
      %v1246 = vadd.f32 %v1245, %v1243
      %v1247 = vmul.f32 %v1246, 0.0009765625
      %v1248 = vld [vmem:[%s2] sm:$0xff]
      %v1249 = vld [vmem:[%s2 + $0x8] sm:$0xff]
      %v1250 = vld [vmem:[%s2 + $0x10] sm:$0xff]
      %v1251 = vld [vmem:[%s2 + $0x18] sm:$0xff]
      %v1252 = vadd.f32 %v1247, 1e-05
      %v1253 = vrsqrt.pop %v1252
      %v1254 = vmul.f32 %v1248, %v1253
      %v1255 = vmul.f32 %v1249, %v1253
      %v1256 = vmul.f32 %v1250, %v1253
      %v1257 = vmul.f32 %v1251, %v1253
      %1259 = vset.pattern.permute.xlu0 0
      %1260 = vperm.xlu0 %1259, %v1254
      %v1261 = vpop.permute.xlu0 %1260
      %1264 = vset.pattern.permute.xlu0 0
      %1265 = vperm.xlu0 %1264, %v1255
      %v1266 = vpop.permute.xlu0 %1265
      %1269 = vset.pattern.permute.xlu0 0
      %1270 = vperm.xlu0 %1269, %v1256
      %v1271 = vpop.permute.xlu0 %1270
      %1274 = vset.pattern.permute.xlu0 0
      %1275 = vperm.xlu0 %1274, %v1257
      %v1276 = vpop.permute.xlu0 %1275
      %v1278 = vmul.f32 %v1216, %v1261
      %v1279 = vmul.f32 %v1217, %v1261
      %v1280 = vmul.f32 %v1218, %v1266
      %v1281 = vmul.f32 %v1219, %v1266
      %v1282 = vmul.f32 %v1220, %v1271
      %v1283 = vmul.f32 %v1221, %v1271
      %v1284 = vmul.f32 %v1222, %v1276
      %v1285 = vmul.f32 %v1223, %v1276
      %v1286 = vld [vmem:[%s3] sm:$0xff]
      %v1287 = vld [vmem:[%s3 + $0x8] sm:$0xff]
      %v1288 = vld [vmem:[%s3 + $0x10] sm:$0xff]
      %v1289 = vld [vmem:[%s3 + $0x18] sm:$0xff]
      %1291 = vset.pattern.permute.xlu0 0
      %1292 = vperm.xlu0 %1291, %v1286
      %v1293 = vpop.permute.xlu0 %1292
      %1296 = vset.pattern.permute.xlu0 0
      %1297 = vperm.xlu0 %1296, %v1287
      %v1298 = vpop.permute.xlu0 %1297
      %1301 = vset.pattern.permute.xlu0 0
      %1302 = vperm.xlu0 %1301, %v1288
      %v1303 = vpop.permute.xlu0 %1302
      %1306 = vset.pattern.permute.xlu0 0
      %1307 = vperm.xlu0 %1306, %v1289
      %v1308 = vpop.permute.xlu0 %1307
      %v1310 = vadd.f32 %v1278, %v1293
      %v1311 = vadd.f32 %v1279, %v1293
      %v1312 = vadd.f32 %v1280, %v1298
      %v1313 = vadd.f32 %v1281, %v1298
      %v1314 = vadd.f32 %v1282, %v1303
      %v1315 = vadd.f32 %v1283, %v1303
      %v1316 = vadd.f32 %v1284, %v1308
      %v1317 = vadd.f32 %v1285, %v1308
      %v1318 = vmax.f32 %v1310, 0.0
      %v1319 = vmax.f32 %v1311, 0.0
      %v1320 = vmax.f32 %v1312, 0.0
      %v1321 = vmax.f32 %v1313, 0.0
      %v1322 = vmax.f32 %v1314, 0.0
      %v1323 = vmax.f32 %v1315, 0.0
      %v1324 = vmax.f32 %v1316, 0.0
      %v1325 = vmax.f32 %v1317, 0.0
      %v1326 = vpack.c.bf16 %v1320, %v1318
      %v1327 = vpack.c.bf16 %v1321, %v1319
      %v1328 = vpack.c.bf16 %v1324, %v1322
      %v1329 = vpack.c.bf16 %v1325, %v1323
      %v1334 = vunpack.c.l.b16 %v1326
      %v1335 = vunpack.c.l.b16 %v1327
      %v1336 = vunpack.c.h.b16 %v1326
      %v1337 = vunpack.c.h.b16 %v1327
      %v1338 = vunpack.c.l.b16 %v1328
      %v1339 = vunpack.c.l.b16 %v1329
      %v1340 = vunpack.c.h.b16 %v1328
      %v1341 = vunpack.c.h.b16 %v1329
      %v1342 = vpack.c.b16 %v1335, %v1334
      %v1343 = vpack.c.b16 %v1337, %v1336
      %v1344 = vpack.c.b16 %v1339, %v1338
      %v1345 = vpack.c.b16 %v1341, %v1340
      %1350 = vst [vmem:[%s197] sm:$0xff] %v1342
      %1351 = vst [vmem:[%s197 + $0x8] sm:$0xff] %v1343
      %1352 = vst [vmem:[%s197 + $0x10] sm:$0xff] %v1344
      %1353 = vst [vmem:[%s197 + $0x18] sm:$0xff] %v1345
      %p1354 = scmp.lt.s32.totalorder %s15, 1
      %s1355 = scalar_select %p1354, %s15, 1
      %s1356 = smul.addr %s1355, 8
      %s1357 = smul.addr %s1356, 4
      %s1358 = scalar_lea.vmem %s4, %s1357
      // Predicated region
      $region37: #{generator_forward.8} parent=35 // pred_check
        %p1359 = pneg %p122
      $region38: #{generator_forward.8} parent=35 // pred_check_branch
        %1361 = sbr.rel (%p1359) target = $region40
      $region39: #{generator_forward.8} parent=35 // pred_region
        _
      $region40: #{generator_forward.8} parent=35 // pred_fallthru
        _
    $region36: #{generator_forward.8} parent=5 // pred_fallthru
      _
    %p1362 = scmp.le.s32.totalorder 2, %s10
    // Predicated region
    $region41: #{generator_forward.8} parent=5 // pred_check
      %p1363 = pneg %p1362
    $region42: #{generator_forward.8} parent=5 // pred_check_branch
      %1365 = sbr.rel (%p1363) target = $region44
    $region43: #{generator_forward.8} parent=5 // pred_region
      %s1366 = ssub.s32 %s10, 2
      // Predicated region
      $region45: #{generator_forward.8} parent=43 // pred_check
        %p1367 = pneg %p128
      $region46: #{generator_forward.8} parent=43 // pred_check_branch
        %1369 = sbr.rel (%p1367) target = $region48
      $region47: #{generator_forward.8} parent=43 // pred_region
        %p1370 = scmp.lt.s32.totalorder %s16, 1
        %s1371 = scalar_select %p1370, %s16, 1
        %s1372 = smul.addr %s1371, 8
        %s1373 = smul.addr %s1372, 4
        %s1374 = scalar_lea.vmem %s4, %s1373
      $region48: #{generator_forward.8} parent=43 // pred_fallthru
        _
    $region44: #{generator_forward.8} parent=5 // pred_fallthru
      _
  $region6: #{generator_forward.8} parent=0 // loop_footer
    %s14 = sadd.s32 1, %s10
  $region7: #{generator_forward.8} parent=0 // loop_footer_branch
    %9 = sbr.rel target = $region3
  $region8: #{generator_forward.8} parent=0 // loop_exit
    _

// kernel: generator_forward.9
$region0: #{generator_forward.9}
  #allocation0 [shape = 'u32[]', space=smem, size = 0x4, offset = 0x4, fixed_abs, tag = 'smem constant byte address 0x4 - core index']
  #allocation1 [shape = 'u32[144,128]{1,0:T(1,128)}', space=vmem, size = 0x12000, scoped, tag = 'internal scratch']
  %s0 = inlined_call_operand.vmem [shape: bf16[2,8,1090], index: 0, kind: input, shape index: {}]
  %s1 = inlined_call_operand.vmem [shape: bf16[9,12,8], index: 1, kind: input, shape index: {}]
  %s2 = inlined_call_operand.vmem [shape: f32[12,1], index: 2, kind: input, shape index: {}]
  %s3 = inlined_call_operand.vmem [shape: f32[2,12,1024], index: 3, kind: output, shape index: {}]
  %s4 = sld [smem:[#allocation0]]
  $region45: #{generator_forward.9} parent=0
    _
  %s6 = ssub.s32 1, %s4
  %s7 = scalar_select 0, %s6, %s4
  loop: start=0, step=1, limit=4
  $region2: #{generator_forward.9} parent=0 // loop_pre_header
    _
  $region3: #{generator_forward.9} parent=0 // loop_header
    %s9 = sphi 0, %s13
    %p10 = scmp.ge.s32.totalorder %s9, 4
    %s19 = sphi 0, %s21
    %s22 = sphi 0, %s19
    %s23 = sphi 0, %s22
    %s39 = sphi 0, %s23
    %s43 = sphi 0, %s43
    %s45 = sphi 0, %s43
    %s46 = sphi 0, %s45
    %s60 = sphi 0, %s46
    %s64 = sphi 0, %s64
    %s66 = sphi 0, %s64
    %s67 = sphi 0, %s66
    %s81 = sphi 0, %s67
    %s87 = sphi 0, %s89
    %s90 = sphi 0, %s87
    %s91 = sphi 0, %s90
    %s107 = sphi 0, %s91
  $region4: #{generator_forward.9} parent=0 // loop_header_branch
    %12 = sbr.rel (%p10) target = $region8
  $region5: #{generator_forward.9} parent=0 // loop_body
    %s14 = ssub.s32 %s9, 1
    %s15 = ssub.s32 %s9, 2
    %s16 = sadd.s32 %s9, 1
    %s17 = ssub.s32 %s9, %s16
    %p18 = scmp.eq.s32.totalorder %s17, 0
    %s20 = sadd.s32 %s19, 1
    %s21 = scalar_select %p18, %s19, %s20
    %p24 = pneg %p18
    %p25 = scmp.eq.s32.totalorder %s9, 1
    %p26 = por %p24, %p25
    %p27 = scmp.ne.s32.totalorder %s19, %s22
    %p28 = scmp.eq.s32.totalorder %s9, 0
    %p29 = por %p27, %p28
    %p30 = scmp.ne.s32.totalorder %s19, %s22
    %p31 = scmp.eq.s32.totalorder %s14, 1
    %p32 = por %p30, %p31
    %p33 = scmp.ne.s32.totalorder %s22, %s23
    %p34 = scmp.eq.s32.totalorder %s14, 0
    %p35 = por %p33, %p34
    %p36 = scmp.ne.s32.totalorder %s22, %s23
    %p37 = scmp.eq.s32.totalorder %s15, 1
    %p38 = por %p36, %p37
    %p40 = scmp.ne.s32.totalorder %s23, %s39
    %p41 = scmp.eq.s32.totalorder %s15, 0
    %p42 = por %p40, %p41
    %s44 = sadd.s32 %s43, 1
    %p47 = scmp.eq.s32.totalorder %s9, 1
    %p48 = scmp.ne.s32.totalorder %s43, %s45
    %p49 = scmp.eq.s32.totalorder %s9, 0
    %p50 = por %p48, %p49
    %p51 = scmp.ne.s32.totalorder %s43, %s45
    %p52 = scmp.eq.s32.totalorder %s14, 1
    %p53 = por %p51, %p52
    %p54 = scmp.ne.s32.totalorder %s45, %s46
    %p55 = scmp.eq.s32.totalorder %s14, 0
    %p56 = por %p54, %p55
    %p57 = scmp.ne.s32.totalorder %s45, %s46
    %p58 = scmp.eq.s32.totalorder %s15, 1
    %p59 = por %p57, %p58
    %p61 = scmp.ne.s32.totalorder %s46, %s60
    %p62 = scmp.eq.s32.totalorder %s15, 0
    %p63 = por %p61, %p62
    %s65 = sadd.s32 %s64, 1
    %p68 = scmp.eq.s32.totalorder %s9, 1
    %p69 = scmp.ne.s32.totalorder %s64, %s66
    %p70 = scmp.eq.s32.totalorder %s9, 0
    %p71 = por %p69, %p70
    %p72 = scmp.ne.s32.totalorder %s64, %s66
    %p73 = scmp.eq.s32.totalorder %s14, 1
    %p74 = por %p72, %p73
    %p75 = scmp.ne.s32.totalorder %s66, %s67
    %p76 = scmp.eq.s32.totalorder %s14, 0
    %p77 = por %p75, %p76
    %p78 = scmp.ne.s32.totalorder %s66, %s67
    %p79 = scmp.eq.s32.totalorder %s15, 1
    %p80 = por %p78, %p79
    %p82 = scmp.ne.s32.totalorder %s67, %s81
    %p83 = scmp.eq.s32.totalorder %s15, 0
    %p84 = por %p82, %p83
    %s85 = ssub.s32 %s9, %s16
    %p86 = scmp.eq.s32.totalorder %s85, 0
    %s88 = sadd.s32 %s87, 1
    %s89 = scalar_select %p86, %s87, %s88
    %p92 = pneg %p86
    %p93 = scmp.eq.s32.totalorder %s9, 1
    %p94 = por %p92, %p93
    %p95 = scmp.ne.s32.totalorder %s87, %s90
    %p96 = scmp.eq.s32.totalorder %s9, 0
    %p97 = por %p95, %p96
    %p98 = scmp.ne.s32.totalorder %s87, %s90
    %p99 = scmp.eq.s32.totalorder %s14, 1
    %p100 = por %p98, %p99
    %p101 = scmp.ne.s32.totalorder %s90, %s91
    %p102 = scmp.eq.s32.totalorder %s14, 0
    %p103 = por %p101, %p102
    %p104 = scmp.ne.s32.totalorder %s90, %s91
    %p105 = scmp.eq.s32.totalorder %s15, 1
    %p106 = por %p104, %p105
    %p108 = scmp.ne.s32.totalorder %s91, %s107
    %p109 = scmp.eq.s32.totalorder %s15, 0
    %p110 = por %p108, %p109
    %p111 = scmp.le.s32.totalorder 1, %s9
    %p112 = scmp.lt.s32.totalorder %s9, 3
    %p113 = pnand %p111, %p112
    %p114 = pneg %p113
    // Predicated region
    $region9: #{generator_forward.9} parent=5 // pred_check
      _
    $region10: #{generator_forward.9} parent=5 // pred_check_branch
      %116 = sbr.rel (%p113) target = $region12
    $region11: #{generator_forward.9} parent=5 // pred_region
      %s117 = ssub.s32 %s9, 1
      // Predicated region
      $region13: #{generator_forward.9} parent=11 // pred_check
        %p118 = pneg %p56
      $region14: #{generator_forward.9} parent=11 // pred_check_branch
        %120 = sbr.rel (%p118) target = $region16
      $region15: #{generator_forward.9} parent=11 // pred_region
        _
      $region16: #{generator_forward.9} parent=11 // pred_fallthru
        _
      // Predicated region
      $region17: #{generator_forward.9} parent=11 // pred_check
        %p121 = pneg %p77
      $region18: #{generator_forward.9} parent=11 // pred_check_branch
        %123 = sbr.rel (%p121) target = $region20
      $region19: #{generator_forward.9} parent=11 // pred_region
        _
      $region20: #{generator_forward.9} parent=11 // pred_fallthru
        _
    $region12: #{generator_forward.9} parent=5 // pred_fallthru
      _
    %p124 = scmp.lt.s32.totalorder %s9, 2
    // Predicated region
    $region21: #{generator_forward.9} parent=5 // pred_check
      %p125 = pneg %p124
    $region22: #{generator_forward.9} parent=5 // pred_check_branch
      %127 = sbr.rel (%p125) target = $region24
    $region23: #{generator_forward.9} parent=5 // pred_region
      // Predicated region
      $region25: #{generator_forward.9} parent=23 // pred_check
        %p128 = pneg %p29
      $region26: #{generator_forward.9} parent=23 // pred_check_branch
        %130 = sbr.rel (%p128) target = $region28
      $region27: #{generator_forward.9} parent=23 // pred_region
        %p131 = scmp.lt.s32.totalorder %s9, 1
        %s132 = scalar_select %p131, %s9, 1
        %s133 = smul.addr %s132, 9
        %s134 = smul.addr %s133, 4
        %s135 = scalar_lea.vmem %s0, %s134
      $region28: #{generator_forward.9} parent=23 // pred_fallthru
        _
    $region24: #{generator_forward.9} parent=5 // pred_fallthru
      _
    %p136 = scmp.le.s32.totalorder 1, %s9
    %p137 = scmp.lt.s32.totalorder %s9, 3
    %p138 = pnand %p136, %p137
    %p139 = pneg %p138
    // Predicated region
    $region29: #{generator_forward.9} parent=5 // pred_check
      _
    $region30: #{generator_forward.9} parent=5 // pred_check_branch
      %141 = sbr.rel (%p138) target = $region32
    $region31: #{generator_forward.9} parent=5 // pred_region
      %s142 = ssub.s32 %s9, 1
      %p143 = scmp.lt.s32.totalorder %s14, 1
      %s144 = scalar_select %p143, %s14, 1
      %s145 = smul.addr %s144, 9
      %s146 = smul.addr %s145, 4
      %s147 = scalar_lea.vmem %s0, %s146
      %p148 = pneg %p35
      %p149 = pneg %p32
      %p150 = pneg %p56
      %p151 = pneg %p53
      %p152 = pneg %p77
      %p153 = pneg %p74
      %p154 = pneg %p103
      %p155 = pneg %p100
      %p156 = scmp.lt.s32.totalorder %s14, 1
      %s157 = scalar_select %p156, %s14, 1
      %s158 = smul.addr %s157, 16
      %s159 = smul.addr %s158, 8
      %s160 = scalar_lea.vmem %s3, %s159
      %p161 = scmp.lt.s32.totalorder %s14, 1
      %s162 = scalar_select %p161, %s14, 1
      %s163 = smul.addr %s162, 9
      %s164 = smul.addr %s163, 4
      %s165 = scalar_lea.vmem %s0, %s164
      %p166 = scmp.lt.s32.totalorder %s14, 1
      %s167 = scalar_select %p166, %s14, 1
      %s168 = smul.addr %s167, 16
      %s169 = smul.addr %s168, 8
      %s170 = scalar_lea.vmem %s3, %s169
      %v174 = vlaneseq
      %v175 = vand.u32 %v174, 127
      %v176 = vadd.s32 %v175, 128
      %v177 = vadd.s32 %v175, 256
      %v178 = vadd.s32 %v175, 384
      %v179 = vadd.s32 %v175, 512
      %v180 = vadd.s32 %v175, 640
      %v181 = vadd.s32 %v175, 768
      %v182 = vadd.s32 %v175, 896
      %vm183 = vcmp.lt.s32.totalorder %v175, 0
      %v184 = vsub.s32 0, %v175
      %v185 = vsel %vm183, %v184, %v175
      %v186 = vshrl.u32 %v185, 5
      %v187 = vand.u32 %v185, 31
      %v188 = vsub.s32 0, %v187
      %v189 = vsel %vm183, %v188, %v187
      %vm190 = vcmp.lt.s32.totalorder %v176, 0
      %v191 = vsub.s32 0, %v176
      %v192 = vsel %vm190, %v191, %v176
      %v193 = vshrl.u32 %v192, 5
      %v194 = vand.u32 %v192, 31
      %v195 = vsub.s32 0, %v194
      %v196 = vsel %vm190, %v195, %v194
      %vm197 = vcmp.lt.s32.totalorder %v177, 0
      %v198 = vsub.s32 0, %v177
      %v199 = vsel %vm197, %v198, %v177
      %v200 = vshrl.u32 %v199, 5
      %v201 = vand.u32 %v199, 31
      %v202 = vsub.s32 0, %v201
      %v203 = vsel %vm197, %v202, %v201
      %vm204 = vcmp.lt.s32.totalorder %v178, 0
      %v205 = vsub.s32 0, %v178
      %v206 = vsel %vm204, %v205, %v178
      %v207 = vshrl.u32 %v206, 5
      %v208 = vand.u32 %v206, 31
      %v209 = vsub.s32 0, %v208
      %v210 = vsel %vm204, %v209, %v208
      %vm211 = vcmp.lt.s32.totalorder %v179, 0
      %v212 = vsub.s32 0, %v179
      %v213 = vsel %vm211, %v212, %v179
      %v214 = vshrl.u32 %v213, 5
      %v215 = vand.u32 %v213, 31
      %v216 = vsub.s32 0, %v215
      %v217 = vsel %vm211, %v216, %v215
      %vm218 = vcmp.lt.s32.totalorder %v180, 0
      %v219 = vsub.s32 0, %v180
      %v220 = vsel %vm218, %v219, %v180
      %v221 = vshrl.u32 %v220, 5
      %v222 = vand.u32 %v220, 31
      %v223 = vsub.s32 0, %v222
      %v224 = vsel %vm218, %v223, %v222
      %vm225 = vcmp.lt.s32.totalorder %v181, 0
      %v226 = vsub.s32 0, %v181
      %v227 = vsel %vm225, %v226, %v181
      %v228 = vshrl.u32 %v227, 5
      %v229 = vand.u32 %v227, 31
      %v230 = vsub.s32 0, %v229
      %v231 = vsel %vm225, %v230, %v229
      %vm232 = vcmp.lt.s32.totalorder %v182, 0
      %v233 = vsub.s32 0, %v182
      %v234 = vsel %vm232, %v233, %v182
      %v235 = vshrl.u32 %v234, 5
      %v236 = vand.u32 %v234, 31
      %v237 = vsub.s32 0, %v236
      %v238 = vsel %vm232, %v237, %v236
      %vm239 = vcmp.ne.s32.totalorder %v189, 0
      %vm240 = vcmp.ne.s32.totalorder %v196, 0
      %vm241 = vcmp.ne.s32.totalorder %v203, 0
      %vm242 = vcmp.ne.s32.totalorder %v210, 0
      %vm243 = vcmp.ne.s32.totalorder %v217, 0
      %vm244 = vcmp.ne.s32.totalorder %v224, 0
      %vm245 = vcmp.ne.s32.totalorder %v231, 0
      %vm246 = vcmp.ne.s32.totalorder %v238, 0
      %vm247 = vcmp.lt.s32.totalorder %v189, 0
      %vm248 = vcmp.lt.s32.totalorder %v196, 0
      %vm249 = vcmp.lt.s32.totalorder %v203, 0
      %vm250 = vcmp.lt.s32.totalorder %v210, 0
      %vm251 = vcmp.lt.s32.totalorder %v217, 0
      %vm252 = vcmp.lt.s32.totalorder %v224, 0
      %vm253 = vcmp.lt.s32.totalorder %v231, 0
      %vm254 = vcmp.lt.s32.totalorder %v238, 0
      %vm255 = vmand %vm247, %vm239
      %vm256 = vmand %vm248, %vm240
      %vm257 = vmand %vm249, %vm241
      %vm258 = vmand %vm250, %vm242
      %vm259 = vmand %vm251, %vm243
      %vm260 = vmand %vm252, %vm244
      %vm261 = vmand %vm253, %vm245
      %vm262 = vmand %vm254, %vm246
      %v263 = vadd.s32 %v189, 32
      %v264 = vadd.s32 %v196, 32
      %v265 = vadd.s32 %v203, 32
      %v266 = vadd.s32 %v210, 32
      %v267 = vadd.s32 %v217, 32
      %v268 = vadd.s32 %v224, 32
      %v269 = vadd.s32 %v231, 32
      %v270 = vadd.s32 %v238, 32
      %v271 = vsel %vm255, %v263, %v189
      %v272 = vsel %vm256, %v264, %v196
      %v273 = vsel %vm257, %v265, %v203
      %v274 = vsel %vm258, %v266, %v210
      %v275 = vsel %vm259, %v267, %v217
      %v276 = vsel %vm260, %v268, %v224
      %v277 = vsel %vm261, %v269, %v231
      %v278 = vsel %vm262, %v270, %v238
      %vm279 = vcmp.gt.s32.totalorder %v271, 0
      %vm280 = vcmp.gt.s32.totalorder %v272, 0
      %vm281 = vcmp.gt.s32.totalorder %v273, 0
      %vm282 = vcmp.gt.s32.totalorder %v274, 0
      %vm283 = vcmp.gt.s32.totalorder %v275, 0
      %vm284 = vcmp.gt.s32.totalorder %v276, 0
      %vm285 = vcmp.gt.s32.totalorder %v277, 0
      %vm286 = vcmp.gt.s32.totalorder %v278, 0
      %vm287 = vcmp.lt.s32.totalorder %v271, 31
      %vm288 = vcmp.lt.s32.totalorder %v272, 31
      %vm289 = vcmp.lt.s32.totalorder %v273, 31
      %vm290 = vcmp.lt.s32.totalorder %v274, 31
      %vm291 = vcmp.lt.s32.totalorder %v275, 31
      %vm292 = vcmp.lt.s32.totalorder %v276, 31
      %vm293 = vcmp.lt.s32.totalorder %v277, 31
      %vm294 = vcmp.lt.s32.totalorder %v278, 31
      %v295 = vld [vmem:[%s165] sm:$0xff]
      %v296 = vld [vmem:[%s165 + $0x8] sm:$0xff]
      %v297 = vld [vmem:[%s165 + $0x10] sm:$0xff]
      %v298 = vld [vmem:[%s165 + $0x18] sm:$0xff]
      %vm299 = vmpackc.low %vm280, %vm279
      %vm300 = vmpackc.low %vm282, %vm281
      %vm301 = vmpackc.low %vm284, %vm283
      %vm302 = vmpackc.low %vm286, %vm285
      %v303 = vsel %vm299, %v295, 0
      %v304 = vsel %vm300, %v296, 0
      %v305 = vsel %vm301, %v297, 0
      %v306 = vsel %vm302, %v298, 0
      %v307 = vld [vmem:[%s1] sm:$0xf]
      %v308 = vld [vmem:[%s1 + $0x4] sm:$0x3]
      %v309 = vld [vmem:[%s165 + $0x20] sm:$0xf]
      %s310 = scalar_lea.vmem %s1, 8
      %v311 = vld [vmem:[%s310] sm:$0xf]
      %v312 = vld [vmem:[%s310 + $0x4] sm:$0x3]
      %v315 = vunpack.c.l.b16 %v311
      %v316 = vunpack.c.l.b16 %v312
      %v317 = vpack.c.b16 %v316, %v315
      %v323 = vunpack.c.l.b16 %v295
      %v324 = vunpack.c.h.b16 %v295
      %v325 = vunpack.c.l.b16 %v296
      %v326 = vunpack.c.h.b16 %v296
      %v327 = vunpack.c.l.b16 %v297
      %v328 = vunpack.c.h.b16 %v297
      %v329 = vunpack.c.l.b16 %v298
      %v330 = vunpack.c.h.b16 %v298
      %v331 = vunpack.c.l.b16 %v309
      %v332 = vpack.c.b16 %v323, %v323
      %v333 = vpack.c.b16 %v324, %v324
      %v334 = vpack.c.b16 %v325, %v325
      %v335 = vpack.c.b16 %v326, %v326
      %v336 = vpack.c.b16 %v327, %v327
      %v337 = vpack.c.b16 %v328, %v328
      %v338 = vpack.c.b16 %v329, %v329
      %v339 = vpack.c.b16 %v330, %v330
      %v340 = vpack.c.b16 %v331, %v331
      %341 = vrot.lane.b32.xlu0 %v332, 127
      %v342 = vpop.permute.xlu0 %341
      %343 = vrot.lane.b32.xlu0 %v333, 127
      %v344 = vpop.permute.xlu0 %343
      %345 = vrot.lane.b32.xlu0 %v334, 127
      %v346 = vpop.permute.xlu0 %345
      %347 = vrot.lane.b32.xlu0 %v335, 127
      %v348 = vpop.permute.xlu0 %347
      %349 = vrot.lane.b32.xlu0 %v336, 127
      %v350 = vpop.permute.xlu0 %349
      %351 = vrot.lane.b32.xlu0 %v337, 127
      %v352 = vpop.permute.xlu0 %351
      %353 = vrot.lane.b32.xlu0 %v338, 127
      %v354 = vpop.permute.xlu0 %353
      %355 = vrot.lane.b32.xlu0 %v339, 127
      %v356 = vpop.permute.xlu0 %355
      %357 = vrot.lane.b32.xlu0 %v340, 127
      %v358 = vpop.permute.xlu0 %357
      %vm359 = vcmask 1039360
      %v360 = vsel %vm359, %v342, %v344
      %v361 = vsel %vm359, %v344, %v346
      %v362 = vsel %vm359, %v346, %v348
      %v363 = vsel %vm359, %v348, %v350
      %v364 = vsel %vm359, %v350, %v352
      %v365 = vsel %vm359, %v352, %v354
      %v366 = vsel %vm359, %v354, %v356
      %v367 = vsel %vm359, %v356, %v358
      %vm368 = vcmask 64512
      %v370 = vsel %vm368, %v317, 0
      %vm372 = vcmask 1043456
      %v374 = vsel %vm372, %v360, 0
      %v377 = vsel %vm372, %v361, 0
      %v380 = vsel %vm372, %v362, 0
      %v383 = vsel %vm372, %v363, 0
      %v386 = vsel %vm372, %v364, 0
      %v389 = vsel %vm372, %v365, 0
      %v392 = vsel %vm372, %v366, 0
      %v395 = vsel %vm372, %v367, 0
      %397 = vmatprep.subr.bf16.mxu0 %v377
      %398 = vmatpush1.bf16.msra.mxu0 %v374
      %399 = vmatprep.subr.bf16.mxu0 0
      %400 = vmatpush1.bf16.msra.mxu0 0
      %401 = vmatprep.subr.bf16.mxu0 0
      %402 = vmatpush1.bf16.msra.mxu0 0
      %403 = vmatprep.subr.bf16.mxu0 0
      %404 = vmatpush1.bf16.msra.mxu0 0
      %405 = vmatprep.subr.bf16.mxu0 0
      %406 = vmatpush1.bf16.msra.mxu0 0
      %407 = vmatprep.subr.bf16.mxu0 0
      %408 = vmatpush1.bf16.msra.mxu0 0
      %409 = vmatprep.subr.bf16.mxu0 0
      %410 = vmatpush1.bf16.msra.mxu0 0
      %411 = vmatprep.subr.bf16.mxu0 0
      %412 = vmatpush1.bf16.msra.mxu0 0
      %413 = vmatprep.subr.bf16.mxu0 0
      %414 = vmatpush1.bf16.msra.mxu0 0
      %415 = vmatprep.subr.bf16.mxu0 0
      %416 = vmatpush1.bf16.msra.mxu0 0
      %417 = vmatprep.subr.bf16.mxu0 0
      %418 = vmatpush1.bf16.msra.mxu0 0
      %419 = vmatprep.subr.bf16.mxu0 0
      %420 = vmatpush1.bf16.msra.mxu0 0
      %421 = vmatprep.subr.bf16.mxu0 0
      %422 = vmatpush1.bf16.msra.mxu0 0
      %423 = vmatprep.subr.bf16.mxu0 0
      %424 = vmatpush1.bf16.msra.mxu0 0
      %425 = vmatprep.subr.bf16.mxu0 0
      %426 = vmatpush1.bf16.msra.mxu0 0
      %427 = vmatprep.subr.bf16.mxu0 0
      %428 = vmatpush1.bf16.msra.mxu0 0
      %429 = vmatprep.mubr.bf16.mxu0 0
      %430 = vmatmul.mubr.bf16.gmra.mrb[0].mxu0 %v370
      %v431 = vpop.f32.mrb[0].mxu0
      %v432 = vadd.f32 0.0, %v431
      %v433 = vpop.f32.mrb[0].mxu0
      %v434 = vadd.f32 0.0, %v433
      %v435 = vpop.f32.mrb[0].mxu0
      %v436 = vadd.f32 0.0, %v435
      %v437 = vpop.f32.mrb[0].mxu0
      %v438 = vadd.f32 0.0, %v437
      %439 = vdwg.mxu0
      %440 = vmatprep.subr.bf16.mxu0 %v383
      %441 = vmatpush1.bf16.msra.mxu0 %v380
      %442 = vmatprep.subr.bf16.mxu0 0
      %443 = vmatpush1.bf16.msra.mxu0 0
      %444 = vmatprep.subr.bf16.mxu0 0
      %445 = vmatpush1.bf16.msra.mxu0 0
      %446 = vmatprep.subr.bf16.mxu0 0
      %447 = vmatpush1.bf16.msra.mxu0 0
      %448 = vmatprep.subr.bf16.mxu0 0
      %449 = vmatpush1.bf16.msra.mxu0 0
      %450 = vmatprep.subr.bf16.mxu0 0
      %451 = vmatpush1.bf16.msra.mxu0 0
      %452 = vmatprep.subr.bf16.mxu0 0
      %453 = vmatpush1.bf16.msra.mxu0 0
      %454 = vmatprep.subr.bf16.mxu0 0
      %455 = vmatpush1.bf16.msra.mxu0 0
      %456 = vmatprep.subr.bf16.mxu0 0
      %457 = vmatpush1.bf16.msra.mxu0 0
      %458 = vmatprep.subr.bf16.mxu0 0
      %459 = vmatpush1.bf16.msra.mxu0 0
      %460 = vmatprep.subr.bf16.mxu0 0
      %461 = vmatpush1.bf16.msra.mxu0 0
      %462 = vmatprep.subr.bf16.mxu0 0
      %463 = vmatpush1.bf16.msra.mxu0 0
      %464 = vmatprep.subr.bf16.mxu0 0
      %465 = vmatpush1.bf16.msra.mxu0 0
      %466 = vmatprep.subr.bf16.mxu0 0
      %467 = vmatpush1.bf16.msra.mxu0 0
      %468 = vmatprep.subr.bf16.mxu0 0
      %469 = vmatpush1.bf16.msra.mxu0 0
      %470 = vmatprep.subr.bf16.mxu0 0
      %471 = vmatpush1.bf16.msra.mxu0 0
      %472 = vmatprep.mubr.bf16.mxu0 0
      %473 = vmatmul.mubr.bf16.gmra.mrb[0].mxu0 %v370
      %v474 = vpop.f32.mrb[0].mxu0
      %v475 = vadd.f32 0.0, %v474
      %v476 = vpop.f32.mrb[0].mxu0
      %v477 = vadd.f32 0.0, %v476
      %v478 = vpop.f32.mrb[0].mxu0
      %v479 = vadd.f32 0.0, %v478
      %v480 = vpop.f32.mrb[0].mxu0
      %v481 = vadd.f32 0.0, %v480
      %482 = vdwg.mxu0
      %483 = vmatprep.subr.bf16.mxu0 %v389
      %484 = vmatpush1.bf16.msra.mxu0 %v386
      %485 = vmatprep.subr.bf16.mxu0 0
      %486 = vmatpush1.bf16.msra.mxu0 0
      %487 = vmatprep.subr.bf16.mxu0 0
      %488 = vmatpush1.bf16.msra.mxu0 0
      %489 = vmatprep.subr.bf16.mxu0 0
      %490 = vmatpush1.bf16.msra.mxu0 0
      %491 = vmatprep.subr.bf16.mxu0 0
      %492 = vmatpush1.bf16.msra.mxu0 0
      %493 = vmatprep.subr.bf16.mxu0 0
      %494 = vmatpush1.bf16.msra.mxu0 0
      %495 = vmatprep.subr.bf16.mxu0 0
      %496 = vmatpush1.bf16.msra.mxu0 0
      %497 = vmatprep.subr.bf16.mxu0 0
      %498 = vmatpush1.bf16.msra.mxu0 0
      %499 = vmatprep.subr.bf16.mxu0 0
      %500 = vmatpush1.bf16.msra.mxu0 0
      %501 = vmatprep.subr.bf16.mxu0 0
      %502 = vmatpush1.bf16.msra.mxu0 0
      %503 = vmatprep.subr.bf16.mxu0 0
      %504 = vmatpush1.bf16.msra.mxu0 0
      %505 = vmatprep.subr.bf16.mxu0 0
      %506 = vmatpush1.bf16.msra.mxu0 0
      %507 = vmatprep.subr.bf16.mxu0 0
      %508 = vmatpush1.bf16.msra.mxu0 0
      %509 = vmatprep.subr.bf16.mxu0 0
      %510 = vmatpush1.bf16.msra.mxu0 0
      %511 = vmatprep.subr.bf16.mxu0 0
      %512 = vmatpush1.bf16.msra.mxu0 0
      %513 = vmatprep.subr.bf16.mxu0 0
      %514 = vmatpush1.bf16.msra.mxu0 0
      %515 = vmatprep.mubr.bf16.mxu0 0
      %516 = vmatmul.mubr.bf16.gmra.mrb[0].mxu0 %v370
      %v517 = vpop.f32.mrb[0].mxu0
      %v518 = vadd.f32 0.0, %v517
      %v519 = vpop.f32.mrb[0].mxu0
      %v520 = vadd.f32 0.0, %v519
      %v521 = vpop.f32.mrb[0].mxu0
      %v522 = vadd.f32 0.0, %v521
      %v523 = vpop.f32.mrb[0].mxu0
      %v524 = vadd.f32 0.0, %v523
      %525 = vdwg.mxu0
      %526 = vmatprep.subr.bf16.mxu0 %v395
      %527 = vmatpush1.bf16.msra.mxu0 %v392
      %528 = vmatprep.subr.bf16.mxu0 0
      %529 = vmatpush1.bf16.msra.mxu0 0
      %530 = vmatprep.subr.bf16.mxu0 0
      %531 = vmatpush1.bf16.msra.mxu0 0
      %532 = vmatprep.subr.bf16.mxu0 0
      %533 = vmatpush1.bf16.msra.mxu0 0
      %534 = vmatprep.subr.bf16.mxu0 0
      %535 = vmatpush1.bf16.msra.mxu0 0
      %536 = vmatprep.subr.bf16.mxu0 0
      %537 = vmatpush1.bf16.msra.mxu0 0
      %538 = vmatprep.subr.bf16.mxu0 0
      %539 = vmatpush1.bf16.msra.mxu0 0
      %540 = vmatprep.subr.bf16.mxu0 0
      %541 = vmatpush1.bf16.msra.mxu0 0
      %542 = vmatprep.subr.bf16.mxu0 0
      %543 = vmatpush1.bf16.msra.mxu0 0
      %544 = vmatprep.subr.bf16.mxu0 0
      %545 = vmatpush1.bf16.msra.mxu0 0
      %546 = vmatprep.subr.bf16.mxu0 0
      %547 = vmatpush1.bf16.msra.mxu0 0
      %548 = vmatprep.subr.bf16.mxu0 0
      %549 = vmatpush1.bf16.msra.mxu0 0
      %550 = vmatprep.subr.bf16.mxu0 0
      %551 = vmatpush1.bf16.msra.mxu0 0
      %552 = vmatprep.subr.bf16.mxu0 0
      %553 = vmatpush1.bf16.msra.mxu0 0
      %554 = vmatprep.subr.bf16.mxu0 0
      %555 = vmatpush1.bf16.msra.mxu0 0
      %556 = vmatprep.subr.bf16.mxu0 0
      %557 = vmatpush1.bf16.msra.mxu0 0
      %558 = vmatprep.mubr.bf16.mxu0 0
      %559 = vmatmul.mubr.bf16.gmra.mrb[0].mxu0 %v370
      %v560 = vpop.f32.mrb[0].mxu0
      %v561 = vadd.f32 0.0, %v560
      %v562 = vpop.f32.mrb[0].mxu0
      %v563 = vadd.f32 0.0, %v562
      %v564 = vpop.f32.mrb[0].mxu0
      %v565 = vadd.f32 0.0, %v564
      %v566 = vpop.f32.mrb[0].mxu0
      %v567 = vadd.f32 0.0, %v566
      %568 = vdwg.mxu0
      %v571 = vunpack.c.l.b16 %v307
      %v572 = vunpack.c.l.b16 %v308
      %v573 = vpack.c.b16 %v572, %v571
      %v578 = vunpack.c.l.b16 %v303
      %v579 = vunpack.c.h.b16 %v303
      %v580 = vunpack.c.l.b16 %v304
      %v581 = vunpack.c.h.b16 %v304
      %v582 = vunpack.c.l.b16 %v305
      %v583 = vunpack.c.h.b16 %v305
      %v584 = vunpack.c.l.b16 %v306
      %v585 = vunpack.c.h.b16 %v306
      %v586 = vpack.c.b16 %v578, %v578
      %v587 = vpack.c.b16 %v579, %v579
      %v588 = vpack.c.b16 %v580, %v580
      %v589 = vpack.c.b16 %v581, %v581
      %v590 = vpack.c.b16 %v582, %v582
      %v591 = vpack.c.b16 %v583, %v583
      %v592 = vpack.c.b16 %v584, %v584
      %v593 = vpack.c.b16 %v585, %v585
      %v595 = vsel %vm368, %v573, 0
      %v598 = vsel %vm372, %v586, 0
      %v601 = vsel %vm372, %v587, 0
      %v604 = vsel %vm372, %v588, 0
      %v607 = vsel %vm372, %v589, 0
      %v610 = vsel %vm372, %v590, 0
      %v613 = vsel %vm372, %v591, 0
      %v616 = vsel %vm372, %v592, 0
      %v619 = vsel %vm372, %v593, 0
      %621 = vmatprep.subr.bf16.mxu0 %v601
      %622 = vmatpush1.bf16.msra.mxu0 %v598
      %623 = vmatprep.subr.bf16.mxu0 0
      %624 = vmatpush1.bf16.msra.mxu0 0
      %625 = vmatprep.subr.bf16.mxu0 0
      %626 = vmatpush1.bf16.msra.mxu0 0
      %627 = vmatprep.subr.bf16.mxu0 0
      %628 = vmatpush1.bf16.msra.mxu0 0
      %629 = vmatprep.subr.bf16.mxu0 0
      %630 = vmatpush1.bf16.msra.mxu0 0
      %631 = vmatprep.subr.bf16.mxu0 0
      %632 = vmatpush1.bf16.msra.mxu0 0
      %633 = vmatprep.subr.bf16.mxu0 0
      %634 = vmatpush1.bf16.msra.mxu0 0
      %635 = vmatprep.subr.bf16.mxu0 0
      %636 = vmatpush1.bf16.msra.mxu0 0
      %637 = vmatprep.subr.bf16.mxu0 0
      %638 = vmatpush1.bf16.msra.mxu0 0
      %639 = vmatprep.subr.bf16.mxu0 0
      %640 = vmatpush1.bf16.msra.mxu0 0
      %641 = vmatprep.subr.bf16.mxu0 0
      %642 = vmatpush1.bf16.msra.mxu0 0
      %643 = vmatprep.subr.bf16.mxu0 0
      %644 = vmatpush1.bf16.msra.mxu0 0
      %645 = vmatprep.subr.bf16.mxu0 0
      %646 = vmatpush1.bf16.msra.mxu0 0
      %647 = vmatprep.subr.bf16.mxu0 0
      %648 = vmatpush1.bf16.msra.mxu0 0
      %649 = vmatprep.subr.bf16.mxu0 0
      %650 = vmatpush1.bf16.msra.mxu0 0
      %651 = vmatprep.subr.bf16.mxu0 0
      %652 = vmatpush1.bf16.msra.mxu0 0
      %653 = vmatprep.mubr.bf16.mxu0 0
      %654 = vmatmul.mubr.bf16.gmra.mrb[0].mxu0 %v595
      %v655 = vpop.f32.mrb[0].mxu0
      %v656 = vadd.f32 %v432, %v655
      %v657 = vpop.f32.mrb[0].mxu0
      %v658 = vadd.f32 %v434, %v657
      %v659 = vpop.f32.mrb[0].mxu0
      %v660 = vadd.f32 %v436, %v659
      %v661 = vpop.f32.mrb[0].mxu0
      %v662 = vadd.f32 %v438, %v661
      %663 = vdwg.mxu0
      %664 = vmatprep.subr.bf16.mxu0 %v607
      %665 = vmatpush1.bf16.msra.mxu0 %v604
      %666 = vmatprep.subr.bf16.mxu0 0
      %667 = vmatpush1.bf16.msra.mxu0 0
      %668 = vmatprep.subr.bf16.mxu0 0
      %669 = vmatpush1.bf16.msra.mxu0 0
      %670 = vmatprep.subr.bf16.mxu0 0
      %671 = vmatpush1.bf16.msra.mxu0 0
      %672 = vmatprep.subr.bf16.mxu0 0
      %673 = vmatpush1.bf16.msra.mxu0 0
      %674 = vmatprep.subr.bf16.mxu0 0
      %675 = vmatpush1.bf16.msra.mxu0 0
      %676 = vmatprep.subr.bf16.mxu0 0
      %677 = vmatpush1.bf16.msra.mxu0 0
      %678 = vmatprep.subr.bf16.mxu0 0
      %679 = vmatpush1.bf16.msra.mxu0 0
      %680 = vmatprep.subr.bf16.mxu0 0
      %681 = vmatpush1.bf16.msra.mxu0 0
      %682 = vmatprep.subr.bf16.mxu0 0
      %683 = vmatpush1.bf16.msra.mxu0 0
      %684 = vmatprep.subr.bf16.mxu0 0
      %685 = vmatpush1.bf16.msra.mxu0 0
      %686 = vmatprep.subr.bf16.mxu0 0
      %687 = vmatpush1.bf16.msra.mxu0 0
      %688 = vmatprep.subr.bf16.mxu0 0
      %689 = vmatpush1.bf16.msra.mxu0 0
      %690 = vmatprep.subr.bf16.mxu0 0
      %691 = vmatpush1.bf16.msra.mxu0 0
      %692 = vmatprep.subr.bf16.mxu0 0
      %693 = vmatpush1.bf16.msra.mxu0 0
      %694 = vmatprep.subr.bf16.mxu0 0
      %695 = vmatpush1.bf16.msra.mxu0 0
      %696 = vmatprep.mubr.bf16.mxu0 0
      %697 = vmatmul.mubr.bf16.gmra.mrb[0].mxu0 %v595
      %v698 = vpop.f32.mrb[0].mxu0
      %v699 = vadd.f32 %v475, %v698
      %v700 = vpop.f32.mrb[0].mxu0
      %v701 = vadd.f32 %v477, %v700
      %v702 = vpop.f32.mrb[0].mxu0
      %v703 = vadd.f32 %v479, %v702
      %v704 = vpop.f32.mrb[0].mxu0
      %v705 = vadd.f32 %v481, %v704
      %706 = vdwg.mxu0
      %707 = vmatprep.subr.bf16.mxu0 %v613
      %708 = vmatpush1.bf16.msra.mxu0 %v610
      %709 = vmatprep.subr.bf16.mxu0 0
      %710 = vmatpush1.bf16.msra.mxu0 0
      %711 = vmatprep.subr.bf16.mxu0 0
      %712 = vmatpush1.bf16.msra.mxu0 0
      %713 = vmatprep.subr.bf16.mxu0 0
      %714 = vmatpush1.bf16.msra.mxu0 0
      %715 = vmatprep.subr.bf16.mxu0 0
      %716 = vmatpush1.bf16.msra.mxu0 0
      %717 = vmatprep.subr.bf16.mxu0 0
      %718 = vmatpush1.bf16.msra.mxu0 0
      %719 = vmatprep.subr.bf16.mxu0 0
      %720 = vmatpush1.bf16.msra.mxu0 0
      %721 = vmatprep.subr.bf16.mxu0 0
      %722 = vmatpush1.bf16.msra.mxu0 0
      %723 = vmatprep.subr.bf16.mxu0 0
      %724 = vmatpush1.bf16.msra.mxu0 0
      %725 = vmatprep.subr.bf16.mxu0 0
      %726 = vmatpush1.bf16.msra.mxu0 0
      %727 = vmatprep.subr.bf16.mxu0 0
      %728 = vmatpush1.bf16.msra.mxu0 0
      %729 = vmatprep.subr.bf16.mxu0 0
      %730 = vmatpush1.bf16.msra.mxu0 0
      %731 = vmatprep.subr.bf16.mxu0 0
      %732 = vmatpush1.bf16.msra.mxu0 0
      %733 = vmatprep.subr.bf16.mxu0 0
      %734 = vmatpush1.bf16.msra.mxu0 0
      %735 = vmatprep.subr.bf16.mxu0 0
      %736 = vmatpush1.bf16.msra.mxu0 0
      %737 = vmatprep.subr.bf16.mxu0 0
      %738 = vmatpush1.bf16.msra.mxu0 0
      %739 = vmatprep.mubr.bf16.mxu0 0
      %740 = vmatmul.mubr.bf16.gmra.mrb[0].mxu0 %v595
      %v741 = vpop.f32.mrb[0].mxu0
      %v742 = vadd.f32 %v518, %v741
      %v743 = vpop.f32.mrb[0].mxu0
      %v744 = vadd.f32 %v520, %v743
      %v745 = vpop.f32.mrb[0].mxu0
      %v746 = vadd.f32 %v522, %v745
      %v747 = vpop.f32.mrb[0].mxu0
      %v748 = vadd.f32 %v524, %v747
      %749 = vdwg.mxu0
      %750 = vmatprep.subr.bf16.mxu0 %v619
      %751 = vmatpush1.bf16.msra.mxu0 %v616
      %752 = vmatprep.subr.bf16.mxu0 0
      %753 = vmatpush1.bf16.msra.mxu0 0
      %754 = vmatprep.subr.bf16.mxu0 0
      %755 = vmatpush1.bf16.msra.mxu0 0
      %756 = vmatprep.subr.bf16.mxu0 0
      %757 = vmatpush1.bf16.msra.mxu0 0
      %758 = vmatprep.subr.bf16.mxu0 0
      %759 = vmatpush1.bf16.msra.mxu0 0
      %760 = vmatprep.subr.bf16.mxu0 0
      %761 = vmatpush1.bf16.msra.mxu0 0
      %762 = vmatprep.subr.bf16.mxu0 0
      %763 = vmatpush1.bf16.msra.mxu0 0
      %764 = vmatprep.subr.bf16.mxu0 0
      %765 = vmatpush1.bf16.msra.mxu0 0
      %766 = vmatprep.subr.bf16.mxu0 0
      %767 = vmatpush1.bf16.msra.mxu0 0
      %768 = vmatprep.subr.bf16.mxu0 0
      %769 = vmatpush1.bf16.msra.mxu0 0
      %770 = vmatprep.subr.bf16.mxu0 0
      %771 = vmatpush1.bf16.msra.mxu0 0
      %772 = vmatprep.subr.bf16.mxu0 0
      %773 = vmatpush1.bf16.msra.mxu0 0
      %774 = vmatprep.subr.bf16.mxu0 0
      %775 = vmatpush1.bf16.msra.mxu0 0
      %776 = vmatprep.subr.bf16.mxu0 0
      %777 = vmatpush1.bf16.msra.mxu0 0
      %778 = vmatprep.subr.bf16.mxu0 0
      %779 = vmatpush1.bf16.msra.mxu0 0
      %780 = vmatprep.subr.bf16.mxu0 0
      %781 = vmatpush1.bf16.msra.mxu0 0
      %782 = vmatprep.mubr.bf16.mxu0 0
      %783 = vmatmul.mubr.bf16.gmra.mrb[0].mxu0 %v595
      %v784 = vpop.f32.mrb[0].mxu0
      %v785 = vadd.f32 %v561, %v784
      %v786 = vpop.f32.mrb[0].mxu0
      %v787 = vadd.f32 %v563, %v786
      %v788 = vpop.f32.mrb[0].mxu0
      %v789 = vadd.f32 %v565, %v788
      %v790 = vpop.f32.mrb[0].mxu0
      %v791 = vadd.f32 %v567, %v790
      %792 = vdwg.mxu0
      %vm793 = vmpackc.low %vm288, %vm287
      %vm794 = vmpackc.low %vm290, %vm289
      %vm795 = vmpackc.low %vm292, %vm291
      %vm796 = vmpackc.low %vm294, %vm293
      %v797 = vsel %vm793, 65537, 0
      %v798 = vsel %vm794, 65537, 0
      %v799 = vsel %vm795, 65537, 0
      %v800 = vsel %vm796, 65537, 0
      %801 = vrot.lane.b32.xlu0 %v797, 2
      %v802 = vpop.permute.xlu0 %801
      %803 = vrot.lane.b32.xlu0 %v798, 2
      %v804 = vpop.permute.xlu0 %803
      %805 = vrot.lane.b32.xlu0 %v799, 2
      %v806 = vpop.permute.xlu0 %805
      %807 = vrot.lane.b32.xlu0 %v800, 2
      %v808 = vpop.permute.xlu0 %807
      %v809 = vrot.slane %v802, 4
      %v810 = vrot.slane %v804, 4
      %v811 = vrot.slane %v806, 4
      %v812 = vrot.slane %v808, 4
      %vm813 = vcmask 15360
      %v814 = vsel %vm813, %v809, %v802
      %vm815 = vcmask 1043456
      %v816 = vsel %vm815, %v809, %v810
      %v817 = vsel %vm813, %v816, %v804
      %v818 = vsel %vm815, %v810, %v811
      %v819 = vsel %vm813, %v818, %v806
      %v820 = vsel %vm815, %v811, %v812
      %v821 = vsel %vm813, %v820, %v808
      %vm822 = vcmp.ne.s16.totalorder %v814, 0
      %vm823 = vcmp.ne.s16.totalorder %v817, 0
      %vm824 = vcmp.ne.s16.totalorder %v819, 0
      %vm825 = vcmp.ne.s16.totalorder %v821, 0
      %vm826 = vcmp.ne.s16.totalorder %v812, 0
      %v827 = vsel %vm822, %v295, 0
      %v828 = vsel %vm823, %v296, 0
      %v829 = vsel %vm824, %v297, 0
      %v830 = vsel %vm825, %v298, 0
      %v831 = vsel %vm826, %v309, 0
      %s832 = scalar_lea.vmem %s1, 16
      %v833 = vld [vmem:[%s832] sm:$0xf]
      %v834 = vld [vmem:[%s832 + $0x4] sm:$0x3]
      %v837 = vunpack.c.l.b16 %v833
      %v838 = vunpack.c.l.b16 %v834
      %v839 = vpack.c.b16 %v838, %v837
      %v845 = vunpack.c.l.b16 %v827
      %v846 = vunpack.c.h.b16 %v827
      %v847 = vunpack.c.l.b16 %v828
      %v848 = vunpack.c.h.b16 %v828
      %v849 = vunpack.c.l.b16 %v829
      %v850 = vunpack.c.h.b16 %v829
      %v851 = vunpack.c.l.b16 %v830
      %v852 = vunpack.c.h.b16 %v830
      %v853 = vunpack.c.l.b16 %v831
      %v854 = vpack.c.b16 %v845, %v845
      %v855 = vpack.c.b16 %v846, %v846
      %v856 = vpack.c.b16 %v847, %v847
      %v857 = vpack.c.b16 %v848, %v848
      %v858 = vpack.c.b16 %v849, %v849
      %v859 = vpack.c.b16 %v850, %v850
      %v860 = vpack.c.b16 %v851, %v851
      %v861 = vpack.c.b16 %v852, %v852
      %v862 = vpack.c.b16 %v853, %v853
      %863 = vrot.lane.b32.xlu0 %v854, 126
      %v864 = vpop.permute.xlu0 %863
      %865 = vrot.lane.b32.xlu0 %v855, 126
      %v866 = vpop.permute.xlu0 %865
      %867 = vrot.lane.b32.xlu0 %v856, 126
      %v868 = vpop.permute.xlu0 %867
      %869 = vrot.lane.b32.xlu0 %v857, 126
      %v870 = vpop.permute.xlu0 %869
      %871 = vrot.lane.b32.xlu0 %v858, 126
      %v872 = vpop.permute.xlu0 %871
      %873 = vrot.lane.b32.xlu0 %v859, 126
      %v874 = vpop.permute.xlu0 %873
      %875 = vrot.lane.b32.xlu0 %v860, 126
      %v876 = vpop.permute.xlu0 %875
      %877 = vrot.lane.b32.xlu0 %v861, 126
      %v878 = vpop.permute.xlu0 %877
      %879 = vrot.lane.b32.xlu0 %v862, 126
      %v880 = vpop.permute.xlu0 %879
      %vm881 = vcmask 1031168
      %v882 = vsel %vm881, %v864, %v866
      %v883 = vsel %vm881, %v866, %v868
      %v884 = vsel %vm881, %v868, %v870
      %v885 = vsel %vm881, %v870, %v872
      %v886 = vsel %vm881, %v872, %v874
      %v887 = vsel %vm881, %v874, %v876
      %v888 = vsel %vm881, %v876, %v878
      %v889 = vsel %vm881, %v878, %v880
      %v891 = vsel %vm368, %v839, 0
      %v894 = vsel %vm372, %v882, 0
      %v897 = vsel %vm372, %v883, 0
      %v900 = vsel %vm372, %v884, 0
      %v903 = vsel %vm372, %v885, 0
      %v906 = vsel %vm372, %v886, 0
      %v909 = vsel %vm372, %v887, 0
      %v912 = vsel %vm372, %v888, 0
      %v915 = vsel %vm372, %v889, 0
      %917 = vmatprep.subr.bf16.mxu0 %v897
      %918 = vmatpush1.bf16.msra.mxu0 %v894
      %919 = vmatprep.subr.bf16.mxu0 0
      %920 = vmatpush1.bf16.msra.mxu0 0
      %921 = vmatprep.subr.bf16.mxu0 0
      %922 = vmatpush1.bf16.msra.mxu0 0
      %923 = vmatprep.subr.bf16.mxu0 0
      %924 = vmatpush1.bf16.msra.mxu0 0
      %925 = vmatprep.subr.bf16.mxu0 0
      %926 = vmatpush1.bf16.msra.mxu0 0
      %927 = vmatprep.subr.bf16.mxu0 0
      %928 = vmatpush1.bf16.msra.mxu0 0
      %929 = vmatprep.subr.bf16.mxu0 0
      %930 = vmatpush1.bf16.msra.mxu0 0
      %931 = vmatprep.subr.bf16.mxu0 0
      %932 = vmatpush1.bf16.msra.mxu0 0
      %933 = vmatprep.subr.bf16.mxu0 0
      %934 = vmatpush1.bf16.msra.mxu0 0
      %935 = vmatprep.subr.bf16.mxu0 0
      %936 = vmatpush1.bf16.msra.mxu0 0
      %937 = vmatprep.subr.bf16.mxu0 0
      %938 = vmatpush1.bf16.msra.mxu0 0
      %939 = vmatprep.subr.bf16.mxu0 0
      %940 = vmatpush1.bf16.msra.mxu0 0
      %941 = vmatprep.subr.bf16.mxu0 0
      %942 = vmatpush1.bf16.msra.mxu0 0
      %943 = vmatprep.subr.bf16.mxu0 0
      %944 = vmatpush1.bf16.msra.mxu0 0
      %945 = vmatprep.subr.bf16.mxu0 0
      %946 = vmatpush1.bf16.msra.mxu0 0
      %947 = vmatprep.subr.bf16.mxu0 0
      %948 = vmatpush1.bf16.msra.mxu0 0
      %949 = vmatprep.mubr.bf16.mxu0 0
      %950 = vmatmul.mubr.bf16.gmra.mrb[0].mxu0 %v891
      %v951 = vpop.f32.mrb[0].mxu0
      %v952 = vadd.f32 0.0, %v951
      %v953 = vpop.f32.mrb[0].mxu0
      %v954 = vadd.f32 0.0, %v953
      %v955 = vpop.f32.mrb[0].mxu0
      %v956 = vadd.f32 0.0, %v955
      %v957 = vpop.f32.mrb[0].mxu0
      %v958 = vadd.f32 0.0, %v957
      %959 = vdwg.mxu0
      %960 = vmatprep.subr.bf16.mxu0 %v903
      %961 = vmatpush1.bf16.msra.mxu0 %v900
      %962 = vmatprep.subr.bf16.mxu0 0
      %963 = vmatpush1.bf16.msra.mxu0 0
      %964 = vmatprep.subr.bf16.mxu0 0
      %965 = vmatpush1.bf16.msra.mxu0 0
      %966 = vmatprep.subr.bf16.mxu0 0
      %967 = vmatpush1.bf16.msra.mxu0 0
      %968 = vmatprep.subr.bf16.mxu0 0
      %969 = vmatpush1.bf16.msra.mxu0 0
      %970 = vmatprep.subr.bf16.mxu0 0
      %971 = vmatpush1.bf16.msra.mxu0 0
      %972 = vmatprep.subr.bf16.mxu0 0
      %973 = vmatpush1.bf16.msra.mxu0 0
      %974 = vmatprep.subr.bf16.mxu0 0
      %975 = vmatpush1.bf16.msra.mxu0 0
      %976 = vmatprep.subr.bf16.mxu0 0
      %977 = vmatpush1.bf16.msra.mxu0 0
      %978 = vmatprep.subr.bf16.mxu0 0
      %979 = vmatpush1.bf16.msra.mxu0 0
      %980 = vmatprep.subr.bf16.mxu0 0
      %981 = vmatpush1.bf16.msra.mxu0 0
      %982 = vmatprep.subr.bf16.mxu0 0
      %983 = vmatpush1.bf16.msra.mxu0 0
      %984 = vmatprep.subr.bf16.mxu0 0
      %985 = vmatpush1.bf16.msra.mxu0 0
      %986 = vmatprep.subr.bf16.mxu0 0
      %987 = vmatpush1.bf16.msra.mxu0 0
      %988 = vmatprep.subr.bf16.mxu0 0
      %989 = vmatpush1.bf16.msra.mxu0 0
      %990 = vmatprep.subr.bf16.mxu0 0
      %991 = vmatpush1.bf16.msra.mxu0 0
      %992 = vmatprep.mubr.bf16.mxu0 0
      %993 = vmatmul.mubr.bf16.gmra.mrb[0].mxu0 %v891
      %v994 = vpop.f32.mrb[0].mxu0
      %v995 = vadd.f32 0.0, %v994
      %v996 = vpop.f32.mrb[0].mxu0
      %v997 = vadd.f32 0.0, %v996
      %v998 = vpop.f32.mrb[0].mxu0
      %v999 = vadd.f32 0.0, %v998
      %v1000 = vpop.f32.mrb[0].mxu0
      %v1001 = vadd.f32 0.0, %v1000
      %1002 = vdwg.mxu0
      %1003 = vmatprep.subr.bf16.mxu0 %v909
      %1004 = vmatpush1.bf16.msra.mxu0 %v906
      %1005 = vmatprep.subr.bf16.mxu0 0
      %1006 = vmatpush1.bf16.msra.mxu0 0
      %1007 = vmatprep.subr.bf16.mxu0 0
      %1008 = vmatpush1.bf16.msra.mxu0 0
      %1009 = vmatprep.subr.bf16.mxu0 0
      %1010 = vmatpush1.bf16.msra.mxu0 0
      %1011 = vmatprep.subr.bf16.mxu0 0
      %1012 = vmatpush1.bf16.msra.mxu0 0
      %1013 = vmatprep.subr.bf16.mxu0 0
      %1014 = vmatpush1.bf16.msra.mxu0 0
      %1015 = vmatprep.subr.bf16.mxu0 0
      %1016 = vmatpush1.bf16.msra.mxu0 0
      %1017 = vmatprep.subr.bf16.mxu0 0
      %1018 = vmatpush1.bf16.msra.mxu0 0
      %1019 = vmatprep.subr.bf16.mxu0 0
      %1020 = vmatpush1.bf16.msra.mxu0 0
      %1021 = vmatprep.subr.bf16.mxu0 0
      %1022 = vmatpush1.bf16.msra.mxu0 0
      %1023 = vmatprep.subr.bf16.mxu0 0
      %1024 = vmatpush1.bf16.msra.mxu0 0
      %1025 = vmatprep.subr.bf16.mxu0 0
      %1026 = vmatpush1.bf16.msra.mxu0 0
      %1027 = vmatprep.subr.bf16.mxu0 0
      %1028 = vmatpush1.bf16.msra.mxu0 0
      %1029 = vmatprep.subr.bf16.mxu0 0
      %1030 = vmatpush1.bf16.msra.mxu0 0
      %1031 = vmatprep.subr.bf16.mxu0 0
      %1032 = vmatpush1.bf16.msra.mxu0 0
      %1033 = vmatprep.subr.bf16.mxu0 0
      %1034 = vmatpush1.bf16.msra.mxu0 0
      %1035 = vmatprep.mubr.bf16.mxu0 0
      %1036 = vmatmul.mubr.bf16.gmra.mrb[0].mxu0 %v891
      %v1037 = vpop.f32.mrb[0].mxu0
      %v1038 = vadd.f32 0.0, %v1037
      %v1039 = vpop.f32.mrb[0].mxu0
      %v1040 = vadd.f32 0.0, %v1039
      %v1041 = vpop.f32.mrb[0].mxu0
      %v1042 = vadd.f32 0.0, %v1041
      %v1043 = vpop.f32.mrb[0].mxu0
      %v1044 = vadd.f32 0.0, %v1043
      %1045 = vdwg.mxu0
      %1046 = vmatprep.subr.bf16.mxu0 %v915
      %1047 = vmatpush1.bf16.msra.mxu0 %v912
      %1048 = vmatprep.subr.bf16.mxu0 0
      %1049 = vmatpush1.bf16.msra.mxu0 0
      %1050 = vmatprep.subr.bf16.mxu0 0
      %1051 = vmatpush1.bf16.msra.mxu0 0
      %1052 = vmatprep.subr.bf16.mxu0 0
      %1053 = vmatpush1.bf16.msra.mxu0 0
      %1054 = vmatprep.subr.bf16.mxu0 0
      %1055 = vmatpush1.bf16.msra.mxu0 0
      %1056 = vmatprep.subr.bf16.mxu0 0
      %1057 = vmatpush1.bf16.msra.mxu0 0
      %1058 = vmatprep.subr.bf16.mxu0 0
      %1059 = vmatpush1.bf16.msra.mxu0 0
      %1060 = vmatprep.subr.bf16.mxu0 0
      %1061 = vmatpush1.bf16.msra.mxu0 0
      %1062 = vmatprep.subr.bf16.mxu0 0
      %1063 = vmatpush1.bf16.msra.mxu0 0
      %1064 = vmatprep.subr.bf16.mxu0 0
      %1065 = vmatpush1.bf16.msra.mxu0 0
      %1066 = vmatprep.subr.bf16.mxu0 0
      %1067 = vmatpush1.bf16.msra.mxu0 0
      %1068 = vmatprep.subr.bf16.mxu0 0
      %1069 = vmatpush1.bf16.msra.mxu0 0
      %1070 = vmatprep.subr.bf16.mxu0 0
      %1071 = vmatpush1.bf16.msra.mxu0 0
      %1072 = vmatprep.subr.bf16.mxu0 0
      %1073 = vmatpush1.bf16.msra.mxu0 0
      %1074 = vmatprep.subr.bf16.mxu0 0
      %1075 = vmatpush1.bf16.msra.mxu0 0
      %1076 = vmatprep.subr.bf16.mxu0 0
      %1077 = vmatpush1.bf16.msra.mxu0 0
      %1078 = vmatprep.mubr.bf16.mxu0 0
      %1079 = vmatmul.mubr.bf16.gmra.mrb[0].mxu0 %v891
      %v1080 = vpop.f32.mrb[0].mxu0
      %v1081 = vadd.f32 0.0, %v1080
      %v1082 = vpop.f32.mrb[0].mxu0
      %v1083 = vadd.f32 0.0, %v1082
      %v1084 = vpop.f32.mrb[0].mxu0
      %v1085 = vadd.f32 0.0, %v1084
      %v1086 = vpop.f32.mrb[0].mxu0
      %v1087 = vadd.f32 0.0, %v1086
      %1088 = vdwg.mxu0
      %v1089 = vadd.f32 %v656, %v952
      %v1090 = vadd.f32 %v658, %v954
      %v1091 = vadd.f32 %v699, %v995
      %v1092 = vadd.f32 %v701, %v997
      %v1093 = vadd.f32 %v742, %v1038
      %v1094 = vadd.f32 %v744, %v1040
      %v1095 = vadd.f32 %v785, %v1081
      %v1096 = vadd.f32 %v787, %v1083
      %v1097 = vadd.f32 %v660, %v956
      %v1098 = vadd.f32 %v662, %v958
      %v1099 = vadd.f32 %v703, %v999
      %v1100 = vadd.f32 %v705, %v1001
      %v1101 = vadd.f32 %v746, %v1042
      %v1102 = vadd.f32 %v748, %v1044
      %v1103 = vadd.f32 %v789, %v1085
      %v1104 = vadd.f32 %v791, %v1087
      %v1105 = vsel %vm299, 65537, 0
      %v1106 = vsel %vm300, 65537, 0
      %v1107 = vsel %vm301, 65537, 0
      %v1108 = vsel %vm302, 65537, 0
      %1109 = vrot.lane.b32.xlu0 %v1105, 32
      %v1110 = vpop.permute.xlu0 %1109
      %1111 = vrot.lane.b32.xlu0 %v1106, 32
      %v1112 = vpop.permute.xlu0 %1111
      %1113 = vrot.lane.b32.xlu0 %v1107, 32
      %v1114 = vpop.permute.xlu0 %1113
      %1115 = vrot.lane.b32.xlu0 %v1108, 32
      %v1116 = vpop.permute.xlu0 %1115
      %v1117 = vrot.slane %v1110, 4
      %v1118 = vrot.slane %v1112, 4
      %v1119 = vrot.slane %v1114, 4
      %v1120 = vrot.slane %v1116, 4
      %vm1121 = vcmask 261120
      %v1122 = vsel %vm1121, %v1117, %v1110
      %v1123 = vsel %vm815, %v1117, %v1118
      %v1124 = vsel %vm1121, %v1123, %v1112
      %v1125 = vsel %vm815, %v1118, %v1119
      %v1126 = vsel %vm1121, %v1125, %v1114
      %v1127 = vsel %vm815, %v1119, %v1120
      %v1128 = vsel %vm1121, %v1127, %v1116
      %vm1129 = vcmp.ne.s16.totalorder %v1122, 0
      %vm1130 = vcmp.ne.s16.totalorder %v1124, 0
      %vm1131 = vcmp.ne.s16.totalorder %v1126, 0
      %vm1132 = vcmp.ne.s16.totalorder %v1128, 0
      %vm1133 = vcmp.ne.s16.totalorder %v1120, 0
      %v1134 = vsel %vm1129, %v295, 0
      %v1135 = vsel %vm1130, %v296, 0
      %v1136 = vsel %vm1131, %v297, 0
      %v1137 = vsel %vm1132, %v298, 0
      %v1138 = vsel %vm1133, %v309, 0
      %s1139 = scalar_lea.vmem %s1, 24
      %v1140 = vld [vmem:[%s1139] sm:$0xf]
      %v1141 = vld [vmem:[%s1139 + $0x4] sm:$0x3]
      %v1144 = vunpack.c.l.b16 %v1140
      %v1145 = vunpack.c.l.b16 %v1141
      %v1146 = vpack.c.b16 %v1145, %v1144
      %v1152 = vunpack.c.l.b16 %v1134
      %v1153 = vunpack.c.h.b16 %v1134
      %v1154 = vunpack.c.l.b16 %v1135
      %v1155 = vunpack.c.h.b16 %v1135
      %v1156 = vunpack.c.l.b16 %v1136
      %v1157 = vunpack.c.h.b16 %v1136
      %v1158 = vunpack.c.l.b16 %v1137
      %v1159 = vunpack.c.h.b16 %v1137
      %v1160 = vunpack.c.l.b16 %v1138
      %v1161 = vpack.c.b16 %v1152, %v1152
      %v1162 = vpack.c.b16 %v1153, %v1153
      %v1163 = vpack.c.b16 %v1154, %v1154
      %v1164 = vpack.c.b16 %v1155, %v1155
      %v1165 = vpack.c.b16 %v1156, %v1156
      %v1166 = vpack.c.b16 %v1157, %v1157
      %v1167 = vpack.c.b16 %v1158, %v1158
      %v1168 = vpack.c.b16 %v1159, %v1159
      %v1169 = vpack.c.b16 %v1160, %v1160
      %1170 = vrot.lane.b32.xlu0 %v1161, 96
      %v1171 = vpop.permute.xlu0 %1170
      %1172 = vrot.lane.b32.xlu0 %v1162, 96
      %v1173 = vpop.permute.xlu0 %1172
      %1174 = vrot.lane.b32.xlu0 %v1163, 96
      %v1175 = vpop.permute.xlu0 %1174
      %1176 = vrot.lane.b32.xlu0 %v1164, 96
      %v1177 = vpop.permute.xlu0 %1176
      %1178 = vrot.lane.b32.xlu0 %v1165, 96
      %v1179 = vpop.permute.xlu0 %1178
      %1180 = vrot.lane.b32.xlu0 %v1166, 96
      %v1181 = vpop.permute.xlu0 %1180
      %1182 = vrot.lane.b32.xlu0 %v1167, 96
      %v1183 = vpop.permute.xlu0 %1182
      %1184 = vrot.lane.b32.xlu0 %v1168, 96
      %v1185 = vpop.permute.xlu0 %1184
      %1186 = vrot.lane.b32.xlu0 %v1169, 96
      %v1187 = vpop.permute.xlu0 %1186
      %vm1188 = vcmask 785408
      %v1189 = vsel %vm1188, %v1171, %v1173
      %v1190 = vsel %vm1188, %v1173, %v1175
      %v1191 = vsel %vm1188, %v1175, %v1177
      %v1192 = vsel %vm1188, %v1177, %v1179
      %v1193 = vsel %vm1188, %v1179, %v1181
      %v1194 = vsel %vm1188, %v1181, %v1183
      %v1195 = vsel %vm1188, %v1183, %v1185
      %v1196 = vsel %vm1188, %v1185, %v1187
      %v1198 = vsel %vm368, %v1146, 0
      %v1201 = vsel %vm372, %v1189, 0
      %v1204 = vsel %vm372, %v1190, 0
      %v1207 = vsel %vm372, %v1191, 0
      %v1210 = vsel %vm372, %v1192, 0
      %v1213 = vsel %vm372, %v1193, 0
      %v1216 = vsel %vm372, %v1194, 0
      %v1219 = vsel %vm372, %v1195, 0
      %v1222 = vsel %vm372, %v1196, 0
      %1224 = vmatprep.subr.bf16.mxu0 %v1204
      %1225 = vmatpush1.bf16.msra.mxu0 %v1201
      %1226 = vmatprep.subr.bf16.mxu0 0
      %1227 = vmatpush1.bf16.msra.mxu0 0
      %1228 = vmatprep.subr.bf16.mxu0 0
      %1229 = vmatpush1.bf16.msra.mxu0 0
      %1230 = vmatprep.subr.bf16.mxu0 0
      %1231 = vmatpush1.bf16.msra.mxu0 0
      %1232 = vmatprep.subr.bf16.mxu0 0
      %1233 = vmatpush1.bf16.msra.mxu0 0
      %1234 = vmatprep.subr.bf16.mxu0 0
      %1235 = vmatpush1.bf16.msra.mxu0 0
      %1236 = vmatprep.subr.bf16.mxu0 0
      %1237 = vmatpush1.bf16.msra.mxu0 0
      %1238 = vmatprep.subr.bf16.mxu0 0
      %1239 = vmatpush1.bf16.msra.mxu0 0
      %1240 = vmatprep.subr.bf16.mxu0 0
      %1241 = vmatpush1.bf16.msra.mxu0 0
      %1242 = vmatprep.subr.bf16.mxu0 0
      %1243 = vmatpush1.bf16.msra.mxu0 0
      %1244 = vmatprep.subr.bf16.mxu0 0
      %1245 = vmatpush1.bf16.msra.mxu0 0
      %1246 = vmatprep.subr.bf16.mxu0 0
      %1247 = vmatpush1.bf16.msra.mxu0 0
      %1248 = vmatprep.subr.bf16.mxu0 0
      %1249 = vmatpush1.bf16.msra.mxu0 0
      %1250 = vmatprep.subr.bf16.mxu0 0
      %1251 = vmatpush1.bf16.msra.mxu0 0
      %1252 = vmatprep.subr.bf16.mxu0 0
      %1253 = vmatpush1.bf16.msra.mxu0 0
      %1254 = vmatprep.subr.bf16.mxu0 0
      %1255 = vmatpush1.bf16.msra.mxu0 0
      %1256 = vmatprep.mubr.bf16.mxu0 0
      %1257 = vmatmul.mubr.bf16.gmra.mrb[0].mxu0 %v1198
      %v1258 = vpop.f32.mrb[0].mxu0
      %v1259 = vadd.f32 0.0, %v1258
      %v1260 = vpop.f32.mrb[0].mxu0
      %v1261 = vadd.f32 0.0, %v1260
      %v1262 = vpop.f32.mrb[0].mxu0
      %v1263 = vadd.f32 0.0, %v1262
      %v1264 = vpop.f32.mrb[0].mxu0
      %v1265 = vadd.f32 0.0, %v1264
      %1266 = vdwg.mxu0
      %1267 = vmatprep.subr.bf16.mxu0 %v1210
      %1268 = vmatpush1.bf16.msra.mxu0 %v1207
      %1269 = vmatprep.subr.bf16.mxu0 0
      %1270 = vmatpush1.bf16.msra.mxu0 0
      %1271 = vmatprep.subr.bf16.mxu0 0
      %1272 = vmatpush1.bf16.msra.mxu0 0
      %1273 = vmatprep.subr.bf16.mxu0 0
      %1274 = vmatpush1.bf16.msra.mxu0 0
      %1275 = vmatprep.subr.bf16.mxu0 0
      %1276 = vmatpush1.bf16.msra.mxu0 0
      %1277 = vmatprep.subr.bf16.mxu0 0
      %1278 = vmatpush1.bf16.msra.mxu0 0
      %1279 = vmatprep.subr.bf16.mxu0 0
      %1280 = vmatpush1.bf16.msra.mxu0 0
      %1281 = vmatprep.subr.bf16.mxu0 0
      %1282 = vmatpush1.bf16.msra.mxu0 0
      %1283 = vmatprep.subr.bf16.mxu0 0
      %1284 = vmatpush1.bf16.msra.mxu0 0
      %1285 = vmatprep.subr.bf16.mxu0 0
      %1286 = vmatpush1.bf16.msra.mxu0 0
      %1287 = vmatprep.subr.bf16.mxu0 0
      %1288 = vmatpush1.bf16.msra.mxu0 0
      %1289 = vmatprep.subr.bf16.mxu0 0
      %1290 = vmatpush1.bf16.msra.mxu0 0
      %1291 = vmatprep.subr.bf16.mxu0 0
      %1292 = vmatpush1.bf16.msra.mxu0 0
      %1293 = vmatprep.subr.bf16.mxu0 0
      %1294 = vmatpush1.bf16.msra.mxu0 0
      %1295 = vmatprep.subr.bf16.mxu0 0
      %1296 = vmatpush1.bf16.msra.mxu0 0
      %1297 = vmatprep.subr.bf16.mxu0 0
      %1298 = vmatpush1.bf16.msra.mxu0 0
      %1299 = vmatprep.mubr.bf16.mxu0 0
      %1300 = vmatmul.mubr.bf16.gmra.mrb[0].mxu0 %v1198
      %v1301 = vpop.f32.mrb[0].mxu0
      %v1302 = vadd.f32 0.0, %v1301
      %v1303 = vpop.f32.mrb[0].mxu0
      %v1304 = vadd.f32 0.0, %v1303
      %v1305 = vpop.f32.mrb[0].mxu0
      %v1306 = vadd.f32 0.0, %v1305
      %v1307 = vpop.f32.mrb[0].mxu0
      %v1308 = vadd.f32 0.0, %v1307
      %1309 = vdwg.mxu0
      %1310 = vmatprep.subr.bf16.mxu0 %v1216
      %1311 = vmatpush1.bf16.msra.mxu0 %v1213
      %1312 = vmatprep.subr.bf16.mxu0 0
      %1313 = vmatpush1.bf16.msra.mxu0 0
      %1314 = vmatprep.subr.bf16.mxu0 0
      %1315 = vmatpush1.bf16.msra.mxu0 0
      %1316 = vmatprep.subr.bf16.mxu0 0
      %1317 = vmatpush1.bf16.msra.mxu0 0
      %1318 = vmatprep.subr.bf16.mxu0 0
      %1319 = vmatpush1.bf16.msra.mxu0 0
      %1320 = vmatprep.subr.bf16.mxu0 0
      %1321 = vmatpush1.bf16.msra.mxu0 0
      %1322 = vmatprep.subr.bf16.mxu0 0
      %1323 = vmatpush1.bf16.msra.mxu0 0
      %1324 = vmatprep.subr.bf16.mxu0 0
      %1325 = vmatpush1.bf16.msra.mxu0 0
      %1326 = vmatprep.subr.bf16.mxu0 0
      %1327 = vmatpush1.bf16.msra.mxu0 0
      %1328 = vmatprep.subr.bf16.mxu0 0
      %1329 = vmatpush1.bf16.msra.mxu0 0
      %1330 = vmatprep.subr.bf16.mxu0 0
      %1331 = vmatpush1.bf16.msra.mxu0 0
      %1332 = vmatprep.subr.bf16.mxu0 0
      %1333 = vmatpush1.bf16.msra.mxu0 0
      %1334 = vmatprep.subr.bf16.mxu0 0
      %1335 = vmatpush1.bf16.msra.mxu0 0
      %1336 = vmatprep.subr.bf16.mxu0 0
      %1337 = vmatpush1.bf16.msra.mxu0 0
      %1338 = vmatprep.subr.bf16.mxu0 0
      %1339 = vmatpush1.bf16.msra.mxu0 0
      %1340 = vmatprep.subr.bf16.mxu0 0
      %1341 = vmatpush1.bf16.msra.mxu0 0
      %1342 = vmatprep.mubr.bf16.mxu0 0
      %1343 = vmatmul.mubr.bf16.gmra.mrb[0].mxu0 %v1198
      %v1344 = vpop.f32.mrb[0].mxu0
      %v1345 = vadd.f32 0.0, %v1344
      %v1346 = vpop.f32.mrb[0].mxu0
      %v1347 = vadd.f32 0.0, %v1346
      %v1348 = vpop.f32.mrb[0].mxu0
      %v1349 = vadd.f32 0.0, %v1348
      %v1350 = vpop.f32.mrb[0].mxu0
      %v1351 = vadd.f32 0.0, %v1350
      %1352 = vdwg.mxu0
      %1353 = vmatprep.subr.bf16.mxu0 %v1222
      %1354 = vmatpush1.bf16.msra.mxu0 %v1219
      %1355 = vmatprep.subr.bf16.mxu0 0
      %1356 = vmatpush1.bf16.msra.mxu0 0
      %1357 = vmatprep.subr.bf16.mxu0 0
      %1358 = vmatpush1.bf16.msra.mxu0 0
      %1359 = vmatprep.subr.bf16.mxu0 0
      %1360 = vmatpush1.bf16.msra.mxu0 0
      %1361 = vmatprep.subr.bf16.mxu0 0
      %1362 = vmatpush1.bf16.msra.mxu0 0
      %1363 = vmatprep.subr.bf16.mxu0 0
      %1364 = vmatpush1.bf16.msra.mxu0 0
      %1365 = vmatprep.subr.bf16.mxu0 0
      %1366 = vmatpush1.bf16.msra.mxu0 0
      %1367 = vmatprep.subr.bf16.mxu0 0
      %1368 = vmatpush1.bf16.msra.mxu0 0
      %1369 = vmatprep.subr.bf16.mxu0 0
      %1370 = vmatpush1.bf16.msra.mxu0 0
      %1371 = vmatprep.subr.bf16.mxu0 0
      %1372 = vmatpush1.bf16.msra.mxu0 0
      %1373 = vmatprep.subr.bf16.mxu0 0
      %1374 = vmatpush1.bf16.msra.mxu0 0
      %1375 = vmatprep.subr.bf16.mxu0 0
      %1376 = vmatpush1.bf16.msra.mxu0 0
      %1377 = vmatprep.subr.bf16.mxu0 0
      %1378 = vmatpush1.bf16.msra.mxu0 0
      %1379 = vmatprep.subr.bf16.mxu0 0
      %1380 = vmatpush1.bf16.msra.mxu0 0
      %1381 = vmatprep.subr.bf16.mxu0 0
      %1382 = vmatpush1.bf16.msra.mxu0 0
      %1383 = vmatprep.subr.bf16.mxu0 0
      %1384 = vmatpush1.bf16.msra.mxu0 0
      %1385 = vmatprep.mubr.bf16.mxu0 0
      %1386 = vmatmul.mubr.bf16.gmra.mrb[0].mxu0 %v1198
      %v1387 = vpop.f32.mrb[0].mxu0
      %v1388 = vadd.f32 0.0, %v1387
      %v1389 = vpop.f32.mrb[0].mxu0
      %v1390 = vadd.f32 0.0, %v1389
      %v1391 = vpop.f32.mrb[0].mxu0
      %v1392 = vadd.f32 0.0, %v1391
      %v1393 = vpop.f32.mrb[0].mxu0
      %v1394 = vadd.f32 0.0, %v1393
      %1395 = vdwg.mxu0
      %v1396 = vadd.f32 %v1089, %v1259
      %v1397 = vadd.f32 %v1090, %v1261
      %v1398 = vadd.f32 %v1091, %v1302
      %v1399 = vadd.f32 %v1092, %v1304
      %v1400 = vadd.f32 %v1093, %v1345
      %v1401 = vadd.f32 %v1094, %v1347
      %v1402 = vadd.f32 %v1095, %v1388
      %v1403 = vadd.f32 %v1096, %v1390
      %v1404 = vadd.f32 %v1097, %v1263
      %v1405 = vadd.f32 %v1098, %v1265
      %v1406 = vadd.f32 %v1099, %v1306
      %v1407 = vadd.f32 %v1100, %v1308
      %v1408 = vadd.f32 %v1101, %v1349
      %v1409 = vadd.f32 %v1102, %v1351
      %v1410 = vadd.f32 %v1103, %v1392
      %v1411 = vadd.f32 %v1104, %v1394
      %s1412 = scalar_lea.vmem %s1, 32
      %v1413 = vld [vmem:[%s1412] sm:$0xf]
      %v1414 = vld [vmem:[%s1412 + $0x4] sm:$0x3]
      %v1417 = vunpack.c.l.b16 %v1413
      %v1418 = vunpack.c.l.b16 %v1414
      %v1419 = vpack.c.b16 %v1418, %v1417
      %1420 = vrot.lane.b32.xlu0 %v332, 95
      %v1421 = vpop.permute.xlu0 %1420
      %1422 = vrot.lane.b32.xlu0 %v333, 95
      %v1423 = vpop.permute.xlu0 %1422
      %1424 = vrot.lane.b32.xlu0 %v334, 95
      %v1425 = vpop.permute.xlu0 %1424
      %1426 = vrot.lane.b32.xlu0 %v335, 95
      %v1427 = vpop.permute.xlu0 %1426
      %1428 = vrot.lane.b32.xlu0 %v336, 95
      %v1429 = vpop.permute.xlu0 %1428
      %1430 = vrot.lane.b32.xlu0 %v337, 95
      %v1431 = vpop.permute.xlu0 %1430
      %1432 = vrot.lane.b32.xlu0 %v338, 95
      %v1433 = vpop.permute.xlu0 %1432
      %1434 = vrot.lane.b32.xlu0 %v339, 95
      %v1435 = vpop.permute.xlu0 %1434
      %1436 = vrot.lane.b32.xlu0 %v340, 95
      %v1437 = vpop.permute.xlu0 %1436
      %vm1438 = vcmask 777216
      %v1439 = vsel %vm1438, %v1421, %v1423
      %v1440 = vsel %vm1438, %v1423, %v1425
      %v1441 = vsel %vm1438, %v1425, %v1427
      %v1442 = vsel %vm1438, %v1427, %v1429
      %v1443 = vsel %vm1438, %v1429, %v1431
      %v1444 = vsel %vm1438, %v1431, %v1433
      %v1445 = vsel %vm1438, %v1433, %v1435
      %v1446 = vsel %vm1438, %v1435, %v1437
      %v1448 = vsel %vm368, %v1419, 0
      %v1451 = vsel %vm372, %v1439, 0
      %v1454 = vsel %vm372, %v1440, 0
      %v1457 = vsel %vm372, %v1441, 0
      %v1460 = vsel %vm372, %v1442, 0
      %v1463 = vsel %vm372, %v1443, 0
      %v1466 = vsel %vm372, %v1444, 0
      %v1469 = vsel %vm372, %v1445, 0
      %v1472 = vsel %vm372, %v1446, 0
      %1474 = vmatprep.subr.bf16.mxu0 %v1454
      %1475 = vmatpush1.bf16.msra.mxu0 %v1451
      %1476 = vmatprep.subr.bf16.mxu0 0
      %1477 = vmatpush1.bf16.msra.mxu0 0
      %1478 = vmatprep.subr.bf16.mxu0 0
      %1479 = vmatpush1.bf16.msra.mxu0 0
      %1480 = vmatprep.subr.bf16.mxu0 0
      %1481 = vmatpush1.bf16.msra.mxu0 0
      %1482 = vmatprep.subr.bf16.mxu0 0
      %1483 = vmatpush1.bf16.msra.mxu0 0
      %1484 = vmatprep.subr.bf16.mxu0 0
      %1485 = vmatpush1.bf16.msra.mxu0 0
      %1486 = vmatprep.subr.bf16.mxu0 0
      %1487 = vmatpush1.bf16.msra.mxu0 0
      %1488 = vmatprep.subr.bf16.mxu0 0
      %1489 = vmatpush1.bf16.msra.mxu0 0
      %1490 = vmatprep.subr.bf16.mxu0 0
      %1491 = vmatpush1.bf16.msra.mxu0 0
      %1492 = vmatprep.subr.bf16.mxu0 0
      %1493 = vmatpush1.bf16.msra.mxu0 0
      %1494 = vmatprep.subr.bf16.mxu0 0
      %1495 = vmatpush1.bf16.msra.mxu0 0
      %1496 = vmatprep.subr.bf16.mxu0 0
      %1497 = vmatpush1.bf16.msra.mxu0 0
      %1498 = vmatprep.subr.bf16.mxu0 0
      %1499 = vmatpush1.bf16.msra.mxu0 0
      %1500 = vmatprep.subr.bf16.mxu0 0
      %1501 = vmatpush1.bf16.msra.mxu0 0
      %1502 = vmatprep.subr.bf16.mxu0 0
      %1503 = vmatpush1.bf16.msra.mxu0 0
      %1504 = vmatprep.subr.bf16.mxu0 0
      %1505 = vmatpush1.bf16.msra.mxu0 0
      %1506 = vmatprep.mubr.bf16.mxu0 0
      %1507 = vmatmul.mubr.bf16.gmra.mrb[0].mxu0 %v1448
      %v1508 = vpop.f32.mrb[0].mxu0
      %v1509 = vadd.f32 0.0, %v1508
      %v1510 = vpop.f32.mrb[0].mxu0
      %v1511 = vadd.f32 0.0, %v1510
      %v1512 = vpop.f32.mrb[0].mxu0
      %v1513 = vadd.f32 0.0, %v1512
      %v1514 = vpop.f32.mrb[0].mxu0
      %v1515 = vadd.f32 0.0, %v1514
      %1516 = vdwg.mxu0
      %1517 = vmatprep.subr.bf16.mxu0 %v1460
      %1518 = vmatpush1.bf16.msra.mxu0 %v1457
      %1519 = vmatprep.subr.bf16.mxu0 0
      %1520 = vmatpush1.bf16.msra.mxu0 0
      %1521 = vmatprep.subr.bf16.mxu0 0
      %1522 = vmatpush1.bf16.msra.mxu0 0
      %1523 = vmatprep.subr.bf16.mxu0 0
      %1524 = vmatpush1.bf16.msra.mxu0 0
      %1525 = vmatprep.subr.bf16.mxu0 0
      %1526 = vmatpush1.bf16.msra.mxu0 0
      %1527 = vmatprep.subr.bf16.mxu0 0
      %1528 = vmatpush1.bf16.msra.mxu0 0
      %1529 = vmatprep.subr.bf16.mxu0 0
      %1530 = vmatpush1.bf16.msra.mxu0 0
      %1531 = vmatprep.subr.bf16.mxu0 0
      %1532 = vmatpush1.bf16.msra.mxu0 0
      %1533 = vmatprep.subr.bf16.mxu0 0
      %1534 = vmatpush1.bf16.msra.mxu0 0
      %1535 = vmatprep.subr.bf16.mxu0 0
      %1536 = vmatpush1.bf16.msra.mxu0 0
      %1537 = vmatprep.subr.bf16.mxu0 0
      %1538 = vmatpush1.bf16.msra.mxu0 0
      %1539 = vmatprep.subr.bf16.mxu0 0
      %1540 = vmatpush1.bf16.msra.mxu0 0
      %1541 = vmatprep.subr.bf16.mxu0 0
      %1542 = vmatpush1.bf16.msra.mxu0 0
      %1543 = vmatprep.subr.bf16.mxu0 0
      %1544 = vmatpush1.bf16.msra.mxu0 0
      %1545 = vmatprep.subr.bf16.mxu0 0
      %1546 = vmatpush1.bf16.msra.mxu0 0
      %1547 = vmatprep.subr.bf16.mxu0 0
      %1548 = vmatpush1.bf16.msra.mxu0 0
      %1549 = vmatprep.mubr.bf16.mxu0 0
      %1550 = vmatmul.mubr.bf16.gmra.mrb[0].mxu0 %v1448
      %v1551 = vpop.f32.mrb[0].mxu0
      %v1552 = vadd.f32 0.0, %v1551
      %v1553 = vpop.f32.mrb[0].mxu0
      %v1554 = vadd.f32 0.0, %v1553
      %v1555 = vpop.f32.mrb[0].mxu0
      %v1556 = vadd.f32 0.0, %v1555
      %v1557 = vpop.f32.mrb[0].mxu0
      %v1558 = vadd.f32 0.0, %v1557
      %1559 = vdwg.mxu0
      %1560 = vmatprep.subr.bf16.mxu0 %v1466
      %1561 = vmatpush1.bf16.msra.mxu0 %v1463
      %1562 = vmatprep.subr.bf16.mxu0 0
      %1563 = vmatpush1.bf16.msra.mxu0 0
      %1564 = vmatprep.subr.bf16.mxu0 0
      %1565 = vmatpush1.bf16.msra.mxu0 0
      %1566 = vmatprep.subr.bf16.mxu0 0
      %1567 = vmatpush1.bf16.msra.mxu0 0
      %1568 = vmatprep.subr.bf16.mxu0 0
      %1569 = vmatpush1.bf16.msra.mxu0 0
      %1570 = vmatprep.subr.bf16.mxu0 0
      %1571 = vmatpush1.bf16.msra.mxu0 0
      %1572 = vmatprep.subr.bf16.mxu0 0
      %1573 = vmatpush1.bf16.msra.mxu0 0
      %1574 = vmatprep.subr.bf16.mxu0 0
      %1575 = vmatpush1.bf16.msra.mxu0 0
      %1576 = vmatprep.subr.bf16.mxu0 0
      %1577 = vmatpush1.bf16.msra.mxu0 0
      %1578 = vmatprep.subr.bf16.mxu0 0
      %1579 = vmatpush1.bf16.msra.mxu0 0
      %1580 = vmatprep.subr.bf16.mxu0 0
      %1581 = vmatpush1.bf16.msra.mxu0 0
      %1582 = vmatprep.subr.bf16.mxu0 0
      %1583 = vmatpush1.bf16.msra.mxu0 0
      %1584 = vmatprep.subr.bf16.mxu0 0
      %1585 = vmatpush1.bf16.msra.mxu0 0
      %1586 = vmatprep.subr.bf16.mxu0 0
      %1587 = vmatpush1.bf16.msra.mxu0 0
      %1588 = vmatprep.subr.bf16.mxu0 0
      %1589 = vmatpush1.bf16.msra.mxu0 0
      %1590 = vmatprep.subr.bf16.mxu0 0
      %1591 = vmatpush1.bf16.msra.mxu0 0
      %1592 = vmatprep.mubr.bf16.mxu0 0
      %1593 = vmatmul.mubr.bf16.gmra.mrb[0].mxu0 %v1448
      %v1594 = vpop.f32.mrb[0].mxu0
      %v1595 = vadd.f32 0.0, %v1594
      %v1596 = vpop.f32.mrb[0].mxu0
      %v1597 = vadd.f32 0.0, %v1596
      %v1598 = vpop.f32.mrb[0].mxu0
      %v1599 = vadd.f32 0.0, %v1598
      %v1600 = vpop.f32.mrb[0].mxu0
      %v1601 = vadd.f32 0.0, %v1600
      %1602 = vdwg.mxu0
      %1603 = vmatprep.subr.bf16.mxu0 %v1472
      %1604 = vmatpush1.bf16.msra.mxu0 %v1469
      %1605 = vmatprep.subr.bf16.mxu0 0
      %1606 = vmatpush1.bf16.msra.mxu0 0
      %1607 = vmatprep.subr.bf16.mxu0 0
      %1608 = vmatpush1.bf16.msra.mxu0 0
      %1609 = vmatprep.subr.bf16.mxu0 0
      %1610 = vmatpush1.bf16.msra.mxu0 0
      %1611 = vmatprep.subr.bf16.mxu0 0
      %1612 = vmatpush1.bf16.msra.mxu0 0
      %1613 = vmatprep.subr.bf16.mxu0 0
      %1614 = vmatpush1.bf16.msra.mxu0 0
      %1615 = vmatprep.subr.bf16.mxu0 0
      %1616 = vmatpush1.bf16.msra.mxu0 0
      %1617 = vmatprep.subr.bf16.mxu0 0
      %1618 = vmatpush1.bf16.msra.mxu0 0
      %1619 = vmatprep.subr.bf16.mxu0 0
      %1620 = vmatpush1.bf16.msra.mxu0 0
      %1621 = vmatprep.subr.bf16.mxu0 0
      %1622 = vmatpush1.bf16.msra.mxu0 0
      %1623 = vmatprep.subr.bf16.mxu0 0
      %1624 = vmatpush1.bf16.msra.mxu0 0
      %1625 = vmatprep.subr.bf16.mxu0 0
      %1626 = vmatpush1.bf16.msra.mxu0 0
      %1627 = vmatprep.subr.bf16.mxu0 0
      %1628 = vmatpush1.bf16.msra.mxu0 0
      %1629 = vmatprep.subr.bf16.mxu0 0
      %1630 = vmatpush1.bf16.msra.mxu0 0
      %1631 = vmatprep.subr.bf16.mxu0 0
      %1632 = vmatpush1.bf16.msra.mxu0 0
      %1633 = vmatprep.subr.bf16.mxu0 0
      %1634 = vmatpush1.bf16.msra.mxu0 0
      %1635 = vmatprep.mubr.bf16.mxu0 0
      %1636 = vmatmul.mubr.bf16.gmra.mrb[0].mxu0 %v1448
      %v1637 = vpop.f32.mrb[0].mxu0
      %v1638 = vadd.f32 0.0, %v1637
      %v1639 = vpop.f32.mrb[0].mxu0
      %v1640 = vadd.f32 0.0, %v1639
      %v1641 = vpop.f32.mrb[0].mxu0
      %v1642 = vadd.f32 0.0, %v1641
      %v1643 = vpop.f32.mrb[0].mxu0
      %v1644 = vadd.f32 0.0, %v1643
      %1645 = vdwg.mxu0
      %v1646 = vadd.f32 %v1396, %v1509
      %v1647 = vadd.f32 %v1397, %v1511
      %v1648 = vadd.f32 %v1398, %v1552
      %v1649 = vadd.f32 %v1399, %v1554
      %v1650 = vadd.f32 %v1400, %v1595
      %v1651 = vadd.f32 %v1401, %v1597
      %v1652 = vadd.f32 %v1402, %v1638
      %v1653 = vadd.f32 %v1403, %v1640
      %v1654 = vadd.f32 %v1404, %v1513
      %v1655 = vadd.f32 %v1405, %v1515
      %v1656 = vadd.f32 %v1406, %v1556
      %v1657 = vadd.f32 %v1407, %v1558
      %v1658 = vadd.f32 %v1408, %v1599
      %v1659 = vadd.f32 %v1409, %v1601
      %v1660 = vadd.f32 %v1410, %v1642
      %v1661 = vadd.f32 %v1411, %v1644
      %1662 = vrot.lane.b32.xlu0 %v797, 34
      %v1663 = vpop.permute.xlu0 %1662
      %1664 = vrot.lane.b32.xlu0 %v798, 34
      %v1665 = vpop.permute.xlu0 %1664
      %1666 = vrot.lane.b32.xlu0 %v799, 34
      %v1667 = vpop.permute.xlu0 %1666
      %1668 = vrot.lane.b32.xlu0 %v800, 34
      %v1669 = vpop.permute.xlu0 %1668
      %v1670 = vrot.slane %v1663, 4
      %v1671 = vrot.slane %v1665, 4
      %v1672 = vrot.slane %v1667, 4
      %v1673 = vrot.slane %v1669, 4
      %vm1674 = vcmask 277504
      %v1675 = vsel %vm1674, %v1670, %v1663
      %v1676 = vsel %vm815, %v1670, %v1671
      %v1677 = vsel %vm1674, %v1676, %v1665
      %v1678 = vsel %vm815, %v1671, %v1672
      %v1679 = vsel %vm1674, %v1678, %v1667
      %v1680 = vsel %vm815, %v1672, %v1673
      %v1681 = vsel %vm1674, %v1680, %v1669
      %vm1682 = vcmp.ne.s16.totalorder %v1675, 0
      %vm1683 = vcmp.ne.s16.totalorder %v1677, 0
      %vm1684 = vcmp.ne.s16.totalorder %v1679, 0
      %vm1685 = vcmp.ne.s16.totalorder %v1681, 0
      %vm1686 = vcmp.ne.s16.totalorder %v1673, 0
      %v1687 = vsel %vm1682, %v295, 0
      %v1688 = vsel %vm1683, %v296, 0
      %v1689 = vsel %vm1684, %v297, 0
      %v1690 = vsel %vm1685, %v298, 0
      %v1691 = vsel %vm1686, %v309, 0
      %s1692 = scalar_lea.vmem %s1, 40
      %v1693 = vld [vmem:[%s1692] sm:$0xf]
      %v1694 = vld [vmem:[%s1692 + $0x4] sm:$0x3]
      %v1697 = vunpack.c.l.b16 %v1693
      %v1698 = vunpack.c.l.b16 %v1694
      %v1699 = vpack.c.b16 %v1698, %v1697
      %v1705 = vunpack.c.l.b16 %v1687
      %v1706 = vunpack.c.h.b16 %v1687
      %v1707 = vunpack.c.l.b16 %v1688
      %v1708 = vunpack.c.h.b16 %v1688
      %v1709 = vunpack.c.l.b16 %v1689
      %v1710 = vunpack.c.h.b16 %v1689
      %v1711 = vunpack.c.l.b16 %v1690
      %v1712 = vunpack.c.h.b16 %v1690
      %v1713 = vunpack.c.l.b16 %v1691
      %v1714 = vpack.c.b16 %v1705, %v1705
      %v1715 = vpack.c.b16 %v1706, %v1706
      %v1716 = vpack.c.b16 %v1707, %v1707
      %v1717 = vpack.c.b16 %v1708, %v1708
      %v1718 = vpack.c.b16 %v1709, %v1709
      %v1719 = vpack.c.b16 %v1710, %v1710
      %v1720 = vpack.c.b16 %v1711, %v1711
      %v1721 = vpack.c.b16 %v1712, %v1712
      %v1722 = vpack.c.b16 %v1713, %v1713
      %1723 = vrot.lane.b32.xlu0 %v1714, 94
      %v1724 = vpop.permute.xlu0 %1723
      %1725 = vrot.lane.b32.xlu0 %v1715, 94
      %v1726 = vpop.permute.xlu0 %1725
      %1727 = vrot.lane.b32.xlu0 %v1716, 94
      %v1728 = vpop.permute.xlu0 %1727
      %1729 = vrot.lane.b32.xlu0 %v1717, 94
      %v1730 = vpop.permute.xlu0 %1729
      %1731 = vrot.lane.b32.xlu0 %v1718, 94
      %v1732 = vpop.permute.xlu0 %1731
      %1733 = vrot.lane.b32.xlu0 %v1719, 94
      %v1734 = vpop.permute.xlu0 %1733
      %1735 = vrot.lane.b32.xlu0 %v1720, 94
      %v1736 = vpop.permute.xlu0 %1735
      %1737 = vrot.lane.b32.xlu0 %v1721, 94
      %v1738 = vpop.permute.xlu0 %1737
      %1739 = vrot.lane.b32.xlu0 %v1722, 94
      %v1740 = vpop.permute.xlu0 %1739
      %vm1741 = vcmask 769024
      %v1742 = vsel %vm1741, %v1724, %v1726
      %v1743 = vsel %vm1741, %v1726, %v1728
      %v1744 = vsel %vm1741, %v1728, %v1730
      %v1745 = vsel %vm1741, %v1730, %v1732
      %v1746 = vsel %vm1741, %v1732, %v1734
      %v1747 = vsel %vm1741, %v1734, %v1736
      %v1748 = vsel %vm1741, %v1736, %v1738
      %v1749 = vsel %vm1741, %v1738, %v1740
      %v1751 = vsel %vm368, %v1699, 0
      %v1754 = vsel %vm372, %v1742, 0
      %v1757 = vsel %vm372, %v1743, 0
      %v1760 = vsel %vm372, %v1744, 0
      %v1763 = vsel %vm372, %v1745, 0
      %v1766 = vsel %vm372, %v1746, 0
      %v1769 = vsel %vm372, %v1747, 0
      %v1772 = vsel %vm372, %v1748, 0
      %v1775 = vsel %vm372, %v1749, 0
      %1777 = vmatprep.subr.bf16.mxu0 %v1757
      %1778 = vmatpush1.bf16.msra.mxu0 %v1754
      %1779 = vmatprep.subr.bf16.mxu0 0
      %1780 = vmatpush1.bf16.msra.mxu0 0
      %1781 = vmatprep.subr.bf16.mxu0 0
      %1782 = vmatpush1.bf16.msra.mxu0 0
      %1783 = vmatprep.subr.bf16.mxu0 0
      %1784 = vmatpush1.bf16.msra.mxu0 0
      %1785 = vmatprep.subr.bf16.mxu0 0
      %1786 = vmatpush1.bf16.msra.mxu0 0
      %1787 = vmatprep.subr.bf16.mxu0 0
      %1788 = vmatpush1.bf16.msra.mxu0 0
      %1789 = vmatprep.subr.bf16.mxu0 0
      %1790 = vmatpush1.bf16.msra.mxu0 0
      %1791 = vmatprep.subr.bf16.mxu0 0
      %1792 = vmatpush1.bf16.msra.mxu0 0
      %1793 = vmatprep.subr.bf16.mxu0 0
      %1794 = vmatpush1.bf16.msra.mxu0 0
      %1795 = vmatprep.subr.bf16.mxu0 0
      %1796 = vmatpush1.bf16.msra.mxu0 0
      %1797 = vmatprep.subr.bf16.mxu0 0
      %1798 = vmatpush1.bf16.msra.mxu0 0
      %1799 = vmatprep.subr.bf16.mxu0 0
      %1800 = vmatpush1.bf16.msra.mxu0 0
      %1801 = vmatprep.subr.bf16.mxu0 0
      %1802 = vmatpush1.bf16.msra.mxu0 0
      %1803 = vmatprep.subr.bf16.mxu0 0
      %1804 = vmatpush1.bf16.msra.mxu0 0
      %1805 = vmatprep.subr.bf16.mxu0 0
      %1806 = vmatpush1.bf16.msra.mxu0 0
      %1807 = vmatprep.subr.bf16.mxu0 0
      %1808 = vmatpush1.bf16.msra.mxu0 0
      %1809 = vmatprep.mubr.bf16.mxu0 0
      %1810 = vmatmul.mubr.bf16.gmra.mrb[0].mxu0 %v1751
      %v1811 = vpop.f32.mrb[0].mxu0
      %v1812 = vadd.f32 0.0, %v1811
      %v1813 = vpop.f32.mrb[0].mxu0
      %v1814 = vadd.f32 0.0, %v1813
      %v1815 = vpop.f32.mrb[0].mxu0
      %v1816 = vadd.f32 0.0, %v1815
      %v1817 = vpop.f32.mrb[0].mxu0
      %v1818 = vadd.f32 0.0, %v1817
      %1819 = vdwg.mxu0
      %1820 = vmatprep.subr.bf16.mxu0 %v1763
      %1821 = vmatpush1.bf16.msra.mxu0 %v1760
      %1822 = vmatprep.subr.bf16.mxu0 0
      %1823 = vmatpush1.bf16.msra.mxu0 0
      %1824 = vmatprep.subr.bf16.mxu0 0
      %1825 = vmatpush1.bf16.msra.mxu0 0
      %1826 = vmatprep.subr.bf16.mxu0 0
      %1827 = vmatpush1.bf16.msra.mxu0 0
      %1828 = vmatprep.subr.bf16.mxu0 0
      %1829 = vmatpush1.bf16.msra.mxu0 0
      %1830 = vmatprep.subr.bf16.mxu0 0
      %1831 = vmatpush1.bf16.msra.mxu0 0
      %1832 = vmatprep.subr.bf16.mxu0 0
      %1833 = vmatpush1.bf16.msra.mxu0 0
      %1834 = vmatprep.subr.bf16.mxu0 0
      %1835 = vmatpush1.bf16.msra.mxu0 0
      %1836 = vmatprep.subr.bf16.mxu0 0
      %1837 = vmatpush1.bf16.msra.mxu0 0
      %1838 = vmatprep.subr.bf16.mxu0 0
      %1839 = vmatpush1.bf16.msra.mxu0 0
      %1840 = vmatprep.subr.bf16.mxu0 0
      %1841 = vmatpush1.bf16.msra.mxu0 0
      %1842 = vmatprep.subr.bf16.mxu0 0
      %1843 = vmatpush1.bf16.msra.mxu0 0
      %1844 = vmatprep.subr.bf16.mxu0 0
      %1845 = vmatpush1.bf16.msra.mxu0 0
      %1846 = vmatprep.subr.bf16.mxu0 0
      %1847 = vmatpush1.bf16.msra.mxu0 0
      %1848 = vmatprep.subr.bf16.mxu0 0
      %1849 = vmatpush1.bf16.msra.mxu0 0
      %1850 = vmatprep.subr.bf16.mxu0 0
      %1851 = vmatpush1.bf16.msra.mxu0 0
      %1852 = vmatprep.mubr.bf16.mxu0 0
      %1853 = vmatmul.mubr.bf16.gmra.mrb[0].mxu0 %v1751
      %v1854 = vpop.f32.mrb[0].mxu0
      %v1855 = vadd.f32 0.0, %v1854
      %v1856 = vpop.f32.mrb[0].mxu0
      %v1857 = vadd.f32 0.0, %v1856
      %v1858 = vpop.f32.mrb[0].mxu0
      %v1859 = vadd.f32 0.0, %v1858
      %v1860 = vpop.f32.mrb[0].mxu0
      %v1861 = vadd.f32 0.0, %v1860
      %1862 = vdwg.mxu0
      %1863 = vmatprep.subr.bf16.mxu0 %v1769
      %1864 = vmatpush1.bf16.msra.mxu0 %v1766
      %1865 = vmatprep.subr.bf16.mxu0 0
      %1866 = vmatpush1.bf16.msra.mxu0 0
      %1867 = vmatprep.subr.bf16.mxu0 0
      %1868 = vmatpush1.bf16.msra.mxu0 0
      %1869 = vmatprep.subr.bf16.mxu0 0
      %1870 = vmatpush1.bf16.msra.mxu0 0
      %1871 = vmatprep.subr.bf16.mxu0 0
      %1872 = vmatpush1.bf16.msra.mxu0 0
      %1873 = vmatprep.subr.bf16.mxu0 0
      %1874 = vmatpush1.bf16.msra.mxu0 0
      %1875 = vmatprep.subr.bf16.mxu0 0
      %1876 = vmatpush1.bf16.msra.mxu0 0
      %1877 = vmatprep.subr.bf16.mxu0 0
      %1878 = vmatpush1.bf16.msra.mxu0 0
      %1879 = vmatprep.subr.bf16.mxu0 0
      %1880 = vmatpush1.bf16.msra.mxu0 0
      %1881 = vmatprep.subr.bf16.mxu0 0
      %1882 = vmatpush1.bf16.msra.mxu0 0
      %1883 = vmatprep.subr.bf16.mxu0 0
      %1884 = vmatpush1.bf16.msra.mxu0 0
      %1885 = vmatprep.subr.bf16.mxu0 0
      %1886 = vmatpush1.bf16.msra.mxu0 0
      %1887 = vmatprep.subr.bf16.mxu0 0
      %1888 = vmatpush1.bf16.msra.mxu0 0
      %1889 = vmatprep.subr.bf16.mxu0 0
      %1890 = vmatpush1.bf16.msra.mxu0 0
      %1891 = vmatprep.subr.bf16.mxu0 0
      %1892 = vmatpush1.bf16.msra.mxu0 0
      %1893 = vmatprep.subr.bf16.mxu0 0
      %1894 = vmatpush1.bf16.msra.mxu0 0
      %1895 = vmatprep.mubr.bf16.mxu0 0
      %1896 = vmatmul.mubr.bf16.gmra.mrb[0].mxu0 %v1751
      %v1897 = vpop.f32.mrb[0].mxu0
      %v1898 = vadd.f32 0.0, %v1897
      %v1899 = vpop.f32.mrb[0].mxu0
      %v1900 = vadd.f32 0.0, %v1899
      %v1901 = vpop.f32.mrb[0].mxu0
      %v1902 = vadd.f32 0.0, %v1901
      %v1903 = vpop.f32.mrb[0].mxu0
      %v1904 = vadd.f32 0.0, %v1903
      %1905 = vdwg.mxu0
      %1906 = vmatprep.subr.bf16.mxu0 %v1775
      %1907 = vmatpush1.bf16.msra.mxu0 %v1772
      %1908 = vmatprep.subr.bf16.mxu0 0
      %1909 = vmatpush1.bf16.msra.mxu0 0
      %1910 = vmatprep.subr.bf16.mxu0 0
      %1911 = vmatpush1.bf16.msra.mxu0 0
      %1912 = vmatprep.subr.bf16.mxu0 0
      %1913 = vmatpush1.bf16.msra.mxu0 0
      %1914 = vmatprep.subr.bf16.mxu0 0
      %1915 = vmatpush1.bf16.msra.mxu0 0
      %1916 = vmatprep.subr.bf16.mxu0 0
      %1917 = vmatpush1.bf16.msra.mxu0 0
      %1918 = vmatprep.subr.bf16.mxu0 0
      %1919 = vmatpush1.bf16.msra.mxu0 0
      %1920 = vmatprep.subr.bf16.mxu0 0
      %1921 = vmatpush1.bf16.msra.mxu0 0
      %1922 = vmatprep.subr.bf16.mxu0 0
      %1923 = vmatpush1.bf16.msra.mxu0 0
      %1924 = vmatprep.subr.bf16.mxu0 0
      %1925 = vmatpush1.bf16.msra.mxu0 0
      %1926 = vmatprep.subr.bf16.mxu0 0
      %1927 = vmatpush1.bf16.msra.mxu0 0
      %1928 = vmatprep.subr.bf16.mxu0 0
      %1929 = vmatpush1.bf16.msra.mxu0 0
      %1930 = vmatprep.subr.bf16.mxu0 0
      %1931 = vmatpush1.bf16.msra.mxu0 0
      %1932 = vmatprep.subr.bf16.mxu0 0
      %1933 = vmatpush1.bf16.msra.mxu0 0
      %1934 = vmatprep.subr.bf16.mxu0 0
      %1935 = vmatpush1.bf16.msra.mxu0 0
      %1936 = vmatprep.subr.bf16.mxu0 0
      %1937 = vmatpush1.bf16.msra.mxu0 0
      %1938 = vmatprep.mubr.bf16.mxu0 0
      %1939 = vmatmul.mubr.bf16.gmra.mrb[0].mxu0 %v1751
      %v1940 = vpop.f32.mrb[0].mxu0
      %v1941 = vadd.f32 0.0, %v1940
      %v1942 = vpop.f32.mrb[0].mxu0
      %v1943 = vadd.f32 0.0, %v1942
      %v1944 = vpop.f32.mrb[0].mxu0
      %v1945 = vadd.f32 0.0, %v1944
      %v1946 = vpop.f32.mrb[0].mxu0
      %v1947 = vadd.f32 0.0, %v1946
      %1948 = vdwg.mxu0
      %v1949 = vadd.f32 %v1646, %v1812
      %v1950 = vadd.f32 %v1647, %v1814
      %v1951 = vadd.f32 %v1648, %v1855
      %v1952 = vadd.f32 %v1649, %v1857
      %v1953 = vadd.f32 %v1650, %v1898
      %v1954 = vadd.f32 %v1651, %v1900
      %v1955 = vadd.f32 %v1652, %v1941
      %v1956 = vadd.f32 %v1653, %v1943
      %v1957 = vadd.f32 %v1654, %v1816
      %v1958 = vadd.f32 %v1655, %v1818
      %v1959 = vadd.f32 %v1656, %v1859
      %v1960 = vadd.f32 %v1657, %v1861
      %v1961 = vadd.f32 %v1658, %v1902
      %v1962 = vadd.f32 %v1659, %v1904
      %v1963 = vadd.f32 %v1660, %v1945
      %v1964 = vadd.f32 %v1661, %v1947
      %1965 = vrot.lane.b32.xlu0 %v1105, 64
      %v1966 = vpop.permute.xlu0 %1965
      %1967 = vrot.lane.b32.xlu0 %v1106, 64
      %v1968 = vpop.permute.xlu0 %1967
      %1969 = vrot.lane.b32.xlu0 %v1107, 64
      %v1970 = vpop.permute.xlu0 %1969
      %1971 = vrot.lane.b32.xlu0 %v1108, 64
      %v1972 = vpop.permute.xlu0 %1971
      %v1973 = vrot.slane %v1966, 4
      %v1974 = vrot.slane %v1968, 4
      %v1975 = vrot.slane %v1970, 4
      %v1976 = vrot.slane %v1972, 4
      %vm1977 = vcmask 523264
      %v1978 = vsel %vm1977, %v1973, %v1966
      %v1979 = vsel %vm815, %v1973, %v1974
      %v1980 = vsel %vm1977, %v1979, %v1968
      %v1981 = vsel %vm815, %v1974, %v1975
      %v1982 = vsel %vm1977, %v1981, %v1970
      %v1983 = vsel %vm815, %v1975, %v1976
      %v1984 = vsel %vm1977, %v1983, %v1972
      %vm1985 = vcmp.ne.s16.totalorder %v1978, 0
      %vm1986 = vcmp.ne.s16.totalorder %v1980, 0
      %vm1987 = vcmp.ne.s16.totalorder %v1982, 0
      %vm1988 = vcmp.ne.s16.totalorder %v1984, 0
      %vm1989 = vcmp.ne.s16.totalorder %v1976, 0
      %v1990 = vsel %vm1985, %v295, 0
      %v1991 = vsel %vm1986, %v296, 0
      %v1992 = vsel %vm1987, %v297, 0
      %v1993 = vsel %vm1988, %v298, 0
      %v1994 = vsel %vm1989, %v309, 0
      %s1995 = scalar_lea.vmem %s1, 48
      %v1996 = vld [vmem:[%s1995] sm:$0xf]
      %v1997 = vld [vmem:[%s1995 + $0x4] sm:$0x3]
      %v2000 = vunpack.c.l.b16 %v1996
      %v2001 = vunpack.c.l.b16 %v1997
      %v2002 = vpack.c.b16 %v2001, %v2000
      %v2008 = vunpack.c.l.b16 %v1990
      %v2009 = vunpack.c.h.b16 %v1990
      %v2010 = vunpack.c.l.b16 %v1991
      %v2011 = vunpack.c.h.b16 %v1991
      %v2012 = vunpack.c.l.b16 %v1992
      %v2013 = vunpack.c.h.b16 %v1992
      %v2014 = vunpack.c.l.b16 %v1993
      %v2015 = vunpack.c.h.b16 %v1993
      %v2016 = vunpack.c.l.b16 %v1994
      %v2017 = vpack.c.b16 %v2008, %v2008
      %v2018 = vpack.c.b16 %v2009, %v2009
      %v2019 = vpack.c.b16 %v2010, %v2010
      %v2020 = vpack.c.b16 %v2011, %v2011
      %v2021 = vpack.c.b16 %v2012, %v2012
      %v2022 = vpack.c.b16 %v2013, %v2013
      %v2023 = vpack.c.b16 %v2014, %v2014
      %v2024 = vpack.c.b16 %v2015, %v2015
      %v2025 = vpack.c.b16 %v2016, %v2016
      %2026 = vrot.lane.b32.xlu0 %v2017, 64
      %v2027 = vpop.permute.xlu0 %2026
      %2028 = vrot.lane.b32.xlu0 %v2018, 64
      %v2029 = vpop.permute.xlu0 %2028
      %2030 = vrot.lane.b32.xlu0 %v2019, 64
      %v2031 = vpop.permute.xlu0 %2030
      %2032 = vrot.lane.b32.xlu0 %v2020, 64
      %v2033 = vpop.permute.xlu0 %2032
      %2034 = vrot.lane.b32.xlu0 %v2021, 64
      %v2035 = vpop.permute.xlu0 %2034
      %2036 = vrot.lane.b32.xlu0 %v2022, 64
      %v2037 = vpop.permute.xlu0 %2036
      %2038 = vrot.lane.b32.xlu0 %v2023, 64
      %v2039 = vpop.permute.xlu0 %2038
      %2040 = vrot.lane.b32.xlu0 %v2024, 64
      %v2041 = vpop.permute.xlu0 %2040
      %2042 = vrot.lane.b32.xlu0 %v2025, 64
      %v2043 = vpop.permute.xlu0 %2042
      %v2044 = vsel %vm1977, %v2027, %v2029
      %v2045 = vsel %vm1977, %v2029, %v2031
      %v2046 = vsel %vm1977, %v2031, %v2033
      %v2047 = vsel %vm1977, %v2033, %v2035
      %v2048 = vsel %vm1977, %v2035, %v2037
      %v2049 = vsel %vm1977, %v2037, %v2039
      %v2050 = vsel %vm1977, %v2039, %v2041
      %v2051 = vsel %vm1977, %v2041, %v2043
      %v2053 = vsel %vm368, %v2002, 0
      %v2056 = vsel %vm372, %v2044, 0
      %v2059 = vsel %vm372, %v2045, 0
      %v2062 = vsel %vm372, %v2046, 0
      %v2065 = vsel %vm372, %v2047, 0
      %v2068 = vsel %vm372, %v2048, 0
      %v2071 = vsel %vm372, %v2049, 0
      %v2074 = vsel %vm372, %v2050, 0
      %v2077 = vsel %vm372, %v2051, 0
      %2079 = vmatprep.subr.bf16.mxu0 %v2059
      %2080 = vmatpush1.bf16.msra.mxu0 %v2056
      %2081 = vmatprep.subr.bf16.mxu0 0
      %2082 = vmatpush1.bf16.msra.mxu0 0
      %2083 = vmatprep.subr.bf16.mxu0 0
      %2084 = vmatpush1.bf16.msra.mxu0 0
      %2085 = vmatprep.subr.bf16.mxu0 0
      %2086 = vmatpush1.bf16.msra.mxu0 0
      %2087 = vmatprep.subr.bf16.mxu0 0
      %2088 = vmatpush1.bf16.msra.mxu0 0
      %2089 = vmatprep.subr.bf16.mxu0 0
      %2090 = vmatpush1.bf16.msra.mxu0 0
      %2091 = vmatprep.subr.bf16.mxu0 0
      %2092 = vmatpush1.bf16.msra.mxu0 0
      %2093 = vmatprep.subr.bf16.mxu0 0
      %2094 = vmatpush1.bf16.msra.mxu0 0
      %2095 = vmatprep.subr.bf16.mxu0 0
      %2096 = vmatpush1.bf16.msra.mxu0 0
      %2097 = vmatprep.subr.bf16.mxu0 0
      %2098 = vmatpush1.bf16.msra.mxu0 0
      %2099 = vmatprep.subr.bf16.mxu0 0
      %2100 = vmatpush1.bf16.msra.mxu0 0
      %2101 = vmatprep.subr.bf16.mxu0 0
      %2102 = vmatpush1.bf16.msra.mxu0 0
      %2103 = vmatprep.subr.bf16.mxu0 0
      %2104 = vmatpush1.bf16.msra.mxu0 0
      %2105 = vmatprep.subr.bf16.mxu0 0
      %2106 = vmatpush1.bf16.msra.mxu0 0
      %2107 = vmatprep.subr.bf16.mxu0 0
      %2108 = vmatpush1.bf16.msra.mxu0 0
      %2109 = vmatprep.subr.bf16.mxu0 0
      %2110 = vmatpush1.bf16.msra.mxu0 0
      %2111 = vmatprep.mubr.bf16.mxu0 0
      %2112 = vmatmul.mubr.bf16.gmra.mrb[0].mxu0 %v2053
      %v2113 = vpop.f32.mrb[0].mxu0
      %v2114 = vadd.f32 0.0, %v2113
      %v2115 = vpop.f32.mrb[0].mxu0
      %v2116 = vadd.f32 0.0, %v2115
      %v2117 = vpop.f32.mrb[0].mxu0
      %v2118 = vadd.f32 0.0, %v2117
      %v2119 = vpop.f32.mrb[0].mxu0
      %v2120 = vadd.f32 0.0, %v2119
      %2121 = vdwg.mxu0
      %2122 = vmatprep.subr.bf16.mxu0 %v2065
      %2123 = vmatpush1.bf16.msra.mxu0 %v2062
      %2124 = vmatprep.subr.bf16.mxu0 0
      %2125 = vmatpush1.bf16.msra.mxu0 0
      %2126 = vmatprep.subr.bf16.mxu0 0
      %2127 = vmatpush1.bf16.msra.mxu0 0
      %2128 = vmatprep.subr.bf16.mxu0 0
      %2129 = vmatpush1.bf16.msra.mxu0 0
      %2130 = vmatprep.subr.bf16.mxu0 0
      %2131 = vmatpush1.bf16.msra.mxu0 0
      %2132 = vmatprep.subr.bf16.mxu0 0
      %2133 = vmatpush1.bf16.msra.mxu0 0
      %2134 = vmatprep.subr.bf16.mxu0 0
      %2135 = vmatpush1.bf16.msra.mxu0 0
      %2136 = vmatprep.subr.bf16.mxu0 0
      %2137 = vmatpush1.bf16.msra.mxu0 0
      %2138 = vmatprep.subr.bf16.mxu0 0
      %2139 = vmatpush1.bf16.msra.mxu0 0
      %2140 = vmatprep.subr.bf16.mxu0 0
      %2141 = vmatpush1.bf16.msra.mxu0 0
      %2142 = vmatprep.subr.bf16.mxu0 0
      %2143 = vmatpush1.bf16.msra.mxu0 0
      %2144 = vmatprep.subr.bf16.mxu0 0
      %2145 = vmatpush1.bf16.msra.mxu0 0
      %2146 = vmatprep.subr.bf16.mxu0 0
      %2147 = vmatpush1.bf16.msra.mxu0 0
      %2148 = vmatprep.subr.bf16.mxu0 0
      %2149 = vmatpush1.bf16.msra.mxu0 0
      %2150 = vmatprep.subr.bf16.mxu0 0
      %2151 = vmatpush1.bf16.msra.mxu0 0
      %2152 = vmatprep.subr.bf16.mxu0 0
      %2153 = vmatpush1.bf16.msra.mxu0 0
      %2154 = vmatprep.mubr.bf16.mxu0 0
      %2155 = vmatmul.mubr.bf16.gmra.mrb[0].mxu0 %v2053
      %v2156 = vpop.f32.mrb[0].mxu0
      %v2157 = vadd.f32 0.0, %v2156
      %v2158 = vpop.f32.mrb[0].mxu0
      %v2159 = vadd.f32 0.0, %v2158
      %v2160 = vpop.f32.mrb[0].mxu0
      %v2161 = vadd.f32 0.0, %v2160
      %v2162 = vpop.f32.mrb[0].mxu0
      %v2163 = vadd.f32 0.0, %v2162
      %2164 = vdwg.mxu0
      %2165 = vmatprep.subr.bf16.mxu0 %v2071
      %2166 = vmatpush1.bf16.msra.mxu0 %v2068
      %2167 = vmatprep.subr.bf16.mxu0 0
      %2168 = vmatpush1.bf16.msra.mxu0 0
      %2169 = vmatprep.subr.bf16.mxu0 0
      %2170 = vmatpush1.bf16.msra.mxu0 0
      %2171 = vmatprep.subr.bf16.mxu0 0
      %2172 = vmatpush1.bf16.msra.mxu0 0
      %2173 = vmatprep.subr.bf16.mxu0 0
      %2174 = vmatpush1.bf16.msra.mxu0 0
      %2175 = vmatprep.subr.bf16.mxu0 0
      %2176 = vmatpush1.bf16.msra.mxu0 0
      %2177 = vmatprep.subr.bf16.mxu0 0
      %2178 = vmatpush1.bf16.msra.mxu0 0
      %2179 = vmatprep.subr.bf16.mxu0 0
      %2180 = vmatpush1.bf16.msra.mxu0 0
      %2181 = vmatprep.subr.bf16.mxu0 0
      %2182 = vmatpush1.bf16.msra.mxu0 0
      %2183 = vmatprep.subr.bf16.mxu0 0
      %2184 = vmatpush1.bf16.msra.mxu0 0
      %2185 = vmatprep.subr.bf16.mxu0 0
      %2186 = vmatpush1.bf16.msra.mxu0 0
      %2187 = vmatprep.subr.bf16.mxu0 0
      %2188 = vmatpush1.bf16.msra.mxu0 0
      %2189 = vmatprep.subr.bf16.mxu0 0
      %2190 = vmatpush1.bf16.msra.mxu0 0
      %2191 = vmatprep.subr.bf16.mxu0 0
      %2192 = vmatpush1.bf16.msra.mxu0 0
      %2193 = vmatprep.subr.bf16.mxu0 0
      %2194 = vmatpush1.bf16.msra.mxu0 0
      %2195 = vmatprep.subr.bf16.mxu0 0
      %2196 = vmatpush1.bf16.msra.mxu0 0
      %2197 = vmatprep.mubr.bf16.mxu0 0
      %2198 = vmatmul.mubr.bf16.gmra.mrb[0].mxu0 %v2053
      %v2199 = vpop.f32.mrb[0].mxu0
      %v2200 = vadd.f32 0.0, %v2199
      %v2201 = vpop.f32.mrb[0].mxu0
      %v2202 = vadd.f32 0.0, %v2201
      %v2203 = vpop.f32.mrb[0].mxu0
      %v2204 = vadd.f32 0.0, %v2203
      %v2205 = vpop.f32.mrb[0].mxu0
      %v2206 = vadd.f32 0.0, %v2205
      %2207 = vdwg.mxu0
      %2208 = vmatprep.subr.bf16.mxu0 %v2077
      %2209 = vmatpush1.bf16.msra.mxu0 %v2074
      %2210 = vmatprep.subr.bf16.mxu0 0
      %2211 = vmatpush1.bf16.msra.mxu0 0
      %2212 = vmatprep.subr.bf16.mxu0 0
      %2213 = vmatpush1.bf16.msra.mxu0 0
      %2214 = vmatprep.subr.bf16.mxu0 0
      %2215 = vmatpush1.bf16.msra.mxu0 0
      %2216 = vmatprep.subr.bf16.mxu0 0
      %2217 = vmatpush1.bf16.msra.mxu0 0
      %2218 = vmatprep.subr.bf16.mxu0 0
      %2219 = vmatpush1.bf16.msra.mxu0 0
      %2220 = vmatprep.subr.bf16.mxu0 0
      %2221 = vmatpush1.bf16.msra.mxu0 0
      %2222 = vmatprep.subr.bf16.mxu0 0
      %2223 = vmatpush1.bf16.msra.mxu0 0
      %2224 = vmatprep.subr.bf16.mxu0 0
      %2225 = vmatpush1.bf16.msra.mxu0 0
      %2226 = vmatprep.subr.bf16.mxu0 0
      %2227 = vmatpush1.bf16.msra.mxu0 0
      %2228 = vmatprep.subr.bf16.mxu0 0
      %2229 = vmatpush1.bf16.msra.mxu0 0
      %2230 = vmatprep.subr.bf16.mxu0 0
      %2231 = vmatpush1.bf16.msra.mxu0 0
      %2232 = vmatprep.subr.bf16.mxu0 0
      %2233 = vmatpush1.bf16.msra.mxu0 0
      %2234 = vmatprep.subr.bf16.mxu0 0
      %2235 = vmatpush1.bf16.msra.mxu0 0
      %2236 = vmatprep.subr.bf16.mxu0 0
      %2237 = vmatpush1.bf16.msra.mxu0 0
      %2238 = vmatprep.subr.bf16.mxu0 0
      %2239 = vmatpush1.bf16.msra.mxu0 0
      %2240 = vmatprep.mubr.bf16.mxu0 0
      %2241 = vmatmul.mubr.bf16.gmra.mrb[0].mxu0 %v2053
      %v2242 = vpop.f32.mrb[0].mxu0
      %v2243 = vadd.f32 0.0, %v2242
      %v2244 = vpop.f32.mrb[0].mxu0
      %v2245 = vadd.f32 0.0, %v2244
      %v2246 = vpop.f32.mrb[0].mxu0
      %v2247 = vadd.f32 0.0, %v2246
      %v2248 = vpop.f32.mrb[0].mxu0
      %v2249 = vadd.f32 0.0, %v2248
      %2250 = vdwg.mxu0
      %v2251 = vadd.f32 %v1949, %v2114
      %v2252 = vadd.f32 %v1950, %v2116
      %v2253 = vadd.f32 %v1951, %v2157
      %v2254 = vadd.f32 %v1952, %v2159
      %v2255 = vadd.f32 %v1953, %v2200
      %v2256 = vadd.f32 %v1954, %v2202
      %v2257 = vadd.f32 %v1955, %v2243
      %v2258 = vadd.f32 %v1956, %v2245
      %v2259 = vadd.f32 %v1957, %v2118
      %v2260 = vadd.f32 %v1958, %v2120
      %v2261 = vadd.f32 %v1959, %v2161
      %v2262 = vadd.f32 %v1960, %v2163
      %v2263 = vadd.f32 %v1961, %v2204
      %v2264 = vadd.f32 %v1962, %v2206
      %v2265 = vadd.f32 %v1963, %v2247
      %v2266 = vadd.f32 %v1964, %v2249
      %s2267 = scalar_lea.vmem %s1, 56
      %v2268 = vld [vmem:[%s2267] sm:$0xf]
      %v2269 = vld [vmem:[%s2267 + $0x4] sm:$0x3]
      %v2272 = vunpack.c.l.b16 %v2268
      %v2273 = vunpack.c.l.b16 %v2269
      %v2274 = vpack.c.b16 %v2273, %v2272
      %2275 = vrot.lane.b32.xlu0 %v332, 63
      %v2276 = vpop.permute.xlu0 %2275
      %2277 = vrot.lane.b32.xlu0 %v333, 63
      %v2278 = vpop.permute.xlu0 %2277
      %2279 = vrot.lane.b32.xlu0 %v334, 63
      %v2280 = vpop.permute.xlu0 %2279
      %2281 = vrot.lane.b32.xlu0 %v335, 63
      %v2282 = vpop.permute.xlu0 %2281
      %2283 = vrot.lane.b32.xlu0 %v336, 63
      %v2284 = vpop.permute.xlu0 %2283
      %2285 = vrot.lane.b32.xlu0 %v337, 63
      %v2286 = vpop.permute.xlu0 %2285
      %2287 = vrot.lane.b32.xlu0 %v338, 63
      %v2288 = vpop.permute.xlu0 %2287
      %2289 = vrot.lane.b32.xlu0 %v339, 63
      %v2290 = vpop.permute.xlu0 %2289
      %2291 = vrot.lane.b32.xlu0 %v340, 63
      %v2292 = vpop.permute.xlu0 %2291
      %vm2293 = vcmask 515072
      %v2294 = vsel %vm2293, %v2276, %v2278
      %v2295 = vsel %vm2293, %v2278, %v2280
      %v2296 = vsel %vm2293, %v2280, %v2282
      %v2297 = vsel %vm2293, %v2282, %v2284
      %v2298 = vsel %vm2293, %v2284, %v2286
      %v2299 = vsel %vm2293, %v2286, %v2288
      %v2300 = vsel %vm2293, %v2288, %v2290
      %v2301 = vsel %vm2293, %v2290, %v2292
      %v2303 = vsel %vm368, %v2274, 0
      %v2306 = vsel %vm372, %v2294, 0
      %v2309 = vsel %vm372, %v2295, 0
      %v2312 = vsel %vm372, %v2296, 0
      %v2315 = vsel %vm372, %v2297, 0
      %v2318 = vsel %vm372, %v2298, 0
      %v2321 = vsel %vm372, %v2299, 0
      %v2324 = vsel %vm372, %v2300, 0
      %v2327 = vsel %vm372, %v2301, 0
      %2329 = vmatprep.subr.bf16.mxu0 %v2309
      %2330 = vmatpush1.bf16.msra.mxu0 %v2306
      %2331 = vmatprep.subr.bf16.mxu0 0
      %2332 = vmatpush1.bf16.msra.mxu0 0
      %2333 = vmatprep.subr.bf16.mxu0 0
      %2334 = vmatpush1.bf16.msra.mxu0 0
      %2335 = vmatprep.subr.bf16.mxu0 0
      %2336 = vmatpush1.bf16.msra.mxu0 0
      %2337 = vmatprep.subr.bf16.mxu0 0
      %2338 = vmatpush1.bf16.msra.mxu0 0
      %2339 = vmatprep.subr.bf16.mxu0 0
      %2340 = vmatpush1.bf16.msra.mxu0 0
      %2341 = vmatprep.subr.bf16.mxu0 0
      %2342 = vmatpush1.bf16.msra.mxu0 0
      %2343 = vmatprep.subr.bf16.mxu0 0
      %2344 = vmatpush1.bf16.msra.mxu0 0
      %2345 = vmatprep.subr.bf16.mxu0 0
      %2346 = vmatpush1.bf16.msra.mxu0 0
      %2347 = vmatprep.subr.bf16.mxu0 0
      %2348 = vmatpush1.bf16.msra.mxu0 0
      %2349 = vmatprep.subr.bf16.mxu0 0
      %2350 = vmatpush1.bf16.msra.mxu0 0
      %2351 = vmatprep.subr.bf16.mxu0 0
      %2352 = vmatpush1.bf16.msra.mxu0 0
      %2353 = vmatprep.subr.bf16.mxu0 0
      %2354 = vmatpush1.bf16.msra.mxu0 0
      %2355 = vmatprep.subr.bf16.mxu0 0
      %2356 = vmatpush1.bf16.msra.mxu0 0
      %2357 = vmatprep.subr.bf16.mxu0 0
      %2358 = vmatpush1.bf16.msra.mxu0 0
      %2359 = vmatprep.subr.bf16.mxu0 0
      %2360 = vmatpush1.bf16.msra.mxu0 0
      %2361 = vmatprep.mubr.bf16.mxu0 0
      %2362 = vmatmul.mubr.bf16.gmra.mrb[0].mxu0 %v2303
      %v2363 = vpop.f32.mrb[0].mxu0
      %v2364 = vadd.f32 0.0, %v2363
      %v2365 = vpop.f32.mrb[0].mxu0
      %v2366 = vadd.f32 0.0, %v2365
      %v2367 = vpop.f32.mrb[0].mxu0
      %v2368 = vadd.f32 0.0, %v2367
      %v2369 = vpop.f32.mrb[0].mxu0
      %v2370 = vadd.f32 0.0, %v2369
      %2371 = vdwg.mxu0
      %2372 = vmatprep.subr.bf16.mxu0 %v2315
      %2373 = vmatpush1.bf16.msra.mxu0 %v2312
      %2374 = vmatprep.subr.bf16.mxu0 0
      %2375 = vmatpush1.bf16.msra.mxu0 0
      %2376 = vmatprep.subr.bf16.mxu0 0
      %2377 = vmatpush1.bf16.msra.mxu0 0
      %2378 = vmatprep.subr.bf16.mxu0 0
      %2379 = vmatpush1.bf16.msra.mxu0 0
      %2380 = vmatprep.subr.bf16.mxu0 0
      %2381 = vmatpush1.bf16.msra.mxu0 0
      %2382 = vmatprep.subr.bf16.mxu0 0
      %2383 = vmatpush1.bf16.msra.mxu0 0
      %2384 = vmatprep.subr.bf16.mxu0 0
      %2385 = vmatpush1.bf16.msra.mxu0 0
      %2386 = vmatprep.subr.bf16.mxu0 0
      %2387 = vmatpush1.bf16.msra.mxu0 0
      %2388 = vmatprep.subr.bf16.mxu0 0
      %2389 = vmatpush1.bf16.msra.mxu0 0
      %2390 = vmatprep.subr.bf16.mxu0 0
      %2391 = vmatpush1.bf16.msra.mxu0 0
      %2392 = vmatprep.subr.bf16.mxu0 0
      %2393 = vmatpush1.bf16.msra.mxu0 0
      %2394 = vmatprep.subr.bf16.mxu0 0
      %2395 = vmatpush1.bf16.msra.mxu0 0
      %2396 = vmatprep.subr.bf16.mxu0 0
      %2397 = vmatpush1.bf16.msra.mxu0 0
      %2398 = vmatprep.subr.bf16.mxu0 0
      %2399 = vmatpush1.bf16.msra.mxu0 0
      %2400 = vmatprep.subr.bf16.mxu0 0
      %2401 = vmatpush1.bf16.msra.mxu0 0
      %2402 = vmatprep.subr.bf16.mxu0 0
      %2403 = vmatpush1.bf16.msra.mxu0 0
      %2404 = vmatprep.mubr.bf16.mxu0 0
      %2405 = vmatmul.mubr.bf16.gmra.mrb[0].mxu0 %v2303
      %v2406 = vpop.f32.mrb[0].mxu0
      %v2407 = vadd.f32 0.0, %v2406
      %v2408 = vpop.f32.mrb[0].mxu0
      %v2409 = vadd.f32 0.0, %v2408
      %v2410 = vpop.f32.mrb[0].mxu0
      %v2411 = vadd.f32 0.0, %v2410
      %v2412 = vpop.f32.mrb[0].mxu0
      %v2413 = vadd.f32 0.0, %v2412
      %2414 = vdwg.mxu0
      %2415 = vmatprep.subr.bf16.mxu0 %v2321
      %2416 = vmatpush1.bf16.msra.mxu0 %v2318
      %2417 = vmatprep.subr.bf16.mxu0 0
      %2418 = vmatpush1.bf16.msra.mxu0 0
      %2419 = vmatprep.subr.bf16.mxu0 0
      %2420 = vmatpush1.bf16.msra.mxu0 0
      %2421 = vmatprep.subr.bf16.mxu0 0
      %2422 = vmatpush1.bf16.msra.mxu0 0
      %2423 = vmatprep.subr.bf16.mxu0 0
      %2424 = vmatpush1.bf16.msra.mxu0 0
      %2425 = vmatprep.subr.bf16.mxu0 0
      %2426 = vmatpush1.bf16.msra.mxu0 0
      %2427 = vmatprep.subr.bf16.mxu0 0
      %2428 = vmatpush1.bf16.msra.mxu0 0
      %2429 = vmatprep.subr.bf16.mxu0 0
      %2430 = vmatpush1.bf16.msra.mxu0 0
      %2431 = vmatprep.subr.bf16.mxu0 0
      %2432 = vmatpush1.bf16.msra.mxu0 0
      %2433 = vmatprep.subr.bf16.mxu0 0
      %2434 = vmatpush1.bf16.msra.mxu0 0
      %2435 = vmatprep.subr.bf16.mxu0 0
      %2436 = vmatpush1.bf16.msra.mxu0 0
      %2437 = vmatprep.subr.bf16.mxu0 0
      %2438 = vmatpush1.bf16.msra.mxu0 0
      %2439 = vmatprep.subr.bf16.mxu0 0
      %2440 = vmatpush1.bf16.msra.mxu0 0
      %2441 = vmatprep.subr.bf16.mxu0 0
      %2442 = vmatpush1.bf16.msra.mxu0 0
      %2443 = vmatprep.subr.bf16.mxu0 0
      %2444 = vmatpush1.bf16.msra.mxu0 0
      %2445 = vmatprep.subr.bf16.mxu0 0
      %2446 = vmatpush1.bf16.msra.mxu0 0
      %2447 = vmatprep.mubr.bf16.mxu0 0
      %2448 = vmatmul.mubr.bf16.gmra.mrb[0].mxu0 %v2303
      %v2449 = vpop.f32.mrb[0].mxu0
      %v2450 = vadd.f32 0.0, %v2449
      %v2451 = vpop.f32.mrb[0].mxu0
      %v2452 = vadd.f32 0.0, %v2451
      %v2453 = vpop.f32.mrb[0].mxu0
      %v2454 = vadd.f32 0.0, %v2453
      %v2455 = vpop.f32.mrb[0].mxu0
      %v2456 = vadd.f32 0.0, %v2455
      %2457 = vdwg.mxu0
      %2458 = vmatprep.subr.bf16.mxu0 %v2327
      %2459 = vmatpush1.bf16.msra.mxu0 %v2324
      %2460 = vmatprep.subr.bf16.mxu0 0
      %2461 = vmatpush1.bf16.msra.mxu0 0
      %2462 = vmatprep.subr.bf16.mxu0 0
      %2463 = vmatpush1.bf16.msra.mxu0 0
      %2464 = vmatprep.subr.bf16.mxu0 0
      %2465 = vmatpush1.bf16.msra.mxu0 0
      %2466 = vmatprep.subr.bf16.mxu0 0
      %2467 = vmatpush1.bf16.msra.mxu0 0
      %2468 = vmatprep.subr.bf16.mxu0 0
      %2469 = vmatpush1.bf16.msra.mxu0 0
      %2470 = vmatprep.subr.bf16.mxu0 0
      %2471 = vmatpush1.bf16.msra.mxu0 0
      %2472 = vmatprep.subr.bf16.mxu0 0
      %2473 = vmatpush1.bf16.msra.mxu0 0
      %2474 = vmatprep.subr.bf16.mxu0 0
      %2475 = vmatpush1.bf16.msra.mxu0 0
      %2476 = vmatprep.subr.bf16.mxu0 0
      %2477 = vmatpush1.bf16.msra.mxu0 0
      %2478 = vmatprep.subr.bf16.mxu0 0
      %2479 = vmatpush1.bf16.msra.mxu0 0
      %2480 = vmatprep.subr.bf16.mxu0 0
      %2481 = vmatpush1.bf16.msra.mxu0 0
      %2482 = vmatprep.subr.bf16.mxu0 0
      %2483 = vmatpush1.bf16.msra.mxu0 0
      %2484 = vmatprep.subr.bf16.mxu0 0
      %2485 = vmatpush1.bf16.msra.mxu0 0
      %2486 = vmatprep.subr.bf16.mxu0 0
      %2487 = vmatpush1.bf16.msra.mxu0 0
      %2488 = vmatprep.subr.bf16.mxu0 0
      %2489 = vmatpush1.bf16.msra.mxu0 0
      %2490 = vmatprep.mubr.bf16.mxu0 0
      %2491 = vmatmul.mubr.bf16.gmra.mrb[0].mxu0 %v2303
      %v2492 = vpop.f32.mrb[0].mxu0
      %v2493 = vadd.f32 0.0, %v2492
      %v2494 = vpop.f32.mrb[0].mxu0
      %v2495 = vadd.f32 0.0, %v2494
      %v2496 = vpop.f32.mrb[0].mxu0
      %v2497 = vadd.f32 0.0, %v2496
      %v2498 = vpop.f32.mrb[0].mxu0
      %v2499 = vadd.f32 0.0, %v2498
      %2500 = vdwg.mxu0
      %v2501 = vadd.f32 %v2251, %v2364
      %v2502 = vadd.f32 %v2252, %v2366
      %v2503 = vadd.f32 %v2253, %v2407
      %v2504 = vadd.f32 %v2254, %v2409
      %v2505 = vadd.f32 %v2255, %v2450
      %v2506 = vadd.f32 %v2256, %v2452
      %v2507 = vadd.f32 %v2257, %v2493
      %v2508 = vadd.f32 %v2258, %v2495
      %v2509 = vadd.f32 %v2259, %v2368
      %v2510 = vadd.f32 %v2260, %v2370
      %v2511 = vadd.f32 %v2261, %v2411
      %v2512 = vadd.f32 %v2262, %v2413
      %v2513 = vadd.f32 %v2263, %v2454
      %v2514 = vadd.f32 %v2264, %v2456
      %v2515 = vadd.f32 %v2265, %v2497
      %v2516 = vadd.f32 %v2266, %v2499
      %2517 = vrot.lane.b32.xlu0 %v797, 66
      %v2518 = vpop.permute.xlu0 %2517
      %2519 = vrot.lane.b32.xlu0 %v798, 66
      %v2520 = vpop.permute.xlu0 %2519
      %2521 = vrot.lane.b32.xlu0 %v799, 66
      %v2522 = vpop.permute.xlu0 %2521
      %2523 = vrot.lane.b32.xlu0 %v800, 66
      %v2524 = vpop.permute.xlu0 %2523
      %v2525 = vrot.slane %v2518, 4
      %v2526 = vrot.slane %v2520, 4
      %v2527 = vrot.slane %v2522, 4
      %v2528 = vrot.slane %v2524, 4
      %vm2529 = vcmask 539648
      %v2530 = vsel %vm2529, %v2525, %v2518
      %v2531 = vsel %vm815, %v2525, %v2526
      %v2532 = vsel %vm2529, %v2531, %v2520
      %v2533 = vsel %vm815, %v2526, %v2527
      %v2534 = vsel %vm2529, %v2533, %v2522
      %v2535 = vsel %vm815, %v2527, %v2528
      %v2536 = vsel %vm2529, %v2535, %v2524
      %vm2537 = vcmp.ne.s16.totalorder %v2530, 0
      %vm2538 = vcmp.ne.s16.totalorder %v2532, 0
      %vm2539 = vcmp.ne.s16.totalorder %v2534, 0
      %vm2540 = vcmp.ne.s16.totalorder %v2536, 0
      %vm2541 = vcmp.ne.s16.totalorder %v2528, 0
      %v2542 = vsel %vm2537, %v295, 0
      %v2543 = vsel %vm2538, %v296, 0
      %v2544 = vsel %vm2539, %v297, 0
      %v2545 = vsel %vm2540, %v298, 0
      %v2546 = vsel %vm2541, %v309, 0
      %s2547 = scalar_lea.vmem %s1, 64
      %v2548 = vld [vmem:[%s2547] sm:$0xf]
      %v2549 = vld [vmem:[%s2547 + $0x4] sm:$0x3]
      %v2552 = vunpack.c.l.b16 %v2548
      %v2553 = vunpack.c.l.b16 %v2549
      %v2554 = vpack.c.b16 %v2553, %v2552
      %v2560 = vunpack.c.l.b16 %v2542
      %v2561 = vunpack.c.h.b16 %v2542
      %v2562 = vunpack.c.l.b16 %v2543
      %v2563 = vunpack.c.h.b16 %v2543
      %v2564 = vunpack.c.l.b16 %v2544
      %v2565 = vunpack.c.h.b16 %v2544
      %v2566 = vunpack.c.l.b16 %v2545
      %v2567 = vunpack.c.h.b16 %v2545
      %v2568 = vunpack.c.l.b16 %v2546
      %v2569 = vpack.c.b16 %v2560, %v2560
      %v2570 = vpack.c.b16 %v2561, %v2561
      %v2571 = vpack.c.b16 %v2562, %v2562
      %v2572 = vpack.c.b16 %v2563, %v2563
      %v2573 = vpack.c.b16 %v2564, %v2564
      %v2574 = vpack.c.b16 %v2565, %v2565
      %v2575 = vpack.c.b16 %v2566, %v2566
      %v2576 = vpack.c.b16 %v2567, %v2567
      %v2577 = vpack.c.b16 %v2568, %v2568
      %2578 = vrot.lane.b32.xlu0 %v2569, 62
      %v2579 = vpop.permute.xlu0 %2578
      %2580 = vrot.lane.b32.xlu0 %v2570, 62
      %v2581 = vpop.permute.xlu0 %2580
      %2582 = vrot.lane.b32.xlu0 %v2571, 62
      %v2583 = vpop.permute.xlu0 %2582
      %2584 = vrot.lane.b32.xlu0 %v2572, 62
      %v2585 = vpop.permute.xlu0 %2584
      %2586 = vrot.lane.b32.xlu0 %v2573, 62
      %v2587 = vpop.permute.xlu0 %2586
      %2588 = vrot.lane.b32.xlu0 %v2574, 62
      %v2589 = vpop.permute.xlu0 %2588
      %2590 = vrot.lane.b32.xlu0 %v2575, 62
      %v2591 = vpop.permute.xlu0 %2590
      %2592 = vrot.lane.b32.xlu0 %v2576, 62
      %v2593 = vpop.permute.xlu0 %2592
      %2594 = vrot.lane.b32.xlu0 %v2577, 62
      %v2595 = vpop.permute.xlu0 %2594
      %vm2596 = vcmask 506880
      %v2597 = vsel %vm2596, %v2579, %v2581
      %v2598 = vsel %vm2596, %v2581, %v2583
      %v2599 = vsel %vm2596, %v2583, %v2585
      %v2600 = vsel %vm2596, %v2585, %v2587
      %v2601 = vsel %vm2596, %v2587, %v2589
      %v2602 = vsel %vm2596, %v2589, %v2591
      %v2603 = vsel %vm2596, %v2591, %v2593
      %v2604 = vsel %vm2596, %v2593, %v2595
      %v2606 = vsel %vm368, %v2554, 0
      %v2609 = vsel %vm372, %v2597, 0
      %v2612 = vsel %vm372, %v2598, 0
      %v2615 = vsel %vm372, %v2599, 0
      %v2618 = vsel %vm372, %v2600, 0
      %v2621 = vsel %vm372, %v2601, 0
      %v2624 = vsel %vm372, %v2602, 0
      %v2627 = vsel %vm372, %v2603, 0
      %v2630 = vsel %vm372, %v2604, 0
      %2632 = vmatprep.subr.bf16.mxu0 %v2612
      %2633 = vmatpush1.bf16.msra.mxu0 %v2609
      %2634 = vmatprep.subr.bf16.mxu0 0
      %2635 = vmatpush1.bf16.msra.mxu0 0
      %2636 = vmatprep.subr.bf16.mxu0 0
      %2637 = vmatpush1.bf16.msra.mxu0 0
      %2638 = vmatprep.subr.bf16.mxu0 0
      %2639 = vmatpush1.bf16.msra.mxu0 0
      %2640 = vmatprep.subr.bf16.mxu0 0
      %2641 = vmatpush1.bf16.msra.mxu0 0
      %2642 = vmatprep.subr.bf16.mxu0 0
      %2643 = vmatpush1.bf16.msra.mxu0 0
      %2644 = vmatprep.subr.bf16.mxu0 0
      %2645 = vmatpush1.bf16.msra.mxu0 0
      %2646 = vmatprep.subr.bf16.mxu0 0
      %2647 = vmatpush1.bf16.msra.mxu0 0
      %2648 = vmatprep.subr.bf16.mxu0 0
      %2649 = vmatpush1.bf16.msra.mxu0 0
      %2650 = vmatprep.subr.bf16.mxu0 0
      %2651 = vmatpush1.bf16.msra.mxu0 0
      %2652 = vmatprep.subr.bf16.mxu0 0
      %2653 = vmatpush1.bf16.msra.mxu0 0
      %2654 = vmatprep.subr.bf16.mxu0 0
      %2655 = vmatpush1.bf16.msra.mxu0 0
      %2656 = vmatprep.subr.bf16.mxu0 0
      %2657 = vmatpush1.bf16.msra.mxu0 0
      %2658 = vmatprep.subr.bf16.mxu0 0
      %2659 = vmatpush1.bf16.msra.mxu0 0
      %2660 = vmatprep.subr.bf16.mxu0 0
      %2661 = vmatpush1.bf16.msra.mxu0 0
      %2662 = vmatprep.subr.bf16.mxu0 0
      %2663 = vmatpush1.bf16.msra.mxu0 0
      %2664 = vmatprep.mubr.bf16.mxu0 0
      %2665 = vmatmul.mubr.bf16.gmra.mrb[0].mxu0 %v2606
      %v2666 = vpop.f32.mrb[0].mxu0
      %v2667 = vadd.f32 0.0, %v2666
      %v2668 = vpop.f32.mrb[0].mxu0
      %v2669 = vadd.f32 0.0, %v2668
      %v2670 = vpop.f32.mrb[0].mxu0
      %v2671 = vadd.f32 0.0, %v2670
      %v2672 = vpop.f32.mrb[0].mxu0
      %v2673 = vadd.f32 0.0, %v2672
      %2674 = vdwg.mxu0
      %2675 = vmatprep.subr.bf16.mxu0 %v2618
      %2676 = vmatpush1.bf16.msra.mxu0 %v2615
      %2677 = vmatprep.subr.bf16.mxu0 0
      %2678 = vmatpush1.bf16.msra.mxu0 0
      %2679 = vmatprep.subr.bf16.mxu0 0
      %2680 = vmatpush1.bf16.msra.mxu0 0
      %2681 = vmatprep.subr.bf16.mxu0 0
      %2682 = vmatpush1.bf16.msra.mxu0 0
      %2683 = vmatprep.subr.bf16.mxu0 0
      %2684 = vmatpush1.bf16.msra.mxu0 0
      %2685 = vmatprep.subr.bf16.mxu0 0
      %2686 = vmatpush1.bf16.msra.mxu0 0
      %2687 = vmatprep.subr.bf16.mxu0 0
      %2688 = vmatpush1.bf16.msra.mxu0 0
      %2689 = vmatprep.subr.bf16.mxu0 0
      %2690 = vmatpush1.bf16.msra.mxu0 0
      %2691 = vmatprep.subr.bf16.mxu0 0
      %2692 = vmatpush1.bf16.msra.mxu0 0
      %2693 = vmatprep.subr.bf16.mxu0 0
      %2694 = vmatpush1.bf16.msra.mxu0 0
      %2695 = vmatprep.subr.bf16.mxu0 0
      %2696 = vmatpush1.bf16.msra.mxu0 0
      %2697 = vmatprep.subr.bf16.mxu0 0
      %2698 = vmatpush1.bf16.msra.mxu0 0
      %2699 = vmatprep.subr.bf16.mxu0 0
      %2700 = vmatpush1.bf16.msra.mxu0 0
      %2701 = vmatprep.subr.bf16.mxu0 0
      %2702 = vmatpush1.bf16.msra.mxu0 0
      %2703 = vmatprep.subr.bf16.mxu0 0
      %2704 = vmatpush1.bf16.msra.mxu0 0
      %2705 = vmatprep.subr.bf16.mxu0 0
      %2706 = vmatpush1.bf16.msra.mxu0 0
      %2707 = vmatprep.mubr.bf16.mxu0 0
      %2708 = vmatmul.mubr.bf16.gmra.mrb[0].mxu0 %v2606
      %v2709 = vpop.f32.mrb[0].mxu0
      %v2710 = vadd.f32 0.0, %v2709
      %v2711 = vpop.f32.mrb[0].mxu0
      %v2712 = vadd.f32 0.0, %v2711
      %v2713 = vpop.f32.mrb[0].mxu0
      %v2714 = vadd.f32 0.0, %v2713
      %v2715 = vpop.f32.mrb[0].mxu0
      %v2716 = vadd.f32 0.0, %v2715
      %2717 = vdwg.mxu0
      %2718 = vmatprep.subr.bf16.mxu0 %v2624
      %2719 = vmatpush1.bf16.msra.mxu0 %v2621
      %2720 = vmatprep.subr.bf16.mxu0 0
      %2721 = vmatpush1.bf16.msra.mxu0 0
      %2722 = vmatprep.subr.bf16.mxu0 0
      %2723 = vmatpush1.bf16.msra.mxu0 0
      %2724 = vmatprep.subr.bf16.mxu0 0
      %2725 = vmatpush1.bf16.msra.mxu0 0
      %2726 = vmatprep.subr.bf16.mxu0 0
      %2727 = vmatpush1.bf16.msra.mxu0 0
      %2728 = vmatprep.subr.bf16.mxu0 0
      %2729 = vmatpush1.bf16.msra.mxu0 0
      %2730 = vmatprep.subr.bf16.mxu0 0
      %2731 = vmatpush1.bf16.msra.mxu0 0
      %2732 = vmatprep.subr.bf16.mxu0 0
      %2733 = vmatpush1.bf16.msra.mxu0 0
      %2734 = vmatprep.subr.bf16.mxu0 0
      %2735 = vmatpush1.bf16.msra.mxu0 0
      %2736 = vmatprep.subr.bf16.mxu0 0
      %2737 = vmatpush1.bf16.msra.mxu0 0
      %2738 = vmatprep.subr.bf16.mxu0 0
      %2739 = vmatpush1.bf16.msra.mxu0 0
      %2740 = vmatprep.subr.bf16.mxu0 0
      %2741 = vmatpush1.bf16.msra.mxu0 0
      %2742 = vmatprep.subr.bf16.mxu0 0
      %2743 = vmatpush1.bf16.msra.mxu0 0
      %2744 = vmatprep.subr.bf16.mxu0 0
      %2745 = vmatpush1.bf16.msra.mxu0 0
      %2746 = vmatprep.subr.bf16.mxu0 0
      %2747 = vmatpush1.bf16.msra.mxu0 0
      %2748 = vmatprep.subr.bf16.mxu0 0
      %2749 = vmatpush1.bf16.msra.mxu0 0
      %2750 = vmatprep.mubr.bf16.mxu0 0
      %2751 = vmatmul.mubr.bf16.gmra.mrb[0].mxu0 %v2606
      %v2752 = vpop.f32.mrb[0].mxu0
      %v2753 = vadd.f32 0.0, %v2752
      %v2754 = vpop.f32.mrb[0].mxu0
      %v2755 = vadd.f32 0.0, %v2754
      %v2756 = vpop.f32.mrb[0].mxu0
      %v2757 = vadd.f32 0.0, %v2756
      %v2758 = vpop.f32.mrb[0].mxu0
      %v2759 = vadd.f32 0.0, %v2758
      %2760 = vdwg.mxu0
      %2761 = vmatprep.subr.bf16.mxu0 %v2630
      %2762 = vmatpush1.bf16.msra.mxu0 %v2627
      %2763 = vmatprep.subr.bf16.mxu0 0
      %2764 = vmatpush1.bf16.msra.mxu0 0
      %2765 = vmatprep.subr.bf16.mxu0 0
      %2766 = vmatpush1.bf16.msra.mxu0 0
      %2767 = vmatprep.subr.bf16.mxu0 0
      %2768 = vmatpush1.bf16.msra.mxu0 0
      %2769 = vmatprep.subr.bf16.mxu0 0
      %2770 = vmatpush1.bf16.msra.mxu0 0
      %2771 = vmatprep.subr.bf16.mxu0 0
      %2772 = vmatpush1.bf16.msra.mxu0 0
      %2773 = vmatprep.subr.bf16.mxu0 0
      %2774 = vmatpush1.bf16.msra.mxu0 0
      %2775 = vmatprep.subr.bf16.mxu0 0
      %2776 = vmatpush1.bf16.msra.mxu0 0
      %2777 = vmatprep.subr.bf16.mxu0 0
      %2778 = vmatpush1.bf16.msra.mxu0 0
      %2779 = vmatprep.subr.bf16.mxu0 0
      %2780 = vmatpush1.bf16.msra.mxu0 0
      %2781 = vmatprep.subr.bf16.mxu0 0
      %2782 = vmatpush1.bf16.msra.mxu0 0
      %2783 = vmatprep.subr.bf16.mxu0 0
      %2784 = vmatpush1.bf16.msra.mxu0 0
      %2785 = vmatprep.subr.bf16.mxu0 0
      %2786 = vmatpush1.bf16.msra.mxu0 0
      %2787 = vmatprep.subr.bf16.mxu0 0
      %2788 = vmatpush1.bf16.msra.mxu0 0
      %2789 = vmatprep.subr.bf16.mxu0 0
      %2790 = vmatpush1.bf16.msra.mxu0 0
      %2791 = vmatprep.subr.bf16.mxu0 0
      %2792 = vmatpush1.bf16.msra.mxu0 0
      %2793 = vmatprep.mubr.bf16.mxu0 0
      %2794 = vmatmul.mubr.bf16.gmra.mrb[0].mxu0 %v2606
      %v2795 = vpop.f32.mrb[0].mxu0
      %v2796 = vadd.f32 0.0, %v2795
      %v2797 = vpop.f32.mrb[0].mxu0
      %v2798 = vadd.f32 0.0, %v2797
      %v2799 = vpop.f32.mrb[0].mxu0
      %v2800 = vadd.f32 0.0, %v2799
      %v2801 = vpop.f32.mrb[0].mxu0
      %v2802 = vadd.f32 0.0, %v2801
      %2803 = vdwg.mxu0
      %v2804 = vadd.f32 %v2501, %v2667
      %v2805 = vadd.f32 %v2502, %v2669
      %v2806 = vadd.f32 %v2503, %v2710
      %v2807 = vadd.f32 %v2504, %v2712
      %v2808 = vadd.f32 %v2505, %v2753
      %v2809 = vadd.f32 %v2506, %v2755
      %v2810 = vadd.f32 %v2507, %v2796
      %v2811 = vadd.f32 %v2508, %v2798
      %v2812 = vadd.f32 %v2509, %v2671
      %v2813 = vadd.f32 %v2510, %v2673
      %v2814 = vadd.f32 %v2511, %v2714
      %v2815 = vadd.f32 %v2512, %v2716
      %v2816 = vadd.f32 %v2513, %v2757
      %v2817 = vadd.f32 %v2514, %v2759
      %v2818 = vadd.f32 %v2515, %v2800
      %v2819 = vadd.f32 %v2516, %v2802
      %v2820 = vld [vmem:[%s2] sm:$0xff]
      %v2821 = vld [vmem:[%s2 + $0x8] sm:$0xf]
      %2823 = vset.pattern.permute.xlu0 0
      %2824 = vperm.xlu0 %2823, %v2820
      %v2825 = vpop.permute.xlu0 %2824
      %2828 = vset.pattern.permute.xlu0 0
      %2829 = vperm.xlu0 %2828, %v2821
      %v2830 = vpop.permute.xlu0 %2829
      %v2832 = vadd.f32 %v2804, %v2825
      %v2833 = vadd.f32 %v2805, %v2825
      %v2834 = vadd.f32 %v2806, %v2825
      %v2835 = vadd.f32 %v2807, %v2825
      %v2836 = vadd.f32 %v2808, %v2825
      %v2837 = vadd.f32 %v2809, %v2825
      %v2838 = vadd.f32 %v2810, %v2825
      %v2839 = vadd.f32 %v2811, %v2825
      %v2840 = vadd.f32 %v2812, %v2830
      %v2841 = vadd.f32 %v2813, %v2830
      %v2842 = vadd.f32 %v2814, %v2830
      %v2843 = vadd.f32 %v2815, %v2830
      %v2844 = vadd.f32 %v2816, %v2830
      %v2845 = vadd.f32 %v2817, %v2830
      %v2846 = vadd.f32 %v2818, %v2830
      %v2847 = vadd.f32 %v2819, %v2830
      %v2848 = vtanh.pop %v2832
      %v2849 = vtanh.pop %v2833
      %v2850 = vtanh.pop %v2834
      %v2851 = vtanh.pop %v2835
      %v2852 = vtanh.pop %v2836
      %v2853 = vtanh.pop %v2837
      %v2854 = vtanh.pop %v2838
      %v2855 = vtanh.pop %v2839
      %v2856 = vtanh.pop %v2840
      %v2857 = vtanh.pop %v2841
      %v2858 = vtanh.pop %v2842
      %v2859 = vtanh.pop %v2843
      %v2860 = vtanh.pop %v2844
      %v2861 = vtanh.pop %v2845
      %v2862 = vtanh.pop %v2846
      %v2863 = vtanh.pop %v2847
      %2864 = vst [vmem:[%s170] sm:$0xff] %v2848
      %2865 = vst [vmem:[%s170 + $0x8] sm:$0xff] %v2849
      %2866 = vst [vmem:[%s170 + $0x10] sm:$0xff] %v2850
      %2867 = vst [vmem:[%s170 + $0x18] sm:$0xff] %v2851
      %2868 = vst [vmem:[%s170 + $0x20] sm:$0xff] %v2852
      %2869 = vst [vmem:[%s170 + $0x28] sm:$0xff] %v2853
      %2870 = vst [vmem:[%s170 + $0x30] sm:$0xff] %v2854
      %2871 = vst [vmem:[%s170 + $0x38] sm:$0xff] %v2855
      %2872 = vst [vmem:[%s170 + $0x40] sm:$0xf] %v2856
      %2873 = vst [vmem:[%s170 + $0x48] sm:$0xf] %v2857
      %2874 = vst [vmem:[%s170 + $0x50] sm:$0xf] %v2858
      %2875 = vst [vmem:[%s170 + $0x58] sm:$0xf] %v2859
      %2876 = vst [vmem:[%s170 + $0x60] sm:$0xf] %v2860
      %2877 = vst [vmem:[%s170 + $0x68] sm:$0xf] %v2861
      %2878 = vst [vmem:[%s170 + $0x70] sm:$0xf] %v2862
      %2879 = vst [vmem:[%s170 + $0x78] sm:$0xf] %v2863
      %p2880 = scmp.lt.s32.totalorder %s14, 1
      %s2881 = scalar_select %p2880, %s14, 1
      %s2882 = smul.addr %s2881, 16
      %s2883 = smul.addr %s2882, 8
      %s2884 = scalar_lea.vmem %s3, %s2883
      // Predicated region
      $region33: #{generator_forward.9} parent=31 // pred_check
        %p2885 = pneg %p100
      $region34: #{generator_forward.9} parent=31 // pred_check_branch
        %2887 = sbr.rel (%p2885) target = $region36
      $region35: #{generator_forward.9} parent=31 // pred_region
        _
      $region36: #{generator_forward.9} parent=31 // pred_fallthru
        _
    $region32: #{generator_forward.9} parent=5 // pred_fallthru
      _
    %p2888 = scmp.le.s32.totalorder 2, %s9
    // Predicated region
    $region37: #{generator_forward.9} parent=5 // pred_check
      %p2889 = pneg %p2888
    $region38: #{generator_forward.9} parent=5 // pred_check_branch
      %2891 = sbr.rel (%p2889) target = $region40
    $region39: #{generator_forward.9} parent=5 // pred_region
      %s2892 = ssub.s32 %s9, 2
      // Predicated region
      $region41: #{generator_forward.9} parent=39 // pred_check
        %p2893 = pneg %p106
      $region42: #{generator_forward.9} parent=39 // pred_check_branch
        %2895 = sbr.rel (%p2893) target = $region44
      $region43: #{generator_forward.9} parent=39 // pred_region
        %p2896 = scmp.lt.s32.totalorder %s15, 1
        %s2897 = scalar_select %p2896, %s15, 1
        %s2898 = smul.addr %s2897, 16
        %s2899 = smul.addr %s2898, 8
        %s2900 = scalar_lea.vmem %s3, %s2899
      $region44: #{generator_forward.9} parent=39 // pred_fallthru
        _
    $region40: #{generator_forward.9} parent=5 // pred_fallthru
      _
  $region6: #{generator_forward.9} parent=0 // loop_footer
    %s13 = sadd.s32 1, %s9
  $region7: #{generator_forward.9} parent=0 // loop_footer_branch
    %8 = sbr.rel target = $region3
  $region8: #{generator_forward.9} parent=0 // loop_exit
    _

</llo_original>
